<compile_context>
chip_gen: v6e
topology: v6e:2x2x1
jax: 0.10.0
libtpu: 0.0.40
codegen_flags: <defaults>
</compile_context>

<pallas_src>
import functools

import jax
import jax.numpy as jnp
from jax.experimental import pallas as pl
from jax.experimental.pallas import tpu as pltpu


# Scoped-VMEM cap: fits v7x's 64 MiB/TC with headroom; harmless on v5e/v6e (128 MiB).
_VMEM_LIMIT = 48 * 1024 * 1024


def _round_up(x, m):
    return ((x + m - 1) // m) * m


def _pick_tile(dim, cands):
    for c in cands:
        if dim % c == 0:
            return c
    return dim


# ----------------------------------------------------------------------------
# Conv 3x3 (stride 1, pad 1) + bias + ReLU, fused im2col in VMEM
# ----------------------------------------------------------------------------

def _conv3x3_kernel(x_ref, w_ref, b_ref, o_ref, a_scr, *, H, W):
    """x_ref: (1, H+2, W+2, C) bf16   padded NHWC slab for one image
       w_ref: (9, C, OC)       bf16   (kh*3+kw, cin, cout)
       b_ref: (1, OC)          f32
       o_ref: (1, H*W, OC)     bf16
       a_scr: (H*W, C)         bf16   VMEM scratch for one (kh, kw) tap."""
    acc = None
    for kh in range(3):
        for kw in range(3):
            # Build the shifted-window A matrix in VMEM (input read from HBM once;
            # no 9x im2col tensor is ever materialized).
            for h in range(H):
                a_scr[h * W:(h + 1) * W, :] = x_ref[0, kh + h, kw:kw + W, :]
            part = jnp.dot(a_scr[...], w_ref[kh * 3 + kw],
                           preferred_element_type=jnp.float32)
            acc = part if acc is None else acc + part
    out = jnp.maximum(acc + b_ref[...], 0.0)      # bias + ReLU epilogue kept in f32
    o_ref[0] = out.astype(o_ref.dtype)


def conv3x3_bias_relu(x, w, b):
    """x: (N, H, W, C) bf16, w: (9, C, OC) bf16, b: (1, OC) f32 -> (N, H, W, OC) bf16."""
    N, H, W, C = x.shape
    OC = w.shape[-1]
    xp = jnp.pad(x, ((0, 0), (1, 1), (1, 1), (0, 0)))
    kernel = functools.partial(_conv3x3_kernel, H=H, W=W)
    out = pl.pallas_call(
        kernel,
        out_shape=jax.ShapeDtypeStruct((N, H * W, OC), jnp.bfloat16),
        grid_spec=pltpu.PrefetchScalarGridSpec(
            num_scalar_prefetch=0,
            grid=(N,),
            in_specs=[
                pl.BlockSpec((1, H + 2, W + 2, C), lambda n: (n, 0, 0, 0)),
                pl.BlockSpec((9, C, OC), lambda n: (0, 0, 0)),
                pl.BlockSpec((1, OC), lambda n: (0, 0)),
            ],
            out_specs=pl.BlockSpec((1, H * W, OC), lambda n: (n, 0, 0)),
            scratch_shapes=[pltpu.VMEM((H * W, C), jnp.bfloat16)],
        ),
        compiler_params=pltpu.CompilerParams(
            dimension_semantics=("parallel",),
            vmem_limit_bytes=_VMEM_LIMIT),
    )(xp, w, b)
    return out.reshape(N, H, W, OC)


# ----------------------------------------------------------------------------
# MaxPool 2x2 / stride 2 (gridded per image; 4-way max in VMEM on value slices)
# ----------------------------------------------------------------------------

def _maxpool2x2_kernel(x_ref, o_ref):
    x = x_ref[0]                                   # (H, W, C) value in VMEM
    r = jnp.maximum(x[0::2], x[1::2])              # pairwise max along H -> (Ho, W, C)
    o_ref[0] = jnp.maximum(r[:, 0::2, :], r[:, 1::2, :])   # pairwise max along W


def maxpool2x2(x):
    N, H, W, C = x.shape
    Ho, Wo = H // 2, W // 2
    return pl.pallas_call(
        _maxpool2x2_kernel,
        out_shape=jax.ShapeDtypeStruct((N, Ho, Wo, C), x.dtype),
        grid_spec=pltpu.PrefetchScalarGridSpec(
            num_scalar_prefetch=0,
            grid=(N,),
            in_specs=[pl.BlockSpec((1, H, W, C), lambda n: (n, 0, 0, 0))],
            out_specs=pl.BlockSpec((1, Ho, Wo, C), lambda n: (n, 0, 0, 0)),
        ),
        compiler_params=pltpu.CompilerParams(
            dimension_semantics=("parallel",),
            vmem_limit_bytes=_VMEM_LIMIT),
    )(x)


# ----------------------------------------------------------------------------
# Fully-connected tiled matmul kernel (bias + optional ReLU epilogue in f32)
# ----------------------------------------------------------------------------

def _fc_kernel(a_ref, w_ref, b_ref, o_ref, *, apply_relu):
    k = pl.program_id(2)
    nk = pl.num_programs(2)

    @pl.when(k == 0)
    def _():
        o_ref[...] = jnp.zeros_like(o_ref)

    o_ref[...] += jnp.dot(a_ref[...], w_ref[...], preferred_element_type=jnp.float32)

    @pl.when(k == nk - 1)
    def _():
        out = o_ref[...] + b_ref[...]
        if apply_relu:
            out = jnp.maximum(out, 0.0)
        o_ref[...] = out


def _fc_tiles(M, K, N):
    tm = min(_round_up(M, 8), 256)
    Mp = _round_up(M, tm)
    tk = _pick_tile(K, (1024, 512, 256, 128))
    tn = _pick_tile(N, (512, 256, 128))
    return tm, Mp, tk, tn


def fc_plain(a, w, bias, *, apply_relu):
    """relu?(a @ w + bias).  a: (M, K) bf16, w: (K, N) bf16, bias: (1, N) f32 -> (M, N) f32."""
    M, K = a.shape
    _, N = w.shape
    tm, Mp, tk, tn = _fc_tiles(M, K, N)
    a_p = a if Mp == M else jnp.zeros((Mp, K), a.dtype).at[:M].set(a)
    kernel = functools.partial(_fc_kernel, apply_relu=apply_relu)
    out = pl.pallas_call(
        kernel,
        out_shape=jax.ShapeDtypeStruct((Mp, N), jnp.float32),
        grid_spec=pltpu.PrefetchScalarGridSpec(
            num_scalar_prefetch=0,
            grid=(Mp // tm, N // tn, K // tk),
            in_specs=[
                pl.BlockSpec((tm, tk), lambda i, j, k: (i, k)),
                pl.BlockSpec((tk, tn), lambda i, j, k: (k, j)),
                pl.BlockSpec((1, tn), lambda i, j, k: (0, j)),
            ],
            out_specs=pl.BlockSpec((tm, tn), lambda i, j, k: (i, j)),
        ),
        compiler_params=pltpu.CompilerParams(
            dimension_semantics=("parallel", "parallel", "arbitrary"),
            vmem_limit_bytes=_VMEM_LIMIT),
    )(a_p, w, bias)
    return out[:M]


# ----------------------------------------------------------------------------
# Parameters (stored in kernel-friendly layouts at init)
# ----------------------------------------------------------------------------

def _init_conv_bayes(key, cin, cout, logvar):
    std = jnp.exp(0.5 * jnp.float32(logvar))
    w_mu = jax.random.normal(key, (9, cin, cout), jnp.float32) * jnp.sqrt(2.0 / (9 * cin))
    return {"w_mu": w_mu,
            "w_std": jnp.full((9, cin, cout), std, jnp.float32),
            "b_mu": jnp.zeros((1, cout), jnp.float32),
            "b_std": jnp.full((1, cout), std, jnp.float32)}


def _init_fc_bayes(key, k_in, n_out, logvar):
    std = jnp.exp(0.5 * jnp.float32(logvar))
    w_mu = jax.random.normal(key, (k_in, n_out), jnp.float32) * jnp.sqrt(2.0 / k_in)
    # Pre-transposed (in, out) layout stored in bf16: streamed straight to the MXU.
    return {"w_mu": w_mu.astype(jnp.bfloat16),
            "w_std": jnp.full((k_in, n_out), std, jnp.bfloat16),
            "b_mu": jnp.zeros((1, n_out), jnp.float32),
            "b_std": jnp.full((1, n_out), std, jnp.float32)}


def init_params(key, inputsize, num_classes=10, num_heads=1,
                lambda_logvar=-15.0, lambda_logvar_mlp=-15.0):
    ncha, size, _ = inputsize
    s = size // 8
    cin1 = _round_up(ncha, 8)           # conv1 input channels zero-padded to 8 lanes
    feat = 256 * s * s
    keys = jax.random.split(key, 8)
    params = {
        "conv1": _init_conv_bayes(keys[0], cin1, 64, lambda_logvar),
        "conv2": _init_conv_bayes(keys[1], 64, 192, lambda_logvar),
        "conv3": _init_conv_bayes(keys[2], 192, 384, lambda_logvar),
        "conv4": _init_conv_bayes(keys[3], 384, 256, lambda_logvar),
        "conv5": _init_conv_bayes(keys[4], 256, 256, lambda_logvar),
        "fc1": _init_fc_bayes(keys[5], feat, 4096, lambda_logvar_mlp),
        "fc2": _init_fc_bayes(keys[6], 4096, 4096, lambda_logvar_mlp),
    }
    ncls_p = _round_up(num_classes, 128)
    hw = jax.random.normal(keys[7], (4096, num_heads, num_classes),
                           jnp.float32) / jnp.sqrt(4096.0)
    w_heads = jnp.zeros((4096, num_heads, ncls_p), jnp.float32).at[:, :, :num_classes].set(hw)
    params["heads"] = {
        "w": w_heads.reshape(4096, num_heads * ncls_p).astype(jnp.bfloat16),
        "b": jnp.zeros((1, num_heads * ncls_p), jnp.float32),
        "num_heads": num_heads, "num_classes": num_classes, "ncls_p": ncls_p,
    }
    return params


def _sample_conv(key, p, sample):
    if not sample:
        return p["w_mu"].astype(jnp.bfloat16), p["b_mu"]
    kw, kb = jax.random.split(key)
    w = p["w_mu"] + p["w_std"] * jax.random.normal(kw, p["w_mu"].shape, jnp.float32)
    b = p["b_mu"] + p["b_std"] * jax.random.normal(kb, p["b_mu"].shape, jnp.float32)
    return w.astype(jnp.bfloat16), b


def _sample_fc(key, p, sample):
    """VCL reparameterization W = mu + std * eps done once per forward in XLA (f32),
    then cast to bf16 for the MXU.  Sampled weights are never stored as parameters."""
    if not sample:
        return p["w_mu"], p["b_mu"]
    kw, kb = jax.random.split(key)
    eps_w = jax.random.normal(kw, p["w_mu"].shape, jnp.float32)
    w = (p["w_mu"].astype(jnp.float32)
         + p["w_std"].astype(jnp.float32) * eps_w).astype(jnp.bfloat16)
    b = p["b_mu"] + p["b_std"] * jax.random.normal(kb, p["b_mu"].shape, jnp.float32)
    return w, b


# ----------------------------------------------------------------------------
# Forward pass (MultiHeadTDVCLBayesianAlexNet.forward)
# ----------------------------------------------------------------------------

def td_vcl_alexnet_forward(params, x_nchw, rng, sample=True):
    """Returns (B, num_heads, num_classes), matching the multi-head torch.cat output."""
    B = x_nchw.shape[0]
    keys = jax.random.split(rng, 7)

    # NCHW -> NHWC, bf16 activations, input channels zero-padded to stored width.
    x = jnp.transpose(x_nchw, (0, 2, 3, 1)).astype(jnp.bfloat16)
    cin1 = params["conv1"]["w_mu"].shape[1]
    if cin1 > x.shape[-1]:
        x = jnp.pad(x, ((0, 0), (0, 0), (0, 0), (0, cin1 - x.shape[-1])))

    w, b = _sample_conv(keys[0], params["conv1"], sample)
    x = conv3x3_bias_relu(x, w, b)
    x = maxpool2x2(x)
    w, b = _sample_conv(keys[1], params["conv2"], sample)
    x = conv3x3_bias_relu(x, w, b)
    x = maxpool2x2(x)
    w, b = _sample_conv(keys[2], params["conv3"], sample)
    x = conv3x3_bias_relu(x, w, b)
    w, b = _sample_conv(keys[3], params["conv4"], sample)
    x = conv3x3_bias_relu(x, w, b)
    w, b = _sample_conv(keys[4], params["conv5"], sample)
    x = conv3x3_bias_relu(x, w, b)
    x = maxpool2x2(x)

    # Flatten exactly like PyTorch's NCHW x.view(B, -1): (C, H, W) ordering.
    x = jnp.transpose(x, (0, 3, 1, 2)).reshape(B, -1)

    w, b = _sample_fc(keys[5], params["fc1"], sample)
    x = fc_plain(x, w, b, apply_relu=True).astype(jnp.bfloat16)
    # TODO(synk): nn.Dropout(0.5) treated as identity (inference / eval mode).
    w, b = _sample_fc(keys[6], params["fc2"], sample)
    x = fc_plain(x, w, b, apply_relu=True).astype(jnp.bfloat16)
    # TODO(synk): second nn.Dropout(0.5) also treated as identity.

    h = params["heads"]
    out = fc_plain(x, h["w"], h["b"], apply_relu=False)          # (B, num_heads * ncls_p)
    out = out.reshape(B, h["num_heads"], h["ncls_p"])[:, :, :h["num_classes"]]
    return out


# ----------------------------------------------------------------------------
# Main
# ----------------------------------------------------------------------------

if __name__ == "__main__":
    key = jax.random.PRNGKey(0)
    k_param, k_data, k_sample = jax.random.split(key, 3)

    batch, ncha, size = 2, 4, 16          # small shapes; size // 8 == 2
    num_classes, num_heads = 10, 1
    inputsize = (ncha, size, size)

    params = init_params(k_param, inputsize, num_classes=num_classes, num_heads=num_heads)
    x = jax.random.normal(k_data, (batch, ncha, size, size), jnp.float32)

    out = td_vcl_alexnet_forward(params, x, k_sample, sample=True)
    out = jax.block_until_ready(out)

    assert out.shape == (batch, num_heads, num_classes), out.shape
    assert bool(jnp.all(jnp.isfinite(out.astype(jnp.float32))))
    print("KERNEL_OK")
</pallas_src>

<mosaic_0001>
module attributes {stable_mosaic.version = 11 : i64} {
  func.func @_conv3x3_kernel(%arg0: i32, %arg1: memref<1x18x18x8xbf16, #tpu.memory_space<vmem>>, %arg2: memref<9x8x64xbf16, #tpu.memory_space<vmem>>, %arg3: memref<1x64xf32, #tpu.memory_space<vmem>>, %arg4: memref<1x256x64xbf16, #tpu.memory_space<vmem>>, %arg5: memref<256x8xbf16, #tpu.memory_space<vmem>>) attributes {dimension_semantics = [#tpu.dimension_semantics<parallel>], iteration_bounds = array<i64: 2>, scalar_prefetch = 0 : i64, scratch_operands = 1 : i64, tpu.core_type = #tpu.core_type<tc>, window_params = [{transform_indices = @transform_0, window_bounds = array<i64: 1, 18, 18, 8>}, {pipeline_mode = #tpu.pipeline_mode<synchronous>, transform_indices = @transform_1, window_bounds = array<i64: 9, 8, 64>}, {pipeline_mode = #tpu.pipeline_mode<synchronous>, transform_indices = @transform_2, window_bounds = array<i64: 1, 64>}, {transform_indices = @transform_3, window_bounds = array<i64: 1, 256, 64>}]} {
    %c0 = arith.constant 0 : index
    %c0_0 = arith.constant 0 : index
    %c0_1 = arith.constant 0 : index
    %c0_2 = arith.constant 0 : index
    %0 = vector.load %arg1[%c0, %c0_0, %c0_1, %c0_2] : memref<1x18x18x8xbf16, #tpu.memory_space<vmem>>, vector<1x1x16x8xbf16>
    %1 = vector.shape_cast %0 : vector<1x1x16x8xbf16> to vector<16x8xbf16>
    %c0_3 = arith.constant 0 : index
    %c0_4 = arith.constant 0 : index
    %2 = vector.load %arg5[%c0_3, %c0_4] : memref<256x8xbf16, #tpu.memory_space<vmem>>, vector<16x8xbf16>
    tpu.vector_store %arg5[%c0_3, %c0_4], %1 {strides = array<i32>} : memref<256x8xbf16, #tpu.memory_space<vmem>>, vector<16x8xbf16>,
    %c0_5 = arith.constant 0 : index
    %c1 = arith.constant 1 : index
    %c0_6 = arith.constant 0 : index
    %c0_7 = arith.constant 0 : index
    %3 = vector.load %arg1[%c0_5, %c1, %c0_6, %c0_7] : memref<1x18x18x8xbf16, #tpu.memory_space<vmem>>, vector<1x1x16x8xbf16>
    %4 = vector.shape_cast %3 : vector<1x1x16x8xbf16> to vector<16x8xbf16>
    %c16 = arith.constant 16 : index
    %c0_8 = arith.constant 0 : index
    %5 = vector.load %arg5[%c16, %c0_8] : memref<256x8xbf16, #tpu.memory_space<vmem>>, vector<16x8xbf16>
    tpu.vector_store %arg5[%c16, %c0_8], %4 {strides = array<i32>} : memref<256x8xbf16, #tpu.memory_space<vmem>>, vector<16x8xbf16>,
    %c0_9 = arith.constant 0 : index
    %c2 = arith.constant 2 : index
    %c0_10 = arith.constant 0 : index
    %c0_11 = arith.constant 0 : index
    %6 = vector.load %arg1[%c0_9, %c2, %c0_10, %c0_11] : memref<1x18x18x8xbf16, #tpu.memory_space<vmem>>, vector<1x1x16x8xbf16>
    %7 = vector.shape_cast %6 : vector<1x1x16x8xbf16> to vector<16x8xbf16>
    %c32 = arith.constant 32 : index
    %c0_12 = arith.constant 0 : index
    %8 = vector.load %arg5[%c32, %c0_12] : memref<256x8xbf16, #tpu.memory_space<vmem>>, vector<16x8xbf16>
    tpu.vector_store %arg5[%c32, %c0_12], %7 {strides = array<i32>} : memref<256x8xbf16, #tpu.memory_space<vmem>>, vector<16x8xbf16>,
    %c0_13 = arith.constant 0 : index
    %c3 = arith.constant 3 : index
    %c0_14 = arith.constant 0 : index
    %c0_15 = arith.constant 0 : index
    %9 = vector.load %arg1[%c0_13, %c3, %c0_14, %c0_15] : memref<1x18x18x8xbf16, #tpu.memory_space<vmem>>, vector<1x1x16x8xbf16>
    %10 = vector.shape_cast %9 : vector<1x1x16x8xbf16> to vector<16x8xbf16>
    %c48 = arith.constant 48 : index
    %c0_16 = arith.constant 0 : index
    %11 = vector.load %arg5[%c48, %c0_16] : memref<256x8xbf16, #tpu.memory_space<vmem>>, vector<16x8xbf16>
    tpu.vector_store %arg5[%c48, %c0_16], %10 {strides = array<i32>} : memref<256x8xbf16, #tpu.memory_space<vmem>>, vector<16x8xbf16>,
    %c0_17 = arith.constant 0 : index
    %c4 = arith.constant 4 : index
    %c0_18 = arith.constant 0 : index
    %c0_19 = arith.constant 0 : index
    %12 = vector.load %arg1[%c0_17, %c4, %c0_18, %c0_19] : memref<1x18x18x8xbf16, #tpu.memory_space<vmem>>, vector<1x1x16x8xbf16>
    %13 = vector.shape_cast %12 : vector<1x1x16x8xbf16> to vector<16x8xbf16>
    %c64 = arith.constant 64 : index
    %c0_20 = arith.constant 0 : index
    %14 = vector.load %arg5[%c64, %c0_20] : memref<256x8xbf16, #tpu.memory_space<vmem>>, vector<16x8xbf16>
    tpu.vector_store %arg5[%c64, %c0_20], %13 {strides = array<i32>} : memref<256x8xbf16, #tpu.memory_space<vmem>>, vector<16x8xbf16>,
    %c0_21 = arith.constant 0 : index
    %c5 = arith.constant 5 : index
    %c0_22 = arith.constant 0 : index
    %c0_23 = arith.constant 0 : index
    %15 = vector.load %arg1[%c0_21, %c5, %c0_22, %c0_23] : memref<1x18x18x8xbf16, #tpu.memory_space<vmem>>, vector<1x1x16x8xbf16>
    %16 = vector.shape_cast %15 : vector<1x1x16x8xbf16> to vector<16x8xbf16>
    %c80 = arith.constant 80 : index
    %c0_24 = arith.constant 0 : index
    %17 = vector.load %arg5[%c80, %c0_24] : memref<256x8xbf16, #tpu.memory_space<vmem>>, vector<16x8xbf16>
    tpu.vector_store %arg5[%c80, %c0_24], %16 {strides = array<i32>} : memref<256x8xbf16, #tpu.memory_space<vmem>>, vector<16x8xbf16>,
    %c0_25 = arith.constant 0 : index
    %c6 = arith.constant 6 : index
    %c0_26 = arith.constant 0 : index
    %c0_27 = arith.constant 0 : index
    %18 = vector.load %arg1[%c0_25, %c6, %c0_26, %c0_27] : memref<1x18x18x8xbf16, #tpu.memory_space<vmem>>, vector<1x1x16x8xbf16>
    %19 = vector.shape_cast %18 : vector<1x1x16x8xbf16> to vector<16x8xbf16>
    %c96 = arith.constant 96 : index
    %c0_28 = arith.constant 0 : index
    %20 = vector.load %arg5[%c96, %c0_28] : memref<256x8xbf16, #tpu.memory_space<vmem>>, vector<16x8xbf16>
    tpu.vector_store %arg5[%c96, %c0_28], %19 {strides = array<i32>} : memref<256x8xbf16, #tpu.memory_space<vmem>>, vector<16x8xbf16>,
    %c0_29 = arith.constant 0 : index
    %c7 = arith.constant 7 : index
    %c0_30 = arith.constant 0 : index
    %c0_31 = arith.constant 0 : index
    %21 = vector.load %arg1[%c0_29, %c7, %c0_30, %c0_31] : memref<1x18x18x8xbf16, #tpu.memory_space<vmem>>, vector<1x1x16x8xbf16>
    %22 = vector.shape_cast %21 : vector<1x1x16x8xbf16> to vector<16x8xbf16>
    %c112 = arith.constant 112 : index
    %c0_32 = arith.constant 0 : index
    %23 = vector.load %arg5[%c112, %c0_32] : memref<256x8xbf16, #tpu.memory_space<vmem>>, vector<16x8xbf16>
    tpu.vector_store %arg5[%c112, %c0_32], %22 {strides = array<i32>} : memref<256x8xbf16, #tpu.memory_space<vmem>>, vector<16x8xbf16>,
    %c0_33 = arith.constant 0 : index
    %c8 = arith.constant 8 : index
    %c0_34 = arith.constant 0 : index
    %c0_35 = arith.constant 0 : index
    %24 = vector.load %arg1[%c0_33, %c8, %c0_34, %c0_35] : memref<1x18x18x8xbf16, #tpu.memory_space<vmem>>, vector<1x1x16x8xbf16>
    %25 = vector.shape_cast %24 : vector<1x1x16x8xbf16> to vector<16x8xbf16>
    %c128 = arith.constant 128 : index
    %c0_36 = arith.constant 0 : index
    %26 = vector.load %arg5[%c128, %c0_36] : memref<256x8xbf16, #tpu.memory_space<vmem>>, vector<16x8xbf16>
    tpu.vector_store %arg5[%c128, %c0_36], %25 {strides = array<i32>} : memref<256x8xbf16, #tpu.memory_space<vmem>>, vector<16x8xbf16>,
    %c0_37 = arith.constant 0 : index
    %c9 = arith.constant 9 : index
    %c0_38 = arith.constant 0 : index
    %c0_39 = arith.constant 0 : index
    %27 = vector.load %arg1[%c0_37, %c9, %c0_38, %c0_39] : memref<1x18x18x8xbf16, #tpu.memory_space<vmem>>, vector<1x1x16x8xbf16>
    %28 = vector.shape_cast %27 : vector<1x1x16x8xbf16> to vector<16x8xbf16>
    %c144 = arith.constant 144 : index
    %c0_40 = arith.constant 0 : index
    %29 = vector.load %arg5[%c144, %c0_40] : memref<256x8xbf16, #tpu.memory_space<vmem>>, vector<16x8xbf16>
    tpu.vector_store %arg5[%c144, %c0_40], %28 {strides = array<i32>} : memref<256x8xbf16, #tpu.memory_space<vmem>>, vector<16x8xbf16>,
    %c0_41 = arith.constant 0 : index
    %c10 = arith.constant 10 : index
    %c0_42 = arith.constant 0 : index
    %c0_43 = arith.constant 0 : index
    %30 = vector.load %arg1[%c0_41, %c10, %c0_42, %c0_43] : memref<1x18x18x8xbf16, #tpu.memory_space<vmem>>, vector<1x1x16x8xbf16>
    %31 = vector.shape_cast %30 : vector<1x1x16x8xbf16> to vector<16x8xbf16>
    %c160 = arith.constant 160 : index
    %c0_44 = arith.constant 0 : index
    %32 = vector.load %arg5[%c160, %c0_44] : memref<256x8xbf16, #tpu.memory_space<vmem>>, vector<16x8xbf16>
    tpu.vector_store %arg5[%c160, %c0_44], %31 {strides = array<i32>} : memref<256x8xbf16, #tpu.memory_space<vmem>>, vector<16x8xbf16>,
    %c0_45 = arith.constant 0 : index
    %c11 = arith.constant 11 : index
    %c0_46 = arith.constant 0 : index
    %c0_47 = arith.constant 0 : index
    %33 = vector.load %arg1[%c0_45, %c11, %c0_46, %c0_47] : memref<1x18x18x8xbf16, #tpu.memory_space<vmem>>, vector<1x1x16x8xbf16>
    %34 = vector.shape_cast %33 : vector<1x1x16x8xbf16> to vector<16x8xbf16>
    %c176 = arith.constant 176 : index
    %c0_48 = arith.constant 0 : index
    %35 = vector.load %arg5[%c176, %c0_48] : memref<256x8xbf16, #tpu.memory_space<vmem>>, vector<16x8xbf16>
    tpu.vector_store %arg5[%c176, %c0_48], %34 {strides = array<i32>} : memref<256x8xbf16, #tpu.memory_space<vmem>>, vector<16x8xbf16>,
    %c0_49 = arith.constant 0 : index
    %c12 = arith.constant 12 : index
    %c0_50 = arith.constant 0 : index
    %c0_51 = arith.constant 0 : index
    %36 = vector.load %arg1[%c0_49, %c12, %c0_50, %c0_51] : memref<1x18x18x8xbf16, #tpu.memory_space<vmem>>, vector<1x1x16x8xbf16>
    %37 = vector.shape_cast %36 : vector<1x1x16x8xbf16> to vector<16x8xbf16>
    %c192 = arith.constant 192 : index
    %c0_52 = arith.constant 0 : index
    %38 = vector.load %arg5[%c192, %c0_52] : memref<256x8xbf16, #tpu.memory_space<vmem>>, vector<16x8xbf16>
    tpu.vector_store %arg5[%c192, %c0_52], %37 {strides = array<i32>} : memref<256x8xbf16, #tpu.memory_space<vmem>>, vector<16x8xbf16>,
    %c0_53 = arith.constant 0 : index
    %c13 = arith.constant 13 : index
    %c0_54 = arith.constant 0 : index
    %c0_55 = arith.constant 0 : index
    %39 = vector.load %arg1[%c0_53, %c13, %c0_54, %c0_55] : memref<1x18x18x8xbf16, #tpu.memory_space<vmem>>, vector<1x1x16x8xbf16>
    %40 = vector.shape_cast %39 : vector<1x1x16x8xbf16> to vector<16x8xbf16>
    %c208 = arith.constant 208 : index
    %c0_56 = arith.constant 0 : index
    %41 = vector.load %arg5[%c208, %c0_56] : memref<256x8xbf16, #tpu.memory_space<vmem>>, vector<16x8xbf16>
    tpu.vector_store %arg5[%c208, %c0_56], %40 {strides = array<i32>} : memref<256x8xbf16, #tpu.memory_space<vmem>>, vector<16x8xbf16>,
    %c0_57 = arith.constant 0 : index
    %c14 = arith.constant 14 : index
    %c0_58 = arith.constant 0 : index
    %c0_59 = arith.constant 0 : index
    %42 = vector.load %arg1[%c0_57, %c14, %c0_58, %c0_59] : memref<1x18x18x8xbf16, #tpu.memory_space<vmem>>, vector<1x1x16x8xbf16>
    %43 = vector.shape_cast %42 : vector<1x1x16x8xbf16> to vector<16x8xbf16>
    %c224 = arith.constant 224 : index
    %c0_60 = arith.constant 0 : index
    %44 = vector.load %arg5[%c224, %c0_60] : memref<256x8xbf16, #tpu.memory_space<vmem>>, vector<16x8xbf16>
    tpu.vector_store %arg5[%c224, %c0_60], %43 {strides = array<i32>} : memref<256x8xbf16, #tpu.memory_space<vmem>>, vector<16x8xbf16>,
    %c0_61 = arith.constant 0 : index
    %c15 = arith.constant 15 : index
    %c0_62 = arith.constant 0 : index
    %c0_63 = arith.constant 0 : index
    %45 = vector.load %arg1[%c0_61, %c15, %c0_62, %c0_63] : memref<1x18x18x8xbf16, #tpu.memory_space<vmem>>, vector<1x1x16x8xbf16>
    %46 = vector.shape_cast %45 : vector<1x1x16x8xbf16> to vector<16x8xbf16>
    %c240 = arith.constant 240 : index
    %c0_64 = arith.constant 0 : index
    %47 = vector.load %arg5[%c240, %c0_64] : memref<256x8xbf16, #tpu.memory_space<vmem>>, vector<16x8xbf16>
    tpu.vector_store %arg5[%c240, %c0_64], %46 {strides = array<i32>} : memref<256x8xbf16, #tpu.memory_space<vmem>>, vector<16x8xbf16>,
    %c0_65 = arith.constant 0 : index
    %c0_66 = arith.constant 0 : index
    %48 = vector.load %arg5[%c0_65, %c0_66] : memref<256x8xbf16, #tpu.memory_space<vmem>>, vector<256x8xbf16>
    %c0_67 = arith.constant 0 : index
    %c0_68 = arith.constant 0 : index
    %c0_69 = arith.constant 0 : index
    %49 = vector.load %arg2[%c0_67, %c0_68, %c0_69] : memref<9x8x64xbf16, #tpu.memory_space<vmem>>, vector<1x8x64xbf16>
    %50 = vector.shape_cast %49 : vector<1x8x64xbf16> to vector<8x64xbf16>
    %cst = arith.constant dense<0.000000e+00> : vector<256x64xf32>
    %51 = tpu.matmul %48, %50, %cst {dimension_numbers = #tpu.dot_dimension_numbers<[1], [0], [0], [1], [0, 0, 1, 1], [], []>} : vector<256x8xbf16>, vector<8x64xbf16>, vector<256x64xf32> -> vector<256x64xf32>
    %c0_70 = arith.constant 0 : index
    %c0_71 = arith.constant 0 : index
    %c1_72 = arith.constant 1 : index
    %c0_73 = arith.constant 0 : index
    %52 = vector.load %arg1[%c0_70, %c0_71, %c1_72, %c0_73] : memref<1x18x18x8xbf16, #tpu.memory_space<vmem>>, vector<1x1x16x8xbf16>
    %53 = vector.shape_cast %52 : vector<1x1x16x8xbf16> to vector<16x8xbf16>
    %c0_74 = arith.constant 0 : index
    %c0_75 = arith.constant 0 : index
    %54 = vector.load %arg5[%c0_74, %c0_75] : memref<256x8xbf16, #tpu.memory_space<vmem>>, vector<16x8xbf16>
    tpu.vector_store %arg5[%c0_74, %c0_75], %53 {strides = array<i32>} : memref<256x8xbf16, #tpu.memory_space<vmem>>, vector<16x8xbf16>,
    %c0_76 = arith.constant 0 : index
    %c1_77 = arith.constant 1 : index
    %c1_78 = arith.constant 1 : index
    %c0_79 = arith.constant 0 : index
    %55 = vector.load %arg1[%c0_76, %c1_77, %c1_78, %c0_79] : memref<1x18x18x8xbf16, #tpu.memory_space<vmem>>, vector<1x1x16x8xbf16>
    %56 = vector.shape_cast %55 : vector<1x1x16x8xbf16> to vector<16x8xbf16>
    %c16_80 = arith.constant 16 : index
    %c0_81 = arith.constant 0 : index
    %57 = vector.load %arg5[%c16_80, %c0_81] : memref<256x8xbf16, #tpu.memory_space<vmem>>, vector<16x8xbf16>
    tpu.vector_store %arg5[%c16_80, %c0_81], %56 {strides = array<i32>} : memref<256x8xbf16, #tpu.memory_space<vmem>>, vector<16x8xbf16>,
    %c0_82 = arith.constant 0 : index
    %c2_83 = arith.constant 2 : index
    %c1_84 = arith.constant 1 : index
    %c0_85 = arith.constant 0 : index
    %58 = vector.load %arg1[%c0_82, %c2_83, %c1_84, %c0_85] : memref<1x18x18x8xbf16, #tpu.memory_space<vmem>>, vector<1x1x16x8xbf16>
    %59 = vector.shape_cast %58 : vector<1x1x16x8xbf16> to vector<16x8xbf16>
    %c32_86 = arith.constant 32 : index
    %c0_87 = arith.constant 0 : index
    %60 = vector.load %arg5[%c32_86, %c0_87] : memref<256x8xbf16, #tpu.memory_space<vmem>>, vector<16x8xbf16>
    tpu.vector_store %arg5[%c32_86, %c0_87], %59 {strides = array<i32>} : memref<256x8xbf16, #tpu.memory_space<vmem>>, vector<16x8xbf16>,
    %c0_88 = arith.constant 0 : index
    %c3_89 = arith.constant 3 : index
    %c1_90 = arith.constant 1 : index
    %c0_91 = arith.constant 0 : index
    %61 = vector.load %arg1[%c0_88, %c3_89, %c1_90, %c0_91] : memref<1x18x18x8xbf16, #tpu.memory_space<vmem>>, vector<1x1x16x8xbf16>
    %62 = vector.shape_cast %61 : vector<1x1x16x8xbf16> to vector<16x8xbf16>
    %c48_92 = arith.constant 48 : index
    %c0_93 = arith.constant 0 : index
    %63 = vector.load %arg5[%c48_92, %c0_93] : memref<256x8xbf16, #tpu.memory_space<vmem>>, vector<16x8xbf16>
    tpu.vector_store %arg5[%c48_92, %c0_93], %62 {strides = array<i32>} : memref<256x8xbf16, #tpu.memory_space<vmem>>, vector<16x8xbf16>,
    %c0_94 = arith.constant 0 : index
    %c4_95 = arith.constant 4 : index
    %c1_96 = arith.constant 1 : index
    %c0_97 = arith.constant 0 : index
    %64 = vector.load %arg1[%c0_94, %c4_95, %c1_96, %c0_97] : memref<1x18x18x8xbf16, #tpu.memory_space<vmem>>, vector<1x1x16x8xbf16>
    %65 = vector.shape_cast %64 : vector<1x1x16x8xbf16> to vector<16x8xbf16>
    %c64_98 = arith.constant 64 : index
    %c0_99 = arith.constant 0 : index
    %66 = vector.load %arg5[%c64_98, %c0_99] : memref<256x8xbf16, #tpu.memory_space<vmem>>, vector<16x8xbf16>
    tpu.vector_store %arg5[%c64_98, %c0_99], %65 {strides = array<i32>} : memref<256x8xbf16, #tpu.memory_space<vmem>>, vector<16x8xbf16>,
    %c0_100 = arith.constant 0 : index
    %c5_101 = arith.constant 5 : index
    %c1_102 = arith.constant 1 : index
    %c0_103 = arith.constant 0 : index
    %67 = vector.load %arg1[%c0_100, %c5_101, %c1_102, %c0_103] : memref<1x18x18x8xbf16, #tpu.memory_space<vmem>>, vector<1x1x16x8xbf16>
    %68 = vector.shape_cast %67 : vector<1x1x16x8xbf16> to vector<16x8xbf16>
    %c80_104 = arith.constant 80 : index
    %c0_105 = arith.constant 0 : index
    %69 = vector.load %arg5[%c80_104, %c0_105] : memref<256x8xbf16, #tpu.memory_space<vmem>>, vector<16x8xbf16>
    tpu.vector_store %arg5[%c80_104, %c0_105], %68 {strides = array<i32>} : memref<256x8xbf16, #tpu.memory_space<vmem>>, vector<16x8xbf16>,
    %c0_106 = arith.constant 0 : index
    %c6_107 = arith.constant 6 : index
    %c1_108 = arith.constant 1 : index
    %c0_109 = arith.constant 0 : index
    %70 = vector.load %arg1[%c0_106, %c6_107, %c1_108, %c0_109] : memref<1x18x18x8xbf16, #tpu.memory_space<vmem>>, vector<1x1x16x8xbf16>
    %71 = vector.shape_cast %70 : vector<1x1x16x8xbf16> to vector<16x8xbf16>
    %c96_110 = arith.constant 96 : index
    %c0_111 = arith.constant 0 : index
    %72 = vector.load %arg5[%c96_110, %c0_111] : memref<256x8xbf16, #tpu.memory_space<vmem>>, vector<16x8xbf16>
    tpu.vector_store %arg5[%c96_110, %c0_111], %71 {strides = array<i32>} : memref<256x8xbf16, #tpu.memory_space<vmem>>, vector<16x8xbf16>,
    %c0_112 = arith.constant 0 : index
    %c7_113 = arith.constant 7 : index
    %c1_114 = arith.constant 1 : index
    %c0_115 = arith.constant 0 : index
    %73 = vector.load %arg1[%c0_112, %c7_113, %c1_114, %c0_115] : memref<1x18x18x8xbf16, #tpu.memory_space<vmem>>, vector<1x1x16x8xbf16>
    %74 = vector.shape_cast %73 : vector<1x1x16x8xbf16> to vector<16x8xbf16>
    %c112_116 = arith.constant 112 : index
    %c0_117 = arith.constant 0 : index
    %75 = vector.load %arg5[%c112_116, %c0_117] : memref<256x8xbf16, #tpu.memory_space<vmem>>, vector<16x8xbf16>
    tpu.vector_store %arg5[%c112_116, %c0_117], %74 {strides = array<i32>} : memref<256x8xbf16, #tpu.memory_space<vmem>>, vector<16x8xbf16>,
    %c0_118 = arith.constant 0 : index
    %c8_119 = arith.constant 8 : index
    %c1_120 = arith.constant 1 : index
    %c0_121 = arith.constant 0 : index
    %76 = vector.load %arg1[%c0_118, %c8_119, %c1_120, %c0_121] : memref<1x18x18x8xbf16, #tpu.memory_space<vmem>>, vector<1x1x16x8xbf16>
    %77 = vector.shape_cast %76 : vector<1x1x16x8xbf16> to vector<16x8xbf16>
    %c128_122 = arith.constant 128 : index
    %c0_123 = arith.constant 0 : index
    %78 = vector.load %arg5[%c128_122, %c0_123] : memref<256x8xbf16, #tpu.memory_space<vmem>>, vector<16x8xbf16>
    tpu.vector_store %arg5[%c128_122, %c0_123], %77 {strides = array<i32>} : memref<256x8xbf16, #tpu.memory_space<vmem>>, vector<16x8xbf16>,
    %c0_124 = arith.constant 0 : index
    %c9_125 = arith.constant 9 : index
    %c1_126 = arith.constant 1 : index
    %c0_127 = arith.constant 0 : index
    %79 = vector.load %arg1[%c0_124, %c9_125, %c1_126, %c0_127] : memref<1x18x18x8xbf16, #tpu.memory_space<vmem>>, vector<1x1x16x8xbf16>
    %80 = vector.shape_cast %79 : vector<1x1x16x8xbf16> to vector<16x8xbf16>
    %c144_128 = arith.constant 144 : index
    %c0_129 = arith.constant 0 : index
    %81 = vector.load %arg5[%c144_128, %c0_129] : memref<256x8xbf16, #tpu.memory_space<vmem>>, vector<16x8xbf16>
    tpu.vector_store %arg5[%c144_128, %c0_129], %80 {strides = array<i32>} : memref<256x8xbf16, #tpu.memory_space<vmem>>, vector<16x8xbf16>,
    %c0_130 = arith.constant 0 : index
    %c10_131 = arith.constant 10 : index
    %c1_132 = arith.constant 1 : index
    %c0_133 = arith.constant 0 : index
    %82 = vector.load %arg1[%c0_130, %c10_131, %c1_132, %c0_133] : memref<1x18x18x8xbf16, #tpu.memory_space<vmem>>, vector<1x1x16x8xbf16>
    %83 = vector.shape_cast %82 : vector<1x1x16x8xbf16> to vector<16x8xbf16>
    %c160_134 = arith.constant 160 : index
    %c0_135 = arith.constant 0 : index
    %84 = vector.load %arg5[%c160_134, %c0_135] : memref<256x8xbf16, #tpu.memory_space<vmem>>, vector<16x8xbf16>
    tpu.vector_store %arg5[%c160_134, %c0_135], %83 {strides = array<i32>} : memref<256x8xbf16, #tpu.memory_space<vmem>>, vector<16x8xbf16>,
    %c0_136 = arith.constant 0 : index
    %c11_137 = arith.constant 11 : index
    %c1_138 = arith.constant 1 : index
    %c0_139 = arith.constant 0 : index
    %85 = vector.load %arg1[%c0_136, %c11_137, %c1_138, %c0_139] : memref<1x18x18x8xbf16, #tpu.memory_space<vmem>>, vector<1x1x16x8xbf16>
    %86 = vector.shape_cast %85 : vector<1x1x16x8xbf16> to vector<16x8xbf16>
    %c176_140 = arith.constant 176 : index
    %c0_141 = arith.constant 0 : index
    %87 = vector.load %arg5[%c176_140, %c0_141] : memref<256x8xbf16, #tpu.memory_space<vmem>>, vector<16x8xbf16>
    tpu.vector_store %arg5[%c176_140, %c0_141], %86 {strides = array<i32>} : memref<256x8xbf16, #tpu.memory_space<vmem>>, vector<16x8xbf16>,
    %c0_142 = arith.constant 0 : index
    %c12_143 = arith.constant 12 : index
    %c1_144 = arith.constant 1 : index
    %c0_145 = arith.constant 0 : index
    %88 = vector.load %arg1[%c0_142, %c12_143, %c1_144, %c0_145] : memref<1x18x18x8xbf16, #tpu.memory_space<vmem>>, vector<1x1x16x8xbf16>
    %89 = vector.shape_cast %88 : vector<1x1x16x8xbf16> to vector<16x8xbf16>
    %c192_146 = arith.constant 192 : index
    %c0_147 = arith.constant 0 : index
    %90 = vector.load %arg5[%c192_146, %c0_147] : memref<256x8xbf16, #tpu.memory_space<vmem>>, vector<16x8xbf16>
    tpu.vector_store %arg5[%c192_146, %c0_147], %89 {strides = array<i32>} : memref<256x8xbf16, #tpu.memory_space<vmem>>, vector<16x8xbf16>,
    %c0_148 = arith.constant 0 : index
    %c13_149 = arith.constant 13 : index
    %c1_150 = arith.constant 1 : index
    %c0_151 = arith.constant 0 : index
    %91 = vector.load %arg1[%c0_148, %c13_149, %c1_150, %c0_151] : memref<1x18x18x8xbf16, #tpu.memory_space<vmem>>, vector<1x1x16x8xbf16>
    %92 = vector.shape_cast %91 : vector<1x1x16x8xbf16> to vector<16x8xbf16>
    %c208_152 = arith.constant 208 : index
    %c0_153 = arith.constant 0 : index
    %93 = vector.load %arg5[%c208_152, %c0_153] : memref<256x8xbf16, #tpu.memory_space<vmem>>, vector<16x8xbf16>
    tpu.vector_store %arg5[%c208_152, %c0_153], %92 {strides = array<i32>} : memref<256x8xbf16, #tpu.memory_space<vmem>>, vector<16x8xbf16>,
    %c0_154 = arith.constant 0 : index
    %c14_155 = arith.constant 14 : index
    %c1_156 = arith.constant 1 : index
    %c0_157 = arith.constant 0 : index
    %94 = vector.load %arg1[%c0_154, %c14_155, %c1_156, %c0_157] : memref<1x18x18x8xbf16, #tpu.memory_space<vmem>>, vector<1x1x16x8xbf16>
    %95 = vector.shape_cast %94 : vector<1x1x16x8xbf16> to vector<16x8xbf16>
    %c224_158 = arith.constant 224 : index
    %c0_159 = arith.constant 0 : index
    %96 = vector.load %arg5[%c224_158, %c0_159] : memref<256x8xbf16, #tpu.memory_space<vmem>>, vector<16x8xbf16>
    tpu.vector_store %arg5[%c224_158, %c0_159], %95 {strides = array<i32>} : memref<256x8xbf16, #tpu.memory_space<vmem>>, vector<16x8xbf16>,
    %c0_160 = arith.constant 0 : index
    %c15_161 = arith.constant 15 : index
    %c1_162 = arith.constant 1 : index
    %c0_163 = arith.constant 0 : index
    %97 = vector.load %arg1[%c0_160, %c15_161, %c1_162, %c0_163] : memref<1x18x18x8xbf16, #tpu.memory_space<vmem>>, vector<1x1x16x8xbf16>
    %98 = vector.shape_cast %97 : vector<1x1x16x8xbf16> to vector<16x8xbf16>
    %c240_164 = arith.constant 240 : index
    %c0_165 = arith.constant 0 : index
    %99 = vector.load %arg5[%c240_164, %c0_165] : memref<256x8xbf16, #tpu.memory_space<vmem>>, vector<16x8xbf16>
    tpu.vector_store %arg5[%c240_164, %c0_165], %98 {strides = array<i32>} : memref<256x8xbf16, #tpu.memory_space<vmem>>, vector<16x8xbf16>,
    %c0_166 = arith.constant 0 : index
    %c0_167 = arith.constant 0 : index
    %100 = vector.load %arg5[%c0_166, %c0_167] : memref<256x8xbf16, #tpu.memory_space<vmem>>, vector<256x8xbf16>
    %c1_168 = arith.constant 1 : index
    %c0_169 = arith.constant 0 : index
    %c0_170 = arith.constant 0 : index
    %101 = vector.load %arg2[%c1_168, %c0_169, %c0_170] : memref<9x8x64xbf16, #tpu.memory_space<vmem>>, vector<1x8x64xbf16>
    %102 = vector.shape_cast %101 : vector<1x8x64xbf16> to vector<8x64xbf16>
    %cst_171 = arith.constant dense<0.000000e+00> : vector<256x64xf32>
    %103 = tpu.matmul %100, %102, %cst_171 {dimension_numbers = #tpu.dot_dimension_numbers<[1], [0], [0], [1], [0, 0, 1, 1], [], []>} : vector<256x8xbf16>, vector<8x64xbf16>, vector<256x64xf32> -> vector<256x64xf32>
    %104 = arith.addf %51, %103 : vector<256x64xf32>
    %c0_172 = arith.constant 0 : index
    %c0_173 = arith.constant 0 : index
    %c2_174 = arith.constant 2 : index
    %c0_175 = arith.constant 0 : index
    %105 = vector.load %arg1[%c0_172, %c0_173, %c2_174, %c0_175] : memref<1x18x18x8xbf16, #tpu.memory_space<vmem>>, vector<1x1x16x8xbf16>
    %106 = vector.shape_cast %105 : vector<1x1x16x8xbf16> to vector<16x8xbf16>
    %c0_176 = arith.constant 0 : index
    %c0_177 = arith.constant 0 : index
    %107 = vector.load %arg5[%c0_176, %c0_177] : memref<256x8xbf16, #tpu.memory_space<vmem>>, vector<16x8xbf16>
    tpu.vector_store %arg5[%c0_176, %c0_177], %106 {strides = array<i32>} : memref<256x8xbf16, #tpu.memory_space<vmem>>, vector<16x8xbf16>,
    %c0_178 = arith.constant 0 : index
    %c1_179 = arith.constant 1 : index
    %c2_180 = arith.constant 2 : index
    %c0_181 = arith.constant 0 : index
    %108 = vector.load %arg1[%c0_178, %c1_179, %c2_180, %c0_181] : memref<1x18x18x8xbf16, #tpu.memory_space<vmem>>, vector<1x1x16x8xbf16>
    %109 = vector.shape_cast %108 : vector<1x1x16x8xbf16> to vector<16x8xbf16>
    %c16_182 = arith.constant 16 : index
    %c0_183 = arith.constant 0 : index
    %110 = vector.load %arg5[%c16_182, %c0_183] : memref<256x8xbf16, #tpu.memory_space<vmem>>, vector<16x8xbf16>
    tpu.vector_store %arg5[%c16_182, %c0_183], %109 {strides = array<i32>} : memref<256x8xbf16, #tpu.memory_space<vmem>>, vector<16x8xbf16>,
    %c0_184 = arith.constant 0 : index
    %c2_185 = arith.constant 2 : index
    %c2_186 = arith.constant 2 : index
    %c0_187 = arith.constant 0 : index
    %111 = vector.load %arg1[%c0_184, %c2_185, %c2_186, %c0_187] : memref<1x18x18x8xbf16, #tpu.memory_space<vmem>>, vector<1x1x16x8xbf16>
    %112 = vector.shape_cast %111 : vector<1x1x16x8xbf16> to vector<16x8xbf16>
    %c32_188 = arith.constant 32 : index
    %c0_189 = arith.constant 0 : index
    %113 = vector.load %arg5[%c32_188, %c0_189] : memref<256x8xbf16, #tpu.memory_space<vmem>>, vector<16x8xbf16>
    tpu.vector_store %arg5[%c32_188, %c0_189], %112 {strides = array<i32>} : memref<256x8xbf16, #tpu.memory_space<vmem>>, vector<16x8xbf16>,
    %c0_190 = arith.constant 0 : index
    %c3_191 = arith.constant 3 : index
    %c2_192 = arith.constant 2 : index
    %c0_193 = arith.constant 0 : index
    %114 = vector.load %arg1[%c0_190, %c3_191, %c2_192, %c0_193] : memref<1x18x18x8xbf16, #tpu.memory_space<vmem>>, vector<1x1x16x8xbf16>
    %115 = vector.shape_cast %114 : vector<1x1x16x8xbf16> to vector<16x8xbf16>
    %c48_194 = arith.constant 48 : index
    %c0_195 = arith.constant 0 : index
    %116 = vector.load %arg5[%c48_194, %c0_195] : memref<256x8xbf16, #tpu.memory_space<vmem>>, vector<16x8xbf16>
    tpu.vector_store %arg5[%c48_194, %c0_195], %115 {strides = array<i32>} : memref<256x8xbf16, #tpu.memory_space<vmem>>, vector<16x8xbf16>,
    %c0_196 = arith.constant 0 : index
    %c4_197 = arith.constant 4 : index
    %c2_198 = arith.constant 2 : index
    %c0_199 = arith.constant 0 : index
    %117 = vector.load %arg1[%c0_196, %c4_197, %c2_198, %c0_199] : memref<1x18x18x8xbf16, #tpu.memory_space<vmem>>, vector<1x1x16x8xbf16>
    %118 = vector.shape_cast %117 : vector<1x1x16x8xbf16> to vector<16x8xbf16>
    %c64_200 = arith.constant 64 : index
    %c0_201 = arith.constant 0 : index
    %119 = vector.load %arg5[%c64_200, %c0_201] : memref<256x8xbf16, #tpu.memory_space<vmem>>, vector<16x8xbf16>
    tpu.vector_store %arg5[%c64_200, %c0_201], %118 {strides = array<i32>} : memref<256x8xbf16, #tpu.memory_space<vmem>>, vector<16x8xbf16>,
    %c0_202 = arith.constant 0 : index
    %c5_203 = arith.constant 5 : index
    %c2_204 = arith.constant 2 : index
    %c0_205 = arith.constant 0 : index
    %120 = vector.load %arg1[%c0_202, %c5_203, %c2_204, %c0_205] : memref<1x18x18x8xbf16, #tpu.memory_space<vmem>>, vector<1x1x16x8xbf16>
    %121 = vector.shape_cast %120 : vector<1x1x16x8xbf16> to vector<16x8xbf16>
    %c80_206 = arith.constant 80 : index
    %c0_207 = arith.constant 0 : index
    %122 = vector.load %arg5[%c80_206, %c0_207] : memref<256x8xbf16, #tpu.memory_space<vmem>>, vector<16x8xbf16>
    tpu.vector_store %arg5[%c80_206, %c0_207], %121 {strides = array<i32>} : memref<256x8xbf16, #tpu.memory_space<vmem>>, vector<16x8xbf16>,
    %c0_208 = arith.constant 0 : index
    %c6_209 = arith.constant 6 : index
    %c2_210 = arith.constant 2 : index
    %c0_211 = arith.constant 0 : index
    %123 = vector.load %arg1[%c0_208, %c6_209, %c2_210, %c0_211] : memref<1x18x18x8xbf16, #tpu.memory_space<vmem>>, vector<1x1x16x8xbf16>
    %124 = vector.shape_cast %123 : vector<1x1x16x8xbf16> to vector<16x8xbf16>
    %c96_212 = arith.constant 96 : index
    %c0_213 = arith.constant 0 : index
    %125 = vector.load %arg5[%c96_212, %c0_213] : memref<256x8xbf16, #tpu.memory_space<vmem>>, vector<16x8xbf16>
    tpu.vector_store %arg5[%c96_212, %c0_213], %124 {strides = array<i32>} : memref<256x8xbf16, #tpu.memory_space<vmem>>, vector<16x8xbf16>,
    %c0_214 = arith.constant 0 : index
    %c7_215 = arith.constant 7 : index
    %c2_216 = arith.constant 2 : index
    %c0_217 = arith.constant 0 : index
    %126 = vector.load %arg1[%c0_214, %c7_215, %c2_216, %c0_217] : memref<1x18x18x8xbf16, #tpu.memory_space<vmem>>, vector<1x1x16x8xbf16>
    %127 = vector.shape_cast %126 : vector<1x1x16x8xbf16> to vector<16x8xbf16>
    %c112_218 = arith.constant 112 : index
    %c0_219 = arith.constant 0 : index
    %128 = vector.load %arg5[%c112_218, %c0_219] : memref<256x8xbf16, #tpu.memory_space<vmem>>, vector<16x8xbf16>
    tpu.vector_store %arg5[%c112_218, %c0_219], %127 {strides = array<i32>} : memref<256x8xbf16, #tpu.memory_space<vmem>>, vector<16x8xbf16>,
    %c0_220 = arith.constant 0 : index
    %c8_221 = arith.constant 8 : index
    %c2_222 = arith.constant 2 : index
    %c0_223 = arith.constant 0 : index
    %129 = vector.load %arg1[%c0_220, %c8_221, %c2_222, %c0_223] : memref<1x18x18x8xbf16, #tpu.memory_space<vmem>>, vector<1x1x16x8xbf16>
    %130 = vector.shape_cast %129 : vector<1x1x16x8xbf16> to vector<16x8xbf16>
    %c128_224 = arith.constant 128 : index
    %c0_225 = arith.constant 0 : index
    %131 = vector.load %arg5[%c128_224, %c0_225] : memref<256x8xbf16, #tpu.memory_space<vmem>>, vector<16x8xbf16>
    tpu.vector_store %arg5[%c128_224, %c0_225], %130 {strides = array<i32>} : memref<256x8xbf16, #tpu.memory_space<vmem>>, vector<16x8xbf16>,
    %c0_226 = arith.constant 0 : index
    %c9_227 = arith.constant 9 : index
    %c2_228 = arith.constant 2 : index
    %c0_229 = arith.constant 0 : index
    %132 = vector.load %arg1[%c0_226, %c9_227, %c2_228, %c0_229] : memref<1x18x18x8xbf16, #tpu.memory_space<vmem>>, vector<1x1x16x8xbf16>
    %133 = vector.shape_cast %132 : vector<1x1x16x8xbf16> to vector<16x8xbf16>
    %c144_230 = arith.constant 144 : index
    %c0_231 = arith.constant 0 : index
    %134 = vector.load %arg5[%c144_230, %c0_231] : memref<256x8xbf16, #tpu.memory_space<vmem>>, vector<16x8xbf16>
    tpu.vector_store %arg5[%c144_230, %c0_231], %133 {strides = array<i32>} : memref<256x8xbf16, #tpu.memory_space<vmem>>, vector<16x8xbf16>,
    %c0_232 = arith.constant 0 : index
    %c10_233 = arith.constant 10 : index
    %c2_234 = arith.constant 2 : index
    %c0_235 = arith.constant 0 : index
    %135 = vector.load %arg1[%c0_232, %c10_233, %c2_234, %c0_235] : memref<1x18x18x8xbf16, #tpu.memory_space<vmem>>, vector<1x1x16x8xbf16>
    %136 = vector.shape_cast %135 : vector<1x1x16x8xbf16> to vector<16x8xbf16>
    %c160_236 = arith.constant 160 : index
    %c0_237 = arith.constant 0 : index
    %137 = vector.load %arg5[%c160_236, %c0_237] : memref<256x8xbf16, #tpu.memory_space<vmem>>, vector<16x8xbf16>
    tpu.vector_store %arg5[%c160_236, %c0_237], %136 {strides = array<i32>} : memref<256x8xbf16, #tpu.memory_space<vmem>>, vector<16x8xbf16>,
    %c0_238 = arith.constant 0 : index
    %c11_239 = arith.constant 11 : index
    %c2_240 = arith.constant 2 : index
    %c0_241 = arith.constant 0 : index
    %138 = vector.load %arg1[%c0_238, %c11_239, %c2_240, %c0_241] : memref<1x18x18x8xbf16, #tpu.memory_space<vmem>>, vector<1x1x16x8xbf16>
    %139 = vector.shape_cast %138 : vector<1x1x16x8xbf16> to vector<16x8xbf16>
    %c176_242 = arith.constant 176 : index
    %c0_243 = arith.constant 0 : index
    %140 = vector.load %arg5[%c176_242, %c0_243] : memref<256x8xbf16, #tpu.memory_space<vmem>>, vector<16x8xbf16>
    tpu.vector_store %arg5[%c176_242, %c0_243], %139 {strides = array<i32>} : memref<256x8xbf16, #tpu.memory_space<vmem>>, vector<16x8xbf16>,
    %c0_244 = arith.constant 0 : index
    %c12_245 = arith.constant 12 : index
    %c2_246 = arith.constant 2 : index
    %c0_247 = arith.constant 0 : index
    %141 = vector.load %arg1[%c0_244, %c12_245, %c2_246, %c0_247] : memref<1x18x18x8xbf16, #tpu.memory_space<vmem>>, vector<1x1x16x8xbf16>
    %142 = vector.shape_cast %141 : vector<1x1x16x8xbf16> to vector<16x8xbf16>
    %c192_248 = arith.constant 192 : index
    %c0_249 = arith.constant 0 : index
    %143 = vector.load %arg5[%c192_248, %c0_249] : memref<256x8xbf16, #tpu.memory_space<vmem>>, vector<16x8xbf16>
    tpu.vector_store %arg5[%c192_248, %c0_249], %142 {strides = array<i32>} : memref<256x8xbf16, #tpu.memory_space<vmem>>, vector<16x8xbf16>,
    %c0_250 = arith.constant 0 : index
    %c13_251 = arith.constant 13 : index
    %c2_252 = arith.constant 2 : index
    %c0_253 = arith.constant 0 : index
    %144 = vector.load %arg1[%c0_250, %c13_251, %c2_252, %c0_253] : memref<1x18x18x8xbf16, #tpu.memory_space<vmem>>, vector<1x1x16x8xbf16>
    %145 = vector.shape_cast %144 : vector<1x1x16x8xbf16> to vector<16x8xbf16>
    %c208_254 = arith.constant 208 : index
    %c0_255 = arith.constant 0 : index
    %146 = vector.load %arg5[%c208_254, %c0_255] : memref<256x8xbf16, #tpu.memory_space<vmem>>, vector<16x8xbf16>
    tpu.vector_store %arg5[%c208_254, %c0_255], %145 {strides = array<i32>} : memref<256x8xbf16, #tpu.memory_space<vmem>>, vector<16x8xbf16>,
    %c0_256 = arith.constant 0 : index
    %c14_257 = arith.constant 14 : index
    %c2_258 = arith.constant 2 : index
    %c0_259 = arith.constant 0 : index
    %147 = vector.load %arg1[%c0_256, %c14_257, %c2_258, %c0_259] : memref<1x18x18x8xbf16, #tpu.memory_space<vmem>>, vector<1x1x16x8xbf16>
    %148 = vector.shape_cast %147 : vector<1x1x16x8xbf16> to vector<16x8xbf16>
    %c224_260 = arith.constant 224 : index
    %c0_261 = arith.constant 0 : index
    %149 = vector.load %arg5[%c224_260, %c0_261] : memref<256x8xbf16, #tpu.memory_space<vmem>>, vector<16x8xbf16>
    tpu.vector_store %arg5[%c224_260, %c0_261], %148 {strides = array<i32>} : memref<256x8xbf16, #tpu.memory_space<vmem>>, vector<16x8xbf16>,
    %c0_262 = arith.constant 0 : index
    %c15_263 = arith.constant 15 : index
    %c2_264 = arith.constant 2 : index
    %c0_265 = arith.constant 0 : index
    %150 = vector.load %arg1[%c0_262, %c15_263, %c2_264, %c0_265] : memref<1x18x18x8xbf16, #tpu.memory_space<vmem>>, vector<1x1x16x8xbf16>
    %151 = vector.shape_cast %150 : vector<1x1x16x8xbf16> to vector<16x8xbf16>
    %c240_266 = arith.constant 240 : index
    %c0_267 = arith.constant 0 : index
    %152 = vector.load %arg5[%c240_266, %c0_267] : memref<256x8xbf16, #tpu.memory_space<vmem>>, vector<16x8xbf16>
    tpu.vector_store %arg5[%c240_266, %c0_267], %151 {strides = array<i32>} : memref<256x8xbf16, #tpu.memory_space<vmem>>, vector<16x8xbf16>,
    %c0_268 = arith.constant 0 : index
    %c0_269 = arith.constant 0 : index
    %153 = vector.load %arg5[%c0_268, %c0_269] : memref<256x8xbf16, #tpu.memory_space<vmem>>, vector<256x8xbf16>
    %c2_270 = arith.constant 2 : index
    %c0_271 = arith.constant 0 : index
    %c0_272 = arith.constant 0 : index
    %154 = vector.load %arg2[%c2_270, %c0_271, %c0_272] : memref<9x8x64xbf16, #tpu.memory_space<vmem>>, vector<1x8x64xbf16>
    %155 = vector.shape_cast %154 : vector<1x8x64xbf16> to vector<8x64xbf16>
    %cst_273 = arith.constant dense<0.000000e+00> : vector<256x64xf32>
    %156 = tpu.matmul %153, %155, %cst_273 {dimension_numbers = #tpu.dot_dimension_numbers<[1], [0], [0], [1], [0, 0, 1, 1], [], []>} : vector<256x8xbf16>, vector<8x64xbf16>, vector<256x64xf32> -> vector<256x64xf32>
    %157 = arith.addf %104, %156 : vector<256x64xf32>
    %c0_274 = arith.constant 0 : index
    %c1_275 = arith.constant 1 : index
    %c0_276 = arith.constant 0 : index
    %c0_277 = arith.constant 0 : index
    %158 = vector.load %arg1[%c0_274, %c1_275, %c0_276, %c0_277] : memref<1x18x18x8xbf16, #tpu.memory_space<vmem>>, vector<1x1x16x8xbf16>
    %159 = vector.shape_cast %158 : vector<1x1x16x8xbf16> to vector<16x8xbf16>
    %c0_278 = arith.constant 0 : index
    %c0_279 = arith.constant 0 : index
    %160 = vector.load %arg5[%c0_278, %c0_279] : memref<256x8xbf16, #tpu.memory_space<vmem>>, vector<16x8xbf16>
    tpu.vector_store %arg5[%c0_278, %c0_279], %159 {strides = array<i32>} : memref<256x8xbf16, #tpu.memory_space<vmem>>, vector<16x8xbf16>,
    %c0_280 = arith.constant 0 : index
    %c2_281 = arith.constant 2 : index
    %c0_282 = arith.constant 0 : index
    %c0_283 = arith.constant 0 : index
    %161 = vector.load %arg1[%c0_280, %c2_281, %c0_282, %c0_283] : memref<1x18x18x8xbf16, #tpu.memory_space<vmem>>, vector<1x1x16x8xbf16>
    %162 = vector.shape_cast %161 : vector<1x1x16x8xbf16> to vector<16x8xbf16>
    %c16_284 = arith.constant 16 : index
    %c0_285 = arith.constant 0 : index
    %163 = vector.load %arg5[%c16_284, %c0_285] : memref<256x8xbf16, #tpu.memory_space<vmem>>, vector<16x8xbf16>
    tpu.vector_store %arg5[%c16_284, %c0_285], %162 {strides = array<i32>} : memref<256x8xbf16, #tpu.memory_space<vmem>>, vector<16x8xbf16>,
    %c0_286 = arith.constant 0 : index
    %c3_287 = arith.constant 3 : index
    %c0_288 = arith.constant 0 : index
    %c0_289 = arith.constant 0 : index
    %164 = vector.load %arg1[%c0_286, %c3_287, %c0_288, %c0_289] : memref<1x18x18x8xbf16, #tpu.memory_space<vmem>>, vector<1x1x16x8xbf16>
    %165 = vector.shape_cast %164 : vector<1x1x16x8xbf16> to vector<16x8xbf16>
    %c32_290 = arith.constant 32 : index
    %c0_291 = arith.constant 0 : index
    %166 = vector.load %arg5[%c32_290, %c0_291] : memref<256x8xbf16, #tpu.memory_space<vmem>>, vector<16x8xbf16>
    tpu.vector_store %arg5[%c32_290, %c0_291], %165 {strides = array<i32>} : memref<256x8xbf16, #tpu.memory_space<vmem>>, vector<16x8xbf16>,
    %c0_292 = arith.constant 0 : index
    %c4_293 = arith.constant 4 : index
    %c0_294 = arith.constant 0 : index
    %c0_295 = arith.constant 0 : index
    %167 = vector.load %arg1[%c0_292, %c4_293, %c0_294, %c0_295] : memref<1x18x18x8xbf16, #tpu.memory_space<vmem>>, vector<1x1x16x8xbf16>
    %168 = vector.shape_cast %167 : vector<1x1x16x8xbf16> to vector<16x8xbf16>
    %c48_296 = arith.constant 48 : index
    %c0_297 = arith.constant 0 : index
    %169 = vector.load %arg5[%c48_296, %c0_297] : memref<256x8xbf16, #tpu.memory_space<vmem>>, vector<16x8xbf16>
    tpu.vector_store %arg5[%c48_296, %c0_297], %168 {strides = array<i32>} : memref<256x8xbf16, #tpu.memory_space<vmem>>, vector<16x8xbf16>,
    %c0_298 = arith.constant 0 : index
    %c5_299 = arith.constant 5 : index
    %c0_300 = arith.constant 0 : index
    %c0_301 = arith.constant 0 : index
    %170 = vector.load %arg1[%c0_298, %c5_299, %c0_300, %c0_301] : memref<1x18x18x8xbf16, #tpu.memory_space<vmem>>, vector<1x1x16x8xbf16>
    %171 = vector.shape_cast %170 : vector<1x1x16x8xbf16> to vector<16x8xbf16>
    %c64_302 = arith.constant 64 : index
    %c0_303 = arith.constant 0 : index
    %172 = vector.load %arg5[%c64_302, %c0_303] : memref<256x8xbf16, #tpu.memory_space<vmem>>, vector<16x8xbf16>
    tpu.vector_store %arg5[%c64_302, %c0_303], %171 {strides = array<i32>} : memref<256x8xbf16, #tpu.memory_space<vmem>>, vector<16x8xbf16>,
    %c0_304 = arith.constant 0 : index
    %c6_305 = arith.constant 6 : index
    %c0_306 = arith.constant 0 : index
    %c0_307 = arith.constant 0 : index
    %173 = vector.load %arg1[%c0_304, %c6_305, %c0_306, %c0_307] : memref<1x18x18x8xbf16, #tpu.memory_space<vmem>>, vector<1x1x16x8xbf16>
    %174 = vector.shape_cast %173 : vector<1x1x16x8xbf16> to vector<16x8xbf16>
    %c80_308 = arith.constant 80 : index
    %c0_309 = arith.constant 0 : index
    %175 = vector.load %arg5[%c80_308, %c0_309] : memref<256x8xbf16, #tpu.memory_space<vmem>>, vector<16x8xbf16>
    tpu.vector_store %arg5[%c80_308, %c0_309], %174 {strides = array<i32>} : memref<256x8xbf16, #tpu.memory_space<vmem>>, vector<16x8xbf16>,
    %c0_310 = arith.constant 0 : index
    %c7_311 = arith.constant 7 : index
    %c0_312 = arith.constant 0 : index
    %c0_313 = arith.constant 0 : index
    %176 = vector.load %arg1[%c0_310, %c7_311, %c0_312, %c0_313] : memref<1x18x18x8xbf16, #tpu.memory_space<vmem>>, vector<1x1x16x8xbf16>
    %177 = vector.shape_cast %176 : vector<1x1x16x8xbf16> to vector<16x8xbf16>
    %c96_314 = arith.constant 96 : index
    %c0_315 = arith.constant 0 : index
    %178 = vector.load %arg5[%c96_314, %c0_315] : memref<256x8xbf16, #tpu.memory_space<vmem>>, vector<16x8xbf16>
    tpu.vector_store %arg5[%c96_314, %c0_315], %177 {strides = array<i32>} : memref<256x8xbf16, #tpu.memory_space<vmem>>, vector<16x8xbf16>,
    %c0_316 = arith.constant 0 : index
    %c8_317 = arith.constant 8 : index
    %c0_318 = arith.constant 0 : index
    %c0_319 = arith.constant 0 : index
    %179 = vector.load %arg1[%c0_316, %c8_317, %c0_318, %c0_319] : memref<1x18x18x8xbf16, #tpu.memory_space<vmem>>, vector<1x1x16x8xbf16>
    %180 = vector.shape_cast %179 : vector<1x1x16x8xbf16> to vector<16x8xbf16>
    %c112_320 = arith.constant 112 : index
    %c0_321 = arith.constant 0 : index
    %181 = vector.load %arg5[%c112_320, %c0_321] : memref<256x8xbf16, #tpu.memory_space<vmem>>, vector<16x8xbf16>
    tpu.vector_store %arg5[%c112_320, %c0_321], %180 {strides = array<i32>} : memref<256x8xbf16, #tpu.memory_space<vmem>>, vector<16x8xbf16>,
    %c0_322 = arith.constant 0 : index
    %c9_323 = arith.constant 9 : index
    %c0_324 = arith.constant 0 : index
    %c0_325 = arith.constant 0 : index
    %182 = vector.load %arg1[%c0_322, %c9_323, %c0_324, %c0_325] : memref<1x18x18x8xbf16, #tpu.memory_space<vmem>>, vector<1x1x16x8xbf16>
    %183 = vector.shape_cast %182 : vector<1x1x16x8xbf16> to vector<16x8xbf16>
    %c128_326 = arith.constant 128 : index
    %c0_327 = arith.constant 0 : index
    %184 = vector.load %arg5[%c128_326, %c0_327] : memref<256x8xbf16, #tpu.memory_space<vmem>>, vector<16x8xbf16>
    tpu.vector_store %arg5[%c128_326, %c0_327], %183 {strides = array<i32>} : memref<256x8xbf16, #tpu.memory_space<vmem>>, vector<16x8xbf16>,
    %c0_328 = arith.constant 0 : index
    %c10_329 = arith.constant 10 : index
    %c0_330 = arith.constant 0 : index
    %c0_331 = arith.constant 0 : index
    %185 = vector.load %arg1[%c0_328, %c10_329, %c0_330, %c0_331] : memref<1x18x18x8xbf16, #tpu.memory_space<vmem>>, vector<1x1x16x8xbf16>
    %186 = vector.shape_cast %185 : vector<1x1x16x8xbf16> to vector<16x8xbf16>
    %c144_332 = arith.constant 144 : index
    %c0_333 = arith.constant 0 : index
    %187 = vector.load %arg5[%c144_332, %c0_333] : memref<256x8xbf16, #tpu.memory_space<vmem>>, vector<16x8xbf16>
    tpu.vector_store %arg5[%c144_332, %c0_333], %186 {strides = array<i32>} : memref<256x8xbf16, #tpu.memory_space<vmem>>, vector<16x8xbf16>,
    %c0_334 = arith.constant 0 : index
    %c11_335 = arith.constant 11 : index
    %c0_336 = arith.constant 0 : index
    %c0_337 = arith.constant 0 : index
    %188 = vector.load %arg1[%c0_334, %c11_335, %c0_336, %c0_337] : memref<1x18x18x8xbf16, #tpu.memory_space<vmem>>, vector<1x1x16x8xbf16>
    %189 = vector.shape_cast %188 : vector<1x1x16x8xbf16> to vector<16x8xbf16>
    %c160_338 = arith.constant 160 : index
    %c0_339 = arith.constant 0 : index
    %190 = vector.load %arg5[%c160_338, %c0_339] : memref<256x8xbf16, #tpu.memory_space<vmem>>, vector<16x8xbf16>
    tpu.vector_store %arg5[%c160_338, %c0_339], %189 {strides = array<i32>} : memref<256x8xbf16, #tpu.memory_space<vmem>>, vector<16x8xbf16>,
    %c0_340 = arith.constant 0 : index
    %c12_341 = arith.constant 12 : index
    %c0_342 = arith.constant 0 : index
    %c0_343 = arith.constant 0 : index
    %191 = vector.load %arg1[%c0_340, %c12_341, %c0_342, %c0_343] : memref<1x18x18x8xbf16, #tpu.memory_space<vmem>>, vector<1x1x16x8xbf16>
    %192 = vector.shape_cast %191 : vector<1x1x16x8xbf16> to vector<16x8xbf16>
    %c176_344 = arith.constant 176 : index
    %c0_345 = arith.constant 0 : index
    %193 = vector.load %arg5[%c176_344, %c0_345] : memref<256x8xbf16, #tpu.memory_space<vmem>>, vector<16x8xbf16>
    tpu.vector_store %arg5[%c176_344, %c0_345], %192 {strides = array<i32>} : memref<256x8xbf16, #tpu.memory_space<vmem>>, vector<16x8xbf16>,
    %c0_346 = arith.constant 0 : index
    %c13_347 = arith.constant 13 : index
    %c0_348 = arith.constant 0 : index
    %c0_349 = arith.constant 0 : index
    %194 = vector.load %arg1[%c0_346, %c13_347, %c0_348, %c0_349] : memref<1x18x18x8xbf16, #tpu.memory_space<vmem>>, vector<1x1x16x8xbf16>
    %195 = vector.shape_cast %194 : vector<1x1x16x8xbf16> to vector<16x8xbf16>
    %c192_350 = arith.constant 192 : index
    %c0_351 = arith.constant 0 : index
    %196 = vector.load %arg5[%c192_350, %c0_351] : memref<256x8xbf16, #tpu.memory_space<vmem>>, vector<16x8xbf16>
    tpu.vector_store %arg5[%c192_350, %c0_351], %195 {strides = array<i32>} : memref<256x8xbf16, #tpu.memory_space<vmem>>, vector<16x8xbf16>,
    %c0_352 = arith.constant 0 : index
    %c14_353 = arith.constant 14 : index
    %c0_354 = arith.constant 0 : index
    %c0_355 = arith.constant 0 : index
    %197 = vector.load %arg1[%c0_352, %c14_353, %c0_354, %c0_355] : memref<1x18x18x8xbf16, #tpu.memory_space<vmem>>, vector<1x1x16x8xbf16>
    %198 = vector.shape_cast %197 : vector<1x1x16x8xbf16> to vector<16x8xbf16>
    %c208_356 = arith.constant 208 : index
    %c0_357 = arith.constant 0 : index
    %199 = vector.load %arg5[%c208_356, %c0_357] : memref<256x8xbf16, #tpu.memory_space<vmem>>, vector<16x8xbf16>
    tpu.vector_store %arg5[%c208_356, %c0_357], %198 {strides = array<i32>} : memref<256x8xbf16, #tpu.memory_space<vmem>>, vector<16x8xbf16>,
    %c0_358 = arith.constant 0 : index
    %c15_359 = arith.constant 15 : index
    %c0_360 = arith.constant 0 : index
    %c0_361 = arith.constant 0 : index
    %200 = vector.load %arg1[%c0_358, %c15_359, %c0_360, %c0_361] : memref<1x18x18x8xbf16, #tpu.memory_space<vmem>>, vector<1x1x16x8xbf16>
    %201 = vector.shape_cast %200 : vector<1x1x16x8xbf16> to vector<16x8xbf16>
    %c224_362 = arith.constant 224 : index
    %c0_363 = arith.constant 0 : index
    %202 = vector.load %arg5[%c224_362, %c0_363] : memref<256x8xbf16, #tpu.memory_space<vmem>>, vector<16x8xbf16>
    tpu.vector_store %arg5[%c224_362, %c0_363], %201 {strides = array<i32>} : memref<256x8xbf16, #tpu.memory_space<vmem>>, vector<16x8xbf16>,
    %c0_364 = arith.constant 0 : index
    %c16_365 = arith.constant 16 : index
    %c0_366 = arith.constant 0 : index
    %c0_367 = arith.constant 0 : index
    %203 = vector.load %arg1[%c0_364, %c16_365, %c0_366, %c0_367] : memref<1x18x18x8xbf16, #tpu.memory_space<vmem>>, vector<1x1x16x8xbf16>
    %204 = vector.shape_cast %203 : vector<1x1x16x8xbf16> to vector<16x8xbf16>
    %c240_368 = arith.constant 240 : index
    %c0_369 = arith.constant 0 : index
    %205 = vector.load %arg5[%c240_368, %c0_369] : memref<256x8xbf16, #tpu.memory_space<vmem>>, vector<16x8xbf16>
    tpu.vector_store %arg5[%c240_368, %c0_369], %204 {strides = array<i32>} : memref<256x8xbf16, #tpu.memory_space<vmem>>, vector<16x8xbf16>,
    %c0_370 = arith.constant 0 : index
    %c0_371 = arith.constant 0 : index
    %206 = vector.load %arg5[%c0_370, %c0_371] : memref<256x8xbf16, #tpu.memory_space<vmem>>, vector<256x8xbf16>
    %c3_372 = arith.constant 3 : index
    %c0_373 = arith.constant 0 : index
    %c0_374 = arith.constant 0 : index
    %207 = vector.load %arg2[%c3_372, %c0_373, %c0_374] : memref<9x8x64xbf16, #tpu.memory_space<vmem>>, vector<1x8x64xbf16>
    %208 = vector.shape_cast %207 : vector<1x8x64xbf16> to vector<8x64xbf16>
    %cst_375 = arith.constant dense<0.000000e+00> : vector<256x64xf32>
    %209 = tpu.matmul %206, %208, %cst_375 {dimension_numbers = #tpu.dot_dimension_numbers<[1], [0], [0], [1], [0, 0, 1, 1], [], []>} : vector<256x8xbf16>, vector<8x64xbf16>, vector<256x64xf32> -> vector<256x64xf32>
    %210 = arith.addf %157, %209 : vector<256x64xf32>
    %c0_376 = arith.constant 0 : index
    %c1_377 = arith.constant 1 : index
    %c1_378 = arith.constant 1 : index
    %c0_379 = arith.constant 0 : index
    %211 = vector.load %arg1[%c0_376, %c1_377, %c1_378, %c0_379] : memref<1x18x18x8xbf16, #tpu.memory_space<vmem>>, vector<1x1x16x8xbf16>
    %212 = vector.shape_cast %211 : vector<1x1x16x8xbf16> to vector<16x8xbf16>
    %c0_380 = arith.constant 0 : index
    %c0_381 = arith.constant 0 : index
    %213 = vector.load %arg5[%c0_380, %c0_381] : memref<256x8xbf16, #tpu.memory_space<vmem>>, vector<16x8xbf16>
    tpu.vector_store %arg5[%c0_380, %c0_381], %212 {strides = array<i32>} : memref<256x8xbf16, #tpu.memory_space<vmem>>, vector<16x8xbf16>,
    %c0_382 = arith.constant 0 : index
    %c2_383 = arith.constant 2 : index
    %c1_384 = arith.constant 1 : index
    %c0_385 = arith.constant 0 : index
    %214 = vector.load %arg1[%c0_382, %c2_383, %c1_384, %c0_385] : memref<1x18x18x8xbf16, #tpu.memory_space<vmem>>, vector<1x1x16x8xbf16>
    %215 = vector.shape_cast %214 : vector<1x1x16x8xbf16> to vector<16x8xbf16>
    %c16_386 = arith.constant 16 : index
    %c0_387 = arith.constant 0 : index
    %216 = vector.load %arg5[%c16_386, %c0_387] : memref<256x8xbf16, #tpu.memory_space<vmem>>, vector<16x8xbf16>
    tpu.vector_store %arg5[%c16_386, %c0_387], %215 {strides = array<i32>} : memref<256x8xbf16, #tpu.memory_space<vmem>>, vector<16x8xbf16>,
    %c0_388 = arith.constant 0 : index
    %c3_389 = arith.constant 3 : index
    %c1_390 = arith.constant 1 : index
    %c0_391 = arith.constant 0 : index
    %217 = vector.load %arg1[%c0_388, %c3_389, %c1_390, %c0_391] : memref<1x18x18x8xbf16, #tpu.memory_space<vmem>>, vector<1x1x16x8xbf16>
    %218 = vector.shape_cast %217 : vector<1x1x16x8xbf16> to vector<16x8xbf16>
    %c32_392 = arith.constant 32 : index
    %c0_393 = arith.constant 0 : index
    %219 = vector.load %arg5[%c32_392, %c0_393] : memref<256x8xbf16, #tpu.memory_space<vmem>>, vector<16x8xbf16>
    tpu.vector_store %arg5[%c32_392, %c0_393], %218 {strides = array<i32>} : memref<256x8xbf16, #tpu.memory_space<vmem>>, vector<16x8xbf16>,
    %c0_394 = arith.constant 0 : index
    %c4_395 = arith.constant 4 : index
    %c1_396 = arith.constant 1 : index
    %c0_397 = arith.constant 0 : index
    %220 = vector.load %arg1[%c0_394, %c4_395, %c1_396, %c0_397] : memref<1x18x18x8xbf16, #tpu.memory_space<vmem>>, vector<1x1x16x8xbf16>
    %221 = vector.shape_cast %220 : vector<1x1x16x8xbf16> to vector<16x8xbf16>
    %c48_398 = arith.constant 48 : index
    %c0_399 = arith.constant 0 : index
    %222 = vector.load %arg5[%c48_398, %c0_399] : memref<256x8xbf16, #tpu.memory_space<vmem>>, vector<16x8xbf16>
    tpu.vector_store %arg5[%c48_398, %c0_399], %221 {strides = array<i32>} : memref<256x8xbf16, #tpu.memory_space<vmem>>, vector<16x8xbf16>,
    %c0_400 = arith.constant 0 : index
    %c5_401 = arith.constant 5 : index
    %c1_402 = arith.constant 1 : index
    %c0_403 = arith.constant 0 : index
    %223 = vector.load %arg1[%c0_400, %c5_401, %c1_402, %c0_403] : memref<1x18x18x8xbf16, #tpu.memory_space<vmem>>, vector<1x1x16x8xbf16>
    %224 = vector.shape_cast %223 : vector<1x1x16x8xbf16> to vector<16x8xbf16>
    %c64_404 = arith.constant 64 : index
    %c0_405 = arith.constant 0 : index
    %225 = vector.load %arg5[%c64_404, %c0_405] : memref<256x8xbf16, #tpu.memory_space<vmem>>, vector<16x8xbf16>
    tpu.vector_store %arg5[%c64_404, %c0_405], %224 {strides = array<i32>} : memref<256x8xbf16, #tpu.memory_space<vmem>>, vector<16x8xbf16>,
    %c0_406 = arith.constant 0 : index
    %c6_407 = arith.constant 6 : index
    %c1_408 = arith.constant 1 : index
    %c0_409 = arith.constant 0 : index
    %226 = vector.load %arg1[%c0_406, %c6_407, %c1_408, %c0_409] : memref<1x18x18x8xbf16, #tpu.memory_space<vmem>>, vector<1x1x16x8xbf16>
    %227 = vector.shape_cast %226 : vector<1x1x16x8xbf16> to vector<16x8xbf16>
    %c80_410 = arith.constant 80 : index
    %c0_411 = arith.constant 0 : index
    %228 = vector.load %arg5[%c80_410, %c0_411] : memref<256x8xbf16, #tpu.memory_space<vmem>>, vector<16x8xbf16>
    tpu.vector_store %arg5[%c80_410, %c0_411], %227 {strides = array<i32>} : memref<256x8xbf16, #tpu.memory_space<vmem>>, vector<16x8xbf16>,
    %c0_412 = arith.constant 0 : index
    %c7_413 = arith.constant 7 : index
    %c1_414 = arith.constant 1 : index
    %c0_415 = arith.constant 0 : index
    %229 = vector.load %arg1[%c0_412, %c7_413, %c1_414, %c0_415] : memref<1x18x18x8xbf16, #tpu.memory_space<vmem>>, vector<1x1x16x8xbf16>
    %230 = vector.shape_cast %229 : vector<1x1x16x8xbf16> to vector<16x8xbf16>
    %c96_416 = arith.constant 96 : index
    %c0_417 = arith.constant 0 : index
    %231 = vector.load %arg5[%c96_416, %c0_417] : memref<256x8xbf16, #tpu.memory_space<vmem>>, vector<16x8xbf16>
    tpu.vector_store %arg5[%c96_416, %c0_417], %230 {strides = array<i32>} : memref<256x8xbf16, #tpu.memory_space<vmem>>, vector<16x8xbf16>,
    %c0_418 = arith.constant 0 : index
    %c8_419 = arith.constant 8 : index
    %c1_420 = arith.constant 1 : index
    %c0_421 = arith.constant 0 : index
    %232 = vector.load %arg1[%c0_418, %c8_419, %c1_420, %c0_421] : memref<1x18x18x8xbf16, #tpu.memory_space<vmem>>, vector<1x1x16x8xbf16>
    %233 = vector.shape_cast %232 : vector<1x1x16x8xbf16> to vector<16x8xbf16>
    %c112_422 = arith.constant 112 : index
    %c0_423 = arith.constant 0 : index
    %234 = vector.load %arg5[%c112_422, %c0_423] : memref<256x8xbf16, #tpu.memory_space<vmem>>, vector<16x8xbf16>
    tpu.vector_store %arg5[%c112_422, %c0_423], %233 {strides = array<i32>} : memref<256x8xbf16, #tpu.memory_space<vmem>>, vector<16x8xbf16>,
    %c0_424 = arith.constant 0 : index
    %c9_425 = arith.constant 9 : index
    %c1_426 = arith.constant 1 : index
    %c0_427 = arith.constant 0 : index
    %235 = vector.load %arg1[%c0_424, %c9_425, %c1_426, %c0_427] : memref<1x18x18x8xbf16, #tpu.memory_space<vmem>>, vector<1x1x16x8xbf16>
    %236 = vector.shape_cast %235 : vector<1x1x16x8xbf16> to vector<16x8xbf16>
    %c128_428 = arith.constant 128 : index
    %c0_429 = arith.constant 0 : index
    %237 = vector.load %arg5[%c128_428, %c0_429] : memref<256x8xbf16, #tpu.memory_space<vmem>>, vector<16x8xbf16>
    tpu.vector_store %arg5[%c128_428, %c0_429], %236 {strides = array<i32>} : memref<256x8xbf16, #tpu.memory_space<vmem>>, vector<16x8xbf16>,
    %c0_430 = arith.constant 0 : index
    %c10_431 = arith.constant 10 : index
    %c1_432 = arith.constant 1 : index
    %c0_433 = arith.constant 0 : index
    %238 = vector.load %arg1[%c0_430, %c10_431, %c1_432, %c0_433] : memref<1x18x18x8xbf16, #tpu.memory_space<vmem>>, vector<1x1x16x8xbf16>
    %239 = vector.shape_cast %238 : vector<1x1x16x8xbf16> to vector<16x8xbf16>
    %c144_434 = arith.constant 144 : index
    %c0_435 = arith.constant 0 : index
    %240 = vector.load %arg5[%c144_434, %c0_435] : memref<256x8xbf16, #tpu.memory_space<vmem>>, vector<16x8xbf16>
    tpu.vector_store %arg5[%c144_434, %c0_435], %239 {strides = array<i32>} : memref<256x8xbf16, #tpu.memory_space<vmem>>, vector<16x8xbf16>,
    %c0_436 = arith.constant 0 : index
    %c11_437 = arith.constant 11 : index
    %c1_438 = arith.constant 1 : index
    %c0_439 = arith.constant 0 : index
    %241 = vector.load %arg1[%c0_436, %c11_437, %c1_438, %c0_439] : memref<1x18x18x8xbf16, #tpu.memory_space<vmem>>, vector<1x1x16x8xbf16>
    %242 = vector.shape_cast %241 : vector<1x1x16x8xbf16> to vector<16x8xbf16>
    %c160_440 = arith.constant 160 : index
    %c0_441 = arith.constant 0 : index
    %243 = vector.load %arg5[%c160_440, %c0_441] : memref<256x8xbf16, #tpu.memory_space<vmem>>, vector<16x8xbf16>
    tpu.vector_store %arg5[%c160_440, %c0_441], %242 {strides = array<i32>} : memref<256x8xbf16, #tpu.memory_space<vmem>>, vector<16x8xbf16>,
    %c0_442 = arith.constant 0 : index
    %c12_443 = arith.constant 12 : index
    %c1_444 = arith.constant 1 : index
    %c0_445 = arith.constant 0 : index
    %244 = vector.load %arg1[%c0_442, %c12_443, %c1_444, %c0_445] : memref<1x18x18x8xbf16, #tpu.memory_space<vmem>>, vector<1x1x16x8xbf16>
    %245 = vector.shape_cast %244 : vector<1x1x16x8xbf16> to vector<16x8xbf16>
    %c176_446 = arith.constant 176 : index
    %c0_447 = arith.constant 0 : index
    %246 = vector.load %arg5[%c176_446, %c0_447] : memref<256x8xbf16, #tpu.memory_space<vmem>>, vector<16x8xbf16>
    tpu.vector_store %arg5[%c176_446, %c0_447], %245 {strides = array<i32>} : memref<256x8xbf16, #tpu.memory_space<vmem>>, vector<16x8xbf16>,
    %c0_448 = arith.constant 0 : index
    %c13_449 = arith.constant 13 : index
    %c1_450 = arith.constant 1 : index
    %c0_451 = arith.constant 0 : index
    %247 = vector.load %arg1[%c0_448, %c13_449, %c1_450, %c0_451] : memref<1x18x18x8xbf16, #tpu.memory_space<vmem>>, vector<1x1x16x8xbf16>
    %248 = vector.shape_cast %247 : vector<1x1x16x8xbf16> to vector<16x8xbf16>
    %c192_452 = arith.constant 192 : index
    %c0_453 = arith.constant 0 : index
    %249 = vector.load %arg5[%c192_452, %c0_453] : memref<256x8xbf16, #tpu.memory_space<vmem>>, vector<16x8xbf16>
    tpu.vector_store %arg5[%c192_452, %c0_453], %248 {strides = array<i32>} : memref<256x8xbf16, #tpu.memory_space<vmem>>, vector<16x8xbf16>,
    %c0_454 = arith.constant 0 : index
    %c14_455 = arith.constant 14 : index
    %c1_456 = arith.constant 1 : index
    %c0_457 = arith.constant 0 : index
    %250 = vector.load %arg1[%c0_454, %c14_455, %c1_456, %c0_457] : memref<1x18x18x8xbf16, #tpu.memory_space<vmem>>, vector<1x1x16x8xbf16>
    %251 = vector.shape_cast %250 : vector<1x1x16x8xbf16> to vector<16x8xbf16>
    %c208_458 = arith.constant 208 : index
    %c0_459 = arith.constant 0 : index
    %252 = vector.load %arg5[%c208_458, %c0_459] : memref<256x8xbf16, #tpu.memory_space<vmem>>, vector<16x8xbf16>
    tpu.vector_store %arg5[%c208_458, %c0_459], %251 {strides = array<i32>} : memref<256x8xbf16, #tpu.memory_space<vmem>>, vector<16x8xbf16>,
    %c0_460 = arith.constant 0 : index
    %c15_461 = arith.constant 15 : index
    %c1_462 = arith.constant 1 : index
    %c0_463 = arith.constant 0 : index
    %253 = vector.load %arg1[%c0_460, %c15_461, %c1_462, %c0_463] : memref<1x18x18x8xbf16, #tpu.memory_space<vmem>>, vector<1x1x16x8xbf16>
    %254 = vector.shape_cast %253 : vector<1x1x16x8xbf16> to vector<16x8xbf16>
    %c224_464 = arith.constant 224 : index
    %c0_465 = arith.constant 0 : index
    %255 = vector.load %arg5[%c224_464, %c0_465] : memref<256x8xbf16, #tpu.memory_space<vmem>>, vector<16x8xbf16>
    tpu.vector_store %arg5[%c224_464, %c0_465], %254 {strides = array<i32>} : memref<256x8xbf16, #tpu.memory_space<vmem>>, vector<16x8xbf16>,
    %c0_466 = arith.constant 0 : index
    %c16_467 = arith.constant 16 : index
    %c1_468 = arith.constant 1 : index
    %c0_469 = arith.constant 0 : index
    %256 = vector.load %arg1[%c0_466, %c16_467, %c1_468, %c0_469] : memref<1x18x18x8xbf16, #tpu.memory_space<vmem>>, vector<1x1x16x8xbf16>
    %257 = vector.shape_cast %256 : vector<1x1x16x8xbf16> to vector<16x8xbf16>
    %c240_470 = arith.constant 240 : index
    %c0_471 = arith.constant 0 : index
    %258 = vector.load %arg5[%c240_470, %c0_471] : memref<256x8xbf16, #tpu.memory_space<vmem>>, vector<16x8xbf16>
    tpu.vector_store %arg5[%c240_470, %c0_471], %257 {strides = array<i32>} : memref<256x8xbf16, #tpu.memory_space<vmem>>, vector<16x8xbf16>,
    %c0_472 = arith.constant 0 : index
    %c0_473 = arith.constant 0 : index
    %259 = vector.load %arg5[%c0_472, %c0_473] : memref<256x8xbf16, #tpu.memory_space<vmem>>, vector<256x8xbf16>
    %c4_474 = arith.constant 4 : index
    %c0_475 = arith.constant 0 : index
    %c0_476 = arith.constant 0 : index
    %260 = vector.load %arg2[%c4_474, %c0_475, %c0_476] : memref<9x8x64xbf16, #tpu.memory_space<vmem>>, vector<1x8x64xbf16>
    %261 = vector.shape_cast %260 : vector<1x8x64xbf16> to vector<8x64xbf16>
    %cst_477 = arith.constant dense<0.000000e+00> : vector<256x64xf32>
    %262 = tpu.matmul %259, %261, %cst_477 {dimension_numbers = #tpu.dot_dimension_numbers<[1], [0], [0], [1], [0, 0, 1, 1], [], []>} : vector<256x8xbf16>, vector<8x64xbf16>, vector<256x64xf32> -> vector<256x64xf32>
    %263 = arith.addf %210, %262 : vector<256x64xf32>
    %c0_478 = arith.constant 0 : index
    %c1_479 = arith.constant 1 : index
    %c2_480 = arith.constant 2 : index
    %c0_481 = arith.constant 0 : index
    %264 = vector.load %arg1[%c0_478, %c1_479, %c2_480, %c0_481] : memref<1x18x18x8xbf16, #tpu.memory_space<vmem>>, vector<1x1x16x8xbf16>
    %265 = vector.shape_cast %264 : vector<1x1x16x8xbf16> to vector<16x8xbf16>
    %c0_482 = arith.constant 0 : index
    %c0_483 = arith.constant 0 : index
    %266 = vector.load %arg5[%c0_482, %c0_483] : memref<256x8xbf16, #tpu.memory_space<vmem>>, vector<16x8xbf16>
    tpu.vector_store %arg5[%c0_482, %c0_483], %265 {strides = array<i32>} : memref<256x8xbf16, #tpu.memory_space<vmem>>, vector<16x8xbf16>,
    %c0_484 = arith.constant 0 : index
    %c2_485 = arith.constant 2 : index
    %c2_486 = arith.constant 2 : index
    %c0_487 = arith.constant 0 : index
    %267 = vector.load %arg1[%c0_484, %c2_485, %c2_486, %c0_487] : memref<1x18x18x8xbf16, #tpu.memory_space<vmem>>, vector<1x1x16x8xbf16>
    %268 = vector.shape_cast %267 : vector<1x1x16x8xbf16> to vector<16x8xbf16>
    %c16_488 = arith.constant 16 : index
    %c0_489 = arith.constant 0 : index
    %269 = vector.load %arg5[%c16_488, %c0_489] : memref<256x8xbf16, #tpu.memory_space<vmem>>, vector<16x8xbf16>
    tpu.vector_store %arg5[%c16_488, %c0_489], %268 {strides = array<i32>} : memref<256x8xbf16, #tpu.memory_space<vmem>>, vector<16x8xbf16>,
    %c0_490 = arith.constant 0 : index
    %c3_491 = arith.constant 3 : index
    %c2_492 = arith.constant 2 : index
    %c0_493 = arith.constant 0 : index
    %270 = vector.load %arg1[%c0_490, %c3_491, %c2_492, %c0_493] : memref<1x18x18x8xbf16, #tpu.memory_space<vmem>>, vector<1x1x16x8xbf16>
    %271 = vector.shape_cast %270 : vector<1x1x16x8xbf16> to vector<16x8xbf16>
    %c32_494 = arith.constant 32 : index
    %c0_495 = arith.constant 0 : index
    %272 = vector.load %arg5[%c32_494, %c0_495] : memref<256x8xbf16, #tpu.memory_space<vmem>>, vector<16x8xbf16>
    tpu.vector_store %arg5[%c32_494, %c0_495], %271 {strides = array<i32>} : memref<256x8xbf16, #tpu.memory_space<vmem>>, vector<16x8xbf16>,
    %c0_496 = arith.constant 0 : index
    %c4_497 = arith.constant 4 : index
    %c2_498 = arith.constant 2 : index
    %c0_499 = arith.constant 0 : index
    %273 = vector.load %arg1[%c0_496, %c4_497, %c2_498, %c0_499] : memref<1x18x18x8xbf16, #tpu.memory_space<vmem>>, vector<1x1x16x8xbf16>
    %274 = vector.shape_cast %273 : vector<1x1x16x8xbf16> to vector<16x8xbf16>
    %c48_500 = arith.constant 48 : index
    %c0_501 = arith.constant 0 : index
    %275 = vector.load %arg5[%c48_500, %c0_501] : memref<256x8xbf16, #tpu.memory_space<vmem>>, vector<16x8xbf16>
    tpu.vector_store %arg5[%c48_500, %c0_501], %274 {strides = array<i32>} : memref<256x8xbf16, #tpu.memory_space<vmem>>, vector<16x8xbf16>,
    %c0_502 = arith.constant 0 : index
    %c5_503 = arith.constant 5 : index
    %c2_504 = arith.constant 2 : index
    %c0_505 = arith.constant 0 : index
    %276 = vector.load %arg1[%c0_502, %c5_503, %c2_504, %c0_505] : memref<1x18x18x8xbf16, #tpu.memory_space<vmem>>, vector<1x1x16x8xbf16>
    %277 = vector.shape_cast %276 : vector<1x1x16x8xbf16> to vector<16x8xbf16>
    %c64_506 = arith.constant 64 : index
    %c0_507 = arith.constant 0 : index
    %278 = vector.load %arg5[%c64_506, %c0_507] : memref<256x8xbf16, #tpu.memory_space<vmem>>, vector<16x8xbf16>
    tpu.vector_store %arg5[%c64_506, %c0_507], %277 {strides = array<i32>} : memref<256x8xbf16, #tpu.memory_space<vmem>>, vector<16x8xbf16>,
    %c0_508 = arith.constant 0 : index
    %c6_509 = arith.constant 6 : index
    %c2_510 = arith.constant 2 : index
    %c0_511 = arith.constant 0 : index
    %279 = vector.load %arg1[%c0_508, %c6_509, %c2_510, %c0_511] : memref<1x18x18x8xbf16, #tpu.memory_space<vmem>>, vector<1x1x16x8xbf16>
    %280 = vector.shape_cast %279 : vector<1x1x16x8xbf16> to vector<16x8xbf16>
    %c80_512 = arith.constant 80 : index
    %c0_513 = arith.constant 0 : index
    %281 = vector.load %arg5[%c80_512, %c0_513] : memref<256x8xbf16, #tpu.memory_space<vmem>>, vector<16x8xbf16>
    tpu.vector_store %arg5[%c80_512, %c0_513], %280 {strides = array<i32>} : memref<256x8xbf16, #tpu.memory_space<vmem>>, vector<16x8xbf16>,
    %c0_514 = arith.constant 0 : index
    %c7_515 = arith.constant 7 : index
    %c2_516 = arith.constant 2 : index
    %c0_517 = arith.constant 0 : index
    %282 = vector.load %arg1[%c0_514, %c7_515, %c2_516, %c0_517] : memref<1x18x18x8xbf16, #tpu.memory_space<vmem>>, vector<1x1x16x8xbf16>
    %283 = vector.shape_cast %282 : vector<1x1x16x8xbf16> to vector<16x8xbf16>
    %c96_518 = arith.constant 96 : index
    %c0_519 = arith.constant 0 : index
    %284 = vector.load %arg5[%c96_518, %c0_519] : memref<256x8xbf16, #tpu.memory_space<vmem>>, vector<16x8xbf16>
    tpu.vector_store %arg5[%c96_518, %c0_519], %283 {strides = array<i32>} : memref<256x8xbf16, #tpu.memory_space<vmem>>, vector<16x8xbf16>,
    %c0_520 = arith.constant 0 : index
    %c8_521 = arith.constant 8 : index
    %c2_522 = arith.constant 2 : index
    %c0_523 = arith.constant 0 : index
    %285 = vector.load %arg1[%c0_520, %c8_521, %c2_522, %c0_523] : memref<1x18x18x8xbf16, #tpu.memory_space<vmem>>, vector<1x1x16x8xbf16>
    %286 = vector.shape_cast %285 : vector<1x1x16x8xbf16> to vector<16x8xbf16>
    %c112_524 = arith.constant 112 : index
    %c0_525 = arith.constant 0 : index
    %287 = vector.load %arg5[%c112_524, %c0_525] : memref<256x8xbf16, #tpu.memory_space<vmem>>, vector<16x8xbf16>
    tpu.vector_store %arg5[%c112_524, %c0_525], %286 {strides = array<i32>} : memref<256x8xbf16, #tpu.memory_space<vmem>>, vector<16x8xbf16>,
    %c0_526 = arith.constant 0 : index
    %c9_527 = arith.constant 9 : index
    %c2_528 = arith.constant 2 : index
    %c0_529 = arith.constant 0 : index
    %288 = vector.load %arg1[%c0_526, %c9_527, %c2_528, %c0_529] : memref<1x18x18x8xbf16, #tpu.memory_space<vmem>>, vector<1x1x16x8xbf16>
    %289 = vector.shape_cast %288 : vector<1x1x16x8xbf16> to vector<16x8xbf16>
    %c128_530 = arith.constant 128 : index
    %c0_531 = arith.constant 0 : index
    %290 = vector.load %arg5[%c128_530, %c0_531] : memref<256x8xbf16, #tpu.memory_space<vmem>>, vector<16x8xbf16>
    tpu.vector_store %arg5[%c128_530, %c0_531], %289 {strides = array<i32>} : memref<256x8xbf16, #tpu.memory_space<vmem>>, vector<16x8xbf16>,
    %c0_532 = arith.constant 0 : index
    %c10_533 = arith.constant 10 : index
    %c2_534 = arith.constant 2 : index
    %c0_535 = arith.constant 0 : index
    %291 = vector.load %arg1[%c0_532, %c10_533, %c2_534, %c0_535] : memref<1x18x18x8xbf16, #tpu.memory_space<vmem>>, vector<1x1x16x8xbf16>
    %292 = vector.shape_cast %291 : vector<1x1x16x8xbf16> to vector<16x8xbf16>
    %c144_536 = arith.constant 144 : index
    %c0_537 = arith.constant 0 : index
    %293 = vector.load %arg5[%c144_536, %c0_537] : memref<256x8xbf16, #tpu.memory_space<vmem>>, vector<16x8xbf16>
    tpu.vector_store %arg5[%c144_536, %c0_537], %292 {strides = array<i32>} : memref<256x8xbf16, #tpu.memory_space<vmem>>, vector<16x8xbf16>,
    %c0_538 = arith.constant 0 : index
    %c11_539 = arith.constant 11 : index
    %c2_540 = arith.constant 2 : index
    %c0_541 = arith.constant 0 : index
    %294 = vector.load %arg1[%c0_538, %c11_539, %c2_540, %c0_541] : memref<1x18x18x8xbf16, #tpu.memory_space<vmem>>, vector<1x1x16x8xbf16>
    %295 = vector.shape_cast %294 : vector<1x1x16x8xbf16> to vector<16x8xbf16>
    %c160_542 = arith.constant 160 : index
    %c0_543 = arith.constant 0 : index
    %296 = vector.load %arg5[%c160_542, %c0_543] : memref<256x8xbf16, #tpu.memory_space<vmem>>, vector<16x8xbf16>
    tpu.vector_store %arg5[%c160_542, %c0_543], %295 {strides = array<i32>} : memref<256x8xbf16, #tpu.memory_space<vmem>>, vector<16x8xbf16>,
    %c0_544 = arith.constant 0 : index
    %c12_545 = arith.constant 12 : index
    %c2_546 = arith.constant 2 : index
    %c0_547 = arith.constant 0 : index
    %297 = vector.load %arg1[%c0_544, %c12_545, %c2_546, %c0_547] : memref<1x18x18x8xbf16, #tpu.memory_space<vmem>>, vector<1x1x16x8xbf16>
    %298 = vector.shape_cast %297 : vector<1x1x16x8xbf16> to vector<16x8xbf16>
    %c176_548 = arith.constant 176 : index
    %c0_549 = arith.constant 0 : index
    %299 = vector.load %arg5[%c176_548, %c0_549] : memref<256x8xbf16, #tpu.memory_space<vmem>>, vector<16x8xbf16>
    tpu.vector_store %arg5[%c176_548, %c0_549], %298 {strides = array<i32>} : memref<256x8xbf16, #tpu.memory_space<vmem>>, vector<16x8xbf16>,
    %c0_550 = arith.constant 0 : index
    %c13_551 = arith.constant 13 : index
    %c2_552 = arith.constant 2 : index
    %c0_553 = arith.constant 0 : index
    %300 = vector.load %arg1[%c0_550, %c13_551, %c2_552, %c0_553] : memref<1x18x18x8xbf16, #tpu.memory_space<vmem>>, vector<1x1x16x8xbf16>
    %301 = vector.shape_cast %300 : vector<1x1x16x8xbf16> to vector<16x8xbf16>
    %c192_554 = arith.constant 192 : index
    %c0_555 = arith.constant 0 : index
    %302 = vector.load %arg5[%c192_554, %c0_555] : memref<256x8xbf16, #tpu.memory_space<vmem>>, vector<16x8xbf16>
    tpu.vector_store %arg5[%c192_554, %c0_555], %301 {strides = array<i32>} : memref<256x8xbf16, #tpu.memory_space<vmem>>, vector<16x8xbf16>,
    %c0_556 = arith.constant 0 : index
    %c14_557 = arith.constant 14 : index
    %c2_558 = arith.constant 2 : index
    %c0_559 = arith.constant 0 : index
    %303 = vector.load %arg1[%c0_556, %c14_557, %c2_558, %c0_559] : memref<1x18x18x8xbf16, #tpu.memory_space<vmem>>, vector<1x1x16x8xbf16>
    %304 = vector.shape_cast %303 : vector<1x1x16x8xbf16> to vector<16x8xbf16>
    %c208_560 = arith.constant 208 : index
    %c0_561 = arith.constant 0 : index
    %305 = vector.load %arg5[%c208_560, %c0_561] : memref<256x8xbf16, #tpu.memory_space<vmem>>, vector<16x8xbf16>
    tpu.vector_store %arg5[%c208_560, %c0_561], %304 {strides = array<i32>} : memref<256x8xbf16, #tpu.memory_space<vmem>>, vector<16x8xbf16>,
    %c0_562 = arith.constant 0 : index
    %c15_563 = arith.constant 15 : index
    %c2_564 = arith.constant 2 : index
    %c0_565 = arith.constant 0 : index
    %306 = vector.load %arg1[%c0_562, %c15_563, %c2_564, %c0_565] : memref<1x18x18x8xbf16, #tpu.memory_space<vmem>>, vector<1x1x16x8xbf16>
    %307 = vector.shape_cast %306 : vector<1x1x16x8xbf16> to vector<16x8xbf16>
    %c224_566 = arith.constant 224 : index
    %c0_567 = arith.constant 0 : index
    %308 = vector.load %arg5[%c224_566, %c0_567] : memref<256x8xbf16, #tpu.memory_space<vmem>>, vector<16x8xbf16>
    tpu.vector_store %arg5[%c224_566, %c0_567], %307 {strides = array<i32>} : memref<256x8xbf16, #tpu.memory_space<vmem>>, vector<16x8xbf16>,
    %c0_568 = arith.constant 0 : index
    %c16_569 = arith.constant 16 : index
    %c2_570 = arith.constant 2 : index
    %c0_571 = arith.constant 0 : index
    %309 = vector.load %arg1[%c0_568, %c16_569, %c2_570, %c0_571] : memref<1x18x18x8xbf16, #tpu.memory_space<vmem>>, vector<1x1x16x8xbf16>
    %310 = vector.shape_cast %309 : vector<1x1x16x8xbf16> to vector<16x8xbf16>
    %c240_572 = arith.constant 240 : index
    %c0_573 = arith.constant 0 : index
    %311 = vector.load %arg5[%c240_572, %c0_573] : memref<256x8xbf16, #tpu.memory_space<vmem>>, vector<16x8xbf16>
    tpu.vector_store %arg5[%c240_572, %c0_573], %310 {strides = array<i32>} : memref<256x8xbf16, #tpu.memory_space<vmem>>, vector<16x8xbf16>,
    %c0_574 = arith.constant 0 : index
    %c0_575 = arith.constant 0 : index
    %312 = vector.load %arg5[%c0_574, %c0_575] : memref<256x8xbf16, #tpu.memory_space<vmem>>, vector<256x8xbf16>
    %c5_576 = arith.constant 5 : index
    %c0_577 = arith.constant 0 : index
    %c0_578 = arith.constant 0 : index
    %313 = vector.load %arg2[%c5_576, %c0_577, %c0_578] : memref<9x8x64xbf16, #tpu.memory_space<vmem>>, vector<1x8x64xbf16>
    %314 = vector.shape_cast %313 : vector<1x8x64xbf16> to vector<8x64xbf16>
    %cst_579 = arith.constant dense<0.000000e+00> : vector<256x64xf32>
    %315 = tpu.matmul %312, %314, %cst_579 {dimension_numbers = #tpu.dot_dimension_numbers<[1], [0], [0], [1], [0, 0, 1, 1], [], []>} : vector<256x8xbf16>, vector<8x64xbf16>, vector<256x64xf32> -> vector<256x64xf32>
    %316 = arith.addf %263, %315 : vector<256x64xf32>
    %c0_580 = arith.constant 0 : index
    %c2_581 = arith.constant 2 : index
    %c0_582 = arith.constant 0 : index
    %c0_583 = arith.constant 0 : index
    %317 = vector.load %arg1[%c0_580, %c2_581, %c0_582, %c0_583] : memref<1x18x18x8xbf16, #tpu.memory_space<vmem>>, vector<1x1x16x8xbf16>
    %318 = vector.shape_cast %317 : vector<1x1x16x8xbf16> to vector<16x8xbf16>
    %c0_584 = arith.constant 0 : index
    %c0_585 = arith.constant 0 : index
    %319 = vector.load %arg5[%c0_584, %c0_585] : memref<256x8xbf16, #tpu.memory_space<vmem>>, vector<16x8xbf16>
    tpu.vector_store %arg5[%c0_584, %c0_585], %318 {strides = array<i32>} : memref<256x8xbf16, #tpu.memory_space<vmem>>, vector<16x8xbf16>,
    %c0_586 = arith.constant 0 : index
    %c3_587 = arith.constant 3 : index
    %c0_588 = arith.constant 0 : index
    %c0_589 = arith.constant 0 : index
    %320 = vector.load %arg1[%c0_586, %c3_587, %c0_588, %c0_589] : memref<1x18x18x8xbf16, #tpu.memory_space<vmem>>, vector<1x1x16x8xbf16>
    %321 = vector.shape_cast %320 : vector<1x1x16x8xbf16> to vector<16x8xbf16>
    %c16_590 = arith.constant 16 : index
    %c0_591 = arith.constant 0 : index
    %322 = vector.load %arg5[%c16_590, %c0_591] : memref<256x8xbf16, #tpu.memory_space<vmem>>, vector<16x8xbf16>
    tpu.vector_store %arg5[%c16_590, %c0_591], %321 {strides = array<i32>} : memref<256x8xbf16, #tpu.memory_space<vmem>>, vector<16x8xbf16>,
    %c0_592 = arith.constant 0 : index
    %c4_593 = arith.constant 4 : index
    %c0_594 = arith.constant 0 : index
    %c0_595 = arith.constant 0 : index
    %323 = vector.load %arg1[%c0_592, %c4_593, %c0_594, %c0_595] : memref<1x18x18x8xbf16, #tpu.memory_space<vmem>>, vector<1x1x16x8xbf16>
    %324 = vector.shape_cast %323 : vector<1x1x16x8xbf16> to vector<16x8xbf16>
    %c32_596 = arith.constant 32 : index
    %c0_597 = arith.constant 0 : index
    %325 = vector.load %arg5[%c32_596, %c0_597] : memref<256x8xbf16, #tpu.memory_space<vmem>>, vector<16x8xbf16>
    tpu.vector_store %arg5[%c32_596, %c0_597], %324 {strides = array<i32>} : memref<256x8xbf16, #tpu.memory_space<vmem>>, vector<16x8xbf16>,
    %c0_598 = arith.constant 0 : index
    %c5_599 = arith.constant 5 : index
    %c0_600 = arith.constant 0 : index
    %c0_601 = arith.constant 0 : index
    %326 = vector.load %arg1[%c0_598, %c5_599, %c0_600, %c0_601] : memref<1x18x18x8xbf16, #tpu.memory_space<vmem>>, vector<1x1x16x8xbf16>
    %327 = vector.shape_cast %326 : vector<1x1x16x8xbf16> to vector<16x8xbf16>
    %c48_602 = arith.constant 48 : index
    %c0_603 = arith.constant 0 : index
    %328 = vector.load %arg5[%c48_602, %c0_603] : memref<256x8xbf16, #tpu.memory_space<vmem>>, vector<16x8xbf16>
    tpu.vector_store %arg5[%c48_602, %c0_603], %327 {strides = array<i32>} : memref<256x8xbf16, #tpu.memory_space<vmem>>, vector<16x8xbf16>,
    %c0_604 = arith.constant 0 : index
    %c6_605 = arith.constant 6 : index
    %c0_606 = arith.constant 0 : index
    %c0_607 = arith.constant 0 : index
    %329 = vector.load %arg1[%c0_604, %c6_605, %c0_606, %c0_607] : memref<1x18x18x8xbf16, #tpu.memory_space<vmem>>, vector<1x1x16x8xbf16>
    %330 = vector.shape_cast %329 : vector<1x1x16x8xbf16> to vector<16x8xbf16>
    %c64_608 = arith.constant 64 : index
    %c0_609 = arith.constant 0 : index
    %331 = vector.load %arg5[%c64_608, %c0_609] : memref<256x8xbf16, #tpu.memory_space<vmem>>, vector<16x8xbf16>
    tpu.vector_store %arg5[%c64_608, %c0_609], %330 {strides = array<i32>} : memref<256x8xbf16, #tpu.memory_space<vmem>>, vector<16x8xbf16>,
    %c0_610 = arith.constant 0 : index
    %c7_611 = arith.constant 7 : index
    %c0_612 = arith.constant 0 : index
    %c0_613 = arith.constant 0 : index
    %332 = vector.load %arg1[%c0_610, %c7_611, %c0_612, %c0_613] : memref<1x18x18x8xbf16, #tpu.memory_space<vmem>>, vector<1x1x16x8xbf16>
    %333 = vector.shape_cast %332 : vector<1x1x16x8xbf16> to vector<16x8xbf16>
    %c80_614 = arith.constant 80 : index
    %c0_615 = arith.constant 0 : index
    %334 = vector.load %arg5[%c80_614, %c0_615] : memref<256x8xbf16, #tpu.memory_space<vmem>>, vector<16x8xbf16>
    tpu.vector_store %arg5[%c80_614, %c0_615], %333 {strides = array<i32>} : memref<256x8xbf16, #tpu.memory_space<vmem>>, vector<16x8xbf16>,
    %c0_616 = arith.constant 0 : index
    %c8_617 = arith.constant 8 : index
    %c0_618 = arith.constant 0 : index
    %c0_619 = arith.constant 0 : index
    %335 = vector.load %arg1[%c0_616, %c8_617, %c0_618, %c0_619] : memref<1x18x18x8xbf16, #tpu.memory_space<vmem>>, vector<1x1x16x8xbf16>
    %336 = vector.shape_cast %335 : vector<1x1x16x8xbf16> to vector<16x8xbf16>
    %c96_620 = arith.constant 96 : index
    %c0_621 = arith.constant 0 : index
    %337 = vector.load %arg5[%c96_620, %c0_621] : memref<256x8xbf16, #tpu.memory_space<vmem>>, vector<16x8xbf16>
    tpu.vector_store %arg5[%c96_620, %c0_621], %336 {strides = array<i32>} : memref<256x8xbf16, #tpu.memory_space<vmem>>, vector<16x8xbf16>,
    %c0_622 = arith.constant 0 : index
    %c9_623 = arith.constant 9 : index
    %c0_624 = arith.constant 0 : index
    %c0_625 = arith.constant 0 : index
    %338 = vector.load %arg1[%c0_622, %c9_623, %c0_624, %c0_625] : memref<1x18x18x8xbf16, #tpu.memory_space<vmem>>, vector<1x1x16x8xbf16>
    %339 = vector.shape_cast %338 : vector<1x1x16x8xbf16> to vector<16x8xbf16>
    %c112_626 = arith.constant 112 : index
    %c0_627 = arith.constant 0 : index
    %340 = vector.load %arg5[%c112_626, %c0_627] : memref<256x8xbf16, #tpu.memory_space<vmem>>, vector<16x8xbf16>
    tpu.vector_store %arg5[%c112_626, %c0_627], %339 {strides = array<i32>} : memref<256x8xbf16, #tpu.memory_space<vmem>>, vector<16x8xbf16>,
    %c0_628 = arith.constant 0 : index
    %c10_629 = arith.constant 10 : index
    %c0_630 = arith.constant 0 : index
    %c0_631 = arith.constant 0 : index
    %341 = vector.load %arg1[%c0_628, %c10_629, %c0_630, %c0_631] : memref<1x18x18x8xbf16, #tpu.memory_space<vmem>>, vector<1x1x16x8xbf16>
    %342 = vector.shape_cast %341 : vector<1x1x16x8xbf16> to vector<16x8xbf16>
    %c128_632 = arith.constant 128 : index
    %c0_633 = arith.constant 0 : index
    %343 = vector.load %arg5[%c128_632, %c0_633] : memref<256x8xbf16, #tpu.memory_space<vmem>>, vector<16x8xbf16>
    tpu.vector_store %arg5[%c128_632, %c0_633], %342 {strides = array<i32>} : memref<256x8xbf16, #tpu.memory_space<vmem>>, vector<16x8xbf16>,
    %c0_634 = arith.constant 0 : index
    %c11_635 = arith.constant 11 : index
    %c0_636 = arith.constant 0 : index
    %c0_637 = arith.constant 0 : index
    %344 = vector.load %arg1[%c0_634, %c11_635, %c0_636, %c0_637] : memref<1x18x18x8xbf16, #tpu.memory_space<vmem>>, vector<1x1x16x8xbf16>
    %345 = vector.shape_cast %344 : vector<1x1x16x8xbf16> to vector<16x8xbf16>
    %c144_638 = arith.constant 144 : index
    %c0_639 = arith.constant 0 : index
    %346 = vector.load %arg5[%c144_638, %c0_639] : memref<256x8xbf16, #tpu.memory_space<vmem>>, vector<16x8xbf16>
    tpu.vector_store %arg5[%c144_638, %c0_639], %345 {strides = array<i32>} : memref<256x8xbf16, #tpu.memory_space<vmem>>, vector<16x8xbf16>,
    %c0_640 = arith.constant 0 : index
    %c12_641 = arith.constant 12 : index
    %c0_642 = arith.constant 0 : index
    %c0_643 = arith.constant 0 : index
    %347 = vector.load %arg1[%c0_640, %c12_641, %c0_642, %c0_643] : memref<1x18x18x8xbf16, #tpu.memory_space<vmem>>, vector<1x1x16x8xbf16>
    %348 = vector.shape_cast %347 : vector<1x1x16x8xbf16> to vector<16x8xbf16>
    %c160_644 = arith.constant 160 : index
    %c0_645 = arith.constant 0 : index
    %349 = vector.load %arg5[%c160_644, %c0_645] : memref<256x8xbf16, #tpu.memory_space<vmem>>, vector<16x8xbf16>
    tpu.vector_store %arg5[%c160_644, %c0_645], %348 {strides = array<i32>} : memref<256x8xbf16, #tpu.memory_space<vmem>>, vector<16x8xbf16>,
    %c0_646 = arith.constant 0 : index
    %c13_647 = arith.constant 13 : index
    %c0_648 = arith.constant 0 : index
    %c0_649 = arith.constant 0 : index
    %350 = vector.load %arg1[%c0_646, %c13_647, %c0_648, %c0_649] : memref<1x18x18x8xbf16, #tpu.memory_space<vmem>>, vector<1x1x16x8xbf16>
    %351 = vector.shape_cast %350 : vector<1x1x16x8xbf16> to vector<16x8xbf16>
    %c176_650 = arith.constant 176 : index
    %c0_651 = arith.constant 0 : index
    %352 = vector.load %arg5[%c176_650, %c0_651] : memref<256x8xbf16, #tpu.memory_space<vmem>>, vector<16x8xbf16>
    tpu.vector_store %arg5[%c176_650, %c0_651], %351 {strides = array<i32>} : memref<256x8xbf16, #tpu.memory_space<vmem>>, vector<16x8xbf16>,
    %c0_652 = arith.constant 0 : index
    %c14_653 = arith.constant 14 : index
    %c0_654 = arith.constant 0 : index
    %c0_655 = arith.constant 0 : index
    %353 = vector.load %arg1[%c0_652, %c14_653, %c0_654, %c0_655] : memref<1x18x18x8xbf16, #tpu.memory_space<vmem>>, vector<1x1x16x8xbf16>
    %354 = vector.shape_cast %353 : vector<1x1x16x8xbf16> to vector<16x8xbf16>
    %c192_656 = arith.constant 192 : index
    %c0_657 = arith.constant 0 : index
    %355 = vector.load %arg5[%c192_656, %c0_657] : memref<256x8xbf16, #tpu.memory_space<vmem>>, vector<16x8xbf16>
    tpu.vector_store %arg5[%c192_656, %c0_657], %354 {strides = array<i32>} : memref<256x8xbf16, #tpu.memory_space<vmem>>, vector<16x8xbf16>,
    %c0_658 = arith.constant 0 : index
    %c15_659 = arith.constant 15 : index
    %c0_660 = arith.constant 0 : index
    %c0_661 = arith.constant 0 : index
    %356 = vector.load %arg1[%c0_658, %c15_659, %c0_660, %c0_661] : memref<1x18x18x8xbf16, #tpu.memory_space<vmem>>, vector<1x1x16x8xbf16>
    %357 = vector.shape_cast %356 : vector<1x1x16x8xbf16> to vector<16x8xbf16>
    %c208_662 = arith.constant 208 : index
    %c0_663 = arith.constant 0 : index
    %358 = vector.load %arg5[%c208_662, %c0_663] : memref<256x8xbf16, #tpu.memory_space<vmem>>, vector<16x8xbf16>
    tpu.vector_store %arg5[%c208_662, %c0_663], %357 {strides = array<i32>} : memref<256x8xbf16, #tpu.memory_space<vmem>>, vector<16x8xbf16>,
    %c0_664 = arith.constant 0 : index
    %c16_665 = arith.constant 16 : index
    %c0_666 = arith.constant 0 : index
    %c0_667 = arith.constant 0 : index
    %359 = vector.load %arg1[%c0_664, %c16_665, %c0_666, %c0_667] : memref<1x18x18x8xbf16, #tpu.memory_space<vmem>>, vector<1x1x16x8xbf16>
    %360 = vector.shape_cast %359 : vector<1x1x16x8xbf16> to vector<16x8xbf16>
    %c224_668 = arith.constant 224 : index
    %c0_669 = arith.constant 0 : index
    %361 = vector.load %arg5[%c224_668, %c0_669] : memref<256x8xbf16, #tpu.memory_space<vmem>>, vector<16x8xbf16>
    tpu.vector_store %arg5[%c224_668, %c0_669], %360 {strides = array<i32>} : memref<256x8xbf16, #tpu.memory_space<vmem>>, vector<16x8xbf16>,
    %c0_670 = arith.constant 0 : index
    %c17 = arith.constant 17 : index
    %c0_671 = arith.constant 0 : index
    %c0_672 = arith.constant 0 : index
    %362 = vector.load %arg1[%c0_670, %c17, %c0_671, %c0_672] : memref<1x18x18x8xbf16, #tpu.memory_space<vmem>>, vector<1x1x16x8xbf16>
    %363 = vector.shape_cast %362 : vector<1x1x16x8xbf16> to vector<16x8xbf16>
    %c240_673 = arith.constant 240 : index
    %c0_674 = arith.constant 0 : index
    %364 = vector.load %arg5[%c240_673, %c0_674] : memref<256x8xbf16, #tpu.memory_space<vmem>>, vector<16x8xbf16>
    tpu.vector_store %arg5[%c240_673, %c0_674], %363 {strides = array<i32>} : memref<256x8xbf16, #tpu.memory_space<vmem>>, vector<16x8xbf16>,
    %c0_675 = arith.constant 0 : index
    %c0_676 = arith.constant 0 : index
    %365 = vector.load %arg5[%c0_675, %c0_676] : memref<256x8xbf16, #tpu.memory_space<vmem>>, vector<256x8xbf16>
    %c6_677 = arith.constant 6 : index
    %c0_678 = arith.constant 0 : index
    %c0_679 = arith.constant 0 : index
    %366 = vector.load %arg2[%c6_677, %c0_678, %c0_679] : memref<9x8x64xbf16, #tpu.memory_space<vmem>>, vector<1x8x64xbf16>
    %367 = vector.shape_cast %366 : vector<1x8x64xbf16> to vector<8x64xbf16>
    %cst_680 = arith.constant dense<0.000000e+00> : vector<256x64xf32>
    %368 = tpu.matmul %365, %367, %cst_680 {dimension_numbers = #tpu.dot_dimension_numbers<[1], [0], [0], [1], [0, 0, 1, 1], [], []>} : vector<256x8xbf16>, vector<8x64xbf16>, vector<256x64xf32> -> vector<256x64xf32>
    %369 = arith.addf %316, %368 : vector<256x64xf32>
    %c0_681 = arith.constant 0 : index
    %c2_682 = arith.constant 2 : index
    %c1_683 = arith.constant 1 : index
    %c0_684 = arith.constant 0 : index
    %370 = vector.load %arg1[%c0_681, %c2_682, %c1_683, %c0_684] : memref<1x18x18x8xbf16, #tpu.memory_space<vmem>>, vector<1x1x16x8xbf16>
    %371 = vector.shape_cast %370 : vector<1x1x16x8xbf16> to vector<16x8xbf16>
    %c0_685 = arith.constant 0 : index
    %c0_686 = arith.constant 0 : index
    %372 = vector.load %arg5[%c0_685, %c0_686] : memref<256x8xbf16, #tpu.memory_space<vmem>>, vector<16x8xbf16>
    tpu.vector_store %arg5[%c0_685, %c0_686], %371 {strides = array<i32>} : memref<256x8xbf16, #tpu.memory_space<vmem>>, vector<16x8xbf16>,
    %c0_687 = arith.constant 0 : index
    %c3_688 = arith.constant 3 : index
    %c1_689 = arith.constant 1 : index
    %c0_690 = arith.constant 0 : index
    %373 = vector.load %arg1[%c0_687, %c3_688, %c1_689, %c0_690] : memref<1x18x18x8xbf16, #tpu.memory_space<vmem>>, vector<1x1x16x8xbf16>
    %374 = vector.shape_cast %373 : vector<1x1x16x8xbf16> to vector<16x8xbf16>
    %c16_691 = arith.constant 16 : index
    %c0_692 = arith.constant 0 : index
    %375 = vector.load %arg5[%c16_691, %c0_692] : memref<256x8xbf16, #tpu.memory_space<vmem>>, vector<16x8xbf16>
    tpu.vector_store %arg5[%c16_691, %c0_692], %374 {strides = array<i32>} : memref<256x8xbf16, #tpu.memory_space<vmem>>, vector<16x8xbf16>,
    %c0_693 = arith.constant 0 : index
    %c4_694 = arith.constant 4 : index
    %c1_695 = arith.constant 1 : index
    %c0_696 = arith.constant 0 : index
    %376 = vector.load %arg1[%c0_693, %c4_694, %c1_695, %c0_696] : memref<1x18x18x8xbf16, #tpu.memory_space<vmem>>, vector<1x1x16x8xbf16>
    %377 = vector.shape_cast %376 : vector<1x1x16x8xbf16> to vector<16x8xbf16>
    %c32_697 = arith.constant 32 : index
    %c0_698 = arith.constant 0 : index
    %378 = vector.load %arg5[%c32_697, %c0_698] : memref<256x8xbf16, #tpu.memory_space<vmem>>, vector<16x8xbf16>
    tpu.vector_store %arg5[%c32_697, %c0_698], %377 {strides = array<i32>} : memref<256x8xbf16, #tpu.memory_space<vmem>>, vector<16x8xbf16>,
    %c0_699 = arith.constant 0 : index
    %c5_700 = arith.constant 5 : index
    %c1_701 = arith.constant 1 : index
    %c0_702 = arith.constant 0 : index
    %379 = vector.load %arg1[%c0_699, %c5_700, %c1_701, %c0_702] : memref<1x18x18x8xbf16, #tpu.memory_space<vmem>>, vector<1x1x16x8xbf16>
    %380 = vector.shape_cast %379 : vector<1x1x16x8xbf16> to vector<16x8xbf16>
    %c48_703 = arith.constant 48 : index
    %c0_704 = arith.constant 0 : index
    %381 = vector.load %arg5[%c48_703, %c0_704] : memref<256x8xbf16, #tpu.memory_space<vmem>>, vector<16x8xbf16>
    tpu.vector_store %arg5[%c48_703, %c0_704], %380 {strides = array<i32>} : memref<256x8xbf16, #tpu.memory_space<vmem>>, vector<16x8xbf16>,
    %c0_705 = arith.constant 0 : index
    %c6_706 = arith.constant 6 : index
    %c1_707 = arith.constant 1 : index
    %c0_708 = arith.constant 0 : index
    %382 = vector.load %arg1[%c0_705, %c6_706, %c1_707, %c0_708] : memref<1x18x18x8xbf16, #tpu.memory_space<vmem>>, vector<1x1x16x8xbf16>
    %383 = vector.shape_cast %382 : vector<1x1x16x8xbf16> to vector<16x8xbf16>
    %c64_709 = arith.constant 64 : index
    %c0_710 = arith.constant 0 : index
    %384 = vector.load %arg5[%c64_709, %c0_710] : memref<256x8xbf16, #tpu.memory_space<vmem>>, vector<16x8xbf16>
    tpu.vector_store %arg5[%c64_709, %c0_710], %383 {strides = array<i32>} : memref<256x8xbf16, #tpu.memory_space<vmem>>, vector<16x8xbf16>,
    %c0_711 = arith.constant 0 : index
    %c7_712 = arith.constant 7 : index
    %c1_713 = arith.constant 1 : index
    %c0_714 = arith.constant 0 : index
    %385 = vector.load %arg1[%c0_711, %c7_712, %c1_713, %c0_714] : memref<1x18x18x8xbf16, #tpu.memory_space<vmem>>, vector<1x1x16x8xbf16>
    %386 = vector.shape_cast %385 : vector<1x1x16x8xbf16> to vector<16x8xbf16>
    %c80_715 = arith.constant 80 : index
    %c0_716 = arith.constant 0 : index
    %387 = vector.load %arg5[%c80_715, %c0_716] : memref<256x8xbf16, #tpu.memory_space<vmem>>, vector<16x8xbf16>
    tpu.vector_store %arg5[%c80_715, %c0_716], %386 {strides = array<i32>} : memref<256x8xbf16, #tpu.memory_space<vmem>>, vector<16x8xbf16>,
    %c0_717 = arith.constant 0 : index
    %c8_718 = arith.constant 8 : index
    %c1_719 = arith.constant 1 : index
    %c0_720 = arith.constant 0 : index
    %388 = vector.load %arg1[%c0_717, %c8_718, %c1_719, %c0_720] : memref<1x18x18x8xbf16, #tpu.memory_space<vmem>>, vector<1x1x16x8xbf16>
    %389 = vector.shape_cast %388 : vector<1x1x16x8xbf16> to vector<16x8xbf16>
    %c96_721 = arith.constant 96 : index
    %c0_722 = arith.constant 0 : index
    %390 = vector.load %arg5[%c96_721, %c0_722] : memref<256x8xbf16, #tpu.memory_space<vmem>>, vector<16x8xbf16>
    tpu.vector_store %arg5[%c96_721, %c0_722], %389 {strides = array<i32>} : memref<256x8xbf16, #tpu.memory_space<vmem>>, vector<16x8xbf16>,
    %c0_723 = arith.constant 0 : index
    %c9_724 = arith.constant 9 : index
    %c1_725 = arith.constant 1 : index
    %c0_726 = arith.constant 0 : index
    %391 = vector.load %arg1[%c0_723, %c9_724, %c1_725, %c0_726] : memref<1x18x18x8xbf16, #tpu.memory_space<vmem>>, vector<1x1x16x8xbf16>
    %392 = vector.shape_cast %391 : vector<1x1x16x8xbf16> to vector<16x8xbf16>
    %c112_727 = arith.constant 112 : index
    %c0_728 = arith.constant 0 : index
    %393 = vector.load %arg5[%c112_727, %c0_728] : memref<256x8xbf16, #tpu.memory_space<vmem>>, vector<16x8xbf16>
    tpu.vector_store %arg5[%c112_727, %c0_728], %392 {strides = array<i32>} : memref<256x8xbf16, #tpu.memory_space<vmem>>, vector<16x8xbf16>,
    %c0_729 = arith.constant 0 : index
    %c10_730 = arith.constant 10 : index
    %c1_731 = arith.constant 1 : index
    %c0_732 = arith.constant 0 : index
    %394 = vector.load %arg1[%c0_729, %c10_730, %c1_731, %c0_732] : memref<1x18x18x8xbf16, #tpu.memory_space<vmem>>, vector<1x1x16x8xbf16>
    %395 = vector.shape_cast %394 : vector<1x1x16x8xbf16> to vector<16x8xbf16>
    %c128_733 = arith.constant 128 : index
    %c0_734 = arith.constant 0 : index
    %396 = vector.load %arg5[%c128_733, %c0_734] : memref<256x8xbf16, #tpu.memory_space<vmem>>, vector<16x8xbf16>
    tpu.vector_store %arg5[%c128_733, %c0_734], %395 {strides = array<i32>} : memref<256x8xbf16, #tpu.memory_space<vmem>>, vector<16x8xbf16>,
    %c0_735 = arith.constant 0 : index
    %c11_736 = arith.constant 11 : index
    %c1_737 = arith.constant 1 : index
    %c0_738 = arith.constant 0 : index
    %397 = vector.load %arg1[%c0_735, %c11_736, %c1_737, %c0_738] : memref<1x18x18x8xbf16, #tpu.memory_space<vmem>>, vector<1x1x16x8xbf16>
    %398 = vector.shape_cast %397 : vector<1x1x16x8xbf16> to vector<16x8xbf16>
    %c144_739 = arith.constant 144 : index
    %c0_740 = arith.constant 0 : index
    %399 = vector.load %arg5[%c144_739, %c0_740] : memref<256x8xbf16, #tpu.memory_space<vmem>>, vector<16x8xbf16>
    tpu.vector_store %arg5[%c144_739, %c0_740], %398 {strides = array<i32>} : memref<256x8xbf16, #tpu.memory_space<vmem>>, vector<16x8xbf16>,
    %c0_741 = arith.constant 0 : index
    %c12_742 = arith.constant 12 : index
    %c1_743 = arith.constant 1 : index
    %c0_744 = arith.constant 0 : index
    %400 = vector.load %arg1[%c0_741, %c12_742, %c1_743, %c0_744] : memref<1x18x18x8xbf16, #tpu.memory_space<vmem>>, vector<1x1x16x8xbf16>
    %401 = vector.shape_cast %400 : vector<1x1x16x8xbf16> to vector<16x8xbf16>
    %c160_745 = arith.constant 160 : index
    %c0_746 = arith.constant 0 : index
    %402 = vector.load %arg5[%c160_745, %c0_746] : memref<256x8xbf16, #tpu.memory_space<vmem>>, vector<16x8xbf16>
    tpu.vector_store %arg5[%c160_745, %c0_746], %401 {strides = array<i32>} : memref<256x8xbf16, #tpu.memory_space<vmem>>, vector<16x8xbf16>,
    %c0_747 = arith.constant 0 : index
    %c13_748 = arith.constant 13 : index
    %c1_749 = arith.constant 1 : index
    %c0_750 = arith.constant 0 : index
    %403 = vector.load %arg1[%c0_747, %c13_748, %c1_749, %c0_750] : memref<1x18x18x8xbf16, #tpu.memory_space<vmem>>, vector<1x1x16x8xbf16>
    %404 = vector.shape_cast %403 : vector<1x1x16x8xbf16> to vector<16x8xbf16>
    %c176_751 = arith.constant 176 : index
    %c0_752 = arith.constant 0 : index
    %405 = vector.load %arg5[%c176_751, %c0_752] : memref<256x8xbf16, #tpu.memory_space<vmem>>, vector<16x8xbf16>
    tpu.vector_store %arg5[%c176_751, %c0_752], %404 {strides = array<i32>} : memref<256x8xbf16, #tpu.memory_space<vmem>>, vector<16x8xbf16>,
    %c0_753 = arith.constant 0 : index
    %c14_754 = arith.constant 14 : index
    %c1_755 = arith.constant 1 : index
    %c0_756 = arith.constant 0 : index
    %406 = vector.load %arg1[%c0_753, %c14_754, %c1_755, %c0_756] : memref<1x18x18x8xbf16, #tpu.memory_space<vmem>>, vector<1x1x16x8xbf16>
    %407 = vector.shape_cast %406 : vector<1x1x16x8xbf16> to vector<16x8xbf16>
    %c192_757 = arith.constant 192 : index
    %c0_758 = arith.constant 0 : index
    %408 = vector.load %arg5[%c192_757, %c0_758] : memref<256x8xbf16, #tpu.memory_space<vmem>>, vector<16x8xbf16>
    tpu.vector_store %arg5[%c192_757, %c0_758], %407 {strides = array<i32>} : memref<256x8xbf16, #tpu.memory_space<vmem>>, vector<16x8xbf16>,
    %c0_759 = arith.constant 0 : index
    %c15_760 = arith.constant 15 : index
    %c1_761 = arith.constant 1 : index
    %c0_762 = arith.constant 0 : index
    %409 = vector.load %arg1[%c0_759, %c15_760, %c1_761, %c0_762] : memref<1x18x18x8xbf16, #tpu.memory_space<vmem>>, vector<1x1x16x8xbf16>
    %410 = vector.shape_cast %409 : vector<1x1x16x8xbf16> to vector<16x8xbf16>
    %c208_763 = arith.constant 208 : index
    %c0_764 = arith.constant 0 : index
    %411 = vector.load %arg5[%c208_763, %c0_764] : memref<256x8xbf16, #tpu.memory_space<vmem>>, vector<16x8xbf16>
    tpu.vector_store %arg5[%c208_763, %c0_764], %410 {strides = array<i32>} : memref<256x8xbf16, #tpu.memory_space<vmem>>, vector<16x8xbf16>,
    %c0_765 = arith.constant 0 : index
    %c16_766 = arith.constant 16 : index
    %c1_767 = arith.constant 1 : index
    %c0_768 = arith.constant 0 : index
    %412 = vector.load %arg1[%c0_765, %c16_766, %c1_767, %c0_768] : memref<1x18x18x8xbf16, #tpu.memory_space<vmem>>, vector<1x1x16x8xbf16>
    %413 = vector.shape_cast %412 : vector<1x1x16x8xbf16> to vector<16x8xbf16>
    %c224_769 = arith.constant 224 : index
    %c0_770 = arith.constant 0 : index
    %414 = vector.load %arg5[%c224_769, %c0_770] : memref<256x8xbf16, #tpu.memory_space<vmem>>, vector<16x8xbf16>
    tpu.vector_store %arg5[%c224_769, %c0_770], %413 {strides = array<i32>} : memref<256x8xbf16, #tpu.memory_space<vmem>>, vector<16x8xbf16>,
    %c0_771 = arith.constant 0 : index
    %c17_772 = arith.constant 17 : index
    %c1_773 = arith.constant 1 : index
    %c0_774 = arith.constant 0 : index
    %415 = vector.load %arg1[%c0_771, %c17_772, %c1_773, %c0_774] : memref<1x18x18x8xbf16, #tpu.memory_space<vmem>>, vector<1x1x16x8xbf16>
    %416 = vector.shape_cast %415 : vector<1x1x16x8xbf16> to vector<16x8xbf16>
    %c240_775 = arith.constant 240 : index
    %c0_776 = arith.constant 0 : index
    %417 = vector.load %arg5[%c240_775, %c0_776] : memref<256x8xbf16, #tpu.memory_space<vmem>>, vector<16x8xbf16>
    tpu.vector_store %arg5[%c240_775, %c0_776], %416 {strides = array<i32>} : memref<256x8xbf16, #tpu.memory_space<vmem>>, vector<16x8xbf16>,
    %c0_777 = arith.constant 0 : index
    %c0_778 = arith.constant 0 : index
    %418 = vector.load %arg5[%c0_777, %c0_778] : memref<256x8xbf16, #tpu.memory_space<vmem>>, vector<256x8xbf16>
    %c7_779 = arith.constant 7 : index
    %c0_780 = arith.constant 0 : index
    %c0_781 = arith.constant 0 : index
    %419 = vector.load %arg2[%c7_779, %c0_780, %c0_781] : memref<9x8x64xbf16, #tpu.memory_space<vmem>>, vector<1x8x64xbf16>
    %420 = vector.shape_cast %419 : vector<1x8x64xbf16> to vector<8x64xbf16>
    %cst_782 = arith.constant dense<0.000000e+00> : vector<256x64xf32>
    %421 = tpu.matmul %418, %420, %cst_782 {dimension_numbers = #tpu.dot_dimension_numbers<[1], [0], [0], [1], [0, 0, 1, 1], [], []>} : vector<256x8xbf16>, vector<8x64xbf16>, vector<256x64xf32> -> vector<256x64xf32>
    %422 = arith.addf %369, %421 : vector<256x64xf32>
    %c0_783 = arith.constant 0 : index
    %c2_784 = arith.constant 2 : index
    %c2_785 = arith.constant 2 : index
    %c0_786 = arith.constant 0 : index
    %423 = vector.load %arg1[%c0_783, %c2_784, %c2_785, %c0_786] : memref<1x18x18x8xbf16, #tpu.memory_space<vmem>>, vector<1x1x16x8xbf16>
    %424 = vector.shape_cast %423 : vector<1x1x16x8xbf16> to vector<16x8xbf16>
    %c0_787 = arith.constant 0 : index
    %c0_788 = arith.constant 0 : index
    %425 = vector.load %arg5[%c0_787, %c0_788] : memref<256x8xbf16, #tpu.memory_space<vmem>>, vector<16x8xbf16>
    tpu.vector_store %arg5[%c0_787, %c0_788], %424 {strides = array<i32>} : memref<256x8xbf16, #tpu.memory_space<vmem>>, vector<16x8xbf16>,
    %c0_789 = arith.constant 0 : index
    %c3_790 = arith.constant 3 : index
    %c2_791 = arith.constant 2 : index
    %c0_792 = arith.constant 0 : index
    %426 = vector.load %arg1[%c0_789, %c3_790, %c2_791, %c0_792] : memref<1x18x18x8xbf16, #tpu.memory_space<vmem>>, vector<1x1x16x8xbf16>
    %427 = vector.shape_cast %426 : vector<1x1x16x8xbf16> to vector<16x8xbf16>
    %c16_793 = arith.constant 16 : index
    %c0_794 = arith.constant 0 : index
    %428 = vector.load %arg5[%c16_793, %c0_794] : memref<256x8xbf16, #tpu.memory_space<vmem>>, vector<16x8xbf16>
    tpu.vector_store %arg5[%c16_793, %c0_794], %427 {strides = array<i32>} : memref<256x8xbf16, #tpu.memory_space<vmem>>, vector<16x8xbf16>,
    %c0_795 = arith.constant 0 : index
    %c4_796 = arith.constant 4 : index
    %c2_797 = arith.constant 2 : index
    %c0_798 = arith.constant 0 : index
    %429 = vector.load %arg1[%c0_795, %c4_796, %c2_797, %c0_798] : memref<1x18x18x8xbf16, #tpu.memory_space<vmem>>, vector<1x1x16x8xbf16>
    %430 = vector.shape_cast %429 : vector<1x1x16x8xbf16> to vector<16x8xbf16>
    %c32_799 = arith.constant 32 : index
    %c0_800 = arith.constant 0 : index
    %431 = vector.load %arg5[%c32_799, %c0_800] : memref<256x8xbf16, #tpu.memory_space<vmem>>, vector<16x8xbf16>
    tpu.vector_store %arg5[%c32_799, %c0_800], %430 {strides = array<i32>} : memref<256x8xbf16, #tpu.memory_space<vmem>>, vector<16x8xbf16>,
    %c0_801 = arith.constant 0 : index
    %c5_802 = arith.constant 5 : index
    %c2_803 = arith.constant 2 : index
    %c0_804 = arith.constant 0 : index
    %432 = vector.load %arg1[%c0_801, %c5_802, %c2_803, %c0_804] : memref<1x18x18x8xbf16, #tpu.memory_space<vmem>>, vector<1x1x16x8xbf16>
    %433 = vector.shape_cast %432 : vector<1x1x16x8xbf16> to vector<16x8xbf16>
    %c48_805 = arith.constant 48 : index
    %c0_806 = arith.constant 0 : index
    %434 = vector.load %arg5[%c48_805, %c0_806] : memref<256x8xbf16, #tpu.memory_space<vmem>>, vector<16x8xbf16>
    tpu.vector_store %arg5[%c48_805, %c0_806], %433 {strides = array<i32>} : memref<256x8xbf16, #tpu.memory_space<vmem>>, vector<16x8xbf16>,
    %c0_807 = arith.constant 0 : index
    %c6_808 = arith.constant 6 : index
    %c2_809 = arith.constant 2 : index
    %c0_810 = arith.constant 0 : index
    %435 = vector.load %arg1[%c0_807, %c6_808, %c2_809, %c0_810] : memref<1x18x18x8xbf16, #tpu.memory_space<vmem>>, vector<1x1x16x8xbf16>
    %436 = vector.shape_cast %435 : vector<1x1x16x8xbf16> to vector<16x8xbf16>
    %c64_811 = arith.constant 64 : index
    %c0_812 = arith.constant 0 : index
    %437 = vector.load %arg5[%c64_811, %c0_812] : memref<256x8xbf16, #tpu.memory_space<vmem>>, vector<16x8xbf16>
    tpu.vector_store %arg5[%c64_811, %c0_812], %436 {strides = array<i32>} : memref<256x8xbf16, #tpu.memory_space<vmem>>, vector<16x8xbf16>,
    %c0_813 = arith.constant 0 : index
    %c7_814 = arith.constant 7 : index
    %c2_815 = arith.constant 2 : index
    %c0_816 = arith.constant 0 : index
    %438 = vector.load %arg1[%c0_813, %c7_814, %c2_815, %c0_816] : memref<1x18x18x8xbf16, #tpu.memory_space<vmem>>, vector<1x1x16x8xbf16>
    %439 = vector.shape_cast %438 : vector<1x1x16x8xbf16> to vector<16x8xbf16>
    %c80_817 = arith.constant 80 : index
    %c0_818 = arith.constant 0 : index
    %440 = vector.load %arg5[%c80_817, %c0_818] : memref<256x8xbf16, #tpu.memory_space<vmem>>, vector<16x8xbf16>
    tpu.vector_store %arg5[%c80_817, %c0_818], %439 {strides = array<i32>} : memref<256x8xbf16, #tpu.memory_space<vmem>>, vector<16x8xbf16>,
    %c0_819 = arith.constant 0 : index
    %c8_820 = arith.constant 8 : index
    %c2_821 = arith.constant 2 : index
    %c0_822 = arith.constant 0 : index
    %441 = vector.load %arg1[%c0_819, %c8_820, %c2_821, %c0_822] : memref<1x18x18x8xbf16, #tpu.memory_space<vmem>>, vector<1x1x16x8xbf16>
    %442 = vector.shape_cast %441 : vector<1x1x16x8xbf16> to vector<16x8xbf16>
    %c96_823 = arith.constant 96 : index
    %c0_824 = arith.constant 0 : index
    %443 = vector.load %arg5[%c96_823, %c0_824] : memref<256x8xbf16, #tpu.memory_space<vmem>>, vector<16x8xbf16>
    tpu.vector_store %arg5[%c96_823, %c0_824], %442 {strides = array<i32>} : memref<256x8xbf16, #tpu.memory_space<vmem>>, vector<16x8xbf16>,
    %c0_825 = arith.constant 0 : index
    %c9_826 = arith.constant 9 : index
    %c2_827 = arith.constant 2 : index
    %c0_828 = arith.constant 0 : index
    %444 = vector.load %arg1[%c0_825, %c9_826, %c2_827, %c0_828] : memref<1x18x18x8xbf16, #tpu.memory_space<vmem>>, vector<1x1x16x8xbf16>
    %445 = vector.shape_cast %444 : vector<1x1x16x8xbf16> to vector<16x8xbf16>
    %c112_829 = arith.constant 112 : index
    %c0_830 = arith.constant 0 : index
    %446 = vector.load %arg5[%c112_829, %c0_830] : memref<256x8xbf16, #tpu.memory_space<vmem>>, vector<16x8xbf16>
    tpu.vector_store %arg5[%c112_829, %c0_830], %445 {strides = array<i32>} : memref<256x8xbf16, #tpu.memory_space<vmem>>, vector<16x8xbf16>,
    %c0_831 = arith.constant 0 : index
    %c10_832 = arith.constant 10 : index
    %c2_833 = arith.constant 2 : index
    %c0_834 = arith.constant 0 : index
    %447 = vector.load %arg1[%c0_831, %c10_832, %c2_833, %c0_834] : memref<1x18x18x8xbf16, #tpu.memory_space<vmem>>, vector<1x1x16x8xbf16>
    %448 = vector.shape_cast %447 : vector<1x1x16x8xbf16> to vector<16x8xbf16>
    %c128_835 = arith.constant 128 : index
    %c0_836 = arith.constant 0 : index
    %449 = vector.load %arg5[%c128_835, %c0_836] : memref<256x8xbf16, #tpu.memory_space<vmem>>, vector<16x8xbf16>
    tpu.vector_store %arg5[%c128_835, %c0_836], %448 {strides = array<i32>} : memref<256x8xbf16, #tpu.memory_space<vmem>>, vector<16x8xbf16>,
    %c0_837 = arith.constant 0 : index
    %c11_838 = arith.constant 11 : index
    %c2_839 = arith.constant 2 : index
    %c0_840 = arith.constant 0 : index
    %450 = vector.load %arg1[%c0_837, %c11_838, %c2_839, %c0_840] : memref<1x18x18x8xbf16, #tpu.memory_space<vmem>>, vector<1x1x16x8xbf16>
    %451 = vector.shape_cast %450 : vector<1x1x16x8xbf16> to vector<16x8xbf16>
    %c144_841 = arith.constant 144 : index
    %c0_842 = arith.constant 0 : index
    %452 = vector.load %arg5[%c144_841, %c0_842] : memref<256x8xbf16, #tpu.memory_space<vmem>>, vector<16x8xbf16>
    tpu.vector_store %arg5[%c144_841, %c0_842], %451 {strides = array<i32>} : memref<256x8xbf16, #tpu.memory_space<vmem>>, vector<16x8xbf16>,
    %c0_843 = arith.constant 0 : index
    %c12_844 = arith.constant 12 : index
    %c2_845 = arith.constant 2 : index
    %c0_846 = arith.constant 0 : index
    %453 = vector.load %arg1[%c0_843, %c12_844, %c2_845, %c0_846] : memref<1x18x18x8xbf16, #tpu.memory_space<vmem>>, vector<1x1x16x8xbf16>
    %454 = vector.shape_cast %453 : vector<1x1x16x8xbf16> to vector<16x8xbf16>
    %c160_847 = arith.constant 160 : index
    %c0_848 = arith.constant 0 : index
    %455 = vector.load %arg5[%c160_847, %c0_848] : memref<256x8xbf16, #tpu.memory_space<vmem>>, vector<16x8xbf16>
    tpu.vector_store %arg5[%c160_847, %c0_848], %454 {strides = array<i32>} : memref<256x8xbf16, #tpu.memory_space<vmem>>, vector<16x8xbf16>,
    %c0_849 = arith.constant 0 : index
    %c13_850 = arith.constant 13 : index
    %c2_851 = arith.constant 2 : index
    %c0_852 = arith.constant 0 : index
    %456 = vector.load %arg1[%c0_849, %c13_850, %c2_851, %c0_852] : memref<1x18x18x8xbf16, #tpu.memory_space<vmem>>, vector<1x1x16x8xbf16>
    %457 = vector.shape_cast %456 : vector<1x1x16x8xbf16> to vector<16x8xbf16>
    %c176_853 = arith.constant 176 : index
    %c0_854 = arith.constant 0 : index
    %458 = vector.load %arg5[%c176_853, %c0_854] : memref<256x8xbf16, #tpu.memory_space<vmem>>, vector<16x8xbf16>
    tpu.vector_store %arg5[%c176_853, %c0_854], %457 {strides = array<i32>} : memref<256x8xbf16, #tpu.memory_space<vmem>>, vector<16x8xbf16>,
    %c0_855 = arith.constant 0 : index
    %c14_856 = arith.constant 14 : index
    %c2_857 = arith.constant 2 : index
    %c0_858 = arith.constant 0 : index
    %459 = vector.load %arg1[%c0_855, %c14_856, %c2_857, %c0_858] : memref<1x18x18x8xbf16, #tpu.memory_space<vmem>>, vector<1x1x16x8xbf16>
    %460 = vector.shape_cast %459 : vector<1x1x16x8xbf16> to vector<16x8xbf16>
    %c192_859 = arith.constant 192 : index
    %c0_860 = arith.constant 0 : index
    %461 = vector.load %arg5[%c192_859, %c0_860] : memref<256x8xbf16, #tpu.memory_space<vmem>>, vector<16x8xbf16>
    tpu.vector_store %arg5[%c192_859, %c0_860], %460 {strides = array<i32>} : memref<256x8xbf16, #tpu.memory_space<vmem>>, vector<16x8xbf16>,
    %c0_861 = arith.constant 0 : index
    %c15_862 = arith.constant 15 : index
    %c2_863 = arith.constant 2 : index
    %c0_864 = arith.constant 0 : index
    %462 = vector.load %arg1[%c0_861, %c15_862, %c2_863, %c0_864] : memref<1x18x18x8xbf16, #tpu.memory_space<vmem>>, vector<1x1x16x8xbf16>
    %463 = vector.shape_cast %462 : vector<1x1x16x8xbf16> to vector<16x8xbf16>
    %c208_865 = arith.constant 208 : index
    %c0_866 = arith.constant 0 : index
    %464 = vector.load %arg5[%c208_865, %c0_866] : memref<256x8xbf16, #tpu.memory_space<vmem>>, vector<16x8xbf16>
    tpu.vector_store %arg5[%c208_865, %c0_866], %463 {strides = array<i32>} : memref<256x8xbf16, #tpu.memory_space<vmem>>, vector<16x8xbf16>,
    %c0_867 = arith.constant 0 : index
    %c16_868 = arith.constant 16 : index
    %c2_869 = arith.constant 2 : index
    %c0_870 = arith.constant 0 : index
    %465 = vector.load %arg1[%c0_867, %c16_868, %c2_869, %c0_870] : memref<1x18x18x8xbf16, #tpu.memory_space<vmem>>, vector<1x1x16x8xbf16>
    %466 = vector.shape_cast %465 : vector<1x1x16x8xbf16> to vector<16x8xbf16>
    %c224_871 = arith.constant 224 : index
    %c0_872 = arith.constant 0 : index
    %467 = vector.load %arg5[%c224_871, %c0_872] : memref<256x8xbf16, #tpu.memory_space<vmem>>, vector<16x8xbf16>
    tpu.vector_store %arg5[%c224_871, %c0_872], %466 {strides = array<i32>} : memref<256x8xbf16, #tpu.memory_space<vmem>>, vector<16x8xbf16>,
    %c0_873 = arith.constant 0 : index
    %c17_874 = arith.constant 17 : index
    %c2_875 = arith.constant 2 : index
    %c0_876 = arith.constant 0 : index
    %468 = vector.load %arg1[%c0_873, %c17_874, %c2_875, %c0_876] : memref<1x18x18x8xbf16, #tpu.memory_space<vmem>>, vector<1x1x16x8xbf16>
    %469 = vector.shape_cast %468 : vector<1x1x16x8xbf16> to vector<16x8xbf16>
    %c240_877 = arith.constant 240 : index
    %c0_878 = arith.constant 0 : index
    %470 = vector.load %arg5[%c240_877, %c0_878] : memref<256x8xbf16, #tpu.memory_space<vmem>>, vector<16x8xbf16>
    tpu.vector_store %arg5[%c240_877, %c0_878], %469 {strides = array<i32>} : memref<256x8xbf16, #tpu.memory_space<vmem>>, vector<16x8xbf16>,
    %c0_879 = arith.constant 0 : index
    %c0_880 = arith.constant 0 : index
    %471 = vector.load %arg5[%c0_879, %c0_880] : memref<256x8xbf16, #tpu.memory_space<vmem>>, vector<256x8xbf16>
    %c8_881 = arith.constant 8 : index
    %c0_882 = arith.constant 0 : index
    %c0_883 = arith.constant 0 : index
    %472 = vector.load %arg2[%c8_881, %c0_882, %c0_883] : memref<9x8x64xbf16, #tpu.memory_space<vmem>>, vector<1x8x64xbf16>
    %473 = vector.shape_cast %472 : vector<1x8x64xbf16> to vector<8x64xbf16>
    %cst_884 = arith.constant dense<0.000000e+00> : vector<256x64xf32>
    %474 = tpu.matmul %471, %473, %cst_884 {dimension_numbers = #tpu.dot_dimension_numbers<[1], [0], [0], [1], [0, 0, 1, 1], [], []>} : vector<256x8xbf16>, vector<8x64xbf16>, vector<256x64xf32> -> vector<256x64xf32>
    %475 = arith.addf %422, %474 : vector<256x64xf32>
    %c0_885 = arith.constant 0 : index
    %c0_886 = arith.constant 0 : index
    %476 = vector.load %arg3[%c0_885, %c0_886] : memref<1x64xf32, #tpu.memory_space<vmem>>, vector<1x64xf32>
    %477 = vector.broadcast %476 : vector<1x64xf32> to vector<256x64xf32>
    %478 = arith.addf %475, %477 : vector<256x64xf32>
    %cst_887 = arith.constant 0.000000e+00 : f32
    %479 = vector.broadcast %cst_887 : f32 to vector<256x64xf32>
    %480 = arith.maximumf %478, %479 : vector<256x64xf32>
    %481 = arith.truncf %480 : vector<256x64xf32> to vector<256x64xbf16>
    %c0_888 = arith.constant 0 : index
    %c0_889 = arith.constant 0 : index
    %c0_890 = arith.constant 0 : index
    %482 = vector.load %arg4[%c0_888, %c0_889, %c0_890] : memref<1x256x64xbf16, #tpu.memory_space<vmem>>, vector<1x256x64xbf16>
    %483 = vector.shape_cast %482 : vector<1x256x64xbf16> to vector<256x64xbf16>
    %484 = vector.shape_cast %481 : vector<256x64xbf16> to vector<1x256x64xbf16>
    tpu.vector_store %arg4[%c0_888, %c0_889, %c0_890], %484 {strides = array<i32>} : memref<1x256x64xbf16, #tpu.memory_space<vmem>>, vector<1x256x64xbf16>,
    return
  }
  func.func @transform_0(%arg0: i32) -> (i32, i32, i32, i32) {
    %c0_i32 = arith.constant 0 : i32
    %c0_i32_0 = arith.constant 0 : i32
    %c0_i32_1 = arith.constant 0 : i32
    %c0_i32_2 = arith.constant 0 : i32
    return %arg0, %c0_i32, %c0_i32_0, %c0_i32_1 : i32, i32, i32, i32
  }
  func.func @transform_1(%arg0: i32) -> (i32, i32, i32) {
    %c0_i32 = arith.constant 0 : i32
    %c0_i32_0 = arith.constant 0 : i32
    %c0_i32_1 = arith.constant 0 : i32
    %c0_i32_2 = arith.constant 0 : i32
    return %c0_i32, %c0_i32_0, %c0_i32_1 : i32, i32, i32
  }
  func.func @transform_2(%arg0: i32) -> (i32, i32) {
    %c0_i32 = arith.constant 0 : i32
    %c0_i32_0 = arith.constant 0 : i32
    %c0_i32_1 = arith.constant 0 : i32
    return %c0_i32, %c0_i32_0 : i32, i32
  }
  func.func @transform_3(%arg0: i32) -> (i32, i32, i32) {
    %c0_i32 = arith.constant 0 : i32
    %c0_i32_0 = arith.constant 0 : i32
    %c0_i32_1 = arith.constant 0 : i32
    return %arg0, %c0_i32, %c0_i32_0 : i32, i32, i32
  }
}

</mosaic_0001>

<llo_original>
// kernel: tpu_custom_call.1
$region0: #{tpu_custom_call.1}
  #allocation0 [shape = 'u32[]', space=smem, size = 0x4, offset = 0x4, fixed_abs, tag = 'smem constant byte address 0x4 - core index']
  #allocation1 [shape = 'u32[144,128]{1,0:T(1,128)}', space=vmem, size = 0x12000, scoped, tag = 'internal scratch']
  #allocation2 [shape = 'bf16[256,8]{1,0:T(8,128)(2,1)}', space=vmem, size = 0x10000, scoped, tag = 'scratch operand']
  %s0 = inlined_call_operand.vmem [shape: bf16[2,18,18,8], index: 0, kind: input, shape index: {}]
  %s1 = inlined_call_operand.vmem [shape: bf16[9,8,64], index: 1, kind: input, shape index: {}]
  %s2 = inlined_call_operand.vmem [shape: f32[1,64], index: 2, kind: input, shape index: {}]
  %s3 = inlined_call_operand.vmem [shape: bf16[2,256,64], index: 3, kind: output, shape index: {}]
  %s4 = sld [smem:[#allocation0]]
  $region45: #{tpu_custom_call.1} parent=0
    _
  %s6 = ssub.s32 1, %s4
  %s7 = scalar_select 0, %s6, %s4
  loop: start=0, step=1, limit=4
  $region2: #{tpu_custom_call.1} parent=0 // loop_pre_header
    _
  $region3: #{tpu_custom_call.1} parent=0 // loop_header
    %s9 = sphi 0, %s13
    %p10 = scmp.ge.s32.totalorder %s9, 4
    %s19 = sphi 0, %s21
    %s22 = sphi 0, %s19
    %s23 = sphi 0, %s22
    %s39 = sphi 0, %s23
    %s43 = sphi 0, %s43
    %s45 = sphi 0, %s43
    %s46 = sphi 0, %s45
    %s60 = sphi 0, %s46
    %s64 = sphi 0, %s64
    %s66 = sphi 0, %s64
    %s67 = sphi 0, %s66
    %s81 = sphi 0, %s67
    %s87 = sphi 0, %s89
    %s90 = sphi 0, %s87
    %s91 = sphi 0, %s90
    %s107 = sphi 0, %s91
  $region4: #{tpu_custom_call.1} parent=0 // loop_header_branch
    %12 = sbr.rel (%p10) target = $region8
  $region5: #{tpu_custom_call.1} parent=0 // loop_body
    %s14 = ssub.s32 %s9, 1
    %s15 = ssub.s32 %s9, 2
    %s16 = sadd.s32 %s9, 1
    %s17 = ssub.s32 %s9, %s16
    %p18 = scmp.eq.s32.totalorder %s17, 0
    %s20 = sadd.s32 %s19, 1
    %s21 = scalar_select %p18, %s19, %s20
    %p24 = pneg %p18
    %p25 = scmp.eq.s32.totalorder %s9, 1
    %p26 = por %p24, %p25
    %p27 = scmp.ne.s32.totalorder %s19, %s22
    %p28 = scmp.eq.s32.totalorder %s9, 0
    %p29 = por %p27, %p28
    %p30 = scmp.ne.s32.totalorder %s19, %s22
    %p31 = scmp.eq.s32.totalorder %s14, 1
    %p32 = por %p30, %p31
    %p33 = scmp.ne.s32.totalorder %s22, %s23
    %p34 = scmp.eq.s32.totalorder %s14, 0
    %p35 = por %p33, %p34
    %p36 = scmp.ne.s32.totalorder %s22, %s23
    %p37 = scmp.eq.s32.totalorder %s15, 1
    %p38 = por %p36, %p37
    %p40 = scmp.ne.s32.totalorder %s23, %s39
    %p41 = scmp.eq.s32.totalorder %s15, 0
    %p42 = por %p40, %p41
    %s44 = sadd.s32 %s43, 1
    %p47 = scmp.eq.s32.totalorder %s9, 1
    %p48 = scmp.ne.s32.totalorder %s43, %s45
    %p49 = scmp.eq.s32.totalorder %s9, 0
    %p50 = por %p48, %p49
    %p51 = scmp.ne.s32.totalorder %s43, %s45
    %p52 = scmp.eq.s32.totalorder %s14, 1
    %p53 = por %p51, %p52
    %p54 = scmp.ne.s32.totalorder %s45, %s46
    %p55 = scmp.eq.s32.totalorder %s14, 0
    %p56 = por %p54, %p55
    %p57 = scmp.ne.s32.totalorder %s45, %s46
    %p58 = scmp.eq.s32.totalorder %s15, 1
    %p59 = por %p57, %p58
    %p61 = scmp.ne.s32.totalorder %s46, %s60
    %p62 = scmp.eq.s32.totalorder %s15, 0
    %p63 = por %p61, %p62
    %s65 = sadd.s32 %s64, 1
    %p68 = scmp.eq.s32.totalorder %s9, 1
    %p69 = scmp.ne.s32.totalorder %s64, %s66
    %p70 = scmp.eq.s32.totalorder %s9, 0
    %p71 = por %p69, %p70
    %p72 = scmp.ne.s32.totalorder %s64, %s66
    %p73 = scmp.eq.s32.totalorder %s14, 1
    %p74 = por %p72, %p73
    %p75 = scmp.ne.s32.totalorder %s66, %s67
    %p76 = scmp.eq.s32.totalorder %s14, 0
    %p77 = por %p75, %p76
    %p78 = scmp.ne.s32.totalorder %s66, %s67
    %p79 = scmp.eq.s32.totalorder %s15, 1
    %p80 = por %p78, %p79
    %p82 = scmp.ne.s32.totalorder %s67, %s81
    %p83 = scmp.eq.s32.totalorder %s15, 0
    %p84 = por %p82, %p83
    %s85 = ssub.s32 %s9, %s16
    %p86 = scmp.eq.s32.totalorder %s85, 0
    %s88 = sadd.s32 %s87, 1
    %s89 = scalar_select %p86, %s87, %s88
    %p92 = pneg %p86
    %p93 = scmp.eq.s32.totalorder %s9, 1
    %p94 = por %p92, %p93
    %p95 = scmp.ne.s32.totalorder %s87, %s90
    %p96 = scmp.eq.s32.totalorder %s9, 0
    %p97 = por %p95, %p96
    %p98 = scmp.ne.s32.totalorder %s87, %s90
    %p99 = scmp.eq.s32.totalorder %s14, 1
    %p100 = por %p98, %p99
    %p101 = scmp.ne.s32.totalorder %s90, %s91
    %p102 = scmp.eq.s32.totalorder %s14, 0
    %p103 = por %p101, %p102
    %p104 = scmp.ne.s32.totalorder %s90, %s91
    %p105 = scmp.eq.s32.totalorder %s15, 1
    %p106 = por %p104, %p105
    %p108 = scmp.ne.s32.totalorder %s91, %s107
    %p109 = scmp.eq.s32.totalorder %s15, 0
    %p110 = por %p108, %p109
    %p111 = scmp.le.s32.totalorder 1, %s9
    %p112 = scmp.lt.s32.totalorder %s9, 3
    %p113 = pnand %p111, %p112
    %p114 = pneg %p113
    // Predicated region
    $region9: #{tpu_custom_call.1} parent=5 // pred_check
      _
    $region10: #{tpu_custom_call.1} parent=5 // pred_check_branch
      %116 = sbr.rel (%p113) target = $region12
    $region11: #{tpu_custom_call.1} parent=5 // pred_region
      %s117 = ssub.s32 %s9, 1
      // Predicated region
      $region13: #{tpu_custom_call.1} parent=11 // pred_check
        %p118 = pneg %p56
      $region14: #{tpu_custom_call.1} parent=11 // pred_check_branch
        %120 = sbr.rel (%p118) target = $region16
      $region15: #{tpu_custom_call.1} parent=11 // pred_region
        _
      $region16: #{tpu_custom_call.1} parent=11 // pred_fallthru
        _
      // Predicated region
      $region17: #{tpu_custom_call.1} parent=11 // pred_check
        %p121 = pneg %p77
      $region18: #{tpu_custom_call.1} parent=11 // pred_check_branch
        %123 = sbr.rel (%p121) target = $region20
      $region19: #{tpu_custom_call.1} parent=11 // pred_region
        _
      $region20: #{tpu_custom_call.1} parent=11 // pred_fallthru
        _
    $region12: #{tpu_custom_call.1} parent=5 // pred_fallthru
      _
    %p124 = scmp.lt.s32.totalorder %s9, 2
    // Predicated region
    $region21: #{tpu_custom_call.1} parent=5 // pred_check
      %p125 = pneg %p124
    $region22: #{tpu_custom_call.1} parent=5 // pred_check_branch
      %127 = sbr.rel (%p125) target = $region24
    $region23: #{tpu_custom_call.1} parent=5 // pred_region
      // Predicated region
      $region25: #{tpu_custom_call.1} parent=23 // pred_check
        %p128 = pneg %p29
      $region26: #{tpu_custom_call.1} parent=23 // pred_check_branch
        %130 = sbr.rel (%p128) target = $region28
      $region27: #{tpu_custom_call.1} parent=23 // pred_region
        %p131 = scmp.lt.s32.totalorder %s9, 1
        %s132 = scalar_select %p131, %s9, 1
        %s133 = smul.addr %s132, 54
        %s134 = smul.addr %s133, 4
        %s135 = scalar_lea.vmem %s0, %s134
      $region28: #{tpu_custom_call.1} parent=23 // pred_fallthru
        _
    $region24: #{tpu_custom_call.1} parent=5 // pred_fallthru
      _
    %p136 = scmp.le.s32.totalorder 1, %s9
    %p137 = scmp.lt.s32.totalorder %s9, 3
    %p138 = pnand %p136, %p137
    %p139 = pneg %p138
    // Predicated region
    $region29: #{tpu_custom_call.1} parent=5 // pred_check
      _
    $region30: #{tpu_custom_call.1} parent=5 // pred_check_branch
      %141 = sbr.rel (%p138) target = $region32
    $region31: #{tpu_custom_call.1} parent=5 // pred_region
      %s142 = ssub.s32 %s9, 1
      %p143 = scmp.lt.s32.totalorder %s14, 1
      %s144 = scalar_select %p143, %s14, 1
      %s145 = smul.addr %s144, 54
      %s146 = smul.addr %s145, 4
      %s147 = scalar_lea.vmem %s0, %s146
      %p148 = pneg %p35
      %p149 = pneg %p32
      %p150 = pneg %p56
      %p151 = pneg %p53
      %p152 = pneg %p77
      %p153 = pneg %p74
      %p154 = pneg %p103
      %p155 = pneg %p100
      %p156 = scmp.lt.s32.totalorder %s14, 1
      %s157 = scalar_select %p156, %s14, 1
      %s158 = smul.addr %s157, 32
      %s159 = smul.addr %s158, 4
      %s160 = scalar_lea.vmem %s3, %s159
      %p161 = scmp.lt.s32.totalorder %s14, 1
      %s162 = scalar_select %p161, %s14, 1
      %s163 = smul.addr %s162, 54
      %s164 = smul.addr %s163, 4
      %s165 = scalar_lea.vmem %s0, %s164
      %p166 = scmp.lt.s32.totalorder %s14, 1
      %s167 = scalar_select %p166, %s14, 1
      %s168 = smul.addr %s167, 32
      %s169 = smul.addr %s168, 4
      %s170 = scalar_lea.vmem %s3, %s169
      %v172 = vld [vmem:[%s165] sm:$0xf]
      %v173 = vld [vmem:[%s165 + $0x4] sm:$0xf]
      %vm174 = vcmask 60416
      %175 = vst.msk [vmem:[#allocation2] sm:$0xf] %vm174, %v172
      %176 = vst.msk [vmem:[#allocation2 + $0x4] sm:$0xf] %vm174, %v173
      %s177 = scalar_lea.vmem %s165, 12
      %v178 = vld [vmem:[%s177] sm:$0xf]
      %v179 = vld [vmem:[%s177 + $0x4] sm:$0xf]
      %180 = vst.msk [vmem:[#allocation2 + $0x8] sm:$0xf] %vm174, %v178
      %181 = vst.msk [vmem:[#allocation2 + $0xc] sm:$0xf] %vm174, %v179
      %s182 = scalar_lea.vmem %s165, 24
      %v183 = vld [vmem:[%s182] sm:$0xf]
      %v184 = vld [vmem:[%s182 + $0x4] sm:$0xf]
      %185 = vst.msk [vmem:[#allocation2 + $0x10] sm:$0xf] %vm174, %v183
      %186 = vst.msk [vmem:[#allocation2 + $0x14] sm:$0xf] %vm174, %v184
      %s187 = scalar_lea.vmem %s165, 36
      %v188 = vld [vmem:[%s187] sm:$0xf]
      %v189 = vld [vmem:[%s187 + $0x4] sm:$0xf]
      %190 = vst.msk [vmem:[#allocation2 + $0x18] sm:$0xf] %vm174, %v188
      %191 = vst.msk [vmem:[#allocation2 + $0x1c] sm:$0xf] %vm174, %v189
      %s192 = scalar_lea.vmem %s165, 48
      %v193 = vld [vmem:[%s192] sm:$0xf]
      %v194 = vld [vmem:[%s192 + $0x4] sm:$0xf]
      %195 = vst.msk [vmem:[#allocation2 + $0x20] sm:$0xf] %vm174, %v193
      %196 = vst.msk [vmem:[#allocation2 + $0x24] sm:$0xf] %vm174, %v194
      %s197 = scalar_lea.vmem %s165, 60
      %v198 = vld [vmem:[%s197] sm:$0xf]
      %v199 = vld [vmem:[%s197 + $0x4] sm:$0xf]
      %200 = vst.msk [vmem:[#allocation2 + $0x28] sm:$0xf] %vm174, %v198
      %201 = vst.msk [vmem:[#allocation2 + $0x2c] sm:$0xf] %vm174, %v199
      %s202 = scalar_lea.vmem %s165, 72
      %v203 = vld [vmem:[%s202] sm:$0xf]
      %v204 = vld [vmem:[%s202 + $0x4] sm:$0xf]
      %205 = vst.msk [vmem:[#allocation2 + $0x30] sm:$0xf] %vm174, %v203
      %206 = vst.msk [vmem:[#allocation2 + $0x34] sm:$0xf] %vm174, %v204
      %s207 = scalar_lea.vmem %s165, 84
      %v208 = vld [vmem:[%s207] sm:$0xf]
      %v209 = vld [vmem:[%s207 + $0x4] sm:$0xf]
      %210 = vst.msk [vmem:[#allocation2 + $0x38] sm:$0xf] %vm174, %v208
      %211 = vst.msk [vmem:[#allocation2 + $0x3c] sm:$0xf] %vm174, %v209
      %s212 = scalar_lea.vmem %s165, 96
      %v213 = vld [vmem:[%s212] sm:$0xf]
      %v214 = vld [vmem:[%s212 + $0x4] sm:$0xf]
      %215 = vst.msk [vmem:[#allocation2 + $0x40] sm:$0xf] %vm174, %v213
      %216 = vst.msk [vmem:[#allocation2 + $0x44] sm:$0xf] %vm174, %v214
      %s217 = scalar_lea.vmem %s165, 108
      %v218 = vld [vmem:[%s217] sm:$0xf]
      %v219 = vld [vmem:[%s217 + $0x4] sm:$0xf]
      %220 = vst.msk [vmem:[#allocation2 + $0x48] sm:$0xf] %vm174, %v218
      %221 = vst.msk [vmem:[#allocation2 + $0x4c] sm:$0xf] %vm174, %v219
      %s222 = scalar_lea.vmem %s165, 120
      %v223 = vld [vmem:[%s222] sm:$0xf]
      %v224 = vld [vmem:[%s222 + $0x4] sm:$0xf]
      %225 = vst.msk [vmem:[#allocation2 + $0x50] sm:$0xf] %vm174, %v223
      %226 = vst.msk [vmem:[#allocation2 + $0x54] sm:$0xf] %vm174, %v224
      %s227 = scalar_lea.vmem %s165, 132
      %v228 = vld [vmem:[%s227] sm:$0xf]
      %v229 = vld [vmem:[%s227 + $0x4] sm:$0xf]
      %230 = vst.msk [vmem:[#allocation2 + $0x58] sm:$0xf] %vm174, %v228
      %231 = vst.msk [vmem:[#allocation2 + $0x5c] sm:$0xf] %vm174, %v229
      %s232 = scalar_lea.vmem %s165, 144
      %v233 = vld [vmem:[%s232] sm:$0xf]
      %v234 = vld [vmem:[%s232 + $0x4] sm:$0xf]
      %235 = vst.msk [vmem:[#allocation2 + $0x60] sm:$0xf] %vm174, %v233
      %236 = vst.msk [vmem:[#allocation2 + $0x64] sm:$0xf] %vm174, %v234
      %s237 = scalar_lea.vmem %s165, 156
      %v238 = vld [vmem:[%s237] sm:$0xf]
      %v239 = vld [vmem:[%s237 + $0x4] sm:$0xf]
      %240 = vst.msk [vmem:[#allocation2 + $0x68] sm:$0xf] %vm174, %v238
      %241 = vst.msk [vmem:[#allocation2 + $0x6c] sm:$0xf] %vm174, %v239
      %s242 = scalar_lea.vmem %s165, 168
      %v243 = vld [vmem:[%s242] sm:$0xf]
      %v244 = vld [vmem:[%s242 + $0x4] sm:$0xf]
      %245 = vst.msk [vmem:[#allocation2 + $0x70] sm:$0xf] %vm174, %v243
      %246 = vst.msk [vmem:[#allocation2 + $0x74] sm:$0xf] %vm174, %v244
      %s247 = scalar_lea.vmem %s165, 180
      %v248 = vld [vmem:[%s247] sm:$0xf]
      %v249 = vld [vmem:[%s247 + $0x4] sm:$0xf]
      %250 = vst.msk [vmem:[#allocation2 + $0x78] sm:$0xf] %vm174, %v248
      %251 = vst.msk [vmem:[#allocation2 + $0x7c] sm:$0xf] %vm174, %v249
      %v252 = vld [vmem:[#allocation2] sm:$0xf]
      %v253 = vld [vmem:[#allocation2 + $0x4] sm:$0xf]
      %v254 = vld [vmem:[#allocation2 + $0x8] sm:$0xf]
      %v255 = vld [vmem:[#allocation2 + $0xc] sm:$0xf]
      %v256 = vld [vmem:[#allocation2 + $0x10] sm:$0xf]
      %v257 = vld [vmem:[#allocation2 + $0x14] sm:$0xf]
      %v258 = vld [vmem:[#allocation2 + $0x18] sm:$0xf]
      %v259 = vld [vmem:[#allocation2 + $0x1c] sm:$0xf]
      %v260 = vld [vmem:[#allocation2 + $0x20] sm:$0xf]
      %v261 = vld [vmem:[#allocation2 + $0x24] sm:$0xf]
      %v262 = vld [vmem:[#allocation2 + $0x28] sm:$0xf]
      %v263 = vld [vmem:[#allocation2 + $0x2c] sm:$0xf]
      %v264 = vld [vmem:[#allocation2 + $0x30] sm:$0xf]
      %v265 = vld [vmem:[#allocation2 + $0x34] sm:$0xf]
      %v266 = vld [vmem:[#allocation2 + $0x38] sm:$0xf]
      %v267 = vld [vmem:[#allocation2 + $0x3c] sm:$0xf]
      %v268 = vld [vmem:[#allocation2 + $0x40] sm:$0xf]
      %v269 = vld [vmem:[#allocation2 + $0x44] sm:$0xf]
      %v270 = vld [vmem:[#allocation2 + $0x48] sm:$0xf]
      %v271 = vld [vmem:[#allocation2 + $0x4c] sm:$0xf]
      %v272 = vld [vmem:[#allocation2 + $0x50] sm:$0xf]
      %v273 = vld [vmem:[#allocation2 + $0x54] sm:$0xf]
      %v274 = vld [vmem:[#allocation2 + $0x58] sm:$0xf]
      %v275 = vld [vmem:[#allocation2 + $0x5c] sm:$0xf]
      %v276 = vld [vmem:[#allocation2 + $0x60] sm:$0xf]
      %v277 = vld [vmem:[#allocation2 + $0x64] sm:$0xf]
      %v278 = vld [vmem:[#allocation2 + $0x68] sm:$0xf]
      %v279 = vld [vmem:[#allocation2 + $0x6c] sm:$0xf]
      %v280 = vld [vmem:[#allocation2 + $0x70] sm:$0xf]
      %v281 = vld [vmem:[#allocation2 + $0x74] sm:$0xf]
      %v282 = vld [vmem:[#allocation2 + $0x78] sm:$0xf]
      %v283 = vld [vmem:[#allocation2 + $0x7c] sm:$0xf]
      %v284 = vld [vmem:[%s1] sm:$0xf]
      %v285 = vld [vmem:[%s165] sm:$0xf]
      %v286 = vld [vmem:[%s165 + $0x4] sm:$0xf]
      %v287 = vld [vmem:[%s165 + $0x8] sm:$0x1]
      %vm288 = vsmask.f32 3328
      %vm289 = vsmask.f32 7440
      %vm290 = vmor %vm288, %vm289
      %v292 = vshrl.u32 %v285, 16
      %v294 = vrot.slane %v292, 4
      %v295 = vshll.u32 %v285, 16
      %v297 = vrot.slane %v295, 5
      %v298 = vor.u32 %v294, %v297
      %v299 = vrot.slane %v298, 4
      %v301 = vshll.u32 %v286, 16
      %v303 = vrot.slane %v301, 5
      %v304 = vsel %vm290, %v299, %v303
      %v305 = vshrl.u32 %v286, 16
      %v307 = vrot.slane %v305, 4
      %v308 = vor.u32 %v307, %v303
      %v309 = vrot.slane %v308, 4
      %v311 = vshll.u32 %v287, 16
      %v313 = vrot.slane %v311, 5
      %v314 = vsel %vm290, %v309, %v313
      %317 = vst.msk [vmem:[#allocation2] sm:$0xf] %vm174, %v304
      %318 = vst.msk [vmem:[#allocation2 + $0x4] sm:$0xf] %vm174, %v314
      %v319 = vld [vmem:[%s177] sm:$0xf]
      %v320 = vld [vmem:[%s177 + $0x4] sm:$0xf]
      %v321 = vld [vmem:[%s177 + $0x8] sm:$0x1]
      %v323 = vshrl.u32 %v319, 16
      %v325 = vrot.slane %v323, 4
      %v326 = vshll.u32 %v319, 16
      %v328 = vrot.slane %v326, 5
      %v329 = vor.u32 %v325, %v328
      %v330 = vrot.slane %v329, 4
      %v332 = vshll.u32 %v320, 16
      %v334 = vrot.slane %v332, 5
      %v335 = vsel %vm290, %v330, %v334
      %v336 = vshrl.u32 %v320, 16
      %v338 = vrot.slane %v336, 4
      %v339 = vor.u32 %v338, %v334
      %v340 = vrot.slane %v339, 4
      %v342 = vshll.u32 %v321, 16
      %v344 = vrot.slane %v342, 5
      %v345 = vsel %vm290, %v340, %v344
      %348 = vst.msk [vmem:[#allocation2 + $0x8] sm:$0xf] %vm174, %v335
      %349 = vst.msk [vmem:[#allocation2 + $0xc] sm:$0xf] %vm174, %v345
      %v350 = vld [vmem:[%s182] sm:$0xf]
      %v351 = vld [vmem:[%s182 + $0x4] sm:$0xf]
      %v352 = vld [vmem:[%s182 + $0x8] sm:$0x1]
      %v354 = vshrl.u32 %v350, 16
      %v356 = vrot.slane %v354, 4
      %v357 = vshll.u32 %v350, 16
      %v359 = vrot.slane %v357, 5
      %v360 = vor.u32 %v356, %v359
      %v361 = vrot.slane %v360, 4
      %v363 = vshll.u32 %v351, 16
      %v365 = vrot.slane %v363, 5
      %v366 = vsel %vm290, %v361, %v365
      %v367 = vshrl.u32 %v351, 16
      %v369 = vrot.slane %v367, 4
      %v370 = vor.u32 %v369, %v365
      %v371 = vrot.slane %v370, 4
      %v373 = vshll.u32 %v352, 16
      %v375 = vrot.slane %v373, 5
      %v376 = vsel %vm290, %v371, %v375
      %379 = vst.msk [vmem:[#allocation2 + $0x10] sm:$0xf] %vm174, %v366
      %380 = vst.msk [vmem:[#allocation2 + $0x14] sm:$0xf] %vm174, %v376
      %v381 = vld [vmem:[%s187] sm:$0xf]
      %v382 = vld [vmem:[%s187 + $0x4] sm:$0xf]
      %v383 = vld [vmem:[%s187 + $0x8] sm:$0x1]
      %v385 = vshrl.u32 %v381, 16
      %v387 = vrot.slane %v385, 4
      %v388 = vshll.u32 %v381, 16
      %v390 = vrot.slane %v388, 5
      %v391 = vor.u32 %v387, %v390
      %v392 = vrot.slane %v391, 4
      %v394 = vshll.u32 %v382, 16
      %v396 = vrot.slane %v394, 5
      %v397 = vsel %vm290, %v392, %v396
      %v398 = vshrl.u32 %v382, 16
      %v400 = vrot.slane %v398, 4
      %v401 = vor.u32 %v400, %v396
      %v402 = vrot.slane %v401, 4
      %v404 = vshll.u32 %v383, 16
      %v406 = vrot.slane %v404, 5
      %v407 = vsel %vm290, %v402, %v406
      %410 = vst.msk [vmem:[#allocation2 + $0x18] sm:$0xf] %vm174, %v397
      %411 = vst.msk [vmem:[#allocation2 + $0x1c] sm:$0xf] %vm174, %v407
      %v412 = vld [vmem:[%s192] sm:$0xf]
      %v413 = vld [vmem:[%s192 + $0x4] sm:$0xf]
      %v414 = vld [vmem:[%s192 + $0x8] sm:$0x1]
      %v416 = vshrl.u32 %v412, 16
      %v418 = vrot.slane %v416, 4
      %v419 = vshll.u32 %v412, 16
      %v421 = vrot.slane %v419, 5
      %v422 = vor.u32 %v418, %v421
      %v423 = vrot.slane %v422, 4
      %v425 = vshll.u32 %v413, 16
      %v427 = vrot.slane %v425, 5
      %v428 = vsel %vm290, %v423, %v427
      %v429 = vshrl.u32 %v413, 16
      %v431 = vrot.slane %v429, 4
      %v432 = vor.u32 %v431, %v427
      %v433 = vrot.slane %v432, 4
      %v435 = vshll.u32 %v414, 16
      %v437 = vrot.slane %v435, 5
      %v438 = vsel %vm290, %v433, %v437
      %441 = vst.msk [vmem:[#allocation2 + $0x20] sm:$0xf] %vm174, %v428
      %442 = vst.msk [vmem:[#allocation2 + $0x24] sm:$0xf] %vm174, %v438
      %v443 = vld [vmem:[%s197] sm:$0xf]
      %v444 = vld [vmem:[%s197 + $0x4] sm:$0xf]
      %v445 = vld [vmem:[%s197 + $0x8] sm:$0x1]
      %v447 = vshrl.u32 %v443, 16
      %v449 = vrot.slane %v447, 4
      %v450 = vshll.u32 %v443, 16
      %v452 = vrot.slane %v450, 5
      %v453 = vor.u32 %v449, %v452
      %v454 = vrot.slane %v453, 4
      %v456 = vshll.u32 %v444, 16
      %v458 = vrot.slane %v456, 5
      %v459 = vsel %vm290, %v454, %v458
      %v460 = vshrl.u32 %v444, 16
      %v462 = vrot.slane %v460, 4
      %v463 = vor.u32 %v462, %v458
      %v464 = vrot.slane %v463, 4
      %v466 = vshll.u32 %v445, 16
      %v468 = vrot.slane %v466, 5
      %v469 = vsel %vm290, %v464, %v468
      %472 = vst.msk [vmem:[#allocation2 + $0x28] sm:$0xf] %vm174, %v459
      %473 = vst.msk [vmem:[#allocation2 + $0x2c] sm:$0xf] %vm174, %v469
      %v474 = vld [vmem:[%s202] sm:$0xf]
      %v475 = vld [vmem:[%s202 + $0x4] sm:$0xf]
      %v476 = vld [vmem:[%s202 + $0x8] sm:$0x1]
      %v478 = vshrl.u32 %v474, 16
      %v480 = vrot.slane %v478, 4
      %v481 = vshll.u32 %v474, 16
      %v483 = vrot.slane %v481, 5
      %v484 = vor.u32 %v480, %v483
      %v485 = vrot.slane %v484, 4
      %v487 = vshll.u32 %v475, 16
      %v489 = vrot.slane %v487, 5
      %v490 = vsel %vm290, %v485, %v489
      %v491 = vshrl.u32 %v475, 16
      %v493 = vrot.slane %v491, 4
      %v494 = vor.u32 %v493, %v489
      %v495 = vrot.slane %v494, 4
      %v497 = vshll.u32 %v476, 16
      %v499 = vrot.slane %v497, 5
      %v500 = vsel %vm290, %v495, %v499
      %503 = vst.msk [vmem:[#allocation2 + $0x30] sm:$0xf] %vm174, %v490
      %504 = vst.msk [vmem:[#allocation2 + $0x34] sm:$0xf] %vm174, %v500
      %v505 = vld [vmem:[%s207] sm:$0xf]
      %v506 = vld [vmem:[%s207 + $0x4] sm:$0xf]
      %v507 = vld [vmem:[%s207 + $0x8] sm:$0x1]
      %v509 = vshrl.u32 %v505, 16
      %v511 = vrot.slane %v509, 4
      %v512 = vshll.u32 %v505, 16
      %v514 = vrot.slane %v512, 5
      %v515 = vor.u32 %v511, %v514
      %v516 = vrot.slane %v515, 4
      %v518 = vshll.u32 %v506, 16
      %v520 = vrot.slane %v518, 5
      %v521 = vsel %vm290, %v516, %v520
      %v522 = vshrl.u32 %v506, 16
      %v524 = vrot.slane %v522, 4
      %v525 = vor.u32 %v524, %v520
      %v526 = vrot.slane %v525, 4
      %v528 = vshll.u32 %v507, 16
      %v530 = vrot.slane %v528, 5
      %v531 = vsel %vm290, %v526, %v530
      %534 = vst.msk [vmem:[#allocation2 + $0x38] sm:$0xf] %vm174, %v521
      %535 = vst.msk [vmem:[#allocation2 + $0x3c] sm:$0xf] %vm174, %v531
      %v536 = vld [vmem:[%s212] sm:$0xf]
      %v537 = vld [vmem:[%s212 + $0x4] sm:$0xf]
      %v538 = vld [vmem:[%s212 + $0x8] sm:$0x1]
      %v540 = vshrl.u32 %v536, 16
      %v542 = vrot.slane %v540, 4
      %v543 = vshll.u32 %v536, 16
      %v545 = vrot.slane %v543, 5
      %v546 = vor.u32 %v542, %v545
      %v547 = vrot.slane %v546, 4
      %v549 = vshll.u32 %v537, 16
      %v551 = vrot.slane %v549, 5
      %v552 = vsel %vm290, %v547, %v551
      %v553 = vshrl.u32 %v537, 16
      %v555 = vrot.slane %v553, 4
      %v556 = vor.u32 %v555, %v551
      %v557 = vrot.slane %v556, 4
      %v559 = vshll.u32 %v538, 16
      %v561 = vrot.slane %v559, 5
      %v562 = vsel %vm290, %v557, %v561
      %565 = vst.msk [vmem:[#allocation2 + $0x40] sm:$0xf] %vm174, %v552
      %566 = vst.msk [vmem:[#allocation2 + $0x44] sm:$0xf] %vm174, %v562
      %v567 = vld [vmem:[%s217] sm:$0xf]
      %v568 = vld [vmem:[%s217 + $0x4] sm:$0xf]
      %v569 = vld [vmem:[%s217 + $0x8] sm:$0x1]
      %v571 = vshrl.u32 %v567, 16
      %v573 = vrot.slane %v571, 4
      %v574 = vshll.u32 %v567, 16
      %v576 = vrot.slane %v574, 5
      %v577 = vor.u32 %v573, %v576
      %v578 = vrot.slane %v577, 4
      %v580 = vshll.u32 %v568, 16
      %v582 = vrot.slane %v580, 5
      %v583 = vsel %vm290, %v578, %v582
      %v584 = vshrl.u32 %v568, 16
      %v586 = vrot.slane %v584, 4
      %v587 = vor.u32 %v586, %v582
      %v588 = vrot.slane %v587, 4
      %v590 = vshll.u32 %v569, 16
      %v592 = vrot.slane %v590, 5
      %v593 = vsel %vm290, %v588, %v592
      %596 = vst.msk [vmem:[#allocation2 + $0x48] sm:$0xf] %vm174, %v583
      %597 = vst.msk [vmem:[#allocation2 + $0x4c] sm:$0xf] %vm174, %v593
      %v598 = vld [vmem:[%s222] sm:$0xf]
      %v599 = vld [vmem:[%s222 + $0x4] sm:$0xf]
      %v600 = vld [vmem:[%s222 + $0x8] sm:$0x1]
      %v602 = vshrl.u32 %v598, 16
      %v604 = vrot.slane %v602, 4
      %v605 = vshll.u32 %v598, 16
      %v607 = vrot.slane %v605, 5
      %v608 = vor.u32 %v604, %v607
      %v609 = vrot.slane %v608, 4
      %v611 = vshll.u32 %v599, 16
      %v613 = vrot.slane %v611, 5
      %v614 = vsel %vm290, %v609, %v613
      %v615 = vshrl.u32 %v599, 16
      %v617 = vrot.slane %v615, 4
      %v618 = vor.u32 %v617, %v613
      %v619 = vrot.slane %v618, 4
      %v621 = vshll.u32 %v600, 16
      %v623 = vrot.slane %v621, 5
      %v624 = vsel %vm290, %v619, %v623
      %627 = vst.msk [vmem:[#allocation2 + $0x50] sm:$0xf] %vm174, %v614
      %628 = vst.msk [vmem:[#allocation2 + $0x54] sm:$0xf] %vm174, %v624
      %v629 = vld [vmem:[%s227] sm:$0xf]
      %v630 = vld [vmem:[%s227 + $0x4] sm:$0xf]
      %v631 = vld [vmem:[%s227 + $0x8] sm:$0x1]
      %v633 = vshrl.u32 %v629, 16
      %v635 = vrot.slane %v633, 4
      %v636 = vshll.u32 %v629, 16
      %v638 = vrot.slane %v636, 5
      %v639 = vor.u32 %v635, %v638
      %v640 = vrot.slane %v639, 4
      %v642 = vshll.u32 %v630, 16
      %v644 = vrot.slane %v642, 5
      %v645 = vsel %vm290, %v640, %v644
      %v646 = vshrl.u32 %v630, 16
      %v648 = vrot.slane %v646, 4
      %v649 = vor.u32 %v648, %v644
      %v650 = vrot.slane %v649, 4
      %v652 = vshll.u32 %v631, 16
      %v654 = vrot.slane %v652, 5
      %v655 = vsel %vm290, %v650, %v654
      %658 = vst.msk [vmem:[#allocation2 + $0x58] sm:$0xf] %vm174, %v645
      %659 = vst.msk [vmem:[#allocation2 + $0x5c] sm:$0xf] %vm174, %v655
      %v660 = vld [vmem:[%s232] sm:$0xf]
      %v661 = vld [vmem:[%s232 + $0x4] sm:$0xf]
      %v662 = vld [vmem:[%s232 + $0x8] sm:$0x1]
      %v664 = vshrl.u32 %v660, 16
      %v666 = vrot.slane %v664, 4
      %v667 = vshll.u32 %v660, 16
      %v669 = vrot.slane %v667, 5
      %v670 = vor.u32 %v666, %v669
      %v671 = vrot.slane %v670, 4
      %v673 = vshll.u32 %v661, 16
      %v675 = vrot.slane %v673, 5
      %v676 = vsel %vm290, %v671, %v675
      %v677 = vshrl.u32 %v661, 16
      %v679 = vrot.slane %v677, 4
      %v680 = vor.u32 %v679, %v675
      %v681 = vrot.slane %v680, 4
      %v683 = vshll.u32 %v662, 16
      %v685 = vrot.slane %v683, 5
      %v686 = vsel %vm290, %v681, %v685
      %689 = vst.msk [vmem:[#allocation2 + $0x60] sm:$0xf] %vm174, %v676
      %690 = vst.msk [vmem:[#allocation2 + $0x64] sm:$0xf] %vm174, %v686
      %v691 = vld [vmem:[%s237] sm:$0xf]
      %v692 = vld [vmem:[%s237 + $0x4] sm:$0xf]
      %v693 = vld [vmem:[%s237 + $0x8] sm:$0x1]
      %v695 = vshrl.u32 %v691, 16
      %v697 = vrot.slane %v695, 4
      %v698 = vshll.u32 %v691, 16
      %v700 = vrot.slane %v698, 5
      %v701 = vor.u32 %v697, %v700
      %v702 = vrot.slane %v701, 4
      %v704 = vshll.u32 %v692, 16
      %v706 = vrot.slane %v704, 5
      %v707 = vsel %vm290, %v702, %v706
      %v708 = vshrl.u32 %v692, 16
      %v710 = vrot.slane %v708, 4
      %v711 = vor.u32 %v710, %v706
      %v712 = vrot.slane %v711, 4
      %v714 = vshll.u32 %v693, 16
      %v716 = vrot.slane %v714, 5
      %v717 = vsel %vm290, %v712, %v716
      %720 = vst.msk [vmem:[#allocation2 + $0x68] sm:$0xf] %vm174, %v707
      %721 = vst.msk [vmem:[#allocation2 + $0x6c] sm:$0xf] %vm174, %v717
      %v722 = vld [vmem:[%s242] sm:$0xf]
      %v723 = vld [vmem:[%s242 + $0x4] sm:$0xf]
      %v724 = vld [vmem:[%s242 + $0x8] sm:$0x1]
      %v726 = vshrl.u32 %v722, 16
      %v728 = vrot.slane %v726, 4
      %v729 = vshll.u32 %v722, 16
      %v731 = vrot.slane %v729, 5
      %v732 = vor.u32 %v728, %v731
      %v733 = vrot.slane %v732, 4
      %v735 = vshll.u32 %v723, 16
      %v737 = vrot.slane %v735, 5
      %v738 = vsel %vm290, %v733, %v737
      %v739 = vshrl.u32 %v723, 16
      %v741 = vrot.slane %v739, 4
      %v742 = vor.u32 %v741, %v737
      %v743 = vrot.slane %v742, 4
      %v745 = vshll.u32 %v724, 16
      %v747 = vrot.slane %v745, 5
      %v748 = vsel %vm290, %v743, %v747
      %751 = vst.msk [vmem:[#allocation2 + $0x70] sm:$0xf] %vm174, %v738
      %752 = vst.msk [vmem:[#allocation2 + $0x74] sm:$0xf] %vm174, %v748
      %v753 = vld [vmem:[%s247] sm:$0xf]
      %v754 = vld [vmem:[%s247 + $0x4] sm:$0xf]
      %v755 = vld [vmem:[%s247 + $0x8] sm:$0x1]
      %v757 = vshrl.u32 %v753, 16
      %v759 = vrot.slane %v757, 4
      %v760 = vshll.u32 %v753, 16
      %v762 = vrot.slane %v760, 5
      %v763 = vor.u32 %v759, %v762
      %v764 = vrot.slane %v763, 4
      %v766 = vshll.u32 %v754, 16
      %v768 = vrot.slane %v766, 5
      %v769 = vsel %vm290, %v764, %v768
      %v770 = vshrl.u32 %v754, 16
      %v772 = vrot.slane %v770, 4
      %v773 = vor.u32 %v772, %v768
      %v774 = vrot.slane %v773, 4
      %v776 = vshll.u32 %v755, 16
      %v778 = vrot.slane %v776, 5
      %v779 = vsel %vm290, %v774, %v778
      %782 = vst.msk [vmem:[#allocation2 + $0x78] sm:$0xf] %vm174, %v769
      %783 = vst.msk [vmem:[#allocation2 + $0x7c] sm:$0xf] %vm174, %v779
      %v784 = vld [vmem:[#allocation2] sm:$0xf]
      %v785 = vld [vmem:[#allocation2 + $0x4] sm:$0xf]
      %v786 = vld [vmem:[#allocation2 + $0x8] sm:$0xf]
      %v787 = vld [vmem:[#allocation2 + $0xc] sm:$0xf]
      %v788 = vld [vmem:[#allocation2 + $0x10] sm:$0xf]
      %v789 = vld [vmem:[#allocation2 + $0x14] sm:$0xf]
      %v790 = vld [vmem:[#allocation2 + $0x18] sm:$0xf]
      %v791 = vld [vmem:[#allocation2 + $0x1c] sm:$0xf]
      %v792 = vld [vmem:[#allocation2 + $0x20] sm:$0xf]
      %v793 = vld [vmem:[#allocation2 + $0x24] sm:$0xf]
      %v794 = vld [vmem:[#allocation2 + $0x28] sm:$0xf]
      %v795 = vld [vmem:[#allocation2 + $0x2c] sm:$0xf]
      %v796 = vld [vmem:[#allocation2 + $0x30] sm:$0xf]
      %v797 = vld [vmem:[#allocation2 + $0x34] sm:$0xf]
      %v798 = vld [vmem:[#allocation2 + $0x38] sm:$0xf]
      %v799 = vld [vmem:[#allocation2 + $0x3c] sm:$0xf]
      %v800 = vld [vmem:[#allocation2 + $0x40] sm:$0xf]
      %v801 = vld [vmem:[#allocation2 + $0x44] sm:$0xf]
      %v802 = vld [vmem:[#allocation2 + $0x48] sm:$0xf]
      %v803 = vld [vmem:[#allocation2 + $0x4c] sm:$0xf]
      %v804 = vld [vmem:[#allocation2 + $0x50] sm:$0xf]
      %v805 = vld [vmem:[#allocation2 + $0x54] sm:$0xf]
      %v806 = vld [vmem:[#allocation2 + $0x58] sm:$0xf]
      %v807 = vld [vmem:[#allocation2 + $0x5c] sm:$0xf]
      %v808 = vld [vmem:[#allocation2 + $0x60] sm:$0xf]
      %v809 = vld [vmem:[#allocation2 + $0x64] sm:$0xf]
      %v810 = vld [vmem:[#allocation2 + $0x68] sm:$0xf]
      %v811 = vld [vmem:[#allocation2 + $0x6c] sm:$0xf]
      %v812 = vld [vmem:[#allocation2 + $0x70] sm:$0xf]
      %v813 = vld [vmem:[#allocation2 + $0x74] sm:$0xf]
      %v814 = vld [vmem:[#allocation2 + $0x78] sm:$0xf]
      %v815 = vld [vmem:[#allocation2 + $0x7c] sm:$0xf]
      %s816 = scalar_lea.vmem %s1, 4
      %v817 = vld [vmem:[%s816] sm:$0xf]
      %v850 = vunpack.c.l.b16 %v784
      %v851 = vunpack.c.l.b16 %v785
      %v852 = vunpack.c.l.b16 %v786
      %v853 = vunpack.c.l.b16 %v787
      %v854 = vunpack.c.l.b16 %v788
      %v855 = vunpack.c.l.b16 %v789
      %v856 = vunpack.c.l.b16 %v790
      %v857 = vunpack.c.l.b16 %v791
      %v858 = vunpack.c.l.b16 %v792
      %v859 = vunpack.c.l.b16 %v793
      %v860 = vunpack.c.l.b16 %v794
      %v861 = vunpack.c.l.b16 %v795
      %v862 = vunpack.c.l.b16 %v796
      %v863 = vunpack.c.l.b16 %v797
      %v864 = vunpack.c.l.b16 %v798
      %v865 = vunpack.c.l.b16 %v799
      %v866 = vunpack.c.l.b16 %v800
      %v867 = vunpack.c.l.b16 %v801
      %v868 = vunpack.c.l.b16 %v802
      %v869 = vunpack.c.l.b16 %v803
      %v870 = vunpack.c.l.b16 %v804
      %v871 = vunpack.c.l.b16 %v805
      %v872 = vunpack.c.l.b16 %v806
      %v873 = vunpack.c.l.b16 %v807
      %v874 = vunpack.c.l.b16 %v808
      %v875 = vunpack.c.l.b16 %v809
      %v876 = vunpack.c.l.b16 %v810
      %v877 = vunpack.c.l.b16 %v811
      %v878 = vunpack.c.l.b16 %v812
      %v879 = vunpack.c.l.b16 %v813
      %v880 = vunpack.c.l.b16 %v814
      %v881 = vunpack.c.l.b16 %v815
      %v882 = vpack.c.b16 %v851, %v850
      %v883 = vpack.c.b16 %v853, %v852
      %v884 = vpack.c.b16 %v855, %v854
      %v885 = vpack.c.b16 %v857, %v856
      %v886 = vpack.c.b16 %v859, %v858
      %v887 = vpack.c.b16 %v861, %v860
      %v888 = vpack.c.b16 %v863, %v862
      %v889 = vpack.c.b16 %v865, %v864
      %v890 = vpack.c.b16 %v867, %v866
      %v891 = vpack.c.b16 %v869, %v868
      %v892 = vpack.c.b16 %v871, %v870
      %v893 = vpack.c.b16 %v873, %v872
      %v894 = vpack.c.b16 %v875, %v874
      %v895 = vpack.c.b16 %v877, %v876
      %v896 = vpack.c.b16 %v879, %v878
      %v897 = vpack.c.b16 %v881, %v880
      %vm898 = vcmask 64512
      %v900 = vsel %vm898, %v882, 0
      %v903 = vsel %vm898, %v883, 0
      %v906 = vsel %vm898, %v884, 0
      %v909 = vsel %vm898, %v885, 0
      %v912 = vsel %vm898, %v886, 0
      %v915 = vsel %vm898, %v887, 0
      %v918 = vsel %vm898, %v888, 0
      %v921 = vsel %vm898, %v889, 0
      %v924 = vsel %vm898, %v890, 0
      %v927 = vsel %vm898, %v891, 0
      %v930 = vsel %vm898, %v892, 0
      %v933 = vsel %vm898, %v893, 0
      %v936 = vsel %vm898, %v894, 0
      %v939 = vsel %vm898, %v895, 0
      %v942 = vsel %vm898, %v896, 0
      %v945 = vsel %vm898, %v897, 0
      %vm947 = vcmask 1043456
      %v949 = vsel %vm947, %v817, 0
      %951 = vmatprep.subr.bf16.mxu0 0
      %952 = vmatpush1.bf16.msra.mxu0 0
      %953 = vmatprep.subr.bf16.mxu0 0
      %954 = vmatpush1.bf16.msra.mxu0 0
      %955 = vmatprep.subr.bf16.mxu0 0
      %956 = vmatpush1.bf16.msra.mxu0 0
      %957 = vmatprep.subr.bf16.mxu0 0
      %958 = vmatpush1.bf16.msra.mxu0 0
      %959 = vmatprep.subr.bf16.mxu0 0
      %960 = vmatpush1.bf16.msra.mxu0 0
      %961 = vmatprep.subr.bf16.mxu0 0
      %962 = vmatpush1.bf16.msra.mxu0 0
      %963 = vmatprep.subr.bf16.mxu0 0
      %964 = vmatpush1.bf16.msra.mxu0 0
      %965 = vmatprep.subr.bf16.mxu0 0
      %966 = vmatpush1.bf16.msra.mxu0 %v949
      %967 = vmatprep.subr.bf16.mxu0 0
      %968 = vmatpush2.bf16.msra.mxu0 0
      %969 = vmatprep.subr.bf16.mxu0 0
      %970 = vmatpush2.bf16.msra.mxu0 0
      %971 = vmatprep.subr.bf16.mxu0 0
      %972 = vmatpush2.bf16.msra.mxu0 0
      %973 = vmatprep.subr.bf16.mxu0 0
      %974 = vmatpush2.bf16.msra.mxu0 0
      %975 = vmatprep.subr.bf16.mxu0 0
      %976 = vmatpush2.bf16.msra.mxu0 0
      %977 = vmatprep.subr.bf16.mxu0 0
      %978 = vmatpush2.bf16.msra.mxu0 0
      %979 = vmatprep.subr.bf16.mxu0 0
      %980 = vmatpush2.bf16.msra.mxu0 0
      %981 = vmatprep.subr.bf16.mxu0 0
      %982 = vmatpush2.bf16.msra.mxu0 0
      %983 = vmatprep.mubr.bf16.mxu0 0
      %984 = vmatmul.mubr.bf16.gmra.mxu0 %v900
      %v985 = vpop.f32.mrf.mxu0
      %v986 = vadd.f32 0.0, %v985
      %v987 = vpop.f32.mrf.mxu0
      %v988 = vpop.f32.mrf.mxu0
      %v989 = vadd.f32 0.0, %v988
      %v990 = vpop.f32.mrf.mxu0
      %991 = vmatprep.mubr.bf16.mxu0 0
      %992 = vmatmul.mubr.bf16.gmra.mxu0 %v903
      %v993 = vpop.f32.mrf.mxu0
      %v994 = vadd.f32 0.0, %v993
      %v995 = vpop.f32.mrf.mxu0
      %v996 = vpop.f32.mrf.mxu0
      %v997 = vadd.f32 0.0, %v996
      %v998 = vpop.f32.mrf.mxu0
      %999 = vmatprep.mubr.bf16.mxu0 0
      %1000 = vmatmul.mubr.bf16.gmra.mxu0 %v906
      %v1001 = vpop.f32.mrf.mxu0
      %v1002 = vadd.f32 0.0, %v1001
      %v1003 = vpop.f32.mrf.mxu0
      %v1004 = vpop.f32.mrf.mxu0
      %v1005 = vadd.f32 0.0, %v1004
      %v1006 = vpop.f32.mrf.mxu0
      %1007 = vmatprep.mubr.bf16.mxu0 0
      %1008 = vmatmul.mubr.bf16.gmra.mxu0 %v909
      %v1009 = vpop.f32.mrf.mxu0
      %v1010 = vadd.f32 0.0, %v1009
      %v1011 = vpop.f32.mrf.mxu0
      %v1012 = vpop.f32.mrf.mxu0
      %v1013 = vadd.f32 0.0, %v1012
      %v1014 = vpop.f32.mrf.mxu0
      %1015 = vmatprep.mubr.bf16.mxu0 0
      %1016 = vmatmul.mubr.bf16.gmra.mxu0 %v912
      %v1017 = vpop.f32.mrf.mxu0
      %v1018 = vadd.f32 0.0, %v1017
      %v1019 = vpop.f32.mrf.mxu0
      %v1020 = vpop.f32.mrf.mxu0
      %v1021 = vadd.f32 0.0, %v1020
      %v1022 = vpop.f32.mrf.mxu0
      %1023 = vmatprep.mubr.bf16.mxu0 0
      %1024 = vmatmul.mubr.bf16.gmra.mxu0 %v915
      %v1025 = vpop.f32.mrf.mxu0
      %v1026 = vadd.f32 0.0, %v1025
      %v1027 = vpop.f32.mrf.mxu0
      %v1028 = vpop.f32.mrf.mxu0
      %v1029 = vadd.f32 0.0, %v1028
      %v1030 = vpop.f32.mrf.mxu0
      %1031 = vmatprep.mubr.bf16.mxu0 0
      %1032 = vmatmul.mubr.bf16.gmra.mxu0 %v918
      %v1033 = vpop.f32.mrf.mxu0
      %v1034 = vadd.f32 0.0, %v1033
      %v1035 = vpop.f32.mrf.mxu0
      %v1036 = vpop.f32.mrf.mxu0
      %v1037 = vadd.f32 0.0, %v1036
      %v1038 = vpop.f32.mrf.mxu0
      %1039 = vmatprep.mubr.bf16.mxu0 0
      %1040 = vmatmul.mubr.bf16.gmra.mxu0 %v921
      %v1041 = vpop.f32.mrf.mxu0
      %v1042 = vadd.f32 0.0, %v1041
      %v1043 = vpop.f32.mrf.mxu0
      %v1044 = vpop.f32.mrf.mxu0
      %v1045 = vadd.f32 0.0, %v1044
      %v1046 = vpop.f32.mrf.mxu0
      %1047 = vmatprep.mubr.bf16.mxu0 0
      %1048 = vmatmul.mubr.bf16.gmra.mxu0 %v924
      %v1049 = vpop.f32.mrf.mxu0
      %v1050 = vadd.f32 0.0, %v1049
      %v1051 = vpop.f32.mrf.mxu0
      %v1052 = vpop.f32.mrf.mxu0
      %v1053 = vadd.f32 0.0, %v1052
      %v1054 = vpop.f32.mrf.mxu0
      %1055 = vmatprep.mubr.bf16.mxu0 0
      %1056 = vmatmul.mubr.bf16.gmra.mxu0 %v927
      %v1057 = vpop.f32.mrf.mxu0
      %v1058 = vadd.f32 0.0, %v1057
      %v1059 = vpop.f32.mrf.mxu0
      %v1060 = vpop.f32.mrf.mxu0
      %v1061 = vadd.f32 0.0, %v1060
      %v1062 = vpop.f32.mrf.mxu0
      %1063 = vmatprep.mubr.bf16.mxu0 0
      %1064 = vmatmul.mubr.bf16.gmra.mxu0 %v930
      %v1065 = vpop.f32.mrf.mxu0
      %v1066 = vadd.f32 0.0, %v1065
      %v1067 = vpop.f32.mrf.mxu0
      %v1068 = vpop.f32.mrf.mxu0
      %v1069 = vadd.f32 0.0, %v1068
      %v1070 = vpop.f32.mrf.mxu0
      %1071 = vmatprep.mubr.bf16.mxu0 0
      %1072 = vmatmul.mubr.bf16.gmra.mxu0 %v933
      %v1073 = vpop.f32.mrf.mxu0
      %v1074 = vadd.f32 0.0, %v1073
      %v1075 = vpop.f32.mrf.mxu0
      %v1076 = vpop.f32.mrf.mxu0
      %v1077 = vadd.f32 0.0, %v1076
      %v1078 = vpop.f32.mrf.mxu0
      %1079 = vmatprep.mubr.bf16.mxu0 0
      %1080 = vmatmul.mubr.bf16.gmra.mxu0 %v936
      %v1081 = vpop.f32.mrf.mxu0
      %v1082 = vadd.f32 0.0, %v1081
      %v1083 = vpop.f32.mrf.mxu0
      %v1084 = vpop.f32.mrf.mxu0
      %v1085 = vadd.f32 0.0, %v1084
      %v1086 = vpop.f32.mrf.mxu0
      %1087 = vmatprep.mubr.bf16.mxu0 0
      %1088 = vmatmul.mubr.bf16.gmra.mxu0 %v939
      %v1089 = vpop.f32.mrf.mxu0
      %v1090 = vadd.f32 0.0, %v1089
      %v1091 = vpop.f32.mrf.mxu0
      %v1092 = vpop.f32.mrf.mxu0
      %v1093 = vadd.f32 0.0, %v1092
      %v1094 = vpop.f32.mrf.mxu0
      %1095 = vmatprep.mubr.bf16.mxu0 0
      %1096 = vmatmul.mubr.bf16.gmra.mxu0 %v942
      %v1097 = vpop.f32.mrf.mxu0
      %v1098 = vadd.f32 0.0, %v1097
      %v1099 = vpop.f32.mrf.mxu0
      %v1100 = vpop.f32.mrf.mxu0
      %v1101 = vadd.f32 0.0, %v1100
      %v1102 = vpop.f32.mrf.mxu0
      %1103 = vmatprep.mubr.bf16.mxu0 0
      %1104 = vmatmul.mubr.bf16.gmra.mxu0 %v945
      %v1105 = vpop.f32.mrf.mxu0
      %v1106 = vadd.f32 0.0, %v1105
      %v1107 = vpop.f32.mrf.mxu0
      %v1108 = vpop.f32.mrf.mxu0
      %v1109 = vadd.f32 0.0, %v1108
      %v1110 = vpop.f32.mrf.mxu0
      %1111 = vdwg.mxu0
      %v1144 = vunpack.c.l.b16 %v252
      %v1145 = vunpack.c.l.b16 %v253
      %v1146 = vunpack.c.l.b16 %v254
      %v1147 = vunpack.c.l.b16 %v255
      %v1148 = vunpack.c.l.b16 %v256
      %v1149 = vunpack.c.l.b16 %v257
      %v1150 = vunpack.c.l.b16 %v258
      %v1151 = vunpack.c.l.b16 %v259
      %v1152 = vunpack.c.l.b16 %v260
      %v1153 = vunpack.c.l.b16 %v261
      %v1154 = vunpack.c.l.b16 %v262
      %v1155 = vunpack.c.l.b16 %v263
      %v1156 = vunpack.c.l.b16 %v264
      %v1157 = vunpack.c.l.b16 %v265
      %v1158 = vunpack.c.l.b16 %v266
      %v1159 = vunpack.c.l.b16 %v267
      %v1160 = vunpack.c.l.b16 %v268
      %v1161 = vunpack.c.l.b16 %v269
      %v1162 = vunpack.c.l.b16 %v270
      %v1163 = vunpack.c.l.b16 %v271
      %v1164 = vunpack.c.l.b16 %v272
      %v1165 = vunpack.c.l.b16 %v273
      %v1166 = vunpack.c.l.b16 %v274
      %v1167 = vunpack.c.l.b16 %v275
      %v1168 = vunpack.c.l.b16 %v276
      %v1169 = vunpack.c.l.b16 %v277
      %v1170 = vunpack.c.l.b16 %v278
      %v1171 = vunpack.c.l.b16 %v279
      %v1172 = vunpack.c.l.b16 %v280
      %v1173 = vunpack.c.l.b16 %v281
      %v1174 = vunpack.c.l.b16 %v282
      %v1175 = vunpack.c.l.b16 %v283
      %v1176 = vpack.c.b16 %v1145, %v1144
      %v1177 = vpack.c.b16 %v1147, %v1146
      %v1178 = vpack.c.b16 %v1149, %v1148
      %v1179 = vpack.c.b16 %v1151, %v1150
      %v1180 = vpack.c.b16 %v1153, %v1152
      %v1181 = vpack.c.b16 %v1155, %v1154
      %v1182 = vpack.c.b16 %v1157, %v1156
      %v1183 = vpack.c.b16 %v1159, %v1158
      %v1184 = vpack.c.b16 %v1161, %v1160
      %v1185 = vpack.c.b16 %v1163, %v1162
      %v1186 = vpack.c.b16 %v1165, %v1164
      %v1187 = vpack.c.b16 %v1167, %v1166
      %v1188 = vpack.c.b16 %v1169, %v1168
      %v1189 = vpack.c.b16 %v1171, %v1170
      %v1190 = vpack.c.b16 %v1173, %v1172
      %v1191 = vpack.c.b16 %v1175, %v1174
      %v1193 = vsel %vm898, %v1176, 0
      %v1196 = vsel %vm898, %v1177, 0
      %v1199 = vsel %vm898, %v1178, 0
      %v1202 = vsel %vm898, %v1179, 0
      %v1205 = vsel %vm898, %v1180, 0
      %v1208 = vsel %vm898, %v1181, 0
      %v1211 = vsel %vm898, %v1182, 0
      %v1214 = vsel %vm898, %v1183, 0
      %v1217 = vsel %vm898, %v1184, 0
      %v1220 = vsel %vm898, %v1185, 0
      %v1223 = vsel %vm898, %v1186, 0
      %v1226 = vsel %vm898, %v1187, 0
      %v1229 = vsel %vm898, %v1188, 0
      %v1232 = vsel %vm898, %v1189, 0
      %v1235 = vsel %vm898, %v1190, 0
      %v1238 = vsel %vm898, %v1191, 0
      %v1241 = vsel %vm947, %v284, 0
      %1243 = vmatprep.subr.bf16.mxu0 0
      %1244 = vmatpush1.bf16.msra.mxu0 0
      %1245 = vmatprep.subr.bf16.mxu0 0
      %1246 = vmatpush1.bf16.msra.mxu0 0
      %1247 = vmatprep.subr.bf16.mxu0 0
      %1248 = vmatpush1.bf16.msra.mxu0 0
      %1249 = vmatprep.subr.bf16.mxu0 0
      %1250 = vmatpush1.bf16.msra.mxu0 0
      %1251 = vmatprep.subr.bf16.mxu0 0
      %1252 = vmatpush1.bf16.msra.mxu0 0
      %1253 = vmatprep.subr.bf16.mxu0 0
      %1254 = vmatpush1.bf16.msra.mxu0 0
      %1255 = vmatprep.subr.bf16.mxu0 0
      %1256 = vmatpush1.bf16.msra.mxu0 0
      %1257 = vmatprep.subr.bf16.mxu0 0
      %1258 = vmatpush1.bf16.msra.mxu0 %v1241
      %1259 = vmatprep.subr.bf16.mxu0 0
      %1260 = vmatpush2.bf16.msra.mxu0 0
      %1261 = vmatprep.subr.bf16.mxu0 0
      %1262 = vmatpush2.bf16.msra.mxu0 0
      %1263 = vmatprep.subr.bf16.mxu0 0
      %1264 = vmatpush2.bf16.msra.mxu0 0
      %1265 = vmatprep.subr.bf16.mxu0 0
      %1266 = vmatpush2.bf16.msra.mxu0 0
      %1267 = vmatprep.subr.bf16.mxu0 0
      %1268 = vmatpush2.bf16.msra.mxu0 0
      %1269 = vmatprep.subr.bf16.mxu0 0
      %1270 = vmatpush2.bf16.msra.mxu0 0
      %1271 = vmatprep.subr.bf16.mxu0 0
      %1272 = vmatpush2.bf16.msra.mxu0 0
      %1273 = vmatprep.subr.bf16.mxu0 0
      %1274 = vmatpush2.bf16.msra.mxu0 0
      %1275 = vmatprep.mubr.bf16.mxu0 0
      %1276 = vmatmul.mubr.bf16.gmra.mxu0 %v1193
      %v1277 = vpop.f32.mrf.mxu0
      %v1278 = vadd.f32 %v986, %v1277
      %v1279 = vpop.f32.mrf.mxu0
      %v1280 = vpop.f32.mrf.mxu0
      %v1281 = vadd.f32 %v989, %v1280
      %v1282 = vpop.f32.mrf.mxu0
      %1283 = vmatprep.mubr.bf16.mxu0 0
      %1284 = vmatmul.mubr.bf16.gmra.mxu0 %v1196
      %v1285 = vpop.f32.mrf.mxu0
      %v1286 = vadd.f32 %v994, %v1285
      %v1287 = vpop.f32.mrf.mxu0
      %v1288 = vpop.f32.mrf.mxu0
      %v1289 = vadd.f32 %v997, %v1288
      %v1290 = vpop.f32.mrf.mxu0
      %1291 = vmatprep.mubr.bf16.mxu0 0
      %1292 = vmatmul.mubr.bf16.gmra.mxu0 %v1199
      %v1293 = vpop.f32.mrf.mxu0
      %v1294 = vadd.f32 %v1002, %v1293
      %v1295 = vpop.f32.mrf.mxu0
      %v1296 = vpop.f32.mrf.mxu0
      %v1297 = vadd.f32 %v1005, %v1296
      %v1298 = vpop.f32.mrf.mxu0
      %1299 = vmatprep.mubr.bf16.mxu0 0
      %1300 = vmatmul.mubr.bf16.gmra.mxu0 %v1202
      %v1301 = vpop.f32.mrf.mxu0
      %v1302 = vadd.f32 %v1010, %v1301
      %v1303 = vpop.f32.mrf.mxu0
      %v1304 = vpop.f32.mrf.mxu0
      %v1305 = vadd.f32 %v1013, %v1304
      %v1306 = vpop.f32.mrf.mxu0
      %1307 = vmatprep.mubr.bf16.mxu0 0
      %1308 = vmatmul.mubr.bf16.gmra.mxu0 %v1205
      %v1309 = vpop.f32.mrf.mxu0
      %v1310 = vadd.f32 %v1018, %v1309
      %v1311 = vpop.f32.mrf.mxu0
      %v1312 = vpop.f32.mrf.mxu0
      %v1313 = vadd.f32 %v1021, %v1312
      %v1314 = vpop.f32.mrf.mxu0
      %1315 = vmatprep.mubr.bf16.mxu0 0
      %1316 = vmatmul.mubr.bf16.gmra.mxu0 %v1208
      %v1317 = vpop.f32.mrf.mxu0
      %v1318 = vadd.f32 %v1026, %v1317
      %v1319 = vpop.f32.mrf.mxu0
      %v1320 = vpop.f32.mrf.mxu0
      %v1321 = vadd.f32 %v1029, %v1320
      %v1322 = vpop.f32.mrf.mxu0
      %1323 = vmatprep.mubr.bf16.mxu0 0
      %1324 = vmatmul.mubr.bf16.gmra.mxu0 %v1211
      %v1325 = vpop.f32.mrf.mxu0
      %v1326 = vadd.f32 %v1034, %v1325
      %v1327 = vpop.f32.mrf.mxu0
      %v1328 = vpop.f32.mrf.mxu0
      %v1329 = vadd.f32 %v1037, %v1328
      %v1330 = vpop.f32.mrf.mxu0
      %1331 = vmatprep.mubr.bf16.mxu0 0
      %1332 = vmatmul.mubr.bf16.gmra.mxu0 %v1214
      %v1333 = vpop.f32.mrf.mxu0
      %v1334 = vadd.f32 %v1042, %v1333
      %v1335 = vpop.f32.mrf.mxu0
      %v1336 = vpop.f32.mrf.mxu0
      %v1337 = vadd.f32 %v1045, %v1336
      %v1338 = vpop.f32.mrf.mxu0
      %1339 = vmatprep.mubr.bf16.mxu0 0
      %1340 = vmatmul.mubr.bf16.gmra.mxu0 %v1217
      %v1341 = vpop.f32.mrf.mxu0
      %v1342 = vadd.f32 %v1050, %v1341
      %v1343 = vpop.f32.mrf.mxu0
      %v1344 = vpop.f32.mrf.mxu0
      %v1345 = vadd.f32 %v1053, %v1344
      %v1346 = vpop.f32.mrf.mxu0
      %1347 = vmatprep.mubr.bf16.mxu0 0
      %1348 = vmatmul.mubr.bf16.gmra.mxu0 %v1220
      %v1349 = vpop.f32.mrf.mxu0
      %v1350 = vadd.f32 %v1058, %v1349
      %v1351 = vpop.f32.mrf.mxu0
      %v1352 = vpop.f32.mrf.mxu0
      %v1353 = vadd.f32 %v1061, %v1352
      %v1354 = vpop.f32.mrf.mxu0
      %1355 = vmatprep.mubr.bf16.mxu0 0
      %1356 = vmatmul.mubr.bf16.gmra.mxu0 %v1223
      %v1357 = vpop.f32.mrf.mxu0
      %v1358 = vadd.f32 %v1066, %v1357
      %v1359 = vpop.f32.mrf.mxu0
      %v1360 = vpop.f32.mrf.mxu0
      %v1361 = vadd.f32 %v1069, %v1360
      %v1362 = vpop.f32.mrf.mxu0
      %1363 = vmatprep.mubr.bf16.mxu0 0
      %1364 = vmatmul.mubr.bf16.gmra.mxu0 %v1226
      %v1365 = vpop.f32.mrf.mxu0
      %v1366 = vadd.f32 %v1074, %v1365
      %v1367 = vpop.f32.mrf.mxu0
      %v1368 = vpop.f32.mrf.mxu0
      %v1369 = vadd.f32 %v1077, %v1368
      %v1370 = vpop.f32.mrf.mxu0
      %1371 = vmatprep.mubr.bf16.mxu0 0
      %1372 = vmatmul.mubr.bf16.gmra.mxu0 %v1229
      %v1373 = vpop.f32.mrf.mxu0
      %v1374 = vadd.f32 %v1082, %v1373
      %v1375 = vpop.f32.mrf.mxu0
      %v1376 = vpop.f32.mrf.mxu0
      %v1377 = vadd.f32 %v1085, %v1376
      %v1378 = vpop.f32.mrf.mxu0
      %1379 = vmatprep.mubr.bf16.mxu0 0
      %1380 = vmatmul.mubr.bf16.gmra.mxu0 %v1232
      %v1381 = vpop.f32.mrf.mxu0
      %v1382 = vadd.f32 %v1090, %v1381
      %v1383 = vpop.f32.mrf.mxu0
      %v1384 = vpop.f32.mrf.mxu0
      %v1385 = vadd.f32 %v1093, %v1384
      %v1386 = vpop.f32.mrf.mxu0
      %1387 = vmatprep.mubr.bf16.mxu0 0
      %1388 = vmatmul.mubr.bf16.gmra.mxu0 %v1235
      %v1389 = vpop.f32.mrf.mxu0
      %v1390 = vadd.f32 %v1098, %v1389
      %v1391 = vpop.f32.mrf.mxu0
      %v1392 = vpop.f32.mrf.mxu0
      %v1393 = vadd.f32 %v1101, %v1392
      %v1394 = vpop.f32.mrf.mxu0
      %1395 = vmatprep.mubr.bf16.mxu0 0
      %1396 = vmatmul.mubr.bf16.gmra.mxu0 %v1238
      %v1397 = vpop.f32.mrf.mxu0
      %v1398 = vadd.f32 %v1106, %v1397
      %v1399 = vpop.f32.mrf.mxu0
      %v1400 = vpop.f32.mrf.mxu0
      %v1401 = vadd.f32 %v1109, %v1400
      %v1402 = vpop.f32.mrf.mxu0
      %1403 = vdwg.mxu0
      %v1404 = vld [vmem:[%s165] sm:$0xe]
      %v1405 = vld [vmem:[%s165 + $0x4] sm:$0xf]
      %v1406 = vld [vmem:[%s165 + $0x8] sm:$0x1]
      %vm1410 = vcmask 1042432
      %vm1411 = vcmask 1046532
      %vm1412 = vmor %vm1410, %vm1411
      %v1413 = vrot.slane %v1404, 5
      %v1414 = vrot.slane %v1413, 4
      %v1415 = vrot.slane %v1405, 5
      %v1416 = vsel %vm1412, %v1414, %v1415
      %v1417 = vrot.slane %v1415, 4
      %v1418 = vrot.slane %v1406, 5
      %v1419 = vsel %vm1412, %v1417, %v1418
      %1422 = vst.msk [vmem:[#allocation2] sm:$0xf] %vm174, %v1416
      %1423 = vst.msk [vmem:[#allocation2 + $0x4] sm:$0xf] %vm174, %v1419
      %v1424 = vld [vmem:[%s177] sm:$0xe]
      %v1425 = vld [vmem:[%s177 + $0x4] sm:$0xf]
      %v1426 = vld [vmem:[%s177 + $0x8] sm:$0x1]
      %v1430 = vrot.slane %v1424, 5
      %v1431 = vrot.slane %v1430, 4
      %v1432 = vrot.slane %v1425, 5
      %v1433 = vsel %vm1412, %v1431, %v1432
      %v1434 = vrot.slane %v1432, 4
      %v1435 = vrot.slane %v1426, 5
      %v1436 = vsel %vm1412, %v1434, %v1435
      %1439 = vst.msk [vmem:[#allocation2 + $0x8] sm:$0xf] %vm174, %v1433
      %1440 = vst.msk [vmem:[#allocation2 + $0xc] sm:$0xf] %vm174, %v1436
      %v1441 = vld [vmem:[%s182] sm:$0xe]
      %v1442 = vld [vmem:[%s182 + $0x4] sm:$0xf]
      %v1443 = vld [vmem:[%s182 + $0x8] sm:$0x1]
      %v1447 = vrot.slane %v1441, 5
      %v1448 = vrot.slane %v1447, 4
      %v1449 = vrot.slane %v1442, 5
      %v1450 = vsel %vm1412, %v1448, %v1449
      %v1451 = vrot.slane %v1449, 4
      %v1452 = vrot.slane %v1443, 5
      %v1453 = vsel %vm1412, %v1451, %v1452
      %1456 = vst.msk [vmem:[#allocation2 + $0x10] sm:$0xf] %vm174, %v1450
      %1457 = vst.msk [vmem:[#allocation2 + $0x14] sm:$0xf] %vm174, %v1453
      %v1458 = vld [vmem:[%s187] sm:$0xe]
      %v1459 = vld [vmem:[%s187 + $0x4] sm:$0xf]
      %v1460 = vld [vmem:[%s187 + $0x8] sm:$0x1]
      %v1464 = vrot.slane %v1458, 5
      %v1465 = vrot.slane %v1464, 4
      %v1466 = vrot.slane %v1459, 5
      %v1467 = vsel %vm1412, %v1465, %v1466
      %v1468 = vrot.slane %v1466, 4
      %v1469 = vrot.slane %v1460, 5
      %v1470 = vsel %vm1412, %v1468, %v1469
      %1473 = vst.msk [vmem:[#allocation2 + $0x18] sm:$0xf] %vm174, %v1467
      %1474 = vst.msk [vmem:[#allocation2 + $0x1c] sm:$0xf] %vm174, %v1470
      %v1475 = vld [vmem:[%s192] sm:$0xe]
      %v1476 = vld [vmem:[%s192 + $0x4] sm:$0xf]
      %v1477 = vld [vmem:[%s192 + $0x8] sm:$0x1]
      %v1481 = vrot.slane %v1475, 5
      %v1482 = vrot.slane %v1481, 4
      %v1483 = vrot.slane %v1476, 5
      %v1484 = vsel %vm1412, %v1482, %v1483
      %v1485 = vrot.slane %v1483, 4
      %v1486 = vrot.slane %v1477, 5
      %v1487 = vsel %vm1412, %v1485, %v1486
      %1490 = vst.msk [vmem:[#allocation2 + $0x20] sm:$0xf] %vm174, %v1484
      %1491 = vst.msk [vmem:[#allocation2 + $0x24] sm:$0xf] %vm174, %v1487
      %v1492 = vld [vmem:[%s197] sm:$0xe]
      %v1493 = vld [vmem:[%s197 + $0x4] sm:$0xf]
      %v1494 = vld [vmem:[%s197 + $0x8] sm:$0x1]
      %v1498 = vrot.slane %v1492, 5
      %v1499 = vrot.slane %v1498, 4
      %v1500 = vrot.slane %v1493, 5
      %v1501 = vsel %vm1412, %v1499, %v1500
      %v1502 = vrot.slane %v1500, 4
      %v1503 = vrot.slane %v1494, 5
      %v1504 = vsel %vm1412, %v1502, %v1503
      %1507 = vst.msk [vmem:[#allocation2 + $0x28] sm:$0xf] %vm174, %v1501
      %1508 = vst.msk [vmem:[#allocation2 + $0x2c] sm:$0xf] %vm174, %v1504
      %v1509 = vld [vmem:[%s202] sm:$0xe]
      %v1510 = vld [vmem:[%s202 + $0x4] sm:$0xf]
      %v1511 = vld [vmem:[%s202 + $0x8] sm:$0x1]
      %v1515 = vrot.slane %v1509, 5
      %v1516 = vrot.slane %v1515, 4
      %v1517 = vrot.slane %v1510, 5
      %v1518 = vsel %vm1412, %v1516, %v1517
      %v1519 = vrot.slane %v1517, 4
      %v1520 = vrot.slane %v1511, 5
      %v1521 = vsel %vm1412, %v1519, %v1520
      %1524 = vst.msk [vmem:[#allocation2 + $0x30] sm:$0xf] %vm174, %v1518
      %1525 = vst.msk [vmem:[#allocation2 + $0x34] sm:$0xf] %vm174, %v1521
      %v1526 = vld [vmem:[%s207] sm:$0xe]
      %v1527 = vld [vmem:[%s207 + $0x4] sm:$0xf]
      %v1528 = vld [vmem:[%s207 + $0x8] sm:$0x1]
      %v1532 = vrot.slane %v1526, 5
      %v1533 = vrot.slane %v1532, 4
      %v1534 = vrot.slane %v1527, 5
      %v1535 = vsel %vm1412, %v1533, %v1534
      %v1536 = vrot.slane %v1534, 4
      %v1537 = vrot.slane %v1528, 5
      %v1538 = vsel %vm1412, %v1536, %v1537
      %1541 = vst.msk [vmem:[#allocation2 + $0x38] sm:$0xf] %vm174, %v1535
      %1542 = vst.msk [vmem:[#allocation2 + $0x3c] sm:$0xf] %vm174, %v1538
      %v1543 = vld [vmem:[%s212] sm:$0xe]
      %v1544 = vld [vmem:[%s212 + $0x4] sm:$0xf]
      %v1545 = vld [vmem:[%s212 + $0x8] sm:$0x1]
      %v1549 = vrot.slane %v1543, 5
      %v1550 = vrot.slane %v1549, 4
      %v1551 = vrot.slane %v1544, 5
      %v1552 = vsel %vm1412, %v1550, %v1551
      %v1553 = vrot.slane %v1551, 4
      %v1554 = vrot.slane %v1545, 5
      %v1555 = vsel %vm1412, %v1553, %v1554
      %1558 = vst.msk [vmem:[#allocation2 + $0x40] sm:$0xf] %vm174, %v1552
      %1559 = vst.msk [vmem:[#allocation2 + $0x44] sm:$0xf] %vm174, %v1555
      %v1560 = vld [vmem:[%s217] sm:$0xe]
      %v1561 = vld [vmem:[%s217 + $0x4] sm:$0xf]
      %v1562 = vld [vmem:[%s217 + $0x8] sm:$0x1]
      %v1566 = vrot.slane %v1560, 5
      %v1567 = vrot.slane %v1566, 4
      %v1568 = vrot.slane %v1561, 5
      %v1569 = vsel %vm1412, %v1567, %v1568
      %v1570 = vrot.slane %v1568, 4
      %v1571 = vrot.slane %v1562, 5
      %v1572 = vsel %vm1412, %v1570, %v1571
      %1575 = vst.msk [vmem:[#allocation2 + $0x48] sm:$0xf] %vm174, %v1569
      %1576 = vst.msk [vmem:[#allocation2 + $0x4c] sm:$0xf] %vm174, %v1572
      %v1577 = vld [vmem:[%s222] sm:$0xe]
      %v1578 = vld [vmem:[%s222 + $0x4] sm:$0xf]
      %v1579 = vld [vmem:[%s222 + $0x8] sm:$0x1]
      %v1583 = vrot.slane %v1577, 5
      %v1584 = vrot.slane %v1583, 4
      %v1585 = vrot.slane %v1578, 5
      %v1586 = vsel %vm1412, %v1584, %v1585
      %v1587 = vrot.slane %v1585, 4
      %v1588 = vrot.slane %v1579, 5
      %v1589 = vsel %vm1412, %v1587, %v1588
      %1592 = vst.msk [vmem:[#allocation2 + $0x50] sm:$0xf] %vm174, %v1586
      %1593 = vst.msk [vmem:[#allocation2 + $0x54] sm:$0xf] %vm174, %v1589
      %v1594 = vld [vmem:[%s227] sm:$0xe]
      %v1595 = vld [vmem:[%s227 + $0x4] sm:$0xf]
      %v1596 = vld [vmem:[%s227 + $0x8] sm:$0x1]
      %v1600 = vrot.slane %v1594, 5
      %v1601 = vrot.slane %v1600, 4
      %v1602 = vrot.slane %v1595, 5
      %v1603 = vsel %vm1412, %v1601, %v1602
      %v1604 = vrot.slane %v1602, 4
      %v1605 = vrot.slane %v1596, 5
      %v1606 = vsel %vm1412, %v1604, %v1605
      %1609 = vst.msk [vmem:[#allocation2 + $0x58] sm:$0xf] %vm174, %v1603
      %1610 = vst.msk [vmem:[#allocation2 + $0x5c] sm:$0xf] %vm174, %v1606
      %v1611 = vld [vmem:[%s232] sm:$0xe]
      %v1612 = vld [vmem:[%s232 + $0x4] sm:$0xf]
      %v1613 = vld [vmem:[%s232 + $0x8] sm:$0x1]
      %v1617 = vrot.slane %v1611, 5
      %v1618 = vrot.slane %v1617, 4
      %v1619 = vrot.slane %v1612, 5
      %v1620 = vsel %vm1412, %v1618, %v1619
      %v1621 = vrot.slane %v1619, 4
      %v1622 = vrot.slane %v1613, 5
      %v1623 = vsel %vm1412, %v1621, %v1622
      %1626 = vst.msk [vmem:[#allocation2 + $0x60] sm:$0xf] %vm174, %v1620
      %1627 = vst.msk [vmem:[#allocation2 + $0x64] sm:$0xf] %vm174, %v1623
      %v1628 = vld [vmem:[%s237] sm:$0xe]
      %v1629 = vld [vmem:[%s237 + $0x4] sm:$0xf]
      %v1630 = vld [vmem:[%s237 + $0x8] sm:$0x1]
      %v1634 = vrot.slane %v1628, 5
      %v1635 = vrot.slane %v1634, 4
      %v1636 = vrot.slane %v1629, 5
      %v1637 = vsel %vm1412, %v1635, %v1636
      %v1638 = vrot.slane %v1636, 4
      %v1639 = vrot.slane %v1630, 5
      %v1640 = vsel %vm1412, %v1638, %v1639
      %1643 = vst.msk [vmem:[#allocation2 + $0x68] sm:$0xf] %vm174, %v1637
      %1644 = vst.msk [vmem:[#allocation2 + $0x6c] sm:$0xf] %vm174, %v1640
      %v1645 = vld [vmem:[%s242] sm:$0xe]
      %v1646 = vld [vmem:[%s242 + $0x4] sm:$0xf]
      %v1647 = vld [vmem:[%s242 + $0x8] sm:$0x1]
      %v1651 = vrot.slane %v1645, 5
      %v1652 = vrot.slane %v1651, 4
      %v1653 = vrot.slane %v1646, 5
      %v1654 = vsel %vm1412, %v1652, %v1653
      %v1655 = vrot.slane %v1653, 4
      %v1656 = vrot.slane %v1647, 5
      %v1657 = vsel %vm1412, %v1655, %v1656
      %1660 = vst.msk [vmem:[#allocation2 + $0x70] sm:$0xf] %vm174, %v1654
      %1661 = vst.msk [vmem:[#allocation2 + $0x74] sm:$0xf] %vm174, %v1657
      %v1662 = vld [vmem:[%s247] sm:$0xe]
      %v1663 = vld [vmem:[%s247 + $0x4] sm:$0xf]
      %v1664 = vld [vmem:[%s247 + $0x8] sm:$0x1]
      %v1668 = vrot.slane %v1662, 5
      %v1669 = vrot.slane %v1668, 4
      %v1670 = vrot.slane %v1663, 5
      %v1671 = vsel %vm1412, %v1669, %v1670
      %v1672 = vrot.slane %v1670, 4
      %v1673 = vrot.slane %v1664, 5
      %v1674 = vsel %vm1412, %v1672, %v1673
      %1677 = vst.msk [vmem:[#allocation2 + $0x78] sm:$0xf] %vm174, %v1671
      %1678 = vst.msk [vmem:[#allocation2 + $0x7c] sm:$0xf] %vm174, %v1674
      %v1679 = vld [vmem:[#allocation2] sm:$0xf]
      %v1680 = vld [vmem:[#allocation2 + $0x4] sm:$0xf]
      %v1681 = vld [vmem:[#allocation2 + $0x8] sm:$0xf]
      %v1682 = vld [vmem:[#allocation2 + $0xc] sm:$0xf]
      %v1683 = vld [vmem:[#allocation2 + $0x10] sm:$0xf]
      %v1684 = vld [vmem:[#allocation2 + $0x14] sm:$0xf]
      %v1685 = vld [vmem:[#allocation2 + $0x18] sm:$0xf]
      %v1686 = vld [vmem:[#allocation2 + $0x1c] sm:$0xf]
      %v1687 = vld [vmem:[#allocation2 + $0x20] sm:$0xf]
      %v1688 = vld [vmem:[#allocation2 + $0x24] sm:$0xf]
      %v1689 = vld [vmem:[#allocation2 + $0x28] sm:$0xf]
      %v1690 = vld [vmem:[#allocation2 + $0x2c] sm:$0xf]
      %v1691 = vld [vmem:[#allocation2 + $0x30] sm:$0xf]
      %v1692 = vld [vmem:[#allocation2 + $0x34] sm:$0xf]
      %v1693 = vld [vmem:[#allocation2 + $0x38] sm:$0xf]
      %v1694 = vld [vmem:[#allocation2 + $0x3c] sm:$0xf]
      %v1695 = vld [vmem:[#allocation2 + $0x40] sm:$0xf]
      %v1696 = vld [vmem:[#allocation2 + $0x44] sm:$0xf]
      %v1697 = vld [vmem:[#allocation2 + $0x48] sm:$0xf]
      %v1698 = vld [vmem:[#allocation2 + $0x4c] sm:$0xf]
      %v1699 = vld [vmem:[#allocation2 + $0x50] sm:$0xf]
      %v1700 = vld [vmem:[#allocation2 + $0x54] sm:$0xf]
      %v1701 = vld [vmem:[#allocation2 + $0x58] sm:$0xf]
      %v1702 = vld [vmem:[#allocation2 + $0x5c] sm:$0xf]
      %v1703 = vld [vmem:[#allocation2 + $0x60] sm:$0xf]
      %v1704 = vld [vmem:[#allocation2 + $0x64] sm:$0xf]
      %v1705 = vld [vmem:[#allocation2 + $0x68] sm:$0xf]
      %v1706 = vld [vmem:[#allocation2 + $0x6c] sm:$0xf]
      %v1707 = vld [vmem:[#allocation2 + $0x70] sm:$0xf]
      %v1708 = vld [vmem:[#allocation2 + $0x74] sm:$0xf]
      %v1709 = vld [vmem:[#allocation2 + $0x78] sm:$0xf]
      %v1710 = vld [vmem:[#allocation2 + $0x7c] sm:$0xf]
      %s1711 = scalar_lea.vmem %s1, 8
      %v1712 = vld [vmem:[%s1711] sm:$0xf]
      %v1745 = vunpack.c.l.b16 %v1679
      %v1746 = vunpack.c.l.b16 %v1680
      %v1747 = vunpack.c.l.b16 %v1681
      %v1748 = vunpack.c.l.b16 %v1682
      %v1749 = vunpack.c.l.b16 %v1683
      %v1750 = vunpack.c.l.b16 %v1684
      %v1751 = vunpack.c.l.b16 %v1685
      %v1752 = vunpack.c.l.b16 %v1686
      %v1753 = vunpack.c.l.b16 %v1687
      %v1754 = vunpack.c.l.b16 %v1688
      %v1755 = vunpack.c.l.b16 %v1689
      %v1756 = vunpack.c.l.b16 %v1690
      %v1757 = vunpack.c.l.b16 %v1691
      %v1758 = vunpack.c.l.b16 %v1692
      %v1759 = vunpack.c.l.b16 %v1693
      %v1760 = vunpack.c.l.b16 %v1694
      %v1761 = vunpack.c.l.b16 %v1695
      %v1762 = vunpack.c.l.b16 %v1696
      %v1763 = vunpack.c.l.b16 %v1697
      %v1764 = vunpack.c.l.b16 %v1698
      %v1765 = vunpack.c.l.b16 %v1699
      %v1766 = vunpack.c.l.b16 %v1700
      %v1767 = vunpack.c.l.b16 %v1701
      %v1768 = vunpack.c.l.b16 %v1702
      %v1769 = vunpack.c.l.b16 %v1703
      %v1770 = vunpack.c.l.b16 %v1704
      %v1771 = vunpack.c.l.b16 %v1705
      %v1772 = vunpack.c.l.b16 %v1706
      %v1773 = vunpack.c.l.b16 %v1707
      %v1774 = vunpack.c.l.b16 %v1708
      %v1775 = vunpack.c.l.b16 %v1709
      %v1776 = vunpack.c.l.b16 %v1710
      %v1777 = vpack.c.b16 %v1746, %v1745
      %v1778 = vpack.c.b16 %v1748, %v1747
      %v1779 = vpack.c.b16 %v1750, %v1749
      %v1780 = vpack.c.b16 %v1752, %v1751
      %v1781 = vpack.c.b16 %v1754, %v1753
      %v1782 = vpack.c.b16 %v1756, %v1755
      %v1783 = vpack.c.b16 %v1758, %v1757
      %v1784 = vpack.c.b16 %v1760, %v1759
      %v1785 = vpack.c.b16 %v1762, %v1761
      %v1786 = vpack.c.b16 %v1764, %v1763
      %v1787 = vpack.c.b16 %v1766, %v1765
      %v1788 = vpack.c.b16 %v1768, %v1767
      %v1789 = vpack.c.b16 %v1770, %v1769
      %v1790 = vpack.c.b16 %v1772, %v1771
      %v1791 = vpack.c.b16 %v1774, %v1773
      %v1792 = vpack.c.b16 %v1776, %v1775
      %v1794 = vsel %vm898, %v1777, 0
      %v1797 = vsel %vm898, %v1778, 0
      %v1800 = vsel %vm898, %v1779, 0
      %v1803 = vsel %vm898, %v1780, 0
      %v1806 = vsel %vm898, %v1781, 0
      %v1809 = vsel %vm898, %v1782, 0
      %v1812 = vsel %vm898, %v1783, 0
      %v1815 = vsel %vm898, %v1784, 0
      %v1818 = vsel %vm898, %v1785, 0
      %v1821 = vsel %vm898, %v1786, 0
      %v1824 = vsel %vm898, %v1787, 0
      %v1827 = vsel %vm898, %v1788, 0
      %v1830 = vsel %vm898, %v1789, 0
      %v1833 = vsel %vm898, %v1790, 0
      %v1836 = vsel %vm898, %v1791, 0
      %v1839 = vsel %vm898, %v1792, 0
      %v1842 = vsel %vm947, %v1712, 0
      %1844 = vmatprep.subr.bf16.mxu0 0
      %1845 = vmatpush1.bf16.msra.mxu0 0
      %1846 = vmatprep.subr.bf16.mxu0 0
      %1847 = vmatpush1.bf16.msra.mxu0 0
      %1848 = vmatprep.subr.bf16.mxu0 0
      %1849 = vmatpush1.bf16.msra.mxu0 0
      %1850 = vmatprep.subr.bf16.mxu0 0
      %1851 = vmatpush1.bf16.msra.mxu0 0
      %1852 = vmatprep.subr.bf16.mxu0 0
      %1853 = vmatpush1.bf16.msra.mxu0 0
      %1854 = vmatprep.subr.bf16.mxu0 0
      %1855 = vmatpush1.bf16.msra.mxu0 0
      %1856 = vmatprep.subr.bf16.mxu0 0
      %1857 = vmatpush1.bf16.msra.mxu0 0
      %1858 = vmatprep.subr.bf16.mxu0 0
      %1859 = vmatpush1.bf16.msra.mxu0 %v1842
      %1860 = vmatprep.subr.bf16.mxu0 0
      %1861 = vmatpush2.bf16.msra.mxu0 0
      %1862 = vmatprep.subr.bf16.mxu0 0
      %1863 = vmatpush2.bf16.msra.mxu0 0
      %1864 = vmatprep.subr.bf16.mxu0 0
      %1865 = vmatpush2.bf16.msra.mxu0 0
      %1866 = vmatprep.subr.bf16.mxu0 0
      %1867 = vmatpush2.bf16.msra.mxu0 0
      %1868 = vmatprep.subr.bf16.mxu0 0
      %1869 = vmatpush2.bf16.msra.mxu0 0
      %1870 = vmatprep.subr.bf16.mxu0 0
      %1871 = vmatpush2.bf16.msra.mxu0 0
      %1872 = vmatprep.subr.bf16.mxu0 0
      %1873 = vmatpush2.bf16.msra.mxu0 0
      %1874 = vmatprep.subr.bf16.mxu0 0
      %1875 = vmatpush2.bf16.msra.mxu0 0
      %1876 = vmatprep.mubr.bf16.mxu0 0
      %1877 = vmatmul.mubr.bf16.gmra.mxu0 %v1794
      %v1878 = vpop.f32.mrf.mxu0
      %v1879 = vadd.f32 0.0, %v1878
      %v1880 = vpop.f32.mrf.mxu0
      %v1881 = vpop.f32.mrf.mxu0
      %v1882 = vadd.f32 0.0, %v1881
      %v1883 = vpop.f32.mrf.mxu0
      %1884 = vmatprep.mubr.bf16.mxu0 0
      %1885 = vmatmul.mubr.bf16.gmra.mxu0 %v1797
      %v1886 = vpop.f32.mrf.mxu0
      %v1887 = vadd.f32 0.0, %v1886
      %v1888 = vpop.f32.mrf.mxu0
      %v1889 = vpop.f32.mrf.mxu0
      %v1890 = vadd.f32 0.0, %v1889
      %v1891 = vpop.f32.mrf.mxu0
      %1892 = vmatprep.mubr.bf16.mxu0 0
      %1893 = vmatmul.mubr.bf16.gmra.mxu0 %v1800
      %v1894 = vpop.f32.mrf.mxu0
      %v1895 = vadd.f32 0.0, %v1894
      %v1896 = vpop.f32.mrf.mxu0
      %v1897 = vpop.f32.mrf.mxu0
      %v1898 = vadd.f32 0.0, %v1897
      %v1899 = vpop.f32.mrf.mxu0
      %1900 = vmatprep.mubr.bf16.mxu0 0
      %1901 = vmatmul.mubr.bf16.gmra.mxu0 %v1803
      %v1902 = vpop.f32.mrf.mxu0
      %v1903 = vadd.f32 0.0, %v1902
      %v1904 = vpop.f32.mrf.mxu0
      %v1905 = vpop.f32.mrf.mxu0
      %v1906 = vadd.f32 0.0, %v1905
      %v1907 = vpop.f32.mrf.mxu0
      %1908 = vmatprep.mubr.bf16.mxu0 0
      %1909 = vmatmul.mubr.bf16.gmra.mxu0 %v1806
      %v1910 = vpop.f32.mrf.mxu0
      %v1911 = vadd.f32 0.0, %v1910
      %v1912 = vpop.f32.mrf.mxu0
      %v1913 = vpop.f32.mrf.mxu0
      %v1914 = vadd.f32 0.0, %v1913
      %v1915 = vpop.f32.mrf.mxu0
      %1916 = vmatprep.mubr.bf16.mxu0 0
      %1917 = vmatmul.mubr.bf16.gmra.mxu0 %v1809
      %v1918 = vpop.f32.mrf.mxu0
      %v1919 = vadd.f32 0.0, %v1918
      %v1920 = vpop.f32.mrf.mxu0
      %v1921 = vpop.f32.mrf.mxu0
      %v1922 = vadd.f32 0.0, %v1921
      %v1923 = vpop.f32.mrf.mxu0
      %1924 = vmatprep.mubr.bf16.mxu0 0
      %1925 = vmatmul.mubr.bf16.gmra.mxu0 %v1812
      %v1926 = vpop.f32.mrf.mxu0
      %v1927 = vadd.f32 0.0, %v1926
      %v1928 = vpop.f32.mrf.mxu0
      %v1929 = vpop.f32.mrf.mxu0
      %v1930 = vadd.f32 0.0, %v1929
      %v1931 = vpop.f32.mrf.mxu0
      %1932 = vmatprep.mubr.bf16.mxu0 0
      %1933 = vmatmul.mubr.bf16.gmra.mxu0 %v1815
      %v1934 = vpop.f32.mrf.mxu0
      %v1935 = vadd.f32 0.0, %v1934
      %v1936 = vpop.f32.mrf.mxu0
      %v1937 = vpop.f32.mrf.mxu0
      %v1938 = vadd.f32 0.0, %v1937
      %v1939 = vpop.f32.mrf.mxu0
      %1940 = vmatprep.mubr.bf16.mxu0 0
      %1941 = vmatmul.mubr.bf16.gmra.mxu0 %v1818
      %v1942 = vpop.f32.mrf.mxu0
      %v1943 = vadd.f32 0.0, %v1942
      %v1944 = vpop.f32.mrf.mxu0
      %v1945 = vpop.f32.mrf.mxu0
      %v1946 = vadd.f32 0.0, %v1945
      %v1947 = vpop.f32.mrf.mxu0
      %1948 = vmatprep.mubr.bf16.mxu0 0
      %1949 = vmatmul.mubr.bf16.gmra.mxu0 %v1821
      %v1950 = vpop.f32.mrf.mxu0
      %v1951 = vadd.f32 0.0, %v1950
      %v1952 = vpop.f32.mrf.mxu0
      %v1953 = vpop.f32.mrf.mxu0
      %v1954 = vadd.f32 0.0, %v1953
      %v1955 = vpop.f32.mrf.mxu0
      %1956 = vmatprep.mubr.bf16.mxu0 0
      %1957 = vmatmul.mubr.bf16.gmra.mxu0 %v1824
      %v1958 = vpop.f32.mrf.mxu0
      %v1959 = vadd.f32 0.0, %v1958
      %v1960 = vpop.f32.mrf.mxu0
      %v1961 = vpop.f32.mrf.mxu0
      %v1962 = vadd.f32 0.0, %v1961
      %v1963 = vpop.f32.mrf.mxu0
      %1964 = vmatprep.mubr.bf16.mxu0 0
      %1965 = vmatmul.mubr.bf16.gmra.mxu0 %v1827
      %v1966 = vpop.f32.mrf.mxu0
      %v1967 = vadd.f32 0.0, %v1966
      %v1968 = vpop.f32.mrf.mxu0
      %v1969 = vpop.f32.mrf.mxu0
      %v1970 = vadd.f32 0.0, %v1969
      %v1971 = vpop.f32.mrf.mxu0
      %1972 = vmatprep.mubr.bf16.mxu0 0
      %1973 = vmatmul.mubr.bf16.gmra.mxu0 %v1830
      %v1974 = vpop.f32.mrf.mxu0
      %v1975 = vadd.f32 0.0, %v1974
      %v1976 = vpop.f32.mrf.mxu0
      %v1977 = vpop.f32.mrf.mxu0
      %v1978 = vadd.f32 0.0, %v1977
      %v1979 = vpop.f32.mrf.mxu0
      %1980 = vmatprep.mubr.bf16.mxu0 0
      %1981 = vmatmul.mubr.bf16.gmra.mxu0 %v1833
      %v1982 = vpop.f32.mrf.mxu0
      %v1983 = vadd.f32 0.0, %v1982
      %v1984 = vpop.f32.mrf.mxu0
      %v1985 = vpop.f32.mrf.mxu0
      %v1986 = vadd.f32 0.0, %v1985
      %v1987 = vpop.f32.mrf.mxu0
      %1988 = vmatprep.mubr.bf16.mxu0 0
      %1989 = vmatmul.mubr.bf16.gmra.mxu0 %v1836
      %v1990 = vpop.f32.mrf.mxu0
      %v1991 = vadd.f32 0.0, %v1990
      %v1992 = vpop.f32.mrf.mxu0
      %v1993 = vpop.f32.mrf.mxu0
      %v1994 = vadd.f32 0.0, %v1993
      %v1995 = vpop.f32.mrf.mxu0
      %1996 = vmatprep.mubr.bf16.mxu0 0
      %1997 = vmatmul.mubr.bf16.gmra.mxu0 %v1839
      %v1998 = vpop.f32.mrf.mxu0
      %v1999 = vadd.f32 0.0, %v1998
      %v2000 = vpop.f32.mrf.mxu0
      %v2001 = vpop.f32.mrf.mxu0
      %v2002 = vadd.f32 0.0, %v2001
      %v2003 = vpop.f32.mrf.mxu0
      %2004 = vdwg.mxu0
      %v2005 = vadd.f32 %v1278, %v1879
      %v2006 = vadd.f32 %v1281, %v1882
      %v2007 = vadd.f32 %v1286, %v1887
      %v2008 = vadd.f32 %v1289, %v1890
      %v2009 = vadd.f32 %v1294, %v1895
      %v2010 = vadd.f32 %v1297, %v1898
      %v2011 = vadd.f32 %v1302, %v1903
      %v2012 = vadd.f32 %v1305, %v1906
      %v2013 = vadd.f32 %v1310, %v1911
      %v2014 = vadd.f32 %v1313, %v1914
      %v2015 = vadd.f32 %v1318, %v1919
      %v2016 = vadd.f32 %v1321, %v1922
      %v2017 = vadd.f32 %v1326, %v1927
      %v2018 = vadd.f32 %v1329, %v1930
      %v2019 = vadd.f32 %v1334, %v1935
      %v2020 = vadd.f32 %v1337, %v1938
      %v2021 = vadd.f32 %v1342, %v1943
      %v2022 = vadd.f32 %v1345, %v1946
      %v2023 = vadd.f32 %v1350, %v1951
      %v2024 = vadd.f32 %v1353, %v1954
      %v2025 = vadd.f32 %v1358, %v1959
      %v2026 = vadd.f32 %v1361, %v1962
      %v2027 = vadd.f32 %v1366, %v1967
      %v2028 = vadd.f32 %v1369, %v1970
      %v2029 = vadd.f32 %v1374, %v1975
      %v2030 = vadd.f32 %v1377, %v1978
      %v2031 = vadd.f32 %v1382, %v1983
      %v2032 = vadd.f32 %v1385, %v1986
      %v2033 = vadd.f32 %v1390, %v1991
      %v2034 = vadd.f32 %v1393, %v1994
      %v2035 = vadd.f32 %v1398, %v1999
      %v2036 = vadd.f32 %v1401, %v2002
      %v2037 = vld [vmem:[%s177] sm:$0xf]
      %v2038 = vld [vmem:[%s177 + $0x4] sm:$0xf]
      %2039 = vst.msk [vmem:[#allocation2] sm:$0xf] %vm174, %v2037
      %2040 = vst.msk [vmem:[#allocation2 + $0x4] sm:$0xf] %vm174, %v2038
      %v2041 = vld [vmem:[%s182] sm:$0xf]
      %v2042 = vld [vmem:[%s182 + $0x4] sm:$0xf]
      %2043 = vst.msk [vmem:[#allocation2 + $0x8] sm:$0xf] %vm174, %v2041
      %2044 = vst.msk [vmem:[#allocation2 + $0xc] sm:$0xf] %vm174, %v2042
      %v2045 = vld [vmem:[%s187] sm:$0xf]
      %v2046 = vld [vmem:[%s187 + $0x4] sm:$0xf]
      %2047 = vst.msk [vmem:[#allocation2 + $0x10] sm:$0xf] %vm174, %v2045
      %2048 = vst.msk [vmem:[#allocation2 + $0x14] sm:$0xf] %vm174, %v2046
      %v2049 = vld [vmem:[%s192] sm:$0xf]
      %v2050 = vld [vmem:[%s192 + $0x4] sm:$0xf]
      %2051 = vst.msk [vmem:[#allocation2 + $0x18] sm:$0xf] %vm174, %v2049
      %2052 = vst.msk [vmem:[#allocation2 + $0x1c] sm:$0xf] %vm174, %v2050
      %v2053 = vld [vmem:[%s197] sm:$0xf]
      %v2054 = vld [vmem:[%s197 + $0x4] sm:$0xf]
      %2055 = vst.msk [vmem:[#allocation2 + $0x20] sm:$0xf] %vm174, %v2053
      %2056 = vst.msk [vmem:[#allocation2 + $0x24] sm:$0xf] %vm174, %v2054
      %v2057 = vld [vmem:[%s202] sm:$0xf]
      %v2058 = vld [vmem:[%s202 + $0x4] sm:$0xf]
      %2059 = vst.msk [vmem:[#allocation2 + $0x28] sm:$0xf] %vm174, %v2057
      %2060 = vst.msk [vmem:[#allocation2 + $0x2c] sm:$0xf] %vm174, %v2058
      %v2061 = vld [vmem:[%s207] sm:$0xf]
      %v2062 = vld [vmem:[%s207 + $0x4] sm:$0xf]
      %2063 = vst.msk [vmem:[#allocation2 + $0x30] sm:$0xf] %vm174, %v2061
      %2064 = vst.msk [vmem:[#allocation2 + $0x34] sm:$0xf] %vm174, %v2062
      %v2065 = vld [vmem:[%s212] sm:$0xf]
      %v2066 = vld [vmem:[%s212 + $0x4] sm:$0xf]
      %2067 = vst.msk [vmem:[#allocation2 + $0x38] sm:$0xf] %vm174, %v2065
      %2068 = vst.msk [vmem:[#allocation2 + $0x3c] sm:$0xf] %vm174, %v2066
      %v2069 = vld [vmem:[%s217] sm:$0xf]
      %v2070 = vld [vmem:[%s217 + $0x4] sm:$0xf]
      %2071 = vst.msk [vmem:[#allocation2 + $0x40] sm:$0xf] %vm174, %v2069
      %2072 = vst.msk [vmem:[#allocation2 + $0x44] sm:$0xf] %vm174, %v2070
      %v2073 = vld [vmem:[%s222] sm:$0xf]
      %v2074 = vld [vmem:[%s222 + $0x4] sm:$0xf]
      %2075 = vst.msk [vmem:[#allocation2 + $0x48] sm:$0xf] %vm174, %v2073
      %2076 = vst.msk [vmem:[#allocation2 + $0x4c] sm:$0xf] %vm174, %v2074
      %v2077 = vld [vmem:[%s227] sm:$0xf]
      %v2078 = vld [vmem:[%s227 + $0x4] sm:$0xf]
      %2079 = vst.msk [vmem:[#allocation2 + $0x50] sm:$0xf] %vm174, %v2077
      %2080 = vst.msk [vmem:[#allocation2 + $0x54] sm:$0xf] %vm174, %v2078
      %v2081 = vld [vmem:[%s232] sm:$0xf]
      %v2082 = vld [vmem:[%s232 + $0x4] sm:$0xf]
      %2083 = vst.msk [vmem:[#allocation2 + $0x58] sm:$0xf] %vm174, %v2081
      %2084 = vst.msk [vmem:[#allocation2 + $0x5c] sm:$0xf] %vm174, %v2082
      %v2085 = vld [vmem:[%s237] sm:$0xf]
      %v2086 = vld [vmem:[%s237 + $0x4] sm:$0xf]
      %2087 = vst.msk [vmem:[#allocation2 + $0x60] sm:$0xf] %vm174, %v2085
      %2088 = vst.msk [vmem:[#allocation2 + $0x64] sm:$0xf] %vm174, %v2086
      %v2089 = vld [vmem:[%s242] sm:$0xf]
      %v2090 = vld [vmem:[%s242 + $0x4] sm:$0xf]
      %2091 = vst.msk [vmem:[#allocation2 + $0x68] sm:$0xf] %vm174, %v2089
      %2092 = vst.msk [vmem:[#allocation2 + $0x6c] sm:$0xf] %vm174, %v2090
      %v2093 = vld [vmem:[%s247] sm:$0xf]
      %v2094 = vld [vmem:[%s247 + $0x4] sm:$0xf]
      %2095 = vst.msk [vmem:[#allocation2 + $0x70] sm:$0xf] %vm174, %v2093
      %2096 = vst.msk [vmem:[#allocation2 + $0x74] sm:$0xf] %vm174, %v2094
      %s2097 = scalar_lea.vmem %s165, 192
      %v2098 = vld [vmem:[%s2097] sm:$0xf]
      %v2099 = vld [vmem:[%s2097 + $0x4] sm:$0xf]
      %2100 = vst.msk [vmem:[#allocation2 + $0x78] sm:$0xf] %vm174, %v2098
      %2101 = vst.msk [vmem:[#allocation2 + $0x7c] sm:$0xf] %vm174, %v2099
      %v2102 = vld [vmem:[#allocation2] sm:$0xf]
      %v2103 = vld [vmem:[#allocation2 + $0x4] sm:$0xf]
      %v2104 = vld [vmem:[#allocation2 + $0x8] sm:$0xf]
      %v2105 = vld [vmem:[#allocation2 + $0xc] sm:$0xf]
      %v2106 = vld [vmem:[#allocation2 + $0x10] sm:$0xf]
      %v2107 = vld [vmem:[#allocation2 + $0x14] sm:$0xf]
      %v2108 = vld [vmem:[#allocation2 + $0x18] sm:$0xf]
      %v2109 = vld [vmem:[#allocation2 + $0x1c] sm:$0xf]
      %v2110 = vld [vmem:[#allocation2 + $0x20] sm:$0xf]
      %v2111 = vld [vmem:[#allocation2 + $0x24] sm:$0xf]
      %v2112 = vld [vmem:[#allocation2 + $0x28] sm:$0xf]
      %v2113 = vld [vmem:[#allocation2 + $0x2c] sm:$0xf]
      %v2114 = vld [vmem:[#allocation2 + $0x30] sm:$0xf]
      %v2115 = vld [vmem:[#allocation2 + $0x34] sm:$0xf]
      %v2116 = vld [vmem:[#allocation2 + $0x38] sm:$0xf]
      %v2117 = vld [vmem:[#allocation2 + $0x3c] sm:$0xf]
      %v2118 = vld [vmem:[#allocation2 + $0x40] sm:$0xf]
      %v2119 = vld [vmem:[#allocation2 + $0x44] sm:$0xf]
      %v2120 = vld [vmem:[#allocation2 + $0x48] sm:$0xf]
      %v2121 = vld [vmem:[#allocation2 + $0x4c] sm:$0xf]
      %v2122 = vld [vmem:[#allocation2 + $0x50] sm:$0xf]
      %v2123 = vld [vmem:[#allocation2 + $0x54] sm:$0xf]
      %v2124 = vld [vmem:[#allocation2 + $0x58] sm:$0xf]
      %v2125 = vld [vmem:[#allocation2 + $0x5c] sm:$0xf]
      %v2126 = vld [vmem:[#allocation2 + $0x60] sm:$0xf]
      %v2127 = vld [vmem:[#allocation2 + $0x64] sm:$0xf]
      %v2128 = vld [vmem:[#allocation2 + $0x68] sm:$0xf]
      %v2129 = vld [vmem:[#allocation2 + $0x6c] sm:$0xf]
      %v2130 = vld [vmem:[#allocation2 + $0x70] sm:$0xf]
      %v2131 = vld [vmem:[#allocation2 + $0x74] sm:$0xf]
      %v2132 = vld [vmem:[#allocation2 + $0x78] sm:$0xf]
      %v2133 = vld [vmem:[#allocation2 + $0x7c] sm:$0xf]
      %s2134 = scalar_lea.vmem %s1, 12
      %v2135 = vld [vmem:[%s2134] sm:$0xf]
      %v2168 = vunpack.c.l.b16 %v2102
      %v2169 = vunpack.c.l.b16 %v2103
      %v2170 = vunpack.c.l.b16 %v2104
      %v2171 = vunpack.c.l.b16 %v2105
      %v2172 = vunpack.c.l.b16 %v2106
      %v2173 = vunpack.c.l.b16 %v2107
      %v2174 = vunpack.c.l.b16 %v2108
      %v2175 = vunpack.c.l.b16 %v2109
      %v2176 = vunpack.c.l.b16 %v2110
      %v2177 = vunpack.c.l.b16 %v2111
      %v2178 = vunpack.c.l.b16 %v2112
      %v2179 = vunpack.c.l.b16 %v2113
      %v2180 = vunpack.c.l.b16 %v2114
      %v2181 = vunpack.c.l.b16 %v2115
      %v2182 = vunpack.c.l.b16 %v2116
      %v2183 = vunpack.c.l.b16 %v2117
      %v2184 = vunpack.c.l.b16 %v2118
      %v2185 = vunpack.c.l.b16 %v2119
      %v2186 = vunpack.c.l.b16 %v2120
      %v2187 = vunpack.c.l.b16 %v2121
      %v2188 = vunpack.c.l.b16 %v2122
      %v2189 = vunpack.c.l.b16 %v2123
      %v2190 = vunpack.c.l.b16 %v2124
      %v2191 = vunpack.c.l.b16 %v2125
      %v2192 = vunpack.c.l.b16 %v2126
      %v2193 = vunpack.c.l.b16 %v2127
      %v2194 = vunpack.c.l.b16 %v2128
      %v2195 = vunpack.c.l.b16 %v2129
      %v2196 = vunpack.c.l.b16 %v2130
      %v2197 = vunpack.c.l.b16 %v2131
      %v2198 = vunpack.c.l.b16 %v2132
      %v2199 = vunpack.c.l.b16 %v2133
      %v2200 = vpack.c.b16 %v2169, %v2168
      %v2201 = vpack.c.b16 %v2171, %v2170
      %v2202 = vpack.c.b16 %v2173, %v2172
      %v2203 = vpack.c.b16 %v2175, %v2174
      %v2204 = vpack.c.b16 %v2177, %v2176
      %v2205 = vpack.c.b16 %v2179, %v2178
      %v2206 = vpack.c.b16 %v2181, %v2180
      %v2207 = vpack.c.b16 %v2183, %v2182
      %v2208 = vpack.c.b16 %v2185, %v2184
      %v2209 = vpack.c.b16 %v2187, %v2186
      %v2210 = vpack.c.b16 %v2189, %v2188
      %v2211 = vpack.c.b16 %v2191, %v2190
      %v2212 = vpack.c.b16 %v2193, %v2192
      %v2213 = vpack.c.b16 %v2195, %v2194
      %v2214 = vpack.c.b16 %v2197, %v2196
      %v2215 = vpack.c.b16 %v2199, %v2198
      %v2217 = vsel %vm898, %v2200, 0
      %v2220 = vsel %vm898, %v2201, 0
      %v2223 = vsel %vm898, %v2202, 0
      %v2226 = vsel %vm898, %v2203, 0
      %v2229 = vsel %vm898, %v2204, 0
      %v2232 = vsel %vm898, %v2205, 0
      %v2235 = vsel %vm898, %v2206, 0
      %v2238 = vsel %vm898, %v2207, 0
      %v2241 = vsel %vm898, %v2208, 0
      %v2244 = vsel %vm898, %v2209, 0
      %v2247 = vsel %vm898, %v2210, 0
      %v2250 = vsel %vm898, %v2211, 0
      %v2253 = vsel %vm898, %v2212, 0
      %v2256 = vsel %vm898, %v2213, 0
      %v2259 = vsel %vm898, %v2214, 0
      %v2262 = vsel %vm898, %v2215, 0
      %v2265 = vsel %vm947, %v2135, 0
      %2267 = vmatprep.subr.bf16.mxu0 0
      %2268 = vmatpush1.bf16.msra.mxu0 0
      %2269 = vmatprep.subr.bf16.mxu0 0
      %2270 = vmatpush1.bf16.msra.mxu0 0
      %2271 = vmatprep.subr.bf16.mxu0 0
      %2272 = vmatpush1.bf16.msra.mxu0 0
      %2273 = vmatprep.subr.bf16.mxu0 0
      %2274 = vmatpush1.bf16.msra.mxu0 0
      %2275 = vmatprep.subr.bf16.mxu0 0
      %2276 = vmatpush1.bf16.msra.mxu0 0
      %2277 = vmatprep.subr.bf16.mxu0 0
      %2278 = vmatpush1.bf16.msra.mxu0 0
      %2279 = vmatprep.subr.bf16.mxu0 0
      %2280 = vmatpush1.bf16.msra.mxu0 0
      %2281 = vmatprep.subr.bf16.mxu0 0
      %2282 = vmatpush1.bf16.msra.mxu0 %v2265
      %2283 = vmatprep.subr.bf16.mxu0 0
      %2284 = vmatpush2.bf16.msra.mxu0 0
      %2285 = vmatprep.subr.bf16.mxu0 0
      %2286 = vmatpush2.bf16.msra.mxu0 0
      %2287 = vmatprep.subr.bf16.mxu0 0
      %2288 = vmatpush2.bf16.msra.mxu0 0
      %2289 = vmatprep.subr.bf16.mxu0 0
      %2290 = vmatpush2.bf16.msra.mxu0 0
      %2291 = vmatprep.subr.bf16.mxu0 0
      %2292 = vmatpush2.bf16.msra.mxu0 0
      %2293 = vmatprep.subr.bf16.mxu0 0
      %2294 = vmatpush2.bf16.msra.mxu0 0
      %2295 = vmatprep.subr.bf16.mxu0 0
      %2296 = vmatpush2.bf16.msra.mxu0 0
      %2297 = vmatprep.subr.bf16.mxu0 0
      %2298 = vmatpush2.bf16.msra.mxu0 0
      %2299 = vmatprep.mubr.bf16.mxu0 0
      %2300 = vmatmul.mubr.bf16.gmra.mxu0 %v2217
      %v2301 = vpop.f32.mrf.mxu0
      %v2302 = vadd.f32 0.0, %v2301
      %v2303 = vpop.f32.mrf.mxu0
      %v2304 = vpop.f32.mrf.mxu0
      %v2305 = vadd.f32 0.0, %v2304
      %v2306 = vpop.f32.mrf.mxu0
      %2307 = vmatprep.mubr.bf16.mxu0 0
      %2308 = vmatmul.mubr.bf16.gmra.mxu0 %v2220
      %v2309 = vpop.f32.mrf.mxu0
      %v2310 = vadd.f32 0.0, %v2309
      %v2311 = vpop.f32.mrf.mxu0
      %v2312 = vpop.f32.mrf.mxu0
      %v2313 = vadd.f32 0.0, %v2312
      %v2314 = vpop.f32.mrf.mxu0
      %2315 = vmatprep.mubr.bf16.mxu0 0
      %2316 = vmatmul.mubr.bf16.gmra.mxu0 %v2223
      %v2317 = vpop.f32.mrf.mxu0
      %v2318 = vadd.f32 0.0, %v2317
      %v2319 = vpop.f32.mrf.mxu0
      %v2320 = vpop.f32.mrf.mxu0
      %v2321 = vadd.f32 0.0, %v2320
      %v2322 = vpop.f32.mrf.mxu0
      %2323 = vmatprep.mubr.bf16.mxu0 0
      %2324 = vmatmul.mubr.bf16.gmra.mxu0 %v2226
      %v2325 = vpop.f32.mrf.mxu0
      %v2326 = vadd.f32 0.0, %v2325
      %v2327 = vpop.f32.mrf.mxu0
      %v2328 = vpop.f32.mrf.mxu0
      %v2329 = vadd.f32 0.0, %v2328
      %v2330 = vpop.f32.mrf.mxu0
      %2331 = vmatprep.mubr.bf16.mxu0 0
      %2332 = vmatmul.mubr.bf16.gmra.mxu0 %v2229
      %v2333 = vpop.f32.mrf.mxu0
      %v2334 = vadd.f32 0.0, %v2333
      %v2335 = vpop.f32.mrf.mxu0
      %v2336 = vpop.f32.mrf.mxu0
      %v2337 = vadd.f32 0.0, %v2336
      %v2338 = vpop.f32.mrf.mxu0
      %2339 = vmatprep.mubr.bf16.mxu0 0
      %2340 = vmatmul.mubr.bf16.gmra.mxu0 %v2232
      %v2341 = vpop.f32.mrf.mxu0
      %v2342 = vadd.f32 0.0, %v2341
      %v2343 = vpop.f32.mrf.mxu0
      %v2344 = vpop.f32.mrf.mxu0
      %v2345 = vadd.f32 0.0, %v2344
      %v2346 = vpop.f32.mrf.mxu0
      %2347 = vmatprep.mubr.bf16.mxu0 0
      %2348 = vmatmul.mubr.bf16.gmra.mxu0 %v2235
      %v2349 = vpop.f32.mrf.mxu0
      %v2350 = vadd.f32 0.0, %v2349
      %v2351 = vpop.f32.mrf.mxu0
      %v2352 = vpop.f32.mrf.mxu0
      %v2353 = vadd.f32 0.0, %v2352
      %v2354 = vpop.f32.mrf.mxu0
      %2355 = vmatprep.mubr.bf16.mxu0 0
      %2356 = vmatmul.mubr.bf16.gmra.mxu0 %v2238
      %v2357 = vpop.f32.mrf.mxu0
      %v2358 = vadd.f32 0.0, %v2357
      %v2359 = vpop.f32.mrf.mxu0
      %v2360 = vpop.f32.mrf.mxu0
      %v2361 = vadd.f32 0.0, %v2360
      %v2362 = vpop.f32.mrf.mxu0
      %2363 = vmatprep.mubr.bf16.mxu0 0
      %2364 = vmatmul.mubr.bf16.gmra.mxu0 %v2241
      %v2365 = vpop.f32.mrf.mxu0
      %v2366 = vadd.f32 0.0, %v2365
      %v2367 = vpop.f32.mrf.mxu0
      %v2368 = vpop.f32.mrf.mxu0
      %v2369 = vadd.f32 0.0, %v2368
      %v2370 = vpop.f32.mrf.mxu0
      %2371 = vmatprep.mubr.bf16.mxu0 0
      %2372 = vmatmul.mubr.bf16.gmra.mxu0 %v2244
      %v2373 = vpop.f32.mrf.mxu0
      %v2374 = vadd.f32 0.0, %v2373
      %v2375 = vpop.f32.mrf.mxu0
      %v2376 = vpop.f32.mrf.mxu0
      %v2377 = vadd.f32 0.0, %v2376
      %v2378 = vpop.f32.mrf.mxu0
      %2379 = vmatprep.mubr.bf16.mxu0 0
      %2380 = vmatmul.mubr.bf16.gmra.mxu0 %v2247
      %v2381 = vpop.f32.mrf.mxu0
      %v2382 = vadd.f32 0.0, %v2381
      %v2383 = vpop.f32.mrf.mxu0
      %v2384 = vpop.f32.mrf.mxu0
      %v2385 = vadd.f32 0.0, %v2384
      %v2386 = vpop.f32.mrf.mxu0
      %2387 = vmatprep.mubr.bf16.mxu0 0
      %2388 = vmatmul.mubr.bf16.gmra.mxu0 %v2250
      %v2389 = vpop.f32.mrf.mxu0
      %v2390 = vadd.f32 0.0, %v2389
      %v2391 = vpop.f32.mrf.mxu0
      %v2392 = vpop.f32.mrf.mxu0
      %v2393 = vadd.f32 0.0, %v2392
      %v2394 = vpop.f32.mrf.mxu0
      %2395 = vmatprep.mubr.bf16.mxu0 0
      %2396 = vmatmul.mubr.bf16.gmra.mxu0 %v2253
      %v2397 = vpop.f32.mrf.mxu0
      %v2398 = vadd.f32 0.0, %v2397
      %v2399 = vpop.f32.mrf.mxu0
      %v2400 = vpop.f32.mrf.mxu0
      %v2401 = vadd.f32 0.0, %v2400
      %v2402 = vpop.f32.mrf.mxu0
      %2403 = vmatprep.mubr.bf16.mxu0 0
      %2404 = vmatmul.mubr.bf16.gmra.mxu0 %v2256
      %v2405 = vpop.f32.mrf.mxu0
      %v2406 = vadd.f32 0.0, %v2405
      %v2407 = vpop.f32.mrf.mxu0
      %v2408 = vpop.f32.mrf.mxu0
      %v2409 = vadd.f32 0.0, %v2408
      %v2410 = vpop.f32.mrf.mxu0
      %2411 = vmatprep.mubr.bf16.mxu0 0
      %2412 = vmatmul.mubr.bf16.gmra.mxu0 %v2259
      %v2413 = vpop.f32.mrf.mxu0
      %v2414 = vadd.f32 0.0, %v2413
      %v2415 = vpop.f32.mrf.mxu0
      %v2416 = vpop.f32.mrf.mxu0
      %v2417 = vadd.f32 0.0, %v2416
      %v2418 = vpop.f32.mrf.mxu0
      %2419 = vmatprep.mubr.bf16.mxu0 0
      %2420 = vmatmul.mubr.bf16.gmra.mxu0 %v2262
      %v2421 = vpop.f32.mrf.mxu0
      %v2422 = vadd.f32 0.0, %v2421
      %v2423 = vpop.f32.mrf.mxu0
      %v2424 = vpop.f32.mrf.mxu0
      %v2425 = vadd.f32 0.0, %v2424
      %v2426 = vpop.f32.mrf.mxu0
      %2427 = vdwg.mxu0
      %v2428 = vadd.f32 %v2005, %v2302
      %v2429 = vadd.f32 %v2006, %v2305
      %v2430 = vadd.f32 %v2007, %v2310
      %v2431 = vadd.f32 %v2008, %v2313
      %v2432 = vadd.f32 %v2009, %v2318
      %v2433 = vadd.f32 %v2010, %v2321
      %v2434 = vadd.f32 %v2011, %v2326
      %v2435 = vadd.f32 %v2012, %v2329
      %v2436 = vadd.f32 %v2013, %v2334
      %v2437 = vadd.f32 %v2014, %v2337
      %v2438 = vadd.f32 %v2015, %v2342
      %v2439 = vadd.f32 %v2016, %v2345
      %v2440 = vadd.f32 %v2017, %v2350
      %v2441 = vadd.f32 %v2018, %v2353
      %v2442 = vadd.f32 %v2019, %v2358
      %v2443 = vadd.f32 %v2020, %v2361
      %v2444 = vadd.f32 %v2021, %v2366
      %v2445 = vadd.f32 %v2022, %v2369
      %v2446 = vadd.f32 %v2023, %v2374
      %v2447 = vadd.f32 %v2024, %v2377
      %v2448 = vadd.f32 %v2025, %v2382
      %v2449 = vadd.f32 %v2026, %v2385
      %v2450 = vadd.f32 %v2027, %v2390
      %v2451 = vadd.f32 %v2028, %v2393
      %v2452 = vadd.f32 %v2029, %v2398
      %v2453 = vadd.f32 %v2030, %v2401
      %v2454 = vadd.f32 %v2031, %v2406
      %v2455 = vadd.f32 %v2032, %v2409
      %v2456 = vadd.f32 %v2033, %v2414
      %v2457 = vadd.f32 %v2034, %v2417
      %v2458 = vadd.f32 %v2035, %v2422
      %v2459 = vadd.f32 %v2036, %v2425
      %v2460 = vld [vmem:[%s177] sm:$0xf]
      %v2461 = vld [vmem:[%s177 + $0x4] sm:$0xf]
      %v2462 = vld [vmem:[%s177 + $0x8] sm:$0x1]
      %v2464 = vshrl.u32 %v2460, 16
      %v2466 = vrot.slane %v2464, 4
      %v2467 = vshll.u32 %v2460, 16
      %v2469 = vrot.slane %v2467, 5
      %v2470 = vor.u32 %v2466, %v2469
      %v2471 = vrot.slane %v2470, 4
      %v2473 = vshll.u32 %v2461, 16
      %v2475 = vrot.slane %v2473, 5
      %v2476 = vsel %vm290, %v2471, %v2475
      %v2477 = vshrl.u32 %v2461, 16
      %v2479 = vrot.slane %v2477, 4
      %v2480 = vor.u32 %v2479, %v2475
      %v2481 = vrot.slane %v2480, 4
      %v2483 = vshll.u32 %v2462, 16
      %v2485 = vrot.slane %v2483, 5
      %v2486 = vsel %vm290, %v2481, %v2485
      %2489 = vst.msk [vmem:[#allocation2] sm:$0xf] %vm174, %v2476
      %2490 = vst.msk [vmem:[#allocation2 + $0x4] sm:$0xf] %vm174, %v2486
      %v2491 = vld [vmem:[%s182] sm:$0xf]
      %v2492 = vld [vmem:[%s182 + $0x4] sm:$0xf]
      %v2493 = vld [vmem:[%s182 + $0x8] sm:$0x1]
      %v2495 = vshrl.u32 %v2491, 16
      %v2497 = vrot.slane %v2495, 4
      %v2498 = vshll.u32 %v2491, 16
      %v2500 = vrot.slane %v2498, 5
      %v2501 = vor.u32 %v2497, %v2500
      %v2502 = vrot.slane %v2501, 4
      %v2504 = vshll.u32 %v2492, 16
      %v2506 = vrot.slane %v2504, 5
      %v2507 = vsel %vm290, %v2502, %v2506
      %v2508 = vshrl.u32 %v2492, 16
      %v2510 = vrot.slane %v2508, 4
      %v2511 = vor.u32 %v2510, %v2506
      %v2512 = vrot.slane %v2511, 4
      %v2514 = vshll.u32 %v2493, 16
      %v2516 = vrot.slane %v2514, 5
      %v2517 = vsel %vm290, %v2512, %v2516
      %2520 = vst.msk [vmem:[#allocation2 + $0x8] sm:$0xf] %vm174, %v2507
      %2521 = vst.msk [vmem:[#allocation2 + $0xc] sm:$0xf] %vm174, %v2517
      %v2522 = vld [vmem:[%s187] sm:$0xf]
      %v2523 = vld [vmem:[%s187 + $0x4] sm:$0xf]
      %v2524 = vld [vmem:[%s187 + $0x8] sm:$0x1]
      %v2526 = vshrl.u32 %v2522, 16
      %v2528 = vrot.slane %v2526, 4
      %v2529 = vshll.u32 %v2522, 16
      %v2531 = vrot.slane %v2529, 5
      %v2532 = vor.u32 %v2528, %v2531
      %v2533 = vrot.slane %v2532, 4
      %v2535 = vshll.u32 %v2523, 16
      %v2537 = vrot.slane %v2535, 5
      %v2538 = vsel %vm290, %v2533, %v2537
      %v2539 = vshrl.u32 %v2523, 16
      %v2541 = vrot.slane %v2539, 4
      %v2542 = vor.u32 %v2541, %v2537
      %v2543 = vrot.slane %v2542, 4
      %v2545 = vshll.u32 %v2524, 16
      %v2547 = vrot.slane %v2545, 5
      %v2548 = vsel %vm290, %v2543, %v2547
      %2551 = vst.msk [vmem:[#allocation2 + $0x10] sm:$0xf] %vm174, %v2538
      %2552 = vst.msk [vmem:[#allocation2 + $0x14] sm:$0xf] %vm174, %v2548
      %v2553 = vld [vmem:[%s192] sm:$0xf]
      %v2554 = vld [vmem:[%s192 + $0x4] sm:$0xf]
      %v2555 = vld [vmem:[%s192 + $0x8] sm:$0x1]
      %v2557 = vshrl.u32 %v2553, 16
      %v2559 = vrot.slane %v2557, 4
      %v2560 = vshll.u32 %v2553, 16
      %v2562 = vrot.slane %v2560, 5
      %v2563 = vor.u32 %v2559, %v2562
      %v2564 = vrot.slane %v2563, 4
      %v2566 = vshll.u32 %v2554, 16
      %v2568 = vrot.slane %v2566, 5
      %v2569 = vsel %vm290, %v2564, %v2568
      %v2570 = vshrl.u32 %v2554, 16
      %v2572 = vrot.slane %v2570, 4
      %v2573 = vor.u32 %v2572, %v2568
      %v2574 = vrot.slane %v2573, 4
      %v2576 = vshll.u32 %v2555, 16
      %v2578 = vrot.slane %v2576, 5
      %v2579 = vsel %vm290, %v2574, %v2578
      %2582 = vst.msk [vmem:[#allocation2 + $0x18] sm:$0xf] %vm174, %v2569
      %2583 = vst.msk [vmem:[#allocation2 + $0x1c] sm:$0xf] %vm174, %v2579
      %v2584 = vld [vmem:[%s197] sm:$0xf]
      %v2585 = vld [vmem:[%s197 + $0x4] sm:$0xf]
      %v2586 = vld [vmem:[%s197 + $0x8] sm:$0x1]
      %v2588 = vshrl.u32 %v2584, 16
      %v2590 = vrot.slane %v2588, 4
      %v2591 = vshll.u32 %v2584, 16
      %v2593 = vrot.slane %v2591, 5
      %v2594 = vor.u32 %v2590, %v2593
      %v2595 = vrot.slane %v2594, 4
      %v2597 = vshll.u32 %v2585, 16
      %v2599 = vrot.slane %v2597, 5
      %v2600 = vsel %vm290, %v2595, %v2599
      %v2601 = vshrl.u32 %v2585, 16
      %v2603 = vrot.slane %v2601, 4
      %v2604 = vor.u32 %v2603, %v2599
      %v2605 = vrot.slane %v2604, 4
      %v2607 = vshll.u32 %v2586, 16
      %v2609 = vrot.slane %v2607, 5
      %v2610 = vsel %vm290, %v2605, %v2609
      %2613 = vst.msk [vmem:[#allocation2 + $0x20] sm:$0xf] %vm174, %v2600
      %2614 = vst.msk [vmem:[#allocation2 + $0x24] sm:$0xf] %vm174, %v2610
      %v2615 = vld [vmem:[%s202] sm:$0xf]
      %v2616 = vld [vmem:[%s202 + $0x4] sm:$0xf]
      %v2617 = vld [vmem:[%s202 + $0x8] sm:$0x1]
      %v2619 = vshrl.u32 %v2615, 16
      %v2621 = vrot.slane %v2619, 4
      %v2622 = vshll.u32 %v2615, 16
      %v2624 = vrot.slane %v2622, 5
      %v2625 = vor.u32 %v2621, %v2624
      %v2626 = vrot.slane %v2625, 4
      %v2628 = vshll.u32 %v2616, 16
      %v2630 = vrot.slane %v2628, 5
      %v2631 = vsel %vm290, %v2626, %v2630
      %v2632 = vshrl.u32 %v2616, 16
      %v2634 = vrot.slane %v2632, 4
      %v2635 = vor.u32 %v2634, %v2630
      %v2636 = vrot.slane %v2635, 4
      %v2638 = vshll.u32 %v2617, 16
      %v2640 = vrot.slane %v2638, 5
      %v2641 = vsel %vm290, %v2636, %v2640
      %2644 = vst.msk [vmem:[#allocation2 + $0x28] sm:$0xf] %vm174, %v2631
      %2645 = vst.msk [vmem:[#allocation2 + $0x2c] sm:$0xf] %vm174, %v2641
      %v2646 = vld [vmem:[%s207] sm:$0xf]
      %v2647 = vld [vmem:[%s207 + $0x4] sm:$0xf]
      %v2648 = vld [vmem:[%s207 + $0x8] sm:$0x1]
      %v2650 = vshrl.u32 %v2646, 16
      %v2652 = vrot.slane %v2650, 4
      %v2653 = vshll.u32 %v2646, 16
      %v2655 = vrot.slane %v2653, 5
      %v2656 = vor.u32 %v2652, %v2655
      %v2657 = vrot.slane %v2656, 4
      %v2659 = vshll.u32 %v2647, 16
      %v2661 = vrot.slane %v2659, 5
      %v2662 = vsel %vm290, %v2657, %v2661
      %v2663 = vshrl.u32 %v2647, 16
      %v2665 = vrot.slane %v2663, 4
      %v2666 = vor.u32 %v2665, %v2661
      %v2667 = vrot.slane %v2666, 4
      %v2669 = vshll.u32 %v2648, 16
      %v2671 = vrot.slane %v2669, 5
      %v2672 = vsel %vm290, %v2667, %v2671
      %2675 = vst.msk [vmem:[#allocation2 + $0x30] sm:$0xf] %vm174, %v2662
      %2676 = vst.msk [vmem:[#allocation2 + $0x34] sm:$0xf] %vm174, %v2672
      %v2677 = vld [vmem:[%s212] sm:$0xf]
      %v2678 = vld [vmem:[%s212 + $0x4] sm:$0xf]
      %v2679 = vld [vmem:[%s212 + $0x8] sm:$0x1]
      %v2681 = vshrl.u32 %v2677, 16
      %v2683 = vrot.slane %v2681, 4
      %v2684 = vshll.u32 %v2677, 16
      %v2686 = vrot.slane %v2684, 5
      %v2687 = vor.u32 %v2683, %v2686
      %v2688 = vrot.slane %v2687, 4
      %v2690 = vshll.u32 %v2678, 16
      %v2692 = vrot.slane %v2690, 5
      %v2693 = vsel %vm290, %v2688, %v2692
      %v2694 = vshrl.u32 %v2678, 16
      %v2696 = vrot.slane %v2694, 4
      %v2697 = vor.u32 %v2696, %v2692
      %v2698 = vrot.slane %v2697, 4
      %v2700 = vshll.u32 %v2679, 16
      %v2702 = vrot.slane %v2700, 5
      %v2703 = vsel %vm290, %v2698, %v2702
      %2706 = vst.msk [vmem:[#allocation2 + $0x38] sm:$0xf] %vm174, %v2693
      %2707 = vst.msk [vmem:[#allocation2 + $0x3c] sm:$0xf] %vm174, %v2703
      %v2708 = vld [vmem:[%s217] sm:$0xf]
      %v2709 = vld [vmem:[%s217 + $0x4] sm:$0xf]
      %v2710 = vld [vmem:[%s217 + $0x8] sm:$0x1]
      %v2712 = vshrl.u32 %v2708, 16
      %v2714 = vrot.slane %v2712, 4
      %v2715 = vshll.u32 %v2708, 16
      %v2717 = vrot.slane %v2715, 5
      %v2718 = vor.u32 %v2714, %v2717
      %v2719 = vrot.slane %v2718, 4
      %v2721 = vshll.u32 %v2709, 16
      %v2723 = vrot.slane %v2721, 5
      %v2724 = vsel %vm290, %v2719, %v2723
      %v2725 = vshrl.u32 %v2709, 16
      %v2727 = vrot.slane %v2725, 4
      %v2728 = vor.u32 %v2727, %v2723
      %v2729 = vrot.slane %v2728, 4
      %v2731 = vshll.u32 %v2710, 16
      %v2733 = vrot.slane %v2731, 5
      %v2734 = vsel %vm290, %v2729, %v2733
      %2737 = vst.msk [vmem:[#allocation2 + $0x40] sm:$0xf] %vm174, %v2724
      %2738 = vst.msk [vmem:[#allocation2 + $0x44] sm:$0xf] %vm174, %v2734
      %v2739 = vld [vmem:[%s222] sm:$0xf]
      %v2740 = vld [vmem:[%s222 + $0x4] sm:$0xf]
      %v2741 = vld [vmem:[%s222 + $0x8] sm:$0x1]
      %v2743 = vshrl.u32 %v2739, 16
      %v2745 = vrot.slane %v2743, 4
      %v2746 = vshll.u32 %v2739, 16
      %v2748 = vrot.slane %v2746, 5
      %v2749 = vor.u32 %v2745, %v2748
      %v2750 = vrot.slane %v2749, 4
      %v2752 = vshll.u32 %v2740, 16
      %v2754 = vrot.slane %v2752, 5
      %v2755 = vsel %vm290, %v2750, %v2754
      %v2756 = vshrl.u32 %v2740, 16
      %v2758 = vrot.slane %v2756, 4
      %v2759 = vor.u32 %v2758, %v2754
      %v2760 = vrot.slane %v2759, 4
      %v2762 = vshll.u32 %v2741, 16
      %v2764 = vrot.slane %v2762, 5
      %v2765 = vsel %vm290, %v2760, %v2764
      %2768 = vst.msk [vmem:[#allocation2 + $0x48] sm:$0xf] %vm174, %v2755
      %2769 = vst.msk [vmem:[#allocation2 + $0x4c] sm:$0xf] %vm174, %v2765
      %v2770 = vld [vmem:[%s227] sm:$0xf]
      %v2771 = vld [vmem:[%s227 + $0x4] sm:$0xf]
      %v2772 = vld [vmem:[%s227 + $0x8] sm:$0x1]
      %v2774 = vshrl.u32 %v2770, 16
      %v2776 = vrot.slane %v2774, 4
      %v2777 = vshll.u32 %v2770, 16
      %v2779 = vrot.slane %v2777, 5
      %v2780 = vor.u32 %v2776, %v2779
      %v2781 = vrot.slane %v2780, 4
      %v2783 = vshll.u32 %v2771, 16
      %v2785 = vrot.slane %v2783, 5
      %v2786 = vsel %vm290, %v2781, %v2785
      %v2787 = vshrl.u32 %v2771, 16
      %v2789 = vrot.slane %v2787, 4
      %v2790 = vor.u32 %v2789, %v2785
      %v2791 = vrot.slane %v2790, 4
      %v2793 = vshll.u32 %v2772, 16
      %v2795 = vrot.slane %v2793, 5
      %v2796 = vsel %vm290, %v2791, %v2795
      %2799 = vst.msk [vmem:[#allocation2 + $0x50] sm:$0xf] %vm174, %v2786
      %2800 = vst.msk [vmem:[#allocation2 + $0x54] sm:$0xf] %vm174, %v2796
      %v2801 = vld [vmem:[%s232] sm:$0xf]
      %v2802 = vld [vmem:[%s232 + $0x4] sm:$0xf]
      %v2803 = vld [vmem:[%s232 + $0x8] sm:$0x1]
      %v2805 = vshrl.u32 %v2801, 16
      %v2807 = vrot.slane %v2805, 4
      %v2808 = vshll.u32 %v2801, 16
      %v2810 = vrot.slane %v2808, 5
      %v2811 = vor.u32 %v2807, %v2810
      %v2812 = vrot.slane %v2811, 4
      %v2814 = vshll.u32 %v2802, 16
      %v2816 = vrot.slane %v2814, 5
      %v2817 = vsel %vm290, %v2812, %v2816
      %v2818 = vshrl.u32 %v2802, 16
      %v2820 = vrot.slane %v2818, 4
      %v2821 = vor.u32 %v2820, %v2816
      %v2822 = vrot.slane %v2821, 4
      %v2824 = vshll.u32 %v2803, 16
      %v2826 = vrot.slane %v2824, 5
      %v2827 = vsel %vm290, %v2822, %v2826
      %2830 = vst.msk [vmem:[#allocation2 + $0x58] sm:$0xf] %vm174, %v2817
      %2831 = vst.msk [vmem:[#allocation2 + $0x5c] sm:$0xf] %vm174, %v2827
      %v2832 = vld [vmem:[%s237] sm:$0xf]
      %v2833 = vld [vmem:[%s237 + $0x4] sm:$0xf]
      %v2834 = vld [vmem:[%s237 + $0x8] sm:$0x1]
      %v2836 = vshrl.u32 %v2832, 16
      %v2838 = vrot.slane %v2836, 4
      %v2839 = vshll.u32 %v2832, 16
      %v2841 = vrot.slane %v2839, 5
      %v2842 = vor.u32 %v2838, %v2841
      %v2843 = vrot.slane %v2842, 4
      %v2845 = vshll.u32 %v2833, 16
      %v2847 = vrot.slane %v2845, 5
      %v2848 = vsel %vm290, %v2843, %v2847
      %v2849 = vshrl.u32 %v2833, 16
      %v2851 = vrot.slane %v2849, 4
      %v2852 = vor.u32 %v2851, %v2847
      %v2853 = vrot.slane %v2852, 4
      %v2855 = vshll.u32 %v2834, 16
      %v2857 = vrot.slane %v2855, 5
      %v2858 = vsel %vm290, %v2853, %v2857
      %2861 = vst.msk [vmem:[#allocation2 + $0x60] sm:$0xf] %vm174, %v2848
      %2862 = vst.msk [vmem:[#allocation2 + $0x64] sm:$0xf] %vm174, %v2858
      %v2863 = vld [vmem:[%s242] sm:$0xf]
      %v2864 = vld [vmem:[%s242 + $0x4] sm:$0xf]
      %v2865 = vld [vmem:[%s242 + $0x8] sm:$0x1]
      %v2867 = vshrl.u32 %v2863, 16
      %v2869 = vrot.slane %v2867, 4
      %v2870 = vshll.u32 %v2863, 16
      %v2872 = vrot.slane %v2870, 5
      %v2873 = vor.u32 %v2869, %v2872
      %v2874 = vrot.slane %v2873, 4
      %v2876 = vshll.u32 %v2864, 16
      %v2878 = vrot.slane %v2876, 5
      %v2879 = vsel %vm290, %v2874, %v2878
      %v2880 = vshrl.u32 %v2864, 16
      %v2882 = vrot.slane %v2880, 4
      %v2883 = vor.u32 %v2882, %v2878
      %v2884 = vrot.slane %v2883, 4
      %v2886 = vshll.u32 %v2865, 16
      %v2888 = vrot.slane %v2886, 5
      %v2889 = vsel %vm290, %v2884, %v2888
      %2892 = vst.msk [vmem:[#allocation2 + $0x68] sm:$0xf] %vm174, %v2879
      %2893 = vst.msk [vmem:[#allocation2 + $0x6c] sm:$0xf] %vm174, %v2889
      %v2894 = vld [vmem:[%s247] sm:$0xf]
      %v2895 = vld [vmem:[%s247 + $0x4] sm:$0xf]
      %v2896 = vld [vmem:[%s247 + $0x8] sm:$0x1]
      %v2898 = vshrl.u32 %v2894, 16
      %v2900 = vrot.slane %v2898, 4
      %v2901 = vshll.u32 %v2894, 16
      %v2903 = vrot.slane %v2901, 5
      %v2904 = vor.u32 %v2900, %v2903
      %v2905 = vrot.slane %v2904, 4
      %v2907 = vshll.u32 %v2895, 16
      %v2909 = vrot.slane %v2907, 5
      %v2910 = vsel %vm290, %v2905, %v2909
      %v2911 = vshrl.u32 %v2895, 16
      %v2913 = vrot.slane %v2911, 4
      %v2914 = vor.u32 %v2913, %v2909
      %v2915 = vrot.slane %v2914, 4
      %v2917 = vshll.u32 %v2896, 16
      %v2919 = vrot.slane %v2917, 5
      %v2920 = vsel %vm290, %v2915, %v2919
      %2923 = vst.msk [vmem:[#allocation2 + $0x70] sm:$0xf] %vm174, %v2910
      %2924 = vst.msk [vmem:[#allocation2 + $0x74] sm:$0xf] %vm174, %v2920
      %v2925 = vld [vmem:[%s2097] sm:$0xf]
      %v2926 = vld [vmem:[%s2097 + $0x4] sm:$0xf]
      %v2927 = vld [vmem:[%s2097 + $0x8] sm:$0x1]
      %v2929 = vshrl.u32 %v2925, 16
      %v2931 = vrot.slane %v2929, 4
      %v2932 = vshll.u32 %v2925, 16
      %v2934 = vrot.slane %v2932, 5
      %v2935 = vor.u32 %v2931, %v2934
      %v2936 = vrot.slane %v2935, 4
      %v2938 = vshll.u32 %v2926, 16
      %v2940 = vrot.slane %v2938, 5
      %v2941 = vsel %vm290, %v2936, %v2940
      %v2942 = vshrl.u32 %v2926, 16
      %v2944 = vrot.slane %v2942, 4
      %v2945 = vor.u32 %v2944, %v2940
      %v2946 = vrot.slane %v2945, 4
      %v2948 = vshll.u32 %v2927, 16
      %v2950 = vrot.slane %v2948, 5
      %v2951 = vsel %vm290, %v2946, %v2950
      %2954 = vst.msk [vmem:[#allocation2 + $0x78] sm:$0xf] %vm174, %v2941
      %2955 = vst.msk [vmem:[#allocation2 + $0x7c] sm:$0xf] %vm174, %v2951
      %v2956 = vld [vmem:[#allocation2] sm:$0xf]
      %v2957 = vld [vmem:[#allocation2 + $0x4] sm:$0xf]
      %v2958 = vld [vmem:[#allocation2 + $0x8] sm:$0xf]
      %v2959 = vld [vmem:[#allocation2 + $0xc] sm:$0xf]
      %v2960 = vld [vmem:[#allocation2 + $0x10] sm:$0xf]
      %v2961 = vld [vmem:[#allocation2 + $0x14] sm:$0xf]
      %v2962 = vld [vmem:[#allocation2 + $0x18] sm:$0xf]
      %v2963 = vld [vmem:[#allocation2 + $0x1c] sm:$0xf]
      %v2964 = vld [vmem:[#allocation2 + $0x20] sm:$0xf]
      %v2965 = vld [vmem:[#allocation2 + $0x24] sm:$0xf]
      %v2966 = vld [vmem:[#allocation2 + $0x28] sm:$0xf]
      %v2967 = vld [vmem:[#allocation2 + $0x2c] sm:$0xf]
      %v2968 = vld [vmem:[#allocation2 + $0x30] sm:$0xf]
      %v2969 = vld [vmem:[#allocation2 + $0x34] sm:$0xf]
      %v2970 = vld [vmem:[#allocation2 + $0x38] sm:$0xf]
      %v2971 = vld [vmem:[#allocation2 + $0x3c] sm:$0xf]
      %v2972 = vld [vmem:[#allocation2 + $0x40] sm:$0xf]
      %v2973 = vld [vmem:[#allocation2 + $0x44] sm:$0xf]
      %v2974 = vld [vmem:[#allocation2 + $0x48] sm:$0xf]
      %v2975 = vld [vmem:[#allocation2 + $0x4c] sm:$0xf]
      %v2976 = vld [vmem:[#allocation2 + $0x50] sm:$0xf]
      %v2977 = vld [vmem:[#allocation2 + $0x54] sm:$0xf]
      %v2978 = vld [vmem:[#allocation2 + $0x58] sm:$0xf]
      %v2979 = vld [vmem:[#allocation2 + $0x5c] sm:$0xf]
      %v2980 = vld [vmem:[#allocation2 + $0x60] sm:$0xf]
      %v2981 = vld [vmem:[#allocation2 + $0x64] sm:$0xf]
      %v2982 = vld [vmem:[#allocation2 + $0x68] sm:$0xf]
      %v2983 = vld [vmem:[#allocation2 + $0x6c] sm:$0xf]
      %v2984 = vld [vmem:[#allocation2 + $0x70] sm:$0xf]
      %v2985 = vld [vmem:[#allocation2 + $0x74] sm:$0xf]
      %v2986 = vld [vmem:[#allocation2 + $0x78] sm:$0xf]
      %v2987 = vld [vmem:[#allocation2 + $0x7c] sm:$0xf]
      %s2988 = scalar_lea.vmem %s1, 16
      %v2989 = vld [vmem:[%s2988] sm:$0xf]
      %v3022 = vunpack.c.l.b16 %v2956
      %v3023 = vunpack.c.l.b16 %v2957
      %v3024 = vunpack.c.l.b16 %v2958
      %v3025 = vunpack.c.l.b16 %v2959
      %v3026 = vunpack.c.l.b16 %v2960
      %v3027 = vunpack.c.l.b16 %v2961
      %v3028 = vunpack.c.l.b16 %v2962
      %v3029 = vunpack.c.l.b16 %v2963
      %v3030 = vunpack.c.l.b16 %v2964
      %v3031 = vunpack.c.l.b16 %v2965
      %v3032 = vunpack.c.l.b16 %v2966
      %v3033 = vunpack.c.l.b16 %v2967
      %v3034 = vunpack.c.l.b16 %v2968
      %v3035 = vunpack.c.l.b16 %v2969
      %v3036 = vunpack.c.l.b16 %v2970
      %v3037 = vunpack.c.l.b16 %v2971
      %v3038 = vunpack.c.l.b16 %v2972
      %v3039 = vunpack.c.l.b16 %v2973
      %v3040 = vunpack.c.l.b16 %v2974
      %v3041 = vunpack.c.l.b16 %v2975
      %v3042 = vunpack.c.l.b16 %v2976
      %v3043 = vunpack.c.l.b16 %v2977
      %v3044 = vunpack.c.l.b16 %v2978
      %v3045 = vunpack.c.l.b16 %v2979
      %v3046 = vunpack.c.l.b16 %v2980
      %v3047 = vunpack.c.l.b16 %v2981
      %v3048 = vunpack.c.l.b16 %v2982
      %v3049 = vunpack.c.l.b16 %v2983
      %v3050 = vunpack.c.l.b16 %v2984
      %v3051 = vunpack.c.l.b16 %v2985
      %v3052 = vunpack.c.l.b16 %v2986
      %v3053 = vunpack.c.l.b16 %v2987
      %v3054 = vpack.c.b16 %v3023, %v3022
      %v3055 = vpack.c.b16 %v3025, %v3024
      %v3056 = vpack.c.b16 %v3027, %v3026
      %v3057 = vpack.c.b16 %v3029, %v3028
      %v3058 = vpack.c.b16 %v3031, %v3030
      %v3059 = vpack.c.b16 %v3033, %v3032
      %v3060 = vpack.c.b16 %v3035, %v3034
      %v3061 = vpack.c.b16 %v3037, %v3036
      %v3062 = vpack.c.b16 %v3039, %v3038
      %v3063 = vpack.c.b16 %v3041, %v3040
      %v3064 = vpack.c.b16 %v3043, %v3042
      %v3065 = vpack.c.b16 %v3045, %v3044
      %v3066 = vpack.c.b16 %v3047, %v3046
      %v3067 = vpack.c.b16 %v3049, %v3048
      %v3068 = vpack.c.b16 %v3051, %v3050
      %v3069 = vpack.c.b16 %v3053, %v3052
      %v3071 = vsel %vm898, %v3054, 0
      %v3074 = vsel %vm898, %v3055, 0
      %v3077 = vsel %vm898, %v3056, 0
      %v3080 = vsel %vm898, %v3057, 0
      %v3083 = vsel %vm898, %v3058, 0
      %v3086 = vsel %vm898, %v3059, 0
      %v3089 = vsel %vm898, %v3060, 0
      %v3092 = vsel %vm898, %v3061, 0
      %v3095 = vsel %vm898, %v3062, 0
      %v3098 = vsel %vm898, %v3063, 0
      %v3101 = vsel %vm898, %v3064, 0
      %v3104 = vsel %vm898, %v3065, 0
      %v3107 = vsel %vm898, %v3066, 0
      %v3110 = vsel %vm898, %v3067, 0
      %v3113 = vsel %vm898, %v3068, 0
      %v3116 = vsel %vm898, %v3069, 0
      %v3119 = vsel %vm947, %v2989, 0
      %3121 = vmatprep.subr.bf16.mxu0 0
      %3122 = vmatpush1.bf16.msra.mxu0 0
      %3123 = vmatprep.subr.bf16.mxu0 0
      %3124 = vmatpush1.bf16.msra.mxu0 0
      %3125 = vmatprep.subr.bf16.mxu0 0
      %3126 = vmatpush1.bf16.msra.mxu0 0
      %3127 = vmatprep.subr.bf16.mxu0 0
      %3128 = vmatpush1.bf16.msra.mxu0 0
      %3129 = vmatprep.subr.bf16.mxu0 0
      %3130 = vmatpush1.bf16.msra.mxu0 0
      %3131 = vmatprep.subr.bf16.mxu0 0
      %3132 = vmatpush1.bf16.msra.mxu0 0
      %3133 = vmatprep.subr.bf16.mxu0 0
      %3134 = vmatpush1.bf16.msra.mxu0 0
      %3135 = vmatprep.subr.bf16.mxu0 0
      %3136 = vmatpush1.bf16.msra.mxu0 %v3119
      %3137 = vmatprep.subr.bf16.mxu0 0
      %3138 = vmatpush2.bf16.msra.mxu0 0
      %3139 = vmatprep.subr.bf16.mxu0 0
      %3140 = vmatpush2.bf16.msra.mxu0 0
      %3141 = vmatprep.subr.bf16.mxu0 0
      %3142 = vmatpush2.bf16.msra.mxu0 0
      %3143 = vmatprep.subr.bf16.mxu0 0
      %3144 = vmatpush2.bf16.msra.mxu0 0
      %3145 = vmatprep.subr.bf16.mxu0 0
      %3146 = vmatpush2.bf16.msra.mxu0 0
      %3147 = vmatprep.subr.bf16.mxu0 0
      %3148 = vmatpush2.bf16.msra.mxu0 0
      %3149 = vmatprep.subr.bf16.mxu0 0
      %3150 = vmatpush2.bf16.msra.mxu0 0
      %3151 = vmatprep.subr.bf16.mxu0 0
      %3152 = vmatpush2.bf16.msra.mxu0 0
      %3153 = vmatprep.mubr.bf16.mxu0 0
      %3154 = vmatmul.mubr.bf16.gmra.mxu0 %v3071
      %v3155 = vpop.f32.mrf.mxu0
      %v3156 = vadd.f32 0.0, %v3155
      %v3157 = vpop.f32.mrf.mxu0
      %v3158 = vpop.f32.mrf.mxu0
      %v3159 = vadd.f32 0.0, %v3158
      %v3160 = vpop.f32.mrf.mxu0
      %3161 = vmatprep.mubr.bf16.mxu0 0
      %3162 = vmatmul.mubr.bf16.gmra.mxu0 %v3074
      %v3163 = vpop.f32.mrf.mxu0
      %v3164 = vadd.f32 0.0, %v3163
      %v3165 = vpop.f32.mrf.mxu0
      %v3166 = vpop.f32.mrf.mxu0
      %v3167 = vadd.f32 0.0, %v3166
      %v3168 = vpop.f32.mrf.mxu0
      %3169 = vmatprep.mubr.bf16.mxu0 0
      %3170 = vmatmul.mubr.bf16.gmra.mxu0 %v3077
      %v3171 = vpop.f32.mrf.mxu0
      %v3172 = vadd.f32 0.0, %v3171
      %v3173 = vpop.f32.mrf.mxu0
      %v3174 = vpop.f32.mrf.mxu0
      %v3175 = vadd.f32 0.0, %v3174
      %v3176 = vpop.f32.mrf.mxu0
      %3177 = vmatprep.mubr.bf16.mxu0 0
      %3178 = vmatmul.mubr.bf16.gmra.mxu0 %v3080
      %v3179 = vpop.f32.mrf.mxu0
      %v3180 = vadd.f32 0.0, %v3179
      %v3181 = vpop.f32.mrf.mxu0
      %v3182 = vpop.f32.mrf.mxu0
      %v3183 = vadd.f32 0.0, %v3182
      %v3184 = vpop.f32.mrf.mxu0
      %3185 = vmatprep.mubr.bf16.mxu0 0
      %3186 = vmatmul.mubr.bf16.gmra.mxu0 %v3083
      %v3187 = vpop.f32.mrf.mxu0
      %v3188 = vadd.f32 0.0, %v3187
      %v3189 = vpop.f32.mrf.mxu0
      %v3190 = vpop.f32.mrf.mxu0
      %v3191 = vadd.f32 0.0, %v3190
      %v3192 = vpop.f32.mrf.mxu0
      %3193 = vmatprep.mubr.bf16.mxu0 0
      %3194 = vmatmul.mubr.bf16.gmra.mxu0 %v3086
      %v3195 = vpop.f32.mrf.mxu0
      %v3196 = vadd.f32 0.0, %v3195
      %v3197 = vpop.f32.mrf.mxu0
      %v3198 = vpop.f32.mrf.mxu0
      %v3199 = vadd.f32 0.0, %v3198
      %v3200 = vpop.f32.mrf.mxu0
      %3201 = vmatprep.mubr.bf16.mxu0 0
      %3202 = vmatmul.mubr.bf16.gmra.mxu0 %v3089
      %v3203 = vpop.f32.mrf.mxu0
      %v3204 = vadd.f32 0.0, %v3203
      %v3205 = vpop.f32.mrf.mxu0
      %v3206 = vpop.f32.mrf.mxu0
      %v3207 = vadd.f32 0.0, %v3206
      %v3208 = vpop.f32.mrf.mxu0
      %3209 = vmatprep.mubr.bf16.mxu0 0
      %3210 = vmatmul.mubr.bf16.gmra.mxu0 %v3092
      %v3211 = vpop.f32.mrf.mxu0
      %v3212 = vadd.f32 0.0, %v3211
      %v3213 = vpop.f32.mrf.mxu0
      %v3214 = vpop.f32.mrf.mxu0
      %v3215 = vadd.f32 0.0, %v3214
      %v3216 = vpop.f32.mrf.mxu0
      %3217 = vmatprep.mubr.bf16.mxu0 0
      %3218 = vmatmul.mubr.bf16.gmra.mxu0 %v3095
      %v3219 = vpop.f32.mrf.mxu0
      %v3220 = vadd.f32 0.0, %v3219
      %v3221 = vpop.f32.mrf.mxu0
      %v3222 = vpop.f32.mrf.mxu0
      %v3223 = vadd.f32 0.0, %v3222
      %v3224 = vpop.f32.mrf.mxu0
      %3225 = vmatprep.mubr.bf16.mxu0 0
      %3226 = vmatmul.mubr.bf16.gmra.mxu0 %v3098
      %v3227 = vpop.f32.mrf.mxu0
      %v3228 = vadd.f32 0.0, %v3227
      %v3229 = vpop.f32.mrf.mxu0
      %v3230 = vpop.f32.mrf.mxu0
      %v3231 = vadd.f32 0.0, %v3230
      %v3232 = vpop.f32.mrf.mxu0
      %3233 = vmatprep.mubr.bf16.mxu0 0
      %3234 = vmatmul.mubr.bf16.gmra.mxu0 %v3101
      %v3235 = vpop.f32.mrf.mxu0
      %v3236 = vadd.f32 0.0, %v3235
      %v3237 = vpop.f32.mrf.mxu0
      %v3238 = vpop.f32.mrf.mxu0
      %v3239 = vadd.f32 0.0, %v3238
      %v3240 = vpop.f32.mrf.mxu0
      %3241 = vmatprep.mubr.bf16.mxu0 0
      %3242 = vmatmul.mubr.bf16.gmra.mxu0 %v3104
      %v3243 = vpop.f32.mrf.mxu0
      %v3244 = vadd.f32 0.0, %v3243
      %v3245 = vpop.f32.mrf.mxu0
      %v3246 = vpop.f32.mrf.mxu0
      %v3247 = vadd.f32 0.0, %v3246
      %v3248 = vpop.f32.mrf.mxu0
      %3249 = vmatprep.mubr.bf16.mxu0 0
      %3250 = vmatmul.mubr.bf16.gmra.mxu0 %v3107
      %v3251 = vpop.f32.mrf.mxu0
      %v3252 = vadd.f32 0.0, %v3251
      %v3253 = vpop.f32.mrf.mxu0
      %v3254 = vpop.f32.mrf.mxu0
      %v3255 = vadd.f32 0.0, %v3254
      %v3256 = vpop.f32.mrf.mxu0
      %3257 = vmatprep.mubr.bf16.mxu0 0
      %3258 = vmatmul.mubr.bf16.gmra.mxu0 %v3110
      %v3259 = vpop.f32.mrf.mxu0
      %v3260 = vadd.f32 0.0, %v3259
      %v3261 = vpop.f32.mrf.mxu0
      %v3262 = vpop.f32.mrf.mxu0
      %v3263 = vadd.f32 0.0, %v3262
      %v3264 = vpop.f32.mrf.mxu0
      %3265 = vmatprep.mubr.bf16.mxu0 0
      %3266 = vmatmul.mubr.bf16.gmra.mxu0 %v3113
      %v3267 = vpop.f32.mrf.mxu0
      %v3268 = vadd.f32 0.0, %v3267
      %v3269 = vpop.f32.mrf.mxu0
      %v3270 = vpop.f32.mrf.mxu0
      %v3271 = vadd.f32 0.0, %v3270
      %v3272 = vpop.f32.mrf.mxu0
      %3273 = vmatprep.mubr.bf16.mxu0 0
      %3274 = vmatmul.mubr.bf16.gmra.mxu0 %v3116
      %v3275 = vpop.f32.mrf.mxu0
      %v3276 = vadd.f32 0.0, %v3275
      %v3277 = vpop.f32.mrf.mxu0
      %v3278 = vpop.f32.mrf.mxu0
      %v3279 = vadd.f32 0.0, %v3278
      %v3280 = vpop.f32.mrf.mxu0
      %3281 = vdwg.mxu0
      %v3282 = vadd.f32 %v2428, %v3156
      %v3283 = vadd.f32 %v2429, %v3159
      %v3284 = vadd.f32 %v2430, %v3164
      %v3285 = vadd.f32 %v2431, %v3167
      %v3286 = vadd.f32 %v2432, %v3172
      %v3287 = vadd.f32 %v2433, %v3175
      %v3288 = vadd.f32 %v2434, %v3180
      %v3289 = vadd.f32 %v2435, %v3183
      %v3290 = vadd.f32 %v2436, %v3188
      %v3291 = vadd.f32 %v2437, %v3191
      %v3292 = vadd.f32 %v2438, %v3196
      %v3293 = vadd.f32 %v2439, %v3199
      %v3294 = vadd.f32 %v2440, %v3204
      %v3295 = vadd.f32 %v2441, %v3207
      %v3296 = vadd.f32 %v2442, %v3212
      %v3297 = vadd.f32 %v2443, %v3215
      %v3298 = vadd.f32 %v2444, %v3220
      %v3299 = vadd.f32 %v2445, %v3223
      %v3300 = vadd.f32 %v2446, %v3228
      %v3301 = vadd.f32 %v2447, %v3231
      %v3302 = vadd.f32 %v2448, %v3236
      %v3303 = vadd.f32 %v2449, %v3239
      %v3304 = vadd.f32 %v2450, %v3244
      %v3305 = vadd.f32 %v2451, %v3247
      %v3306 = vadd.f32 %v2452, %v3252
      %v3307 = vadd.f32 %v2453, %v3255
      %v3308 = vadd.f32 %v2454, %v3260
      %v3309 = vadd.f32 %v2455, %v3263
      %v3310 = vadd.f32 %v2456, %v3268
      %v3311 = vadd.f32 %v2457, %v3271
      %v3312 = vadd.f32 %v2458, %v3276
      %v3313 = vadd.f32 %v2459, %v3279
      %v3314 = vld [vmem:[%s177] sm:$0xe]
      %v3315 = vld [vmem:[%s177 + $0x4] sm:$0xf]
      %v3316 = vld [vmem:[%s177 + $0x8] sm:$0x1]
      %v3320 = vrot.slane %v3314, 5
      %v3321 = vrot.slane %v3320, 4
      %v3322 = vrot.slane %v3315, 5
      %v3323 = vsel %vm1412, %v3321, %v3322
      %v3324 = vrot.slane %v3322, 4
      %v3325 = vrot.slane %v3316, 5
      %v3326 = vsel %vm1412, %v3324, %v3325
      %3329 = vst.msk [vmem:[#allocation2] sm:$0xf] %vm174, %v3323
      %3330 = vst.msk [vmem:[#allocation2 + $0x4] sm:$0xf] %vm174, %v3326
      %v3331 = vld [vmem:[%s182] sm:$0xe]
      %v3332 = vld [vmem:[%s182 + $0x4] sm:$0xf]
      %v3333 = vld [vmem:[%s182 + $0x8] sm:$0x1]
      %v3337 = vrot.slane %v3331, 5
      %v3338 = vrot.slane %v3337, 4
      %v3339 = vrot.slane %v3332, 5
      %v3340 = vsel %vm1412, %v3338, %v3339
      %v3341 = vrot.slane %v3339, 4
      %v3342 = vrot.slane %v3333, 5
      %v3343 = vsel %vm1412, %v3341, %v3342
      %3346 = vst.msk [vmem:[#allocation2 + $0x8] sm:$0xf] %vm174, %v3340
      %3347 = vst.msk [vmem:[#allocation2 + $0xc] sm:$0xf] %vm174, %v3343
      %v3348 = vld [vmem:[%s187] sm:$0xe]
      %v3349 = vld [vmem:[%s187 + $0x4] sm:$0xf]
      %v3350 = vld [vmem:[%s187 + $0x8] sm:$0x1]
      %v3354 = vrot.slane %v3348, 5
      %v3355 = vrot.slane %v3354, 4
      %v3356 = vrot.slane %v3349, 5
      %v3357 = vsel %vm1412, %v3355, %v3356
      %v3358 = vrot.slane %v3356, 4
      %v3359 = vrot.slane %v3350, 5
      %v3360 = vsel %vm1412, %v3358, %v3359
      %3363 = vst.msk [vmem:[#allocation2 + $0x10] sm:$0xf] %vm174, %v3357
      %3364 = vst.msk [vmem:[#allocation2 + $0x14] sm:$0xf] %vm174, %v3360
      %v3365 = vld [vmem:[%s192] sm:$0xe]
      %v3366 = vld [vmem:[%s192 + $0x4] sm:$0xf]
      %v3367 = vld [vmem:[%s192 + $0x8] sm:$0x1]
      %v3371 = vrot.slane %v3365, 5
      %v3372 = vrot.slane %v3371, 4
      %v3373 = vrot.slane %v3366, 5
      %v3374 = vsel %vm1412, %v3372, %v3373
      %v3375 = vrot.slane %v3373, 4
      %v3376 = vrot.slane %v3367, 5
      %v3377 = vsel %vm1412, %v3375, %v3376
      %3380 = vst.msk [vmem:[#allocation2 + $0x18] sm:$0xf] %vm174, %v3374
      %3381 = vst.msk [vmem:[#allocation2 + $0x1c] sm:$0xf] %vm174, %v3377
      %v3382 = vld [vmem:[%s197] sm:$0xe]
      %v3383 = vld [vmem:[%s197 + $0x4] sm:$0xf]
      %v3384 = vld [vmem:[%s197 + $0x8] sm:$0x1]
      %v3388 = vrot.slane %v3382, 5
      %v3389 = vrot.slane %v3388, 4
      %v3390 = vrot.slane %v3383, 5
      %v3391 = vsel %vm1412, %v3389, %v3390
      %v3392 = vrot.slane %v3390, 4
      %v3393 = vrot.slane %v3384, 5
      %v3394 = vsel %vm1412, %v3392, %v3393
      %3397 = vst.msk [vmem:[#allocation2 + $0x20] sm:$0xf] %vm174, %v3391
      %3398 = vst.msk [vmem:[#allocation2 + $0x24] sm:$0xf] %vm174, %v3394
      %v3399 = vld [vmem:[%s202] sm:$0xe]
      %v3400 = vld [vmem:[%s202 + $0x4] sm:$0xf]
      %v3401 = vld [vmem:[%s202 + $0x8] sm:$0x1]
      %v3405 = vrot.slane %v3399, 5
      %v3406 = vrot.slane %v3405, 4
      %v3407 = vrot.slane %v3400, 5
      %v3408 = vsel %vm1412, %v3406, %v3407
      %v3409 = vrot.slane %v3407, 4
      %v3410 = vrot.slane %v3401, 5
      %v3411 = vsel %vm1412, %v3409, %v3410
      %3414 = vst.msk [vmem:[#allocation2 + $0x28] sm:$0xf] %vm174, %v3408
      %3415 = vst.msk [vmem:[#allocation2 + $0x2c] sm:$0xf] %vm174, %v3411
      %v3416 = vld [vmem:[%s207] sm:$0xe]
      %v3417 = vld [vmem:[%s207 + $0x4] sm:$0xf]
      %v3418 = vld [vmem:[%s207 + $0x8] sm:$0x1]
      %v3422 = vrot.slane %v3416, 5
      %v3423 = vrot.slane %v3422, 4
      %v3424 = vrot.slane %v3417, 5
      %v3425 = vsel %vm1412, %v3423, %v3424
      %v3426 = vrot.slane %v3424, 4
      %v3427 = vrot.slane %v3418, 5
      %v3428 = vsel %vm1412, %v3426, %v3427
      %3431 = vst.msk [vmem:[#allocation2 + $0x30] sm:$0xf] %vm174, %v3425
      %3432 = vst.msk [vmem:[#allocation2 + $0x34] sm:$0xf] %vm174, %v3428
      %v3433 = vld [vmem:[%s212] sm:$0xe]
      %v3434 = vld [vmem:[%s212 + $0x4] sm:$0xf]
      %v3435 = vld [vmem:[%s212 + $0x8] sm:$0x1]
      %v3439 = vrot.slane %v3433, 5
      %v3440 = vrot.slane %v3439, 4
      %v3441 = vrot.slane %v3434, 5
      %v3442 = vsel %vm1412, %v3440, %v3441
      %v3443 = vrot.slane %v3441, 4
      %v3444 = vrot.slane %v3435, 5
      %v3445 = vsel %vm1412, %v3443, %v3444
      %3448 = vst.msk [vmem:[#allocation2 + $0x38] sm:$0xf] %vm174, %v3442
      %3449 = vst.msk [vmem:[#allocation2 + $0x3c] sm:$0xf] %vm174, %v3445
      %v3450 = vld [vmem:[%s217] sm:$0xe]
      %v3451 = vld [vmem:[%s217 + $0x4] sm:$0xf]
      %v3452 = vld [vmem:[%s217 + $0x8] sm:$0x1]
      %v3456 = vrot.slane %v3450, 5
      %v3457 = vrot.slane %v3456, 4
      %v3458 = vrot.slane %v3451, 5
      %v3459 = vsel %vm1412, %v3457, %v3458
      %v3460 = vrot.slane %v3458, 4
      %v3461 = vrot.slane %v3452, 5
      %v3462 = vsel %vm1412, %v3460, %v3461
      %3465 = vst.msk [vmem:[#allocation2 + $0x40] sm:$0xf] %vm174, %v3459
      %3466 = vst.msk [vmem:[#allocation2 + $0x44] sm:$0xf] %vm174, %v3462
      %v3467 = vld [vmem:[%s222] sm:$0xe]
      %v3468 = vld [vmem:[%s222 + $0x4] sm:$0xf]
      %v3469 = vld [vmem:[%s222 + $0x8] sm:$0x1]
      %v3473 = vrot.slane %v3467, 5
      %v3474 = vrot.slane %v3473, 4
      %v3475 = vrot.slane %v3468, 5
      %v3476 = vsel %vm1412, %v3474, %v3475
      %v3477 = vrot.slane %v3475, 4
      %v3478 = vrot.slane %v3469, 5
      %v3479 = vsel %vm1412, %v3477, %v3478
      %3482 = vst.msk [vmem:[#allocation2 + $0x48] sm:$0xf] %vm174, %v3476
      %3483 = vst.msk [vmem:[#allocation2 + $0x4c] sm:$0xf] %vm174, %v3479
      %v3484 = vld [vmem:[%s227] sm:$0xe]
      %v3485 = vld [vmem:[%s227 + $0x4] sm:$0xf]
      %v3486 = vld [vmem:[%s227 + $0x8] sm:$0x1]
      %v3490 = vrot.slane %v3484, 5
      %v3491 = vrot.slane %v3490, 4
      %v3492 = vrot.slane %v3485, 5
      %v3493 = vsel %vm1412, %v3491, %v3492
      %v3494 = vrot.slane %v3492, 4
      %v3495 = vrot.slane %v3486, 5
      %v3496 = vsel %vm1412, %v3494, %v3495
      %3499 = vst.msk [vmem:[#allocation2 + $0x50] sm:$0xf] %vm174, %v3493
      %3500 = vst.msk [vmem:[#allocation2 + $0x54] sm:$0xf] %vm174, %v3496
      %v3501 = vld [vmem:[%s232] sm:$0xe]
      %v3502 = vld [vmem:[%s232 + $0x4] sm:$0xf]
      %v3503 = vld [vmem:[%s232 + $0x8] sm:$0x1]
      %v3507 = vrot.slane %v3501, 5
      %v3508 = vrot.slane %v3507, 4
      %v3509 = vrot.slane %v3502, 5
      %v3510 = vsel %vm1412, %v3508, %v3509
      %v3511 = vrot.slane %v3509, 4
      %v3512 = vrot.slane %v3503, 5
      %v3513 = vsel %vm1412, %v3511, %v3512
      %3516 = vst.msk [vmem:[#allocation2 + $0x58] sm:$0xf] %vm174, %v3510
      %3517 = vst.msk [vmem:[#allocation2 + $0x5c] sm:$0xf] %vm174, %v3513
      %v3518 = vld [vmem:[%s237] sm:$0xe]
      %v3519 = vld [vmem:[%s237 + $0x4] sm:$0xf]
      %v3520 = vld [vmem:[%s237 + $0x8] sm:$0x1]
      %v3524 = vrot.slane %v3518, 5
      %v3525 = vrot.slane %v3524, 4
      %v3526 = vrot.slane %v3519, 5
      %v3527 = vsel %vm1412, %v3525, %v3526
      %v3528 = vrot.slane %v3526, 4
      %v3529 = vrot.slane %v3520, 5
      %v3530 = vsel %vm1412, %v3528, %v3529
      %3533 = vst.msk [vmem:[#allocation2 + $0x60] sm:$0xf] %vm174, %v3527
      %3534 = vst.msk [vmem:[#allocation2 + $0x64] sm:$0xf] %vm174, %v3530
      %v3535 = vld [vmem:[%s242] sm:$0xe]
      %v3536 = vld [vmem:[%s242 + $0x4] sm:$0xf]
      %v3537 = vld [vmem:[%s242 + $0x8] sm:$0x1]
      %v3541 = vrot.slane %v3535, 5
      %v3542 = vrot.slane %v3541, 4
      %v3543 = vrot.slane %v3536, 5
      %v3544 = vsel %vm1412, %v3542, %v3543
      %v3545 = vrot.slane %v3543, 4
      %v3546 = vrot.slane %v3537, 5
      %v3547 = vsel %vm1412, %v3545, %v3546
      %3550 = vst.msk [vmem:[#allocation2 + $0x68] sm:$0xf] %vm174, %v3544
      %3551 = vst.msk [vmem:[#allocation2 + $0x6c] sm:$0xf] %vm174, %v3547
      %v3552 = vld [vmem:[%s247] sm:$0xe]
      %v3553 = vld [vmem:[%s247 + $0x4] sm:$0xf]
      %v3554 = vld [vmem:[%s247 + $0x8] sm:$0x1]
      %v3558 = vrot.slane %v3552, 5
      %v3559 = vrot.slane %v3558, 4
      %v3560 = vrot.slane %v3553, 5
      %v3561 = vsel %vm1412, %v3559, %v3560
      %v3562 = vrot.slane %v3560, 4
      %v3563 = vrot.slane %v3554, 5
      %v3564 = vsel %vm1412, %v3562, %v3563
      %3567 = vst.msk [vmem:[#allocation2 + $0x70] sm:$0xf] %vm174, %v3561
      %3568 = vst.msk [vmem:[#allocation2 + $0x74] sm:$0xf] %vm174, %v3564
      %v3569 = vld [vmem:[%s2097] sm:$0xe]
      %v3570 = vld [vmem:[%s2097 + $0x4] sm:$0xf]
      %v3571 = vld [vmem:[%s2097 + $0x8] sm:$0x1]
      %v3575 = vrot.slane %v3569, 5
      %v3576 = vrot.slane %v3575, 4
      %v3577 = vrot.slane %v3570, 5
      %v3578 = vsel %vm1412, %v3576, %v3577
      %v3579 = vrot.slane %v3577, 4
      %v3580 = vrot.slane %v3571, 5
      %v3581 = vsel %vm1412, %v3579, %v3580
      %3584 = vst.msk [vmem:[#allocation2 + $0x78] sm:$0xf] %vm174, %v3578
      %3585 = vst.msk [vmem:[#allocation2 + $0x7c] sm:$0xf] %vm174, %v3581
      %v3586 = vld [vmem:[#allocation2] sm:$0xf]
      %v3587 = vld [vmem:[#allocation2 + $0x4] sm:$0xf]
      %v3588 = vld [vmem:[#allocation2 + $0x8] sm:$0xf]
      %v3589 = vld [vmem:[#allocation2 + $0xc] sm:$0xf]
      %v3590 = vld [vmem:[#allocation2 + $0x10] sm:$0xf]
      %v3591 = vld [vmem:[#allocation2 + $0x14] sm:$0xf]
      %v3592 = vld [vmem:[#allocation2 + $0x18] sm:$0xf]
      %v3593 = vld [vmem:[#allocation2 + $0x1c] sm:$0xf]
      %v3594 = vld [vmem:[#allocation2 + $0x20] sm:$0xf]
      %v3595 = vld [vmem:[#allocation2 + $0x24] sm:$0xf]
      %v3596 = vld [vmem:[#allocation2 + $0x28] sm:$0xf]
      %v3597 = vld [vmem:[#allocation2 + $0x2c] sm:$0xf]
      %v3598 = vld [vmem:[#allocation2 + $0x30] sm:$0xf]
      %v3599 = vld [vmem:[#allocation2 + $0x34] sm:$0xf]
      %v3600 = vld [vmem:[#allocation2 + $0x38] sm:$0xf]
      %v3601 = vld [vmem:[#allocation2 + $0x3c] sm:$0xf]
      %v3602 = vld [vmem:[#allocation2 + $0x40] sm:$0xf]
      %v3603 = vld [vmem:[#allocation2 + $0x44] sm:$0xf]
      %v3604 = vld [vmem:[#allocation2 + $0x48] sm:$0xf]
      %v3605 = vld [vmem:[#allocation2 + $0x4c] sm:$0xf]
      %v3606 = vld [vmem:[#allocation2 + $0x50] sm:$0xf]
      %v3607 = vld [vmem:[#allocation2 + $0x54] sm:$0xf]
      %v3608 = vld [vmem:[#allocation2 + $0x58] sm:$0xf]
      %v3609 = vld [vmem:[#allocation2 + $0x5c] sm:$0xf]
      %v3610 = vld [vmem:[#allocation2 + $0x60] sm:$0xf]
      %v3611 = vld [vmem:[#allocation2 + $0x64] sm:$0xf]
      %v3612 = vld [vmem:[#allocation2 + $0x68] sm:$0xf]
      %v3613 = vld [vmem:[#allocation2 + $0x6c] sm:$0xf]
      %v3614 = vld [vmem:[#allocation2 + $0x70] sm:$0xf]
      %v3615 = vld [vmem:[#allocation2 + $0x74] sm:$0xf]
      %v3616 = vld [vmem:[#allocation2 + $0x78] sm:$0xf]
      %v3617 = vld [vmem:[#allocation2 + $0x7c] sm:$0xf]
      %s3618 = scalar_lea.vmem %s1, 20
      %v3619 = vld [vmem:[%s3618] sm:$0xf]
      %v3652 = vunpack.c.l.b16 %v3586
      %v3653 = vunpack.c.l.b16 %v3587
      %v3654 = vunpack.c.l.b16 %v3588
      %v3655 = vunpack.c.l.b16 %v3589
      %v3656 = vunpack.c.l.b16 %v3590
      %v3657 = vunpack.c.l.b16 %v3591
      %v3658 = vunpack.c.l.b16 %v3592
      %v3659 = vunpack.c.l.b16 %v3593
      %v3660 = vunpack.c.l.b16 %v3594
      %v3661 = vunpack.c.l.b16 %v3595
      %v3662 = vunpack.c.l.b16 %v3596
      %v3663 = vunpack.c.l.b16 %v3597
      %v3664 = vunpack.c.l.b16 %v3598
      %v3665 = vunpack.c.l.b16 %v3599
      %v3666 = vunpack.c.l.b16 %v3600
      %v3667 = vunpack.c.l.b16 %v3601
      %v3668 = vunpack.c.l.b16 %v3602
      %v3669 = vunpack.c.l.b16 %v3603
      %v3670 = vunpack.c.l.b16 %v3604
      %v3671 = vunpack.c.l.b16 %v3605
      %v3672 = vunpack.c.l.b16 %v3606
      %v3673 = vunpack.c.l.b16 %v3607
      %v3674 = vunpack.c.l.b16 %v3608
      %v3675 = vunpack.c.l.b16 %v3609
      %v3676 = vunpack.c.l.b16 %v3610
      %v3677 = vunpack.c.l.b16 %v3611
      %v3678 = vunpack.c.l.b16 %v3612
      %v3679 = vunpack.c.l.b16 %v3613
      %v3680 = vunpack.c.l.b16 %v3614
      %v3681 = vunpack.c.l.b16 %v3615
      %v3682 = vunpack.c.l.b16 %v3616
      %v3683 = vunpack.c.l.b16 %v3617
      %v3684 = vpack.c.b16 %v3653, %v3652
      %v3685 = vpack.c.b16 %v3655, %v3654
      %v3686 = vpack.c.b16 %v3657, %v3656
      %v3687 = vpack.c.b16 %v3659, %v3658
      %v3688 = vpack.c.b16 %v3661, %v3660
      %v3689 = vpack.c.b16 %v3663, %v3662
      %v3690 = vpack.c.b16 %v3665, %v3664
      %v3691 = vpack.c.b16 %v3667, %v3666
      %v3692 = vpack.c.b16 %v3669, %v3668
      %v3693 = vpack.c.b16 %v3671, %v3670
      %v3694 = vpack.c.b16 %v3673, %v3672
      %v3695 = vpack.c.b16 %v3675, %v3674
      %v3696 = vpack.c.b16 %v3677, %v3676
      %v3697 = vpack.c.b16 %v3679, %v3678
      %v3698 = vpack.c.b16 %v3681, %v3680
      %v3699 = vpack.c.b16 %v3683, %v3682
      %v3701 = vsel %vm898, %v3684, 0
      %v3704 = vsel %vm898, %v3685, 0
      %v3707 = vsel %vm898, %v3686, 0
      %v3710 = vsel %vm898, %v3687, 0
      %v3713 = vsel %vm898, %v3688, 0
      %v3716 = vsel %vm898, %v3689, 0
      %v3719 = vsel %vm898, %v3690, 0
      %v3722 = vsel %vm898, %v3691, 0
      %v3725 = vsel %vm898, %v3692, 0
      %v3728 = vsel %vm898, %v3693, 0
      %v3731 = vsel %vm898, %v3694, 0
      %v3734 = vsel %vm898, %v3695, 0
      %v3737 = vsel %vm898, %v3696, 0
      %v3740 = vsel %vm898, %v3697, 0
      %v3743 = vsel %vm898, %v3698, 0
      %v3746 = vsel %vm898, %v3699, 0
      %v3749 = vsel %vm947, %v3619, 0
      %3751 = vmatprep.subr.bf16.mxu0 0
      %3752 = vmatpush1.bf16.msra.mxu0 0
      %3753 = vmatprep.subr.bf16.mxu0 0
      %3754 = vmatpush1.bf16.msra.mxu0 0
      %3755 = vmatprep.subr.bf16.mxu0 0
      %3756 = vmatpush1.bf16.msra.mxu0 0
      %3757 = vmatprep.subr.bf16.mxu0 0
      %3758 = vmatpush1.bf16.msra.mxu0 0
      %3759 = vmatprep.subr.bf16.mxu0 0
      %3760 = vmatpush1.bf16.msra.mxu0 0
      %3761 = vmatprep.subr.bf16.mxu0 0
      %3762 = vmatpush1.bf16.msra.mxu0 0
      %3763 = vmatprep.subr.bf16.mxu0 0
      %3764 = vmatpush1.bf16.msra.mxu0 0
      %3765 = vmatprep.subr.bf16.mxu0 0
      %3766 = vmatpush1.bf16.msra.mxu0 %v3749
      %3767 = vmatprep.subr.bf16.mxu0 0
      %3768 = vmatpush2.bf16.msra.mxu0 0
      %3769 = vmatprep.subr.bf16.mxu0 0
      %3770 = vmatpush2.bf16.msra.mxu0 0
      %3771 = vmatprep.subr.bf16.mxu0 0
      %3772 = vmatpush2.bf16.msra.mxu0 0
      %3773 = vmatprep.subr.bf16.mxu0 0
      %3774 = vmatpush2.bf16.msra.mxu0 0
      %3775 = vmatprep.subr.bf16.mxu0 0
      %3776 = vmatpush2.bf16.msra.mxu0 0
      %3777 = vmatprep.subr.bf16.mxu0 0
      %3778 = vmatpush2.bf16.msra.mxu0 0
      %3779 = vmatprep.subr.bf16.mxu0 0
      %3780 = vmatpush2.bf16.msra.mxu0 0
      %3781 = vmatprep.subr.bf16.mxu0 0
      %3782 = vmatpush2.bf16.msra.mxu0 0
      %3783 = vmatprep.mubr.bf16.mxu0 0
      %3784 = vmatmul.mubr.bf16.gmra.mxu0 %v3701
      %v3785 = vpop.f32.mrf.mxu0
      %v3786 = vadd.f32 0.0, %v3785
      %v3787 = vpop.f32.mrf.mxu0
      %v3788 = vpop.f32.mrf.mxu0
      %v3789 = vadd.f32 0.0, %v3788
      %v3790 = vpop.f32.mrf.mxu0
      %3791 = vmatprep.mubr.bf16.mxu0 0
      %3792 = vmatmul.mubr.bf16.gmra.mxu0 %v3704
      %v3793 = vpop.f32.mrf.mxu0
      %v3794 = vadd.f32 0.0, %v3793
      %v3795 = vpop.f32.mrf.mxu0
      %v3796 = vpop.f32.mrf.mxu0
      %v3797 = vadd.f32 0.0, %v3796
      %v3798 = vpop.f32.mrf.mxu0
      %3799 = vmatprep.mubr.bf16.mxu0 0
      %3800 = vmatmul.mubr.bf16.gmra.mxu0 %v3707
      %v3801 = vpop.f32.mrf.mxu0
      %v3802 = vadd.f32 0.0, %v3801
      %v3803 = vpop.f32.mrf.mxu0
      %v3804 = vpop.f32.mrf.mxu0
      %v3805 = vadd.f32 0.0, %v3804
      %v3806 = vpop.f32.mrf.mxu0
      %3807 = vmatprep.mubr.bf16.mxu0 0
      %3808 = vmatmul.mubr.bf16.gmra.mxu0 %v3710
      %v3809 = vpop.f32.mrf.mxu0
      %v3810 = vadd.f32 0.0, %v3809
      %v3811 = vpop.f32.mrf.mxu0
      %v3812 = vpop.f32.mrf.mxu0
      %v3813 = vadd.f32 0.0, %v3812
      %v3814 = vpop.f32.mrf.mxu0
      %3815 = vmatprep.mubr.bf16.mxu0 0
      %3816 = vmatmul.mubr.bf16.gmra.mxu0 %v3713
      %v3817 = vpop.f32.mrf.mxu0
      %v3818 = vadd.f32 0.0, %v3817
      %v3819 = vpop.f32.mrf.mxu0
      %v3820 = vpop.f32.mrf.mxu0
      %v3821 = vadd.f32 0.0, %v3820
      %v3822 = vpop.f32.mrf.mxu0
      %3823 = vmatprep.mubr.bf16.mxu0 0
      %3824 = vmatmul.mubr.bf16.gmra.mxu0 %v3716
      %v3825 = vpop.f32.mrf.mxu0
      %v3826 = vadd.f32 0.0, %v3825
      %v3827 = vpop.f32.mrf.mxu0
      %v3828 = vpop.f32.mrf.mxu0
      %v3829 = vadd.f32 0.0, %v3828
      %v3830 = vpop.f32.mrf.mxu0
      %3831 = vmatprep.mubr.bf16.mxu0 0
      %3832 = vmatmul.mubr.bf16.gmra.mxu0 %v3719
      %v3833 = vpop.f32.mrf.mxu0
      %v3834 = vadd.f32 0.0, %v3833
      %v3835 = vpop.f32.mrf.mxu0
      %v3836 = vpop.f32.mrf.mxu0
      %v3837 = vadd.f32 0.0, %v3836
      %v3838 = vpop.f32.mrf.mxu0
      %3839 = vmatprep.mubr.bf16.mxu0 0
      %3840 = vmatmul.mubr.bf16.gmra.mxu0 %v3722
      %v3841 = vpop.f32.mrf.mxu0
      %v3842 = vadd.f32 0.0, %v3841
      %v3843 = vpop.f32.mrf.mxu0
      %v3844 = vpop.f32.mrf.mxu0
      %v3845 = vadd.f32 0.0, %v3844
      %v3846 = vpop.f32.mrf.mxu0
      %3847 = vmatprep.mubr.bf16.mxu0 0
      %3848 = vmatmul.mubr.bf16.gmra.mxu0 %v3725
      %v3849 = vpop.f32.mrf.mxu0
      %v3850 = vadd.f32 0.0, %v3849
      %v3851 = vpop.f32.mrf.mxu0
      %v3852 = vpop.f32.mrf.mxu0
      %v3853 = vadd.f32 0.0, %v3852
      %v3854 = vpop.f32.mrf.mxu0
      %3855 = vmatprep.mubr.bf16.mxu0 0
      %3856 = vmatmul.mubr.bf16.gmra.mxu0 %v3728
      %v3857 = vpop.f32.mrf.mxu0
      %v3858 = vadd.f32 0.0, %v3857
      %v3859 = vpop.f32.mrf.mxu0
      %v3860 = vpop.f32.mrf.mxu0
      %v3861 = vadd.f32 0.0, %v3860
      %v3862 = vpop.f32.mrf.mxu0
      %3863 = vmatprep.mubr.bf16.mxu0 0
      %3864 = vmatmul.mubr.bf16.gmra.mxu0 %v3731
      %v3865 = vpop.f32.mrf.mxu0
      %v3866 = vadd.f32 0.0, %v3865
      %v3867 = vpop.f32.mrf.mxu0
      %v3868 = vpop.f32.mrf.mxu0
      %v3869 = vadd.f32 0.0, %v3868
      %v3870 = vpop.f32.mrf.mxu0
      %3871 = vmatprep.mubr.bf16.mxu0 0
      %3872 = vmatmul.mubr.bf16.gmra.mxu0 %v3734
      %v3873 = vpop.f32.mrf.mxu0
      %v3874 = vadd.f32 0.0, %v3873
      %v3875 = vpop.f32.mrf.mxu0
      %v3876 = vpop.f32.mrf.mxu0
      %v3877 = vadd.f32 0.0, %v3876
      %v3878 = vpop.f32.mrf.mxu0
      %3879 = vmatprep.mubr.bf16.mxu0 0
      %3880 = vmatmul.mubr.bf16.gmra.mxu0 %v3737
      %v3881 = vpop.f32.mrf.mxu0
      %v3882 = vadd.f32 0.0, %v3881
      %v3883 = vpop.f32.mrf.mxu0
      %v3884 = vpop.f32.mrf.mxu0
      %v3885 = vadd.f32 0.0, %v3884
      %v3886 = vpop.f32.mrf.mxu0
      %3887 = vmatprep.mubr.bf16.mxu0 0
      %3888 = vmatmul.mubr.bf16.gmra.mxu0 %v3740
      %v3889 = vpop.f32.mrf.mxu0
      %v3890 = vadd.f32 0.0, %v3889
      %v3891 = vpop.f32.mrf.mxu0
      %v3892 = vpop.f32.mrf.mxu0
      %v3893 = vadd.f32 0.0, %v3892
      %v3894 = vpop.f32.mrf.mxu0
      %3895 = vmatprep.mubr.bf16.mxu0 0
      %3896 = vmatmul.mubr.bf16.gmra.mxu0 %v3743
      %v3897 = vpop.f32.mrf.mxu0
      %v3898 = vadd.f32 0.0, %v3897
      %v3899 = vpop.f32.mrf.mxu0
      %v3900 = vpop.f32.mrf.mxu0
      %v3901 = vadd.f32 0.0, %v3900
      %v3902 = vpop.f32.mrf.mxu0
      %3903 = vmatprep.mubr.bf16.mxu0 0
      %3904 = vmatmul.mubr.bf16.gmra.mxu0 %v3746
      %v3905 = vpop.f32.mrf.mxu0
      %v3906 = vadd.f32 0.0, %v3905
      %v3907 = vpop.f32.mrf.mxu0
      %v3908 = vpop.f32.mrf.mxu0
      %v3909 = vadd.f32 0.0, %v3908
      %v3910 = vpop.f32.mrf.mxu0
      %3911 = vdwg.mxu0
      %v3912 = vadd.f32 %v3282, %v3786
      %v3913 = vadd.f32 %v3283, %v3789
      %v3914 = vadd.f32 %v3284, %v3794
      %v3915 = vadd.f32 %v3285, %v3797
      %v3916 = vadd.f32 %v3286, %v3802
      %v3917 = vadd.f32 %v3287, %v3805
      %v3918 = vadd.f32 %v3288, %v3810
      %v3919 = vadd.f32 %v3289, %v3813
      %v3920 = vadd.f32 %v3290, %v3818
      %v3921 = vadd.f32 %v3291, %v3821
      %v3922 = vadd.f32 %v3292, %v3826
      %v3923 = vadd.f32 %v3293, %v3829
      %v3924 = vadd.f32 %v3294, %v3834
      %v3925 = vadd.f32 %v3295, %v3837
      %v3926 = vadd.f32 %v3296, %v3842
      %v3927 = vadd.f32 %v3297, %v3845
      %v3928 = vadd.f32 %v3298, %v3850
      %v3929 = vadd.f32 %v3299, %v3853
      %v3930 = vadd.f32 %v3300, %v3858
      %v3931 = vadd.f32 %v3301, %v3861
      %v3932 = vadd.f32 %v3302, %v3866
      %v3933 = vadd.f32 %v3303, %v3869
      %v3934 = vadd.f32 %v3304, %v3874
      %v3935 = vadd.f32 %v3305, %v3877
      %v3936 = vadd.f32 %v3306, %v3882
      %v3937 = vadd.f32 %v3307, %v3885
      %v3938 = vadd.f32 %v3308, %v3890
      %v3939 = vadd.f32 %v3309, %v3893
      %v3940 = vadd.f32 %v3310, %v3898
      %v3941 = vadd.f32 %v3311, %v3901
      %v3942 = vadd.f32 %v3312, %v3906
      %v3943 = vadd.f32 %v3313, %v3909
      %v3944 = vld [vmem:[%s182] sm:$0xf]
      %v3945 = vld [vmem:[%s182 + $0x4] sm:$0xf]
      %3946 = vst.msk [vmem:[#allocation2] sm:$0xf] %vm174, %v3944
      %3947 = vst.msk [vmem:[#allocation2 + $0x4] sm:$0xf] %vm174, %v3945
      %v3948 = vld [vmem:[%s187] sm:$0xf]
      %v3949 = vld [vmem:[%s187 + $0x4] sm:$0xf]
      %3950 = vst.msk [vmem:[#allocation2 + $0x8] sm:$0xf] %vm174, %v3948
      %3951 = vst.msk [vmem:[#allocation2 + $0xc] sm:$0xf] %vm174, %v3949
      %v3952 = vld [vmem:[%s192] sm:$0xf]
      %v3953 = vld [vmem:[%s192 + $0x4] sm:$0xf]
      %3954 = vst.msk [vmem:[#allocation2 + $0x10] sm:$0xf] %vm174, %v3952
      %3955 = vst.msk [vmem:[#allocation2 + $0x14] sm:$0xf] %vm174, %v3953
      %v3956 = vld [vmem:[%s197] sm:$0xf]
      %v3957 = vld [vmem:[%s197 + $0x4] sm:$0xf]
      %3958 = vst.msk [vmem:[#allocation2 + $0x18] sm:$0xf] %vm174, %v3956
      %3959 = vst.msk [vmem:[#allocation2 + $0x1c] sm:$0xf] %vm174, %v3957
      %v3960 = vld [vmem:[%s202] sm:$0xf]
      %v3961 = vld [vmem:[%s202 + $0x4] sm:$0xf]
      %3962 = vst.msk [vmem:[#allocation2 + $0x20] sm:$0xf] %vm174, %v3960
      %3963 = vst.msk [vmem:[#allocation2 + $0x24] sm:$0xf] %vm174, %v3961
      %v3964 = vld [vmem:[%s207] sm:$0xf]
      %v3965 = vld [vmem:[%s207 + $0x4] sm:$0xf]
      %3966 = vst.msk [vmem:[#allocation2 + $0x28] sm:$0xf] %vm174, %v3964
      %3967 = vst.msk [vmem:[#allocation2 + $0x2c] sm:$0xf] %vm174, %v3965
      %v3968 = vld [vmem:[%s212] sm:$0xf]
      %v3969 = vld [vmem:[%s212 + $0x4] sm:$0xf]
      %3970 = vst.msk [vmem:[#allocation2 + $0x30] sm:$0xf] %vm174, %v3968
      %3971 = vst.msk [vmem:[#allocation2 + $0x34] sm:$0xf] %vm174, %v3969
      %v3972 = vld [vmem:[%s217] sm:$0xf]
      %v3973 = vld [vmem:[%s217 + $0x4] sm:$0xf]
      %3974 = vst.msk [vmem:[#allocation2 + $0x38] sm:$0xf] %vm174, %v3972
      %3975 = vst.msk [vmem:[#allocation2 + $0x3c] sm:$0xf] %vm174, %v3973
      %v3976 = vld [vmem:[%s222] sm:$0xf]
      %v3977 = vld [vmem:[%s222 + $0x4] sm:$0xf]
      %3978 = vst.msk [vmem:[#allocation2 + $0x40] sm:$0xf] %vm174, %v3976
      %3979 = vst.msk [vmem:[#allocation2 + $0x44] sm:$0xf] %vm174, %v3977
      %v3980 = vld [vmem:[%s227] sm:$0xf]
      %v3981 = vld [vmem:[%s227 + $0x4] sm:$0xf]
      %3982 = vst.msk [vmem:[#allocation2 + $0x48] sm:$0xf] %vm174, %v3980
      %3983 = vst.msk [vmem:[#allocation2 + $0x4c] sm:$0xf] %vm174, %v3981
      %v3984 = vld [vmem:[%s232] sm:$0xf]
      %v3985 = vld [vmem:[%s232 + $0x4] sm:$0xf]
      %3986 = vst.msk [vmem:[#allocation2 + $0x50] sm:$0xf] %vm174, %v3984
      %3987 = vst.msk [vmem:[#allocation2 + $0x54] sm:$0xf] %vm174, %v3985
      %v3988 = vld [vmem:[%s237] sm:$0xf]
      %v3989 = vld [vmem:[%s237 + $0x4] sm:$0xf]
      %3990 = vst.msk [vmem:[#allocation2 + $0x58] sm:$0xf] %vm174, %v3988
      %3991 = vst.msk [vmem:[#allocation2 + $0x5c] sm:$0xf] %vm174, %v3989
      %v3992 = vld [vmem:[%s242] sm:$0xf]
      %v3993 = vld [vmem:[%s242 + $0x4] sm:$0xf]
      %3994 = vst.msk [vmem:[#allocation2 + $0x60] sm:$0xf] %vm174, %v3992
      %3995 = vst.msk [vmem:[#allocation2 + $0x64] sm:$0xf] %vm174, %v3993
      %v3996 = vld [vmem:[%s247] sm:$0xf]
      %v3997 = vld [vmem:[%s247 + $0x4] sm:$0xf]
      %3998 = vst.msk [vmem:[#allocation2 + $0x68] sm:$0xf] %vm174, %v3996
      %3999 = vst.msk [vmem:[#allocation2 + $0x6c] sm:$0xf] %vm174, %v3997
      %v4000 = vld [vmem:[%s2097] sm:$0xf]
      %v4001 = vld [vmem:[%s2097 + $0x4] sm:$0xf]
      %4002 = vst.msk [vmem:[#allocation2 + $0x70] sm:$0xf] %vm174, %v4000
      %4003 = vst.msk [vmem:[#allocation2 + $0x74] sm:$0xf] %vm174, %v4001
      %s4004 = scalar_lea.vmem %s165, 204
      %v4005 = vld [vmem:[%s4004] sm:$0xf]
      %v4006 = vld [vmem:[%s4004 + $0x4] sm:$0xf]
      %4007 = vst.msk [vmem:[#allocation2 + $0x78] sm:$0xf] %vm174, %v4005
      %4008 = vst.msk [vmem:[#allocation2 + $0x7c] sm:$0xf] %vm174, %v4006
      %v4009 = vld [vmem:[#allocation2] sm:$0xf]
      %v4010 = vld [vmem:[#allocation2 + $0x4] sm:$0xf]
      %v4011 = vld [vmem:[#allocation2 + $0x8] sm:$0xf]
      %v4012 = vld [vmem:[#allocation2 + $0xc] sm:$0xf]
      %v4013 = vld [vmem:[#allocation2 + $0x10] sm:$0xf]
      %v4014 = vld [vmem:[#allocation2 + $0x14] sm:$0xf]
      %v4015 = vld [vmem:[#allocation2 + $0x18] sm:$0xf]
      %v4016 = vld [vmem:[#allocation2 + $0x1c] sm:$0xf]
      %v4017 = vld [vmem:[#allocation2 + $0x20] sm:$0xf]
      %v4018 = vld [vmem:[#allocation2 + $0x24] sm:$0xf]
      %v4019 = vld [vmem:[#allocation2 + $0x28] sm:$0xf]
      %v4020 = vld [vmem:[#allocation2 + $0x2c] sm:$0xf]
      %v4021 = vld [vmem:[#allocation2 + $0x30] sm:$0xf]
      %v4022 = vld [vmem:[#allocation2 + $0x34] sm:$0xf]
      %v4023 = vld [vmem:[#allocation2 + $0x38] sm:$0xf]
      %v4024 = vld [vmem:[#allocation2 + $0x3c] sm:$0xf]
      %v4025 = vld [vmem:[#allocation2 + $0x40] sm:$0xf]
      %v4026 = vld [vmem:[#allocation2 + $0x44] sm:$0xf]
      %v4027 = vld [vmem:[#allocation2 + $0x48] sm:$0xf]
      %v4028 = vld [vmem:[#allocation2 + $0x4c] sm:$0xf]
      %v4029 = vld [vmem:[#allocation2 + $0x50] sm:$0xf]
      %v4030 = vld [vmem:[#allocation2 + $0x54] sm:$0xf]
      %v4031 = vld [vmem:[#allocation2 + $0x58] sm:$0xf]
      %v4032 = vld [vmem:[#allocation2 + $0x5c] sm:$0xf]
      %v4033 = vld [vmem:[#allocation2 + $0x60] sm:$0xf]
      %v4034 = vld [vmem:[#allocation2 + $0x64] sm:$0xf]
      %v4035 = vld [vmem:[#allocation2 + $0x68] sm:$0xf]
      %v4036 = vld [vmem:[#allocation2 + $0x6c] sm:$0xf]
      %v4037 = vld [vmem:[#allocation2 + $0x70] sm:$0xf]
      %v4038 = vld [vmem:[#allocation2 + $0x74] sm:$0xf]
      %v4039 = vld [vmem:[#allocation2 + $0x78] sm:$0xf]
      %v4040 = vld [vmem:[#allocation2 + $0x7c] sm:$0xf]
      %s4041 = scalar_lea.vmem %s1, 24
      %v4042 = vld [vmem:[%s4041] sm:$0xf]
      %v4075 = vunpack.c.l.b16 %v4009
      %v4076 = vunpack.c.l.b16 %v4010
      %v4077 = vunpack.c.l.b16 %v4011
      %v4078 = vunpack.c.l.b16 %v4012
      %v4079 = vunpack.c.l.b16 %v4013
      %v4080 = vunpack.c.l.b16 %v4014
      %v4081 = vunpack.c.l.b16 %v4015
      %v4082 = vunpack.c.l.b16 %v4016
      %v4083 = vunpack.c.l.b16 %v4017
      %v4084 = vunpack.c.l.b16 %v4018
      %v4085 = vunpack.c.l.b16 %v4019
      %v4086 = vunpack.c.l.b16 %v4020
      %v4087 = vunpack.c.l.b16 %v4021
      %v4088 = vunpack.c.l.b16 %v4022
      %v4089 = vunpack.c.l.b16 %v4023
      %v4090 = vunpack.c.l.b16 %v4024
      %v4091 = vunpack.c.l.b16 %v4025
      %v4092 = vunpack.c.l.b16 %v4026
      %v4093 = vunpack.c.l.b16 %v4027
      %v4094 = vunpack.c.l.b16 %v4028
      %v4095 = vunpack.c.l.b16 %v4029
      %v4096 = vunpack.c.l.b16 %v4030
      %v4097 = vunpack.c.l.b16 %v4031
      %v4098 = vunpack.c.l.b16 %v4032
      %v4099 = vunpack.c.l.b16 %v4033
      %v4100 = vunpack.c.l.b16 %v4034
      %v4101 = vunpack.c.l.b16 %v4035
      %v4102 = vunpack.c.l.b16 %v4036
      %v4103 = vunpack.c.l.b16 %v4037
      %v4104 = vunpack.c.l.b16 %v4038
      %v4105 = vunpack.c.l.b16 %v4039
      %v4106 = vunpack.c.l.b16 %v4040
      %v4107 = vpack.c.b16 %v4076, %v4075
      %v4108 = vpack.c.b16 %v4078, %v4077
      %v4109 = vpack.c.b16 %v4080, %v4079
      %v4110 = vpack.c.b16 %v4082, %v4081
      %v4111 = vpack.c.b16 %v4084, %v4083
      %v4112 = vpack.c.b16 %v4086, %v4085
      %v4113 = vpack.c.b16 %v4088, %v4087
      %v4114 = vpack.c.b16 %v4090, %v4089
      %v4115 = vpack.c.b16 %v4092, %v4091
      %v4116 = vpack.c.b16 %v4094, %v4093
      %v4117 = vpack.c.b16 %v4096, %v4095
      %v4118 = vpack.c.b16 %v4098, %v4097
      %v4119 = vpack.c.b16 %v4100, %v4099
      %v4120 = vpack.c.b16 %v4102, %v4101
      %v4121 = vpack.c.b16 %v4104, %v4103
      %v4122 = vpack.c.b16 %v4106, %v4105
      %v4124 = vsel %vm898, %v4107, 0
      %v4127 = vsel %vm898, %v4108, 0
      %v4130 = vsel %vm898, %v4109, 0
      %v4133 = vsel %vm898, %v4110, 0
      %v4136 = vsel %vm898, %v4111, 0
      %v4139 = vsel %vm898, %v4112, 0
      %v4142 = vsel %vm898, %v4113, 0
      %v4145 = vsel %vm898, %v4114, 0
      %v4148 = vsel %vm898, %v4115, 0
      %v4151 = vsel %vm898, %v4116, 0
      %v4154 = vsel %vm898, %v4117, 0
      %v4157 = vsel %vm898, %v4118, 0
      %v4160 = vsel %vm898, %v4119, 0
      %v4163 = vsel %vm898, %v4120, 0
      %v4166 = vsel %vm898, %v4121, 0
      %v4169 = vsel %vm898, %v4122, 0
      %v4172 = vsel %vm947, %v4042, 0
      %4174 = vmatprep.subr.bf16.mxu0 0
      %4175 = vmatpush1.bf16.msra.mxu0 0
      %4176 = vmatprep.subr.bf16.mxu0 0
      %4177 = vmatpush1.bf16.msra.mxu0 0
      %4178 = vmatprep.subr.bf16.mxu0 0
      %4179 = vmatpush1.bf16.msra.mxu0 0
      %4180 = vmatprep.subr.bf16.mxu0 0
      %4181 = vmatpush1.bf16.msra.mxu0 0
      %4182 = vmatprep.subr.bf16.mxu0 0
      %4183 = vmatpush1.bf16.msra.mxu0 0
      %4184 = vmatprep.subr.bf16.mxu0 0
      %4185 = vmatpush1.bf16.msra.mxu0 0
      %4186 = vmatprep.subr.bf16.mxu0 0
      %4187 = vmatpush1.bf16.msra.mxu0 0
      %4188 = vmatprep.subr.bf16.mxu0 0
      %4189 = vmatpush1.bf16.msra.mxu0 %v4172
      %4190 = vmatprep.subr.bf16.mxu0 0
      %4191 = vmatpush2.bf16.msra.mxu0 0
      %4192 = vmatprep.subr.bf16.mxu0 0
      %4193 = vmatpush2.bf16.msra.mxu0 0
      %4194 = vmatprep.subr.bf16.mxu0 0
      %4195 = vmatpush2.bf16.msra.mxu0 0
      %4196 = vmatprep.subr.bf16.mxu0 0
      %4197 = vmatpush2.bf16.msra.mxu0 0
      %4198 = vmatprep.subr.bf16.mxu0 0
      %4199 = vmatpush2.bf16.msra.mxu0 0
      %4200 = vmatprep.subr.bf16.mxu0 0
      %4201 = vmatpush2.bf16.msra.mxu0 0
      %4202 = vmatprep.subr.bf16.mxu0 0
      %4203 = vmatpush2.bf16.msra.mxu0 0
      %4204 = vmatprep.subr.bf16.mxu0 0
      %4205 = vmatpush2.bf16.msra.mxu0 0
      %4206 = vmatprep.mubr.bf16.mxu0 0
      %4207 = vmatmul.mubr.bf16.gmra.mxu0 %v4124
      %v4208 = vpop.f32.mrf.mxu0
      %v4209 = vadd.f32 0.0, %v4208
      %v4210 = vpop.f32.mrf.mxu0
      %v4211 = vpop.f32.mrf.mxu0
      %v4212 = vadd.f32 0.0, %v4211
      %v4213 = vpop.f32.mrf.mxu0
      %4214 = vmatprep.mubr.bf16.mxu0 0
      %4215 = vmatmul.mubr.bf16.gmra.mxu0 %v4127
      %v4216 = vpop.f32.mrf.mxu0
      %v4217 = vadd.f32 0.0, %v4216
      %v4218 = vpop.f32.mrf.mxu0
      %v4219 = vpop.f32.mrf.mxu0
      %v4220 = vadd.f32 0.0, %v4219
      %v4221 = vpop.f32.mrf.mxu0
      %4222 = vmatprep.mubr.bf16.mxu0 0
      %4223 = vmatmul.mubr.bf16.gmra.mxu0 %v4130
      %v4224 = vpop.f32.mrf.mxu0
      %v4225 = vadd.f32 0.0, %v4224
      %v4226 = vpop.f32.mrf.mxu0
      %v4227 = vpop.f32.mrf.mxu0
      %v4228 = vadd.f32 0.0, %v4227
      %v4229 = vpop.f32.mrf.mxu0
      %4230 = vmatprep.mubr.bf16.mxu0 0
      %4231 = vmatmul.mubr.bf16.gmra.mxu0 %v4133
      %v4232 = vpop.f32.mrf.mxu0
      %v4233 = vadd.f32 0.0, %v4232
      %v4234 = vpop.f32.mrf.mxu0
      %v4235 = vpop.f32.mrf.mxu0
      %v4236 = vadd.f32 0.0, %v4235
      %v4237 = vpop.f32.mrf.mxu0
      %4238 = vmatprep.mubr.bf16.mxu0 0
      %4239 = vmatmul.mubr.bf16.gmra.mxu0 %v4136
      %v4240 = vpop.f32.mrf.mxu0
      %v4241 = vadd.f32 0.0, %v4240
      %v4242 = vpop.f32.mrf.mxu0
      %v4243 = vpop.f32.mrf.mxu0
      %v4244 = vadd.f32 0.0, %v4243
      %v4245 = vpop.f32.mrf.mxu0
      %4246 = vmatprep.mubr.bf16.mxu0 0
      %4247 = vmatmul.mubr.bf16.gmra.mxu0 %v4139
      %v4248 = vpop.f32.mrf.mxu0
      %v4249 = vadd.f32 0.0, %v4248
      %v4250 = vpop.f32.mrf.mxu0
      %v4251 = vpop.f32.mrf.mxu0
      %v4252 = vadd.f32 0.0, %v4251
      %v4253 = vpop.f32.mrf.mxu0
      %4254 = vmatprep.mubr.bf16.mxu0 0
      %4255 = vmatmul.mubr.bf16.gmra.mxu0 %v4142
      %v4256 = vpop.f32.mrf.mxu0
      %v4257 = vadd.f32 0.0, %v4256
      %v4258 = vpop.f32.mrf.mxu0
      %v4259 = vpop.f32.mrf.mxu0
      %v4260 = vadd.f32 0.0, %v4259
      %v4261 = vpop.f32.mrf.mxu0
      %4262 = vmatprep.mubr.bf16.mxu0 0
      %4263 = vmatmul.mubr.bf16.gmra.mxu0 %v4145
      %v4264 = vpop.f32.mrf.mxu0
      %v4265 = vadd.f32 0.0, %v4264
      %v4266 = vpop.f32.mrf.mxu0
      %v4267 = vpop.f32.mrf.mxu0
      %v4268 = vadd.f32 0.0, %v4267
      %v4269 = vpop.f32.mrf.mxu0
      %4270 = vmatprep.mubr.bf16.mxu0 0
      %4271 = vmatmul.mubr.bf16.gmra.mxu0 %v4148
      %v4272 = vpop.f32.mrf.mxu0
      %v4273 = vadd.f32 0.0, %v4272
      %v4274 = vpop.f32.mrf.mxu0
      %v4275 = vpop.f32.mrf.mxu0
      %v4276 = vadd.f32 0.0, %v4275
      %v4277 = vpop.f32.mrf.mxu0
      %4278 = vmatprep.mubr.bf16.mxu0 0
      %4279 = vmatmul.mubr.bf16.gmra.mxu0 %v4151
      %v4280 = vpop.f32.mrf.mxu0
      %v4281 = vadd.f32 0.0, %v4280
      %v4282 = vpop.f32.mrf.mxu0
      %v4283 = vpop.f32.mrf.mxu0
      %v4284 = vadd.f32 0.0, %v4283
      %v4285 = vpop.f32.mrf.mxu0
      %4286 = vmatprep.mubr.bf16.mxu0 0
      %4287 = vmatmul.mubr.bf16.gmra.mxu0 %v4154
      %v4288 = vpop.f32.mrf.mxu0
      %v4289 = vadd.f32 0.0, %v4288
      %v4290 = vpop.f32.mrf.mxu0
      %v4291 = vpop.f32.mrf.mxu0
      %v4292 = vadd.f32 0.0, %v4291
      %v4293 = vpop.f32.mrf.mxu0
      %4294 = vmatprep.mubr.bf16.mxu0 0
      %4295 = vmatmul.mubr.bf16.gmra.mxu0 %v4157
      %v4296 = vpop.f32.mrf.mxu0
      %v4297 = vadd.f32 0.0, %v4296
      %v4298 = vpop.f32.mrf.mxu0
      %v4299 = vpop.f32.mrf.mxu0
      %v4300 = vadd.f32 0.0, %v4299
      %v4301 = vpop.f32.mrf.mxu0
      %4302 = vmatprep.mubr.bf16.mxu0 0
      %4303 = vmatmul.mubr.bf16.gmra.mxu0 %v4160
      %v4304 = vpop.f32.mrf.mxu0
      %v4305 = vadd.f32 0.0, %v4304
      %v4306 = vpop.f32.mrf.mxu0
      %v4307 = vpop.f32.mrf.mxu0
      %v4308 = vadd.f32 0.0, %v4307
      %v4309 = vpop.f32.mrf.mxu0
      %4310 = vmatprep.mubr.bf16.mxu0 0
      %4311 = vmatmul.mubr.bf16.gmra.mxu0 %v4163
      %v4312 = vpop.f32.mrf.mxu0
      %v4313 = vadd.f32 0.0, %v4312
      %v4314 = vpop.f32.mrf.mxu0
      %v4315 = vpop.f32.mrf.mxu0
      %v4316 = vadd.f32 0.0, %v4315
      %v4317 = vpop.f32.mrf.mxu0
      %4318 = vmatprep.mubr.bf16.mxu0 0
      %4319 = vmatmul.mubr.bf16.gmra.mxu0 %v4166
      %v4320 = vpop.f32.mrf.mxu0
      %v4321 = vadd.f32 0.0, %v4320
      %v4322 = vpop.f32.mrf.mxu0
      %v4323 = vpop.f32.mrf.mxu0
      %v4324 = vadd.f32 0.0, %v4323
      %v4325 = vpop.f32.mrf.mxu0
      %4326 = vmatprep.mubr.bf16.mxu0 0
      %4327 = vmatmul.mubr.bf16.gmra.mxu0 %v4169
      %v4328 = vpop.f32.mrf.mxu0
      %v4329 = vadd.f32 0.0, %v4328
      %v4330 = vpop.f32.mrf.mxu0
      %v4331 = vpop.f32.mrf.mxu0
      %v4332 = vadd.f32 0.0, %v4331
      %v4333 = vpop.f32.mrf.mxu0
      %4334 = vdwg.mxu0
      %v4335 = vadd.f32 %v3912, %v4209
      %v4336 = vadd.f32 %v3913, %v4212
      %v4337 = vadd.f32 %v3914, %v4217
      %v4338 = vadd.f32 %v3915, %v4220
      %v4339 = vadd.f32 %v3916, %v4225
      %v4340 = vadd.f32 %v3917, %v4228
      %v4341 = vadd.f32 %v3918, %v4233
      %v4342 = vadd.f32 %v3919, %v4236
      %v4343 = vadd.f32 %v3920, %v4241
      %v4344 = vadd.f32 %v3921, %v4244
      %v4345 = vadd.f32 %v3922, %v4249
      %v4346 = vadd.f32 %v3923, %v4252
      %v4347 = vadd.f32 %v3924, %v4257
      %v4348 = vadd.f32 %v3925, %v4260
      %v4349 = vadd.f32 %v3926, %v4265
      %v4350 = vadd.f32 %v3927, %v4268
      %v4351 = vadd.f32 %v3928, %v4273
      %v4352 = vadd.f32 %v3929, %v4276
      %v4353 = vadd.f32 %v3930, %v4281
      %v4354 = vadd.f32 %v3931, %v4284
      %v4355 = vadd.f32 %v3932, %v4289
      %v4356 = vadd.f32 %v3933, %v4292
      %v4357 = vadd.f32 %v3934, %v4297
      %v4358 = vadd.f32 %v3935, %v4300
      %v4359 = vadd.f32 %v3936, %v4305
      %v4360 = vadd.f32 %v3937, %v4308
      %v4361 = vadd.f32 %v3938, %v4313
      %v4362 = vadd.f32 %v3939, %v4316
      %v4363 = vadd.f32 %v3940, %v4321
      %v4364 = vadd.f32 %v3941, %v4324
      %v4365 = vadd.f32 %v3942, %v4329
      %v4366 = vadd.f32 %v3943, %v4332
      %v4367 = vld [vmem:[%s182] sm:$0xf]
      %v4368 = vld [vmem:[%s182 + $0x4] sm:$0xf]
      %v4369 = vld [vmem:[%s182 + $0x8] sm:$0x1]
      %v4371 = vshrl.u32 %v4367, 16
      %v4373 = vrot.slane %v4371, 4
      %v4374 = vshll.u32 %v4367, 16
      %v4376 = vrot.slane %v4374, 5
      %v4377 = vor.u32 %v4373, %v4376
      %v4378 = vrot.slane %v4377, 4
      %v4380 = vshll.u32 %v4368, 16
      %v4382 = vrot.slane %v4380, 5
      %v4383 = vsel %vm290, %v4378, %v4382
      %v4384 = vshrl.u32 %v4368, 16
      %v4386 = vrot.slane %v4384, 4
      %v4387 = vor.u32 %v4386, %v4382
      %v4388 = vrot.slane %v4387, 4
      %v4390 = vshll.u32 %v4369, 16
      %v4392 = vrot.slane %v4390, 5
      %v4393 = vsel %vm290, %v4388, %v4392
      %4396 = vst.msk [vmem:[#allocation2] sm:$0xf] %vm174, %v4383
      %4397 = vst.msk [vmem:[#allocation2 + $0x4] sm:$0xf] %vm174, %v4393
      %v4398 = vld [vmem:[%s187] sm:$0xf]
      %v4399 = vld [vmem:[%s187 + $0x4] sm:$0xf]
      %v4400 = vld [vmem:[%s187 + $0x8] sm:$0x1]
      %v4402 = vshrl.u32 %v4398, 16
      %v4404 = vrot.slane %v4402, 4
      %v4405 = vshll.u32 %v4398, 16
      %v4407 = vrot.slane %v4405, 5
      %v4408 = vor.u32 %v4404, %v4407
      %v4409 = vrot.slane %v4408, 4
      %v4411 = vshll.u32 %v4399, 16
      %v4413 = vrot.slane %v4411, 5
      %v4414 = vsel %vm290, %v4409, %v4413
      %v4415 = vshrl.u32 %v4399, 16
      %v4417 = vrot.slane %v4415, 4
      %v4418 = vor.u32 %v4417, %v4413
      %v4419 = vrot.slane %v4418, 4
      %v4421 = vshll.u32 %v4400, 16
      %v4423 = vrot.slane %v4421, 5
      %v4424 = vsel %vm290, %v4419, %v4423
      %4427 = vst.msk [vmem:[#allocation2 + $0x8] sm:$0xf] %vm174, %v4414
      %4428 = vst.msk [vmem:[#allocation2 + $0xc] sm:$0xf] %vm174, %v4424
      %v4429 = vld [vmem:[%s192] sm:$0xf]
      %v4430 = vld [vmem:[%s192 + $0x4] sm:$0xf]
      %v4431 = vld [vmem:[%s192 + $0x8] sm:$0x1]
      %v4433 = vshrl.u32 %v4429, 16
      %v4435 = vrot.slane %v4433, 4
      %v4436 = vshll.u32 %v4429, 16
      %v4438 = vrot.slane %v4436, 5
      %v4439 = vor.u32 %v4435, %v4438
      %v4440 = vrot.slane %v4439, 4
      %v4442 = vshll.u32 %v4430, 16
      %v4444 = vrot.slane %v4442, 5
      %v4445 = vsel %vm290, %v4440, %v4444
      %v4446 = vshrl.u32 %v4430, 16
      %v4448 = vrot.slane %v4446, 4
      %v4449 = vor.u32 %v4448, %v4444
      %v4450 = vrot.slane %v4449, 4
      %v4452 = vshll.u32 %v4431, 16
      %v4454 = vrot.slane %v4452, 5
      %v4455 = vsel %vm290, %v4450, %v4454
      %4458 = vst.msk [vmem:[#allocation2 + $0x10] sm:$0xf] %vm174, %v4445
      %4459 = vst.msk [vmem:[#allocation2 + $0x14] sm:$0xf] %vm174, %v4455
      %v4460 = vld [vmem:[%s197] sm:$0xf]
      %v4461 = vld [vmem:[%s197 + $0x4] sm:$0xf]
      %v4462 = vld [vmem:[%s197 + $0x8] sm:$0x1]
      %v4464 = vshrl.u32 %v4460, 16
      %v4466 = vrot.slane %v4464, 4
      %v4467 = vshll.u32 %v4460, 16
      %v4469 = vrot.slane %v4467, 5
      %v4470 = vor.u32 %v4466, %v4469
      %v4471 = vrot.slane %v4470, 4
      %v4473 = vshll.u32 %v4461, 16
      %v4475 = vrot.slane %v4473, 5
      %v4476 = vsel %vm290, %v4471, %v4475
      %v4477 = vshrl.u32 %v4461, 16
      %v4479 = vrot.slane %v4477, 4
      %v4480 = vor.u32 %v4479, %v4475
      %v4481 = vrot.slane %v4480, 4
      %v4483 = vshll.u32 %v4462, 16
      %v4485 = vrot.slane %v4483, 5
      %v4486 = vsel %vm290, %v4481, %v4485
      %4489 = vst.msk [vmem:[#allocation2 + $0x18] sm:$0xf] %vm174, %v4476
      %4490 = vst.msk [vmem:[#allocation2 + $0x1c] sm:$0xf] %vm174, %v4486
      %v4491 = vld [vmem:[%s202] sm:$0xf]
      %v4492 = vld [vmem:[%s202 + $0x4] sm:$0xf]
      %v4493 = vld [vmem:[%s202 + $0x8] sm:$0x1]
      %v4495 = vshrl.u32 %v4491, 16
      %v4497 = vrot.slane %v4495, 4
      %v4498 = vshll.u32 %v4491, 16
      %v4500 = vrot.slane %v4498, 5
      %v4501 = vor.u32 %v4497, %v4500
      %v4502 = vrot.slane %v4501, 4
      %v4504 = vshll.u32 %v4492, 16
      %v4506 = vrot.slane %v4504, 5
      %v4507 = vsel %vm290, %v4502, %v4506
      %v4508 = vshrl.u32 %v4492, 16
      %v4510 = vrot.slane %v4508, 4
      %v4511 = vor.u32 %v4510, %v4506
      %v4512 = vrot.slane %v4511, 4
      %v4514 = vshll.u32 %v4493, 16
      %v4516 = vrot.slane %v4514, 5
      %v4517 = vsel %vm290, %v4512, %v4516
      %4520 = vst.msk [vmem:[#allocation2 + $0x20] sm:$0xf] %vm174, %v4507
      %4521 = vst.msk [vmem:[#allocation2 + $0x24] sm:$0xf] %vm174, %v4517
      %v4522 = vld [vmem:[%s207] sm:$0xf]
      %v4523 = vld [vmem:[%s207 + $0x4] sm:$0xf]
      %v4524 = vld [vmem:[%s207 + $0x8] sm:$0x1]
      %v4526 = vshrl.u32 %v4522, 16
      %v4528 = vrot.slane %v4526, 4
      %v4529 = vshll.u32 %v4522, 16
      %v4531 = vrot.slane %v4529, 5
      %v4532 = vor.u32 %v4528, %v4531
      %v4533 = vrot.slane %v4532, 4
      %v4535 = vshll.u32 %v4523, 16
      %v4537 = vrot.slane %v4535, 5
      %v4538 = vsel %vm290, %v4533, %v4537
      %v4539 = vshrl.u32 %v4523, 16
      %v4541 = vrot.slane %v4539, 4
      %v4542 = vor.u32 %v4541, %v4537
      %v4543 = vrot.slane %v4542, 4
      %v4545 = vshll.u32 %v4524, 16
      %v4547 = vrot.slane %v4545, 5
      %v4548 = vsel %vm290, %v4543, %v4547
      %4551 = vst.msk [vmem:[#allocation2 + $0x28] sm:$0xf] %vm174, %v4538
      %4552 = vst.msk [vmem:[#allocation2 + $0x2c] sm:$0xf] %vm174, %v4548
      %v4553 = vld [vmem:[%s212] sm:$0xf]
      %v4554 = vld [vmem:[%s212 + $0x4] sm:$0xf]
      %v4555 = vld [vmem:[%s212 + $0x8] sm:$0x1]
      %v4557 = vshrl.u32 %v4553, 16
      %v4559 = vrot.slane %v4557, 4
      %v4560 = vshll.u32 %v4553, 16
      %v4562 = vrot.slane %v4560, 5
      %v4563 = vor.u32 %v4559, %v4562
      %v4564 = vrot.slane %v4563, 4
      %v4566 = vshll.u32 %v4554, 16
      %v4568 = vrot.slane %v4566, 5
      %v4569 = vsel %vm290, %v4564, %v4568
      %v4570 = vshrl.u32 %v4554, 16
      %v4572 = vrot.slane %v4570, 4
      %v4573 = vor.u32 %v4572, %v4568
      %v4574 = vrot.slane %v4573, 4
      %v4576 = vshll.u32 %v4555, 16
      %v4578 = vrot.slane %v4576, 5
      %v4579 = vsel %vm290, %v4574, %v4578
      %4582 = vst.msk [vmem:[#allocation2 + $0x30] sm:$0xf] %vm174, %v4569
      %4583 = vst.msk [vmem:[#allocation2 + $0x34] sm:$0xf] %vm174, %v4579
      %v4584 = vld [vmem:[%s217] sm:$0xf]
      %v4585 = vld [vmem:[%s217 + $0x4] sm:$0xf]
      %v4586 = vld [vmem:[%s217 + $0x8] sm:$0x1]
      %v4588 = vshrl.u32 %v4584, 16
      %v4590 = vrot.slane %v4588, 4
      %v4591 = vshll.u32 %v4584, 16
      %v4593 = vrot.slane %v4591, 5
      %v4594 = vor.u32 %v4590, %v4593
      %v4595 = vrot.slane %v4594, 4
      %v4597 = vshll.u32 %v4585, 16
      %v4599 = vrot.slane %v4597, 5
      %v4600 = vsel %vm290, %v4595, %v4599
      %v4601 = vshrl.u32 %v4585, 16
      %v4603 = vrot.slane %v4601, 4
      %v4604 = vor.u32 %v4603, %v4599
      %v4605 = vrot.slane %v4604, 4
      %v4607 = vshll.u32 %v4586, 16
      %v4609 = vrot.slane %v4607, 5
      %v4610 = vsel %vm290, %v4605, %v4609
      %4613 = vst.msk [vmem:[#allocation2 + $0x38] sm:$0xf] %vm174, %v4600
      %4614 = vst.msk [vmem:[#allocation2 + $0x3c] sm:$0xf] %vm174, %v4610
      %v4615 = vld [vmem:[%s222] sm:$0xf]
      %v4616 = vld [vmem:[%s222 + $0x4] sm:$0xf]
      %v4617 = vld [vmem:[%s222 + $0x8] sm:$0x1]
      %v4619 = vshrl.u32 %v4615, 16
      %v4621 = vrot.slane %v4619, 4
      %v4622 = vshll.u32 %v4615, 16
      %v4624 = vrot.slane %v4622, 5
      %v4625 = vor.u32 %v4621, %v4624
      %v4626 = vrot.slane %v4625, 4
      %v4628 = vshll.u32 %v4616, 16
      %v4630 = vrot.slane %v4628, 5
      %v4631 = vsel %vm290, %v4626, %v4630
      %v4632 = vshrl.u32 %v4616, 16
      %v4634 = vrot.slane %v4632, 4
      %v4635 = vor.u32 %v4634, %v4630
      %v4636 = vrot.slane %v4635, 4
      %v4638 = vshll.u32 %v4617, 16
      %v4640 = vrot.slane %v4638, 5
      %v4641 = vsel %vm290, %v4636, %v4640
      %4644 = vst.msk [vmem:[#allocation2 + $0x40] sm:$0xf] %vm174, %v4631
      %4645 = vst.msk [vmem:[#allocation2 + $0x44] sm:$0xf] %vm174, %v4641
      %v4646 = vld [vmem:[%s227] sm:$0xf]
      %v4647 = vld [vmem:[%s227 + $0x4] sm:$0xf]
      %v4648 = vld [vmem:[%s227 + $0x8] sm:$0x1]
      %v4650 = vshrl.u32 %v4646, 16
      %v4652 = vrot.slane %v4650, 4
      %v4653 = vshll.u32 %v4646, 16
      %v4655 = vrot.slane %v4653, 5
      %v4656 = vor.u32 %v4652, %v4655
      %v4657 = vrot.slane %v4656, 4
      %v4659 = vshll.u32 %v4647, 16
      %v4661 = vrot.slane %v4659, 5
      %v4662 = vsel %vm290, %v4657, %v4661
      %v4663 = vshrl.u32 %v4647, 16
      %v4665 = vrot.slane %v4663, 4
      %v4666 = vor.u32 %v4665, %v4661
      %v4667 = vrot.slane %v4666, 4
      %v4669 = vshll.u32 %v4648, 16
      %v4671 = vrot.slane %v4669, 5
      %v4672 = vsel %vm290, %v4667, %v4671
      %4675 = vst.msk [vmem:[#allocation2 + $0x48] sm:$0xf] %vm174, %v4662
      %4676 = vst.msk [vmem:[#allocation2 + $0x4c] sm:$0xf] %vm174, %v4672
      %v4677 = vld [vmem:[%s232] sm:$0xf]
      %v4678 = vld [vmem:[%s232 + $0x4] sm:$0xf]
      %v4679 = vld [vmem:[%s232 + $0x8] sm:$0x1]
      %v4681 = vshrl.u32 %v4677, 16
      %v4683 = vrot.slane %v4681, 4
      %v4684 = vshll.u32 %v4677, 16
      %v4686 = vrot.slane %v4684, 5
      %v4687 = vor.u32 %v4683, %v4686
      %v4688 = vrot.slane %v4687, 4
      %v4690 = vshll.u32 %v4678, 16
      %v4692 = vrot.slane %v4690, 5
      %v4693 = vsel %vm290, %v4688, %v4692
      %v4694 = vshrl.u32 %v4678, 16
      %v4696 = vrot.slane %v4694, 4
      %v4697 = vor.u32 %v4696, %v4692
      %v4698 = vrot.slane %v4697, 4
      %v4700 = vshll.u32 %v4679, 16
      %v4702 = vrot.slane %v4700, 5
      %v4703 = vsel %vm290, %v4698, %v4702
      %4706 = vst.msk [vmem:[#allocation2 + $0x50] sm:$0xf] %vm174, %v4693
      %4707 = vst.msk [vmem:[#allocation2 + $0x54] sm:$0xf] %vm174, %v4703
      %v4708 = vld [vmem:[%s237] sm:$0xf]
      %v4709 = vld [vmem:[%s237 + $0x4] sm:$0xf]
      %v4710 = vld [vmem:[%s237 + $0x8] sm:$0x1]
      %v4712 = vshrl.u32 %v4708, 16
      %v4714 = vrot.slane %v4712, 4
      %v4715 = vshll.u32 %v4708, 16
      %v4717 = vrot.slane %v4715, 5
      %v4718 = vor.u32 %v4714, %v4717
      %v4719 = vrot.slane %v4718, 4
      %v4721 = vshll.u32 %v4709, 16
      %v4723 = vrot.slane %v4721, 5
      %v4724 = vsel %vm290, %v4719, %v4723
      %v4725 = vshrl.u32 %v4709, 16
      %v4727 = vrot.slane %v4725, 4
      %v4728 = vor.u32 %v4727, %v4723
      %v4729 = vrot.slane %v4728, 4
      %v4731 = vshll.u32 %v4710, 16
      %v4733 = vrot.slane %v4731, 5
      %v4734 = vsel %vm290, %v4729, %v4733
      %4737 = vst.msk [vmem:[#allocation2 + $0x58] sm:$0xf] %vm174, %v4724
      %4738 = vst.msk [vmem:[#allocation2 + $0x5c] sm:$0xf] %vm174, %v4734
      %v4739 = vld [vmem:[%s242] sm:$0xf]
      %v4740 = vld [vmem:[%s242 + $0x4] sm:$0xf]
      %v4741 = vld [vmem:[%s242 + $0x8] sm:$0x1]
      %v4743 = vshrl.u32 %v4739, 16
      %v4745 = vrot.slane %v4743, 4
      %v4746 = vshll.u32 %v4739, 16
      %v4748 = vrot.slane %v4746, 5
      %v4749 = vor.u32 %v4745, %v4748
      %v4750 = vrot.slane %v4749, 4
      %v4752 = vshll.u32 %v4740, 16
      %v4754 = vrot.slane %v4752, 5
      %v4755 = vsel %vm290, %v4750, %v4754
      %v4756 = vshrl.u32 %v4740, 16
      %v4758 = vrot.slane %v4756, 4
      %v4759 = vor.u32 %v4758, %v4754
      %v4760 = vrot.slane %v4759, 4
      %v4762 = vshll.u32 %v4741, 16
      %v4764 = vrot.slane %v4762, 5
      %v4765 = vsel %vm290, %v4760, %v4764
      %4768 = vst.msk [vmem:[#allocation2 + $0x60] sm:$0xf] %vm174, %v4755
      %4769 = vst.msk [vmem:[#allocation2 + $0x64] sm:$0xf] %vm174, %v4765
      %v4770 = vld [vmem:[%s247] sm:$0xf]
      %v4771 = vld [vmem:[%s247 + $0x4] sm:$0xf]
      %v4772 = vld [vmem:[%s247 + $0x8] sm:$0x1]
      %v4774 = vshrl.u32 %v4770, 16
      %v4776 = vrot.slane %v4774, 4
      %v4777 = vshll.u32 %v4770, 16
      %v4779 = vrot.slane %v4777, 5
      %v4780 = vor.u32 %v4776, %v4779
      %v4781 = vrot.slane %v4780, 4
      %v4783 = vshll.u32 %v4771, 16
      %v4785 = vrot.slane %v4783, 5
      %v4786 = vsel %vm290, %v4781, %v4785
      %v4787 = vshrl.u32 %v4771, 16
      %v4789 = vrot.slane %v4787, 4
      %v4790 = vor.u32 %v4789, %v4785
      %v4791 = vrot.slane %v4790, 4
      %v4793 = vshll.u32 %v4772, 16
      %v4795 = vrot.slane %v4793, 5
      %v4796 = vsel %vm290, %v4791, %v4795
      %4799 = vst.msk [vmem:[#allocation2 + $0x68] sm:$0xf] %vm174, %v4786
      %4800 = vst.msk [vmem:[#allocation2 + $0x6c] sm:$0xf] %vm174, %v4796
      %v4801 = vld [vmem:[%s2097] sm:$0xf]
      %v4802 = vld [vmem:[%s2097 + $0x4] sm:$0xf]
      %v4803 = vld [vmem:[%s2097 + $0x8] sm:$0x1]
      %v4805 = vshrl.u32 %v4801, 16
      %v4807 = vrot.slane %v4805, 4
      %v4808 = vshll.u32 %v4801, 16
      %v4810 = vrot.slane %v4808, 5
      %v4811 = vor.u32 %v4807, %v4810
      %v4812 = vrot.slane %v4811, 4
      %v4814 = vshll.u32 %v4802, 16
      %v4816 = vrot.slane %v4814, 5
      %v4817 = vsel %vm290, %v4812, %v4816
      %v4818 = vshrl.u32 %v4802, 16
      %v4820 = vrot.slane %v4818, 4
      %v4821 = vor.u32 %v4820, %v4816
      %v4822 = vrot.slane %v4821, 4
      %v4824 = vshll.u32 %v4803, 16
      %v4826 = vrot.slane %v4824, 5
      %v4827 = vsel %vm290, %v4822, %v4826
      %4830 = vst.msk [vmem:[#allocation2 + $0x70] sm:$0xf] %vm174, %v4817
      %4831 = vst.msk [vmem:[#allocation2 + $0x74] sm:$0xf] %vm174, %v4827
      %v4832 = vld [vmem:[%s4004] sm:$0xf]
      %v4833 = vld [vmem:[%s4004 + $0x4] sm:$0xf]
      %v4834 = vld [vmem:[%s4004 + $0x8] sm:$0x1]
      %v4836 = vshrl.u32 %v4832, 16
      %v4838 = vrot.slane %v4836, 4
      %v4839 = vshll.u32 %v4832, 16
      %v4841 = vrot.slane %v4839, 5
      %v4842 = vor.u32 %v4838, %v4841
      %v4843 = vrot.slane %v4842, 4
      %v4845 = vshll.u32 %v4833, 16
      %v4847 = vrot.slane %v4845, 5
      %v4848 = vsel %vm290, %v4843, %v4847
      %v4849 = vshrl.u32 %v4833, 16
      %v4851 = vrot.slane %v4849, 4
      %v4852 = vor.u32 %v4851, %v4847
      %v4853 = vrot.slane %v4852, 4
      %v4855 = vshll.u32 %v4834, 16
      %v4857 = vrot.slane %v4855, 5
      %v4858 = vsel %vm290, %v4853, %v4857
      %4861 = vst.msk [vmem:[#allocation2 + $0x78] sm:$0xf] %vm174, %v4848
      %4862 = vst.msk [vmem:[#allocation2 + $0x7c] sm:$0xf] %vm174, %v4858
      %v4863 = vld [vmem:[#allocation2] sm:$0xf]
      %v4864 = vld [vmem:[#allocation2 + $0x4] sm:$0xf]
      %v4865 = vld [vmem:[#allocation2 + $0x8] sm:$0xf]
      %v4866 = vld [vmem:[#allocation2 + $0xc] sm:$0xf]
      %v4867 = vld [vmem:[#allocation2 + $0x10] sm:$0xf]
      %v4868 = vld [vmem:[#allocation2 + $0x14] sm:$0xf]
      %v4869 = vld [vmem:[#allocation2 + $0x18] sm:$0xf]
      %v4870 = vld [vmem:[#allocation2 + $0x1c] sm:$0xf]
      %v4871 = vld [vmem:[#allocation2 + $0x20] sm:$0xf]
      %v4872 = vld [vmem:[#allocation2 + $0x24] sm:$0xf]
      %v4873 = vld [vmem:[#allocation2 + $0x28] sm:$0xf]
      %v4874 = vld [vmem:[#allocation2 + $0x2c] sm:$0xf]
      %v4875 = vld [vmem:[#allocation2 + $0x30] sm:$0xf]
      %v4876 = vld [vmem:[#allocation2 + $0x34] sm:$0xf]
      %v4877 = vld [vmem:[#allocation2 + $0x38] sm:$0xf]
      %v4878 = vld [vmem:[#allocation2 + $0x3c] sm:$0xf]
      %v4879 = vld [vmem:[#allocation2 + $0x40] sm:$0xf]
      %v4880 = vld [vmem:[#allocation2 + $0x44] sm:$0xf]
      %v4881 = vld [vmem:[#allocation2 + $0x48] sm:$0xf]
      %v4882 = vld [vmem:[#allocation2 + $0x4c] sm:$0xf]
      %v4883 = vld [vmem:[#allocation2 + $0x50] sm:$0xf]
      %v4884 = vld [vmem:[#allocation2 + $0x54] sm:$0xf]
      %v4885 = vld [vmem:[#allocation2 + $0x58] sm:$0xf]
      %v4886 = vld [vmem:[#allocation2 + $0x5c] sm:$0xf]
      %v4887 = vld [vmem:[#allocation2 + $0x60] sm:$0xf]
      %v4888 = vld [vmem:[#allocation2 + $0x64] sm:$0xf]
      %v4889 = vld [vmem:[#allocation2 + $0x68] sm:$0xf]
      %v4890 = vld [vmem:[#allocation2 + $0x6c] sm:$0xf]
      %v4891 = vld [vmem:[#allocation2 + $0x70] sm:$0xf]
      %v4892 = vld [vmem:[#allocation2 + $0x74] sm:$0xf]
      %v4893 = vld [vmem:[#allocation2 + $0x78] sm:$0xf]
      %v4894 = vld [vmem:[#allocation2 + $0x7c] sm:$0xf]
      %s4895 = scalar_lea.vmem %s1, 28
      %v4896 = vld [vmem:[%s4895] sm:$0xf]
      %v4929 = vunpack.c.l.b16 %v4863
      %v4930 = vunpack.c.l.b16 %v4864
      %v4931 = vunpack.c.l.b16 %v4865
      %v4932 = vunpack.c.l.b16 %v4866
      %v4933 = vunpack.c.l.b16 %v4867
      %v4934 = vunpack.c.l.b16 %v4868
      %v4935 = vunpack.c.l.b16 %v4869
      %v4936 = vunpack.c.l.b16 %v4870
      %v4937 = vunpack.c.l.b16 %v4871
      %v4938 = vunpack.c.l.b16 %v4872
      %v4939 = vunpack.c.l.b16 %v4873
      %v4940 = vunpack.c.l.b16 %v4874
      %v4941 = vunpack.c.l.b16 %v4875
      %v4942 = vunpack.c.l.b16 %v4876
      %v4943 = vunpack.c.l.b16 %v4877
      %v4944 = vunpack.c.l.b16 %v4878
      %v4945 = vunpack.c.l.b16 %v4879
      %v4946 = vunpack.c.l.b16 %v4880
      %v4947 = vunpack.c.l.b16 %v4881
      %v4948 = vunpack.c.l.b16 %v4882
      %v4949 = vunpack.c.l.b16 %v4883
      %v4950 = vunpack.c.l.b16 %v4884
      %v4951 = vunpack.c.l.b16 %v4885
      %v4952 = vunpack.c.l.b16 %v4886
      %v4953 = vunpack.c.l.b16 %v4887
      %v4954 = vunpack.c.l.b16 %v4888
      %v4955 = vunpack.c.l.b16 %v4889
      %v4956 = vunpack.c.l.b16 %v4890
      %v4957 = vunpack.c.l.b16 %v4891
      %v4958 = vunpack.c.l.b16 %v4892
      %v4959 = vunpack.c.l.b16 %v4893
      %v4960 = vunpack.c.l.b16 %v4894
      %v4961 = vpack.c.b16 %v4930, %v4929
      %v4962 = vpack.c.b16 %v4932, %v4931
      %v4963 = vpack.c.b16 %v4934, %v4933
      %v4964 = vpack.c.b16 %v4936, %v4935
      %v4965 = vpack.c.b16 %v4938, %v4937
      %v4966 = vpack.c.b16 %v4940, %v4939
      %v4967 = vpack.c.b16 %v4942, %v4941
      %v4968 = vpack.c.b16 %v4944, %v4943
      %v4969 = vpack.c.b16 %v4946, %v4945
      %v4970 = vpack.c.b16 %v4948, %v4947
      %v4971 = vpack.c.b16 %v4950, %v4949
      %v4972 = vpack.c.b16 %v4952, %v4951
      %v4973 = vpack.c.b16 %v4954, %v4953
      %v4974 = vpack.c.b16 %v4956, %v4955
      %v4975 = vpack.c.b16 %v4958, %v4957
      %v4976 = vpack.c.b16 %v4960, %v4959
      %v4978 = vsel %vm898, %v4961, 0
      %v4981 = vsel %vm898, %v4962, 0
      %v4984 = vsel %vm898, %v4963, 0
      %v4987 = vsel %vm898, %v4964, 0
      %v4990 = vsel %vm898, %v4965, 0
      %v4993 = vsel %vm898, %v4966, 0
      %v4996 = vsel %vm898, %v4967, 0
      %v4999 = vsel %vm898, %v4968, 0
      %v5002 = vsel %vm898, %v4969, 0
      %v5005 = vsel %vm898, %v4970, 0
      %v5008 = vsel %vm898, %v4971, 0
      %v5011 = vsel %vm898, %v4972, 0
      %v5014 = vsel %vm898, %v4973, 0
      %v5017 = vsel %vm898, %v4974, 0
      %v5020 = vsel %vm898, %v4975, 0
      %v5023 = vsel %vm898, %v4976, 0
      %v5026 = vsel %vm947, %v4896, 0
      %5028 = vmatprep.subr.bf16.mxu0 0
      %5029 = vmatpush1.bf16.msra.mxu0 0
      %5030 = vmatprep.subr.bf16.mxu0 0
      %5031 = vmatpush1.bf16.msra.mxu0 0
      %5032 = vmatprep.subr.bf16.mxu0 0
      %5033 = vmatpush1.bf16.msra.mxu0 0
      %5034 = vmatprep.subr.bf16.mxu0 0
      %5035 = vmatpush1.bf16.msra.mxu0 0
      %5036 = vmatprep.subr.bf16.mxu0 0
      %5037 = vmatpush1.bf16.msra.mxu0 0
      %5038 = vmatprep.subr.bf16.mxu0 0
      %5039 = vmatpush1.bf16.msra.mxu0 0
      %5040 = vmatprep.subr.bf16.mxu0 0
      %5041 = vmatpush1.bf16.msra.mxu0 0
      %5042 = vmatprep.subr.bf16.mxu0 0
      %5043 = vmatpush1.bf16.msra.mxu0 %v5026
      %5044 = vmatprep.subr.bf16.mxu0 0
      %5045 = vmatpush2.bf16.msra.mxu0 0
      %5046 = vmatprep.subr.bf16.mxu0 0
      %5047 = vmatpush2.bf16.msra.mxu0 0
      %5048 = vmatprep.subr.bf16.mxu0 0
      %5049 = vmatpush2.bf16.msra.mxu0 0
      %5050 = vmatprep.subr.bf16.mxu0 0
      %5051 = vmatpush2.bf16.msra.mxu0 0
      %5052 = vmatprep.subr.bf16.mxu0 0
      %5053 = vmatpush2.bf16.msra.mxu0 0
      %5054 = vmatprep.subr.bf16.mxu0 0
      %5055 = vmatpush2.bf16.msra.mxu0 0
      %5056 = vmatprep.subr.bf16.mxu0 0
      %5057 = vmatpush2.bf16.msra.mxu0 0
      %5058 = vmatprep.subr.bf16.mxu0 0
      %5059 = vmatpush2.bf16.msra.mxu0 0
      %5060 = vmatprep.mubr.bf16.mxu0 0
      %5061 = vmatmul.mubr.bf16.gmra.mxu0 %v4978
      %v5062 = vpop.f32.mrf.mxu0
      %v5063 = vadd.f32 0.0, %v5062
      %v5064 = vpop.f32.mrf.mxu0
      %v5065 = vpop.f32.mrf.mxu0
      %v5066 = vadd.f32 0.0, %v5065
      %v5067 = vpop.f32.mrf.mxu0
      %5068 = vmatprep.mubr.bf16.mxu0 0
      %5069 = vmatmul.mubr.bf16.gmra.mxu0 %v4981
      %v5070 = vpop.f32.mrf.mxu0
      %v5071 = vadd.f32 0.0, %v5070
      %v5072 = vpop.f32.mrf.mxu0
      %v5073 = vpop.f32.mrf.mxu0
      %v5074 = vadd.f32 0.0, %v5073
      %v5075 = vpop.f32.mrf.mxu0
      %5076 = vmatprep.mubr.bf16.mxu0 0
      %5077 = vmatmul.mubr.bf16.gmra.mxu0 %v4984
      %v5078 = vpop.f32.mrf.mxu0
      %v5079 = vadd.f32 0.0, %v5078
      %v5080 = vpop.f32.mrf.mxu0
      %v5081 = vpop.f32.mrf.mxu0
      %v5082 = vadd.f32 0.0, %v5081
      %v5083 = vpop.f32.mrf.mxu0
      %5084 = vmatprep.mubr.bf16.mxu0 0
      %5085 = vmatmul.mubr.bf16.gmra.mxu0 %v4987
      %v5086 = vpop.f32.mrf.mxu0
      %v5087 = vadd.f32 0.0, %v5086
      %v5088 = vpop.f32.mrf.mxu0
      %v5089 = vpop.f32.mrf.mxu0
      %v5090 = vadd.f32 0.0, %v5089
      %v5091 = vpop.f32.mrf.mxu0
      %5092 = vmatprep.mubr.bf16.mxu0 0
      %5093 = vmatmul.mubr.bf16.gmra.mxu0 %v4990
      %v5094 = vpop.f32.mrf.mxu0
      %v5095 = vadd.f32 0.0, %v5094
      %v5096 = vpop.f32.mrf.mxu0
      %v5097 = vpop.f32.mrf.mxu0
      %v5098 = vadd.f32 0.0, %v5097
      %v5099 = vpop.f32.mrf.mxu0
      %5100 = vmatprep.mubr.bf16.mxu0 0
      %5101 = vmatmul.mubr.bf16.gmra.mxu0 %v4993
      %v5102 = vpop.f32.mrf.mxu0
      %v5103 = vadd.f32 0.0, %v5102
      %v5104 = vpop.f32.mrf.mxu0
      %v5105 = vpop.f32.mrf.mxu0
      %v5106 = vadd.f32 0.0, %v5105
      %v5107 = vpop.f32.mrf.mxu0
      %5108 = vmatprep.mubr.bf16.mxu0 0
      %5109 = vmatmul.mubr.bf16.gmra.mxu0 %v4996
      %v5110 = vpop.f32.mrf.mxu0
      %v5111 = vadd.f32 0.0, %v5110
      %v5112 = vpop.f32.mrf.mxu0
      %v5113 = vpop.f32.mrf.mxu0
      %v5114 = vadd.f32 0.0, %v5113
      %v5115 = vpop.f32.mrf.mxu0
      %5116 = vmatprep.mubr.bf16.mxu0 0
      %5117 = vmatmul.mubr.bf16.gmra.mxu0 %v4999
      %v5118 = vpop.f32.mrf.mxu0
      %v5119 = vadd.f32 0.0, %v5118
      %v5120 = vpop.f32.mrf.mxu0
      %v5121 = vpop.f32.mrf.mxu0
      %v5122 = vadd.f32 0.0, %v5121
      %v5123 = vpop.f32.mrf.mxu0
      %5124 = vmatprep.mubr.bf16.mxu0 0
      %5125 = vmatmul.mubr.bf16.gmra.mxu0 %v5002
      %v5126 = vpop.f32.mrf.mxu0
      %v5127 = vadd.f32 0.0, %v5126
      %v5128 = vpop.f32.mrf.mxu0
      %v5129 = vpop.f32.mrf.mxu0
      %v5130 = vadd.f32 0.0, %v5129
      %v5131 = vpop.f32.mrf.mxu0
      %5132 = vmatprep.mubr.bf16.mxu0 0
      %5133 = vmatmul.mubr.bf16.gmra.mxu0 %v5005
      %v5134 = vpop.f32.mrf.mxu0
      %v5135 = vadd.f32 0.0, %v5134
      %v5136 = vpop.f32.mrf.mxu0
      %v5137 = vpop.f32.mrf.mxu0
      %v5138 = vadd.f32 0.0, %v5137
      %v5139 = vpop.f32.mrf.mxu0
      %5140 = vmatprep.mubr.bf16.mxu0 0
      %5141 = vmatmul.mubr.bf16.gmra.mxu0 %v5008
      %v5142 = vpop.f32.mrf.mxu0
      %v5143 = vadd.f32 0.0, %v5142
      %v5144 = vpop.f32.mrf.mxu0
      %v5145 = vpop.f32.mrf.mxu0
      %v5146 = vadd.f32 0.0, %v5145
      %v5147 = vpop.f32.mrf.mxu0
      %5148 = vmatprep.mubr.bf16.mxu0 0
      %5149 = vmatmul.mubr.bf16.gmra.mxu0 %v5011
      %v5150 = vpop.f32.mrf.mxu0
      %v5151 = vadd.f32 0.0, %v5150
      %v5152 = vpop.f32.mrf.mxu0
      %v5153 = vpop.f32.mrf.mxu0
      %v5154 = vadd.f32 0.0, %v5153
      %v5155 = vpop.f32.mrf.mxu0
      %5156 = vmatprep.mubr.bf16.mxu0 0
      %5157 = vmatmul.mubr.bf16.gmra.mxu0 %v5014
      %v5158 = vpop.f32.mrf.mxu0
      %v5159 = vadd.f32 0.0, %v5158
      %v5160 = vpop.f32.mrf.mxu0
      %v5161 = vpop.f32.mrf.mxu0
      %v5162 = vadd.f32 0.0, %v5161
      %v5163 = vpop.f32.mrf.mxu0
      %5164 = vmatprep.mubr.bf16.mxu0 0
      %5165 = vmatmul.mubr.bf16.gmra.mxu0 %v5017
      %v5166 = vpop.f32.mrf.mxu0
      %v5167 = vadd.f32 0.0, %v5166
      %v5168 = vpop.f32.mrf.mxu0
      %v5169 = vpop.f32.mrf.mxu0
      %v5170 = vadd.f32 0.0, %v5169
      %v5171 = vpop.f32.mrf.mxu0
      %5172 = vmatprep.mubr.bf16.mxu0 0
      %5173 = vmatmul.mubr.bf16.gmra.mxu0 %v5020
      %v5174 = vpop.f32.mrf.mxu0
      %v5175 = vadd.f32 0.0, %v5174
      %v5176 = vpop.f32.mrf.mxu0
      %v5177 = vpop.f32.mrf.mxu0
      %v5178 = vadd.f32 0.0, %v5177
      %v5179 = vpop.f32.mrf.mxu0
      %5180 = vmatprep.mubr.bf16.mxu0 0
      %5181 = vmatmul.mubr.bf16.gmra.mxu0 %v5023
      %v5182 = vpop.f32.mrf.mxu0
      %v5183 = vadd.f32 0.0, %v5182
      %v5184 = vpop.f32.mrf.mxu0
      %v5185 = vpop.f32.mrf.mxu0
      %v5186 = vadd.f32 0.0, %v5185
      %v5187 = vpop.f32.mrf.mxu0
      %5188 = vdwg.mxu0
      %v5189 = vadd.f32 %v4335, %v5063
      %v5190 = vadd.f32 %v4336, %v5066
      %v5191 = vadd.f32 %v4337, %v5071
      %v5192 = vadd.f32 %v4338, %v5074
      %v5193 = vadd.f32 %v4339, %v5079
      %v5194 = vadd.f32 %v4340, %v5082
      %v5195 = vadd.f32 %v4341, %v5087
      %v5196 = vadd.f32 %v4342, %v5090
      %v5197 = vadd.f32 %v4343, %v5095
      %v5198 = vadd.f32 %v4344, %v5098
      %v5199 = vadd.f32 %v4345, %v5103
      %v5200 = vadd.f32 %v4346, %v5106
      %v5201 = vadd.f32 %v4347, %v5111
      %v5202 = vadd.f32 %v4348, %v5114
      %v5203 = vadd.f32 %v4349, %v5119
      %v5204 = vadd.f32 %v4350, %v5122
      %v5205 = vadd.f32 %v4351, %v5127
      %v5206 = vadd.f32 %v4352, %v5130
      %v5207 = vadd.f32 %v4353, %v5135
      %v5208 = vadd.f32 %v4354, %v5138
      %v5209 = vadd.f32 %v4355, %v5143
      %v5210 = vadd.f32 %v4356, %v5146
      %v5211 = vadd.f32 %v4357, %v5151
      %v5212 = vadd.f32 %v4358, %v5154
      %v5213 = vadd.f32 %v4359, %v5159
      %v5214 = vadd.f32 %v4360, %v5162
      %v5215 = vadd.f32 %v4361, %v5167
      %v5216 = vadd.f32 %v4362, %v5170
      %v5217 = vadd.f32 %v4363, %v5175
      %v5218 = vadd.f32 %v4364, %v5178
      %v5219 = vadd.f32 %v4365, %v5183
      %v5220 = vadd.f32 %v4366, %v5186
      %v5221 = vld [vmem:[%s182] sm:$0xe]
      %v5222 = vld [vmem:[%s182 + $0x4] sm:$0xf]
      %v5223 = vld [vmem:[%s182 + $0x8] sm:$0x1]
      %v5227 = vrot.slane %v5221, 5
      %v5228 = vrot.slane %v5227, 4
      %v5229 = vrot.slane %v5222, 5
      %v5230 = vsel %vm1412, %v5228, %v5229
      %v5231 = vrot.slane %v5229, 4
      %v5232 = vrot.slane %v5223, 5
      %v5233 = vsel %vm1412, %v5231, %v5232
      %5236 = vst.msk [vmem:[#allocation2] sm:$0xf] %vm174, %v5230
      %5237 = vst.msk [vmem:[#allocation2 + $0x4] sm:$0xf] %vm174, %v5233
      %v5238 = vld [vmem:[%s187] sm:$0xe]
      %v5239 = vld [vmem:[%s187 + $0x4] sm:$0xf]
      %v5240 = vld [vmem:[%s187 + $0x8] sm:$0x1]
      %v5244 = vrot.slane %v5238, 5
      %v5245 = vrot.slane %v5244, 4
      %v5246 = vrot.slane %v5239, 5
      %v5247 = vsel %vm1412, %v5245, %v5246
      %v5248 = vrot.slane %v5246, 4
      %v5249 = vrot.slane %v5240, 5
      %v5250 = vsel %vm1412, %v5248, %v5249
      %5253 = vst.msk [vmem:[#allocation2 + $0x8] sm:$0xf] %vm174, %v5247
      %5254 = vst.msk [vmem:[#allocation2 + $0xc] sm:$0xf] %vm174, %v5250
      %v5255 = vld [vmem:[%s192] sm:$0xe]
      %v5256 = vld [vmem:[%s192 + $0x4] sm:$0xf]
      %v5257 = vld [vmem:[%s192 + $0x8] sm:$0x1]
      %v5261 = vrot.slane %v5255, 5
      %v5262 = vrot.slane %v5261, 4
      %v5263 = vrot.slane %v5256, 5
      %v5264 = vsel %vm1412, %v5262, %v5263
      %v5265 = vrot.slane %v5263, 4
      %v5266 = vrot.slane %v5257, 5
      %v5267 = vsel %vm1412, %v5265, %v5266
      %5270 = vst.msk [vmem:[#allocation2 + $0x10] sm:$0xf] %vm174, %v5264
      %5271 = vst.msk [vmem:[#allocation2 + $0x14] sm:$0xf] %vm174, %v5267
      %v5272 = vld [vmem:[%s197] sm:$0xe]
      %v5273 = vld [vmem:[%s197 + $0x4] sm:$0xf]
      %v5274 = vld [vmem:[%s197 + $0x8] sm:$0x1]
      %v5278 = vrot.slane %v5272, 5
      %v5279 = vrot.slane %v5278, 4
      %v5280 = vrot.slane %v5273, 5
      %v5281 = vsel %vm1412, %v5279, %v5280
      %v5282 = vrot.slane %v5280, 4
      %v5283 = vrot.slane %v5274, 5
      %v5284 = vsel %vm1412, %v5282, %v5283
      %5287 = vst.msk [vmem:[#allocation2 + $0x18] sm:$0xf] %vm174, %v5281
      %5288 = vst.msk [vmem:[#allocation2 + $0x1c] sm:$0xf] %vm174, %v5284
      %v5289 = vld [vmem:[%s202] sm:$0xe]
      %v5290 = vld [vmem:[%s202 + $0x4] sm:$0xf]
      %v5291 = vld [vmem:[%s202 + $0x8] sm:$0x1]
      %v5295 = vrot.slane %v5289, 5
      %v5296 = vrot.slane %v5295, 4
      %v5297 = vrot.slane %v5290, 5
      %v5298 = vsel %vm1412, %v5296, %v5297
      %v5299 = vrot.slane %v5297, 4
      %v5300 = vrot.slane %v5291, 5
      %v5301 = vsel %vm1412, %v5299, %v5300
      %5304 = vst.msk [vmem:[#allocation2 + $0x20] sm:$0xf] %vm174, %v5298
      %5305 = vst.msk [vmem:[#allocation2 + $0x24] sm:$0xf] %vm174, %v5301
      %v5306 = vld [vmem:[%s207] sm:$0xe]
      %v5307 = vld [vmem:[%s207 + $0x4] sm:$0xf]
      %v5308 = vld [vmem:[%s207 + $0x8] sm:$0x1]
      %v5312 = vrot.slane %v5306, 5
      %v5313 = vrot.slane %v5312, 4
      %v5314 = vrot.slane %v5307, 5
      %v5315 = vsel %vm1412, %v5313, %v5314
      %v5316 = vrot.slane %v5314, 4
      %v5317 = vrot.slane %v5308, 5
      %v5318 = vsel %vm1412, %v5316, %v5317
      %5321 = vst.msk [vmem:[#allocation2 + $0x28] sm:$0xf] %vm174, %v5315
      %5322 = vst.msk [vmem:[#allocation2 + $0x2c] sm:$0xf] %vm174, %v5318
      %v5323 = vld [vmem:[%s212] sm:$0xe]
      %v5324 = vld [vmem:[%s212 + $0x4] sm:$0xf]
      %v5325 = vld [vmem:[%s212 + $0x8] sm:$0x1]
      %v5329 = vrot.slane %v5323, 5
      %v5330 = vrot.slane %v5329, 4
      %v5331 = vrot.slane %v5324, 5
      %v5332 = vsel %vm1412, %v5330, %v5331
      %v5333 = vrot.slane %v5331, 4
      %v5334 = vrot.slane %v5325, 5
      %v5335 = vsel %vm1412, %v5333, %v5334
      %5338 = vst.msk [vmem:[#allocation2 + $0x30] sm:$0xf] %vm174, %v5332
      %5339 = vst.msk [vmem:[#allocation2 + $0x34] sm:$0xf] %vm174, %v5335
      %v5340 = vld [vmem:[%s217] sm:$0xe]
      %v5341 = vld [vmem:[%s217 + $0x4] sm:$0xf]
      %v5342 = vld [vmem:[%s217 + $0x8] sm:$0x1]
      %v5346 = vrot.slane %v5340, 5
      %v5347 = vrot.slane %v5346, 4
      %v5348 = vrot.slane %v5341, 5
      %v5349 = vsel %vm1412, %v5347, %v5348
      %v5350 = vrot.slane %v5348, 4
      %v5351 = vrot.slane %v5342, 5
      %v5352 = vsel %vm1412, %v5350, %v5351
      %5355 = vst.msk [vmem:[#allocation2 + $0x38] sm:$0xf] %vm174, %v5349
      %5356 = vst.msk [vmem:[#allocation2 + $0x3c] sm:$0xf] %vm174, %v5352
      %v5357 = vld [vmem:[%s222] sm:$0xe]
      %v5358 = vld [vmem:[%s222 + $0x4] sm:$0xf]
      %v5359 = vld [vmem:[%s222 + $0x8] sm:$0x1]
      %v5363 = vrot.slane %v5357, 5
      %v5364 = vrot.slane %v5363, 4
      %v5365 = vrot.slane %v5358, 5
      %v5366 = vsel %vm1412, %v5364, %v5365
      %v5367 = vrot.slane %v5365, 4
      %v5368 = vrot.slane %v5359, 5
      %v5369 = vsel %vm1412, %v5367, %v5368
      %5372 = vst.msk [vmem:[#allocation2 + $0x40] sm:$0xf] %vm174, %v5366
      %5373 = vst.msk [vmem:[#allocation2 + $0x44] sm:$0xf] %vm174, %v5369
      %v5374 = vld [vmem:[%s227] sm:$0xe]
      %v5375 = vld [vmem:[%s227 + $0x4] sm:$0xf]
      %v5376 = vld [vmem:[%s227 + $0x8] sm:$0x1]
      %v5380 = vrot.slane %v5374, 5
      %v5381 = vrot.slane %v5380, 4
      %v5382 = vrot.slane %v5375, 5
      %v5383 = vsel %vm1412, %v5381, %v5382
      %v5384 = vrot.slane %v5382, 4
      %v5385 = vrot.slane %v5376, 5
      %v5386 = vsel %vm1412, %v5384, %v5385
      %5389 = vst.msk [vmem:[#allocation2 + $0x48] sm:$0xf] %vm174, %v5383
      %5390 = vst.msk [vmem:[#allocation2 + $0x4c] sm:$0xf] %vm174, %v5386
      %v5391 = vld [vmem:[%s232] sm:$0xe]
      %v5392 = vld [vmem:[%s232 + $0x4] sm:$0xf]
      %v5393 = vld [vmem:[%s232 + $0x8] sm:$0x1]
      %v5397 = vrot.slane %v5391, 5
      %v5398 = vrot.slane %v5397, 4
      %v5399 = vrot.slane %v5392, 5
      %v5400 = vsel %vm1412, %v5398, %v5399
      %v5401 = vrot.slane %v5399, 4
      %v5402 = vrot.slane %v5393, 5
      %v5403 = vsel %vm1412, %v5401, %v5402
      %5406 = vst.msk [vmem:[#allocation2 + $0x50] sm:$0xf] %vm174, %v5400
      %5407 = vst.msk [vmem:[#allocation2 + $0x54] sm:$0xf] %vm174, %v5403
      %v5408 = vld [vmem:[%s237] sm:$0xe]
      %v5409 = vld [vmem:[%s237 + $0x4] sm:$0xf]
      %v5410 = vld [vmem:[%s237 + $0x8] sm:$0x1]
      %v5414 = vrot.slane %v5408, 5
      %v5415 = vrot.slane %v5414, 4
      %v5416 = vrot.slane %v5409, 5
      %v5417 = vsel %vm1412, %v5415, %v5416
      %v5418 = vrot.slane %v5416, 4
      %v5419 = vrot.slane %v5410, 5
      %v5420 = vsel %vm1412, %v5418, %v5419
      %5423 = vst.msk [vmem:[#allocation2 + $0x58] sm:$0xf] %vm174, %v5417
      %5424 = vst.msk [vmem:[#allocation2 + $0x5c] sm:$0xf] %vm174, %v5420
      %v5425 = vld [vmem:[%s242] sm:$0xe]
      %v5426 = vld [vmem:[%s242 + $0x4] sm:$0xf]
      %v5427 = vld [vmem:[%s242 + $0x8] sm:$0x1]
      %v5431 = vrot.slane %v5425, 5
      %v5432 = vrot.slane %v5431, 4
      %v5433 = vrot.slane %v5426, 5
      %v5434 = vsel %vm1412, %v5432, %v5433
      %v5435 = vrot.slane %v5433, 4
      %v5436 = vrot.slane %v5427, 5
      %v5437 = vsel %vm1412, %v5435, %v5436
      %5440 = vst.msk [vmem:[#allocation2 + $0x60] sm:$0xf] %vm174, %v5434
      %5441 = vst.msk [vmem:[#allocation2 + $0x64] sm:$0xf] %vm174, %v5437
      %v5442 = vld [vmem:[%s247] sm:$0xe]
      %v5443 = vld [vmem:[%s247 + $0x4] sm:$0xf]
      %v5444 = vld [vmem:[%s247 + $0x8] sm:$0x1]
      %v5448 = vrot.slane %v5442, 5
      %v5449 = vrot.slane %v5448, 4
      %v5450 = vrot.slane %v5443, 5
      %v5451 = vsel %vm1412, %v5449, %v5450
      %v5452 = vrot.slane %v5450, 4
      %v5453 = vrot.slane %v5444, 5
      %v5454 = vsel %vm1412, %v5452, %v5453
      %5457 = vst.msk [vmem:[#allocation2 + $0x68] sm:$0xf] %vm174, %v5451
      %5458 = vst.msk [vmem:[#allocation2 + $0x6c] sm:$0xf] %vm174, %v5454
      %v5459 = vld [vmem:[%s2097] sm:$0xe]
      %v5460 = vld [vmem:[%s2097 + $0x4] sm:$0xf]
      %v5461 = vld [vmem:[%s2097 + $0x8] sm:$0x1]
      %v5465 = vrot.slane %v5459, 5
      %v5466 = vrot.slane %v5465, 4
      %v5467 = vrot.slane %v5460, 5
      %v5468 = vsel %vm1412, %v5466, %v5467
      %v5469 = vrot.slane %v5467, 4
      %v5470 = vrot.slane %v5461, 5
      %v5471 = vsel %vm1412, %v5469, %v5470
      %5474 = vst.msk [vmem:[#allocation2 + $0x70] sm:$0xf] %vm174, %v5468
      %5475 = vst.msk [vmem:[#allocation2 + $0x74] sm:$0xf] %vm174, %v5471
      %v5476 = vld [vmem:[%s4004] sm:$0xe]
      %v5477 = vld [vmem:[%s4004 + $0x4] sm:$0xf]
      %v5478 = vld [vmem:[%s4004 + $0x8] sm:$0x1]
      %v5482 = vrot.slane %v5476, 5
      %v5483 = vrot.slane %v5482, 4
      %v5484 = vrot.slane %v5477, 5
      %v5485 = vsel %vm1412, %v5483, %v5484
      %v5486 = vrot.slane %v5484, 4
      %v5487 = vrot.slane %v5478, 5
      %v5488 = vsel %vm1412, %v5486, %v5487
      %5491 = vst.msk [vmem:[#allocation2 + $0x78] sm:$0xf] %vm174, %v5485
      %5492 = vst.msk [vmem:[#allocation2 + $0x7c] sm:$0xf] %vm174, %v5488
      %v5493 = vld [vmem:[#allocation2] sm:$0xf]
      %v5494 = vld [vmem:[#allocation2 + $0x4] sm:$0xf]
      %v5495 = vld [vmem:[#allocation2 + $0x8] sm:$0xf]
      %v5496 = vld [vmem:[#allocation2 + $0xc] sm:$0xf]
      %v5497 = vld [vmem:[#allocation2 + $0x10] sm:$0xf]
      %v5498 = vld [vmem:[#allocation2 + $0x14] sm:$0xf]
      %v5499 = vld [vmem:[#allocation2 + $0x18] sm:$0xf]
      %v5500 = vld [vmem:[#allocation2 + $0x1c] sm:$0xf]
      %v5501 = vld [vmem:[#allocation2 + $0x20] sm:$0xf]
      %v5502 = vld [vmem:[#allocation2 + $0x24] sm:$0xf]
      %v5503 = vld [vmem:[#allocation2 + $0x28] sm:$0xf]
      %v5504 = vld [vmem:[#allocation2 + $0x2c] sm:$0xf]
      %v5505 = vld [vmem:[#allocation2 + $0x30] sm:$0xf]
      %v5506 = vld [vmem:[#allocation2 + $0x34] sm:$0xf]
      %v5507 = vld [vmem:[#allocation2 + $0x38] sm:$0xf]
      %v5508 = vld [vmem:[#allocation2 + $0x3c] sm:$0xf]
      %v5509 = vld [vmem:[#allocation2 + $0x40] sm:$0xf]
      %v5510 = vld [vmem:[#allocation2 + $0x44] sm:$0xf]
      %v5511 = vld [vmem:[#allocation2 + $0x48] sm:$0xf]
      %v5512 = vld [vmem:[#allocation2 + $0x4c] sm:$0xf]
      %v5513 = vld [vmem:[#allocation2 + $0x50] sm:$0xf]
      %v5514 = vld [vmem:[#allocation2 + $0x54] sm:$0xf]
      %v5515 = vld [vmem:[#allocation2 + $0x58] sm:$0xf]
      %v5516 = vld [vmem:[#allocation2 + $0x5c] sm:$0xf]
      %v5517 = vld [vmem:[#allocation2 + $0x60] sm:$0xf]
      %v5518 = vld [vmem:[#allocation2 + $0x64] sm:$0xf]
      %v5519 = vld [vmem:[#allocation2 + $0x68] sm:$0xf]
      %v5520 = vld [vmem:[#allocation2 + $0x6c] sm:$0xf]
      %v5521 = vld [vmem:[#allocation2 + $0x70] sm:$0xf]
      %v5522 = vld [vmem:[#allocation2 + $0x74] sm:$0xf]
      %v5523 = vld [vmem:[#allocation2 + $0x78] sm:$0xf]
      %v5524 = vld [vmem:[#allocation2 + $0x7c] sm:$0xf]
      %s5525 = scalar_lea.vmem %s1, 32
      %v5526 = vld [vmem:[%s5525] sm:$0xf]
      %v5559 = vunpack.c.l.b16 %v5493
      %v5560 = vunpack.c.l.b16 %v5494
      %v5561 = vunpack.c.l.b16 %v5495
      %v5562 = vunpack.c.l.b16 %v5496
      %v5563 = vunpack.c.l.b16 %v5497
      %v5564 = vunpack.c.l.b16 %v5498
      %v5565 = vunpack.c.l.b16 %v5499
      %v5566 = vunpack.c.l.b16 %v5500
      %v5567 = vunpack.c.l.b16 %v5501
      %v5568 = vunpack.c.l.b16 %v5502
      %v5569 = vunpack.c.l.b16 %v5503
      %v5570 = vunpack.c.l.b16 %v5504
      %v5571 = vunpack.c.l.b16 %v5505
      %v5572 = vunpack.c.l.b16 %v5506
      %v5573 = vunpack.c.l.b16 %v5507
      %v5574 = vunpack.c.l.b16 %v5508
      %v5575 = vunpack.c.l.b16 %v5509
      %v5576 = vunpack.c.l.b16 %v5510
      %v5577 = vunpack.c.l.b16 %v5511
      %v5578 = vunpack.c.l.b16 %v5512
      %v5579 = vunpack.c.l.b16 %v5513
      %v5580 = vunpack.c.l.b16 %v5514
      %v5581 = vunpack.c.l.b16 %v5515
      %v5582 = vunpack.c.l.b16 %v5516
      %v5583 = vunpack.c.l.b16 %v5517
      %v5584 = vunpack.c.l.b16 %v5518
      %v5585 = vunpack.c.l.b16 %v5519
      %v5586 = vunpack.c.l.b16 %v5520
      %v5587 = vunpack.c.l.b16 %v5521
      %v5588 = vunpack.c.l.b16 %v5522
      %v5589 = vunpack.c.l.b16 %v5523
      %v5590 = vunpack.c.l.b16 %v5524
      %v5591 = vpack.c.b16 %v5560, %v5559
      %v5592 = vpack.c.b16 %v5562, %v5561
      %v5593 = vpack.c.b16 %v5564, %v5563
      %v5594 = vpack.c.b16 %v5566, %v5565
      %v5595 = vpack.c.b16 %v5568, %v5567
      %v5596 = vpack.c.b16 %v5570, %v5569
      %v5597 = vpack.c.b16 %v5572, %v5571
      %v5598 = vpack.c.b16 %v5574, %v5573
      %v5599 = vpack.c.b16 %v5576, %v5575
      %v5600 = vpack.c.b16 %v5578, %v5577
      %v5601 = vpack.c.b16 %v5580, %v5579
      %v5602 = vpack.c.b16 %v5582, %v5581
      %v5603 = vpack.c.b16 %v5584, %v5583
      %v5604 = vpack.c.b16 %v5586, %v5585
      %v5605 = vpack.c.b16 %v5588, %v5587
      %v5606 = vpack.c.b16 %v5590, %v5589
      %v5608 = vsel %vm898, %v5591, 0
      %v5611 = vsel %vm898, %v5592, 0
      %v5614 = vsel %vm898, %v5593, 0
      %v5617 = vsel %vm898, %v5594, 0
      %v5620 = vsel %vm898, %v5595, 0
      %v5623 = vsel %vm898, %v5596, 0
      %v5626 = vsel %vm898, %v5597, 0
      %v5629 = vsel %vm898, %v5598, 0
      %v5632 = vsel %vm898, %v5599, 0
      %v5635 = vsel %vm898, %v5600, 0
      %v5638 = vsel %vm898, %v5601, 0
      %v5641 = vsel %vm898, %v5602, 0
      %v5644 = vsel %vm898, %v5603, 0
      %v5647 = vsel %vm898, %v5604, 0
      %v5650 = vsel %vm898, %v5605, 0
      %v5653 = vsel %vm898, %v5606, 0
      %v5656 = vsel %vm947, %v5526, 0
      %5658 = vmatprep.subr.bf16.mxu0 0
      %5659 = vmatpush1.bf16.msra.mxu0 0
      %5660 = vmatprep.subr.bf16.mxu0 0
      %5661 = vmatpush1.bf16.msra.mxu0 0
      %5662 = vmatprep.subr.bf16.mxu0 0
      %5663 = vmatpush1.bf16.msra.mxu0 0
      %5664 = vmatprep.subr.bf16.mxu0 0
      %5665 = vmatpush1.bf16.msra.mxu0 0
      %5666 = vmatprep.subr.bf16.mxu0 0
      %5667 = vmatpush1.bf16.msra.mxu0 0
      %5668 = vmatprep.subr.bf16.mxu0 0
      %5669 = vmatpush1.bf16.msra.mxu0 0
      %5670 = vmatprep.subr.bf16.mxu0 0
      %5671 = vmatpush1.bf16.msra.mxu0 0
      %5672 = vmatprep.subr.bf16.mxu0 0
      %5673 = vmatpush1.bf16.msra.mxu0 %v5656
      %5674 = vmatprep.subr.bf16.mxu0 0
      %5675 = vmatpush2.bf16.msra.mxu0 0
      %5676 = vmatprep.subr.bf16.mxu0 0
      %5677 = vmatpush2.bf16.msra.mxu0 0
      %5678 = vmatprep.subr.bf16.mxu0 0
      %5679 = vmatpush2.bf16.msra.mxu0 0
      %5680 = vmatprep.subr.bf16.mxu0 0
      %5681 = vmatpush2.bf16.msra.mxu0 0
      %5682 = vmatprep.subr.bf16.mxu0 0
      %5683 = vmatpush2.bf16.msra.mxu0 0
      %5684 = vmatprep.subr.bf16.mxu0 0
      %5685 = vmatpush2.bf16.msra.mxu0 0
      %5686 = vmatprep.subr.bf16.mxu0 0
      %5687 = vmatpush2.bf16.msra.mxu0 0
      %5688 = vmatprep.subr.bf16.mxu0 0
      %5689 = vmatpush2.bf16.msra.mxu0 0
      %5690 = vmatprep.mubr.bf16.mxu0 0
      %5691 = vmatmul.mubr.bf16.gmra.mxu0 %v5608
      %v5692 = vpop.f32.mrf.mxu0
      %v5693 = vadd.f32 0.0, %v5692
      %v5694 = vpop.f32.mrf.mxu0
      %v5695 = vpop.f32.mrf.mxu0
      %v5696 = vadd.f32 0.0, %v5695
      %v5697 = vpop.f32.mrf.mxu0
      %5698 = vmatprep.mubr.bf16.mxu0 0
      %5699 = vmatmul.mubr.bf16.gmra.mxu0 %v5611
      %v5700 = vpop.f32.mrf.mxu0
      %v5701 = vadd.f32 0.0, %v5700
      %v5702 = vpop.f32.mrf.mxu0
      %v5703 = vpop.f32.mrf.mxu0
      %v5704 = vadd.f32 0.0, %v5703
      %v5705 = vpop.f32.mrf.mxu0
      %5706 = vmatprep.mubr.bf16.mxu0 0
      %5707 = vmatmul.mubr.bf16.gmra.mxu0 %v5614
      %v5708 = vpop.f32.mrf.mxu0
      %v5709 = vadd.f32 0.0, %v5708
      %v5710 = vpop.f32.mrf.mxu0
      %v5711 = vpop.f32.mrf.mxu0
      %v5712 = vadd.f32 0.0, %v5711
      %v5713 = vpop.f32.mrf.mxu0
      %5714 = vmatprep.mubr.bf16.mxu0 0
      %5715 = vmatmul.mubr.bf16.gmra.mxu0 %v5617
      %v5716 = vpop.f32.mrf.mxu0
      %v5717 = vadd.f32 0.0, %v5716
      %v5718 = vpop.f32.mrf.mxu0
      %v5719 = vpop.f32.mrf.mxu0
      %v5720 = vadd.f32 0.0, %v5719
      %v5721 = vpop.f32.mrf.mxu0
      %5722 = vmatprep.mubr.bf16.mxu0 0
      %5723 = vmatmul.mubr.bf16.gmra.mxu0 %v5620
      %v5724 = vpop.f32.mrf.mxu0
      %v5725 = vadd.f32 0.0, %v5724
      %v5726 = vpop.f32.mrf.mxu0
      %v5727 = vpop.f32.mrf.mxu0
      %v5728 = vadd.f32 0.0, %v5727
      %v5729 = vpop.f32.mrf.mxu0
      %5730 = vmatprep.mubr.bf16.mxu0 0
      %5731 = vmatmul.mubr.bf16.gmra.mxu0 %v5623
      %v5732 = vpop.f32.mrf.mxu0
      %v5733 = vadd.f32 0.0, %v5732
      %v5734 = vpop.f32.mrf.mxu0
      %v5735 = vpop.f32.mrf.mxu0
      %v5736 = vadd.f32 0.0, %v5735
      %v5737 = vpop.f32.mrf.mxu0
      %5738 = vmatprep.mubr.bf16.mxu0 0
      %5739 = vmatmul.mubr.bf16.gmra.mxu0 %v5626
      %v5740 = vpop.f32.mrf.mxu0
      %v5741 = vadd.f32 0.0, %v5740
      %v5742 = vpop.f32.mrf.mxu0
      %v5743 = vpop.f32.mrf.mxu0
      %v5744 = vadd.f32 0.0, %v5743
      %v5745 = vpop.f32.mrf.mxu0
      %5746 = vmatprep.mubr.bf16.mxu0 0
      %5747 = vmatmul.mubr.bf16.gmra.mxu0 %v5629
      %v5748 = vpop.f32.mrf.mxu0
      %v5749 = vadd.f32 0.0, %v5748
      %v5750 = vpop.f32.mrf.mxu0
      %v5751 = vpop.f32.mrf.mxu0
      %v5752 = vadd.f32 0.0, %v5751
      %v5753 = vpop.f32.mrf.mxu0
      %5754 = vmatprep.mubr.bf16.mxu0 0
      %5755 = vmatmul.mubr.bf16.gmra.mxu0 %v5632
      %v5756 = vpop.f32.mrf.mxu0
      %v5757 = vadd.f32 0.0, %v5756
      %v5758 = vpop.f32.mrf.mxu0
      %v5759 = vpop.f32.mrf.mxu0
      %v5760 = vadd.f32 0.0, %v5759
      %v5761 = vpop.f32.mrf.mxu0
      %5762 = vmatprep.mubr.bf16.mxu0 0
      %5763 = vmatmul.mubr.bf16.gmra.mxu0 %v5635
      %v5764 = vpop.f32.mrf.mxu0
      %v5765 = vadd.f32 0.0, %v5764
      %v5766 = vpop.f32.mrf.mxu0
      %v5767 = vpop.f32.mrf.mxu0
      %v5768 = vadd.f32 0.0, %v5767
      %v5769 = vpop.f32.mrf.mxu0
      %5770 = vmatprep.mubr.bf16.mxu0 0
      %5771 = vmatmul.mubr.bf16.gmra.mxu0 %v5638
      %v5772 = vpop.f32.mrf.mxu0
      %v5773 = vadd.f32 0.0, %v5772
      %v5774 = vpop.f32.mrf.mxu0
      %v5775 = vpop.f32.mrf.mxu0
      %v5776 = vadd.f32 0.0, %v5775
      %v5777 = vpop.f32.mrf.mxu0
      %5778 = vmatprep.mubr.bf16.mxu0 0
      %5779 = vmatmul.mubr.bf16.gmra.mxu0 %v5641
      %v5780 = vpop.f32.mrf.mxu0
      %v5781 = vadd.f32 0.0, %v5780
      %v5782 = vpop.f32.mrf.mxu0
      %v5783 = vpop.f32.mrf.mxu0
      %v5784 = vadd.f32 0.0, %v5783
      %v5785 = vpop.f32.mrf.mxu0
      %5786 = vmatprep.mubr.bf16.mxu0 0
      %5787 = vmatmul.mubr.bf16.gmra.mxu0 %v5644
      %v5788 = vpop.f32.mrf.mxu0
      %v5789 = vadd.f32 0.0, %v5788
      %v5790 = vpop.f32.mrf.mxu0
      %v5791 = vpop.f32.mrf.mxu0
      %v5792 = vadd.f32 0.0, %v5791
      %v5793 = vpop.f32.mrf.mxu0
      %5794 = vmatprep.mubr.bf16.mxu0 0
      %5795 = vmatmul.mubr.bf16.gmra.mxu0 %v5647
      %v5796 = vpop.f32.mrf.mxu0
      %v5797 = vadd.f32 0.0, %v5796
      %v5798 = vpop.f32.mrf.mxu0
      %v5799 = vpop.f32.mrf.mxu0
      %v5800 = vadd.f32 0.0, %v5799
      %v5801 = vpop.f32.mrf.mxu0
      %5802 = vmatprep.mubr.bf16.mxu0 0
      %5803 = vmatmul.mubr.bf16.gmra.mxu0 %v5650
      %v5804 = vpop.f32.mrf.mxu0
      %v5805 = vadd.f32 0.0, %v5804
      %v5806 = vpop.f32.mrf.mxu0
      %v5807 = vpop.f32.mrf.mxu0
      %v5808 = vadd.f32 0.0, %v5807
      %v5809 = vpop.f32.mrf.mxu0
      %5810 = vmatprep.mubr.bf16.mxu0 0
      %5811 = vmatmul.mubr.bf16.gmra.mxu0 %v5653
      %v5812 = vpop.f32.mrf.mxu0
      %v5813 = vadd.f32 0.0, %v5812
      %v5814 = vpop.f32.mrf.mxu0
      %v5815 = vpop.f32.mrf.mxu0
      %v5816 = vadd.f32 0.0, %v5815
      %v5817 = vpop.f32.mrf.mxu0
      %5818 = vdwg.mxu0
      %v5819 = vadd.f32 %v5189, %v5693
      %v5820 = vadd.f32 %v5190, %v5696
      %v5821 = vadd.f32 %v5191, %v5701
      %v5822 = vadd.f32 %v5192, %v5704
      %v5823 = vadd.f32 %v5193, %v5709
      %v5824 = vadd.f32 %v5194, %v5712
      %v5825 = vadd.f32 %v5195, %v5717
      %v5826 = vadd.f32 %v5196, %v5720
      %v5827 = vadd.f32 %v5197, %v5725
      %v5828 = vadd.f32 %v5198, %v5728
      %v5829 = vadd.f32 %v5199, %v5733
      %v5830 = vadd.f32 %v5200, %v5736
      %v5831 = vadd.f32 %v5201, %v5741
      %v5832 = vadd.f32 %v5202, %v5744
      %v5833 = vadd.f32 %v5203, %v5749
      %v5834 = vadd.f32 %v5204, %v5752
      %v5835 = vadd.f32 %v5205, %v5757
      %v5836 = vadd.f32 %v5206, %v5760
      %v5837 = vadd.f32 %v5207, %v5765
      %v5838 = vadd.f32 %v5208, %v5768
      %v5839 = vadd.f32 %v5209, %v5773
      %v5840 = vadd.f32 %v5210, %v5776
      %v5841 = vadd.f32 %v5211, %v5781
      %v5842 = vadd.f32 %v5212, %v5784
      %v5843 = vadd.f32 %v5213, %v5789
      %v5844 = vadd.f32 %v5214, %v5792
      %v5845 = vadd.f32 %v5215, %v5797
      %v5846 = vadd.f32 %v5216, %v5800
      %v5847 = vadd.f32 %v5217, %v5805
      %v5848 = vadd.f32 %v5218, %v5808
      %v5849 = vadd.f32 %v5219, %v5813
      %v5850 = vadd.f32 %v5220, %v5816
      %v5851 = vld [vmem:[%s2] sm:$0x1]
      %v5853 = vlaneseq
      %v5854 = vshrl.u32 %v5853, 7
      %v5855 = vsub.s32 0, %v5854
      %v5856 = vrot.slane %v5851, %v5855
      %v5858 = vadd.f32 %v5819, %v5856
      %v5859 = vadd.f32 %v5820, %v5856
      %v5860 = vadd.f32 %v5821, %v5856
      %v5861 = vadd.f32 %v5822, %v5856
      %v5862 = vadd.f32 %v5823, %v5856
      %v5863 = vadd.f32 %v5824, %v5856
      %v5864 = vadd.f32 %v5825, %v5856
      %v5865 = vadd.f32 %v5826, %v5856
      %v5866 = vadd.f32 %v5827, %v5856
      %v5867 = vadd.f32 %v5828, %v5856
      %v5868 = vadd.f32 %v5829, %v5856
      %v5869 = vadd.f32 %v5830, %v5856
      %v5870 = vadd.f32 %v5831, %v5856
      %v5871 = vadd.f32 %v5832, %v5856
      %v5872 = vadd.f32 %v5833, %v5856
      %v5873 = vadd.f32 %v5834, %v5856
      %v5874 = vadd.f32 %v5835, %v5856
      %v5875 = vadd.f32 %v5836, %v5856
      %v5876 = vadd.f32 %v5837, %v5856
      %v5877 = vadd.f32 %v5838, %v5856
      %v5878 = vadd.f32 %v5839, %v5856
      %v5879 = vadd.f32 %v5840, %v5856
      %v5880 = vadd.f32 %v5841, %v5856
      %v5881 = vadd.f32 %v5842, %v5856
      %v5882 = vadd.f32 %v5843, %v5856
      %v5883 = vadd.f32 %v5844, %v5856
      %v5884 = vadd.f32 %v5845, %v5856
      %v5885 = vadd.f32 %v5846, %v5856
      %v5886 = vadd.f32 %v5847, %v5856
      %v5887 = vadd.f32 %v5848, %v5856
      %v5888 = vadd.f32 %v5849, %v5856
      %v5889 = vadd.f32 %v5850, %v5856
      %v5890 = vmax.f32 %v5858, 0.0
      %v5891 = vmax.f32 %v5859, 0.0
      %v5892 = vmax.f32 %v5860, 0.0
      %v5893 = vmax.f32 %v5861, 0.0
      %v5894 = vmax.f32 %v5862, 0.0
      %v5895 = vmax.f32 %v5863, 0.0
      %v5896 = vmax.f32 %v5864, 0.0
      %v5897 = vmax.f32 %v5865, 0.0
      %v5898 = vmax.f32 %v5866, 0.0
      %v5899 = vmax.f32 %v5867, 0.0
      %v5900 = vmax.f32 %v5868, 0.0
      %v5901 = vmax.f32 %v5869, 0.0
      %v5902 = vmax.f32 %v5870, 0.0
      %v5903 = vmax.f32 %v5871, 0.0
      %v5904 = vmax.f32 %v5872, 0.0
      %v5905 = vmax.f32 %v5873, 0.0
      %v5906 = vmax.f32 %v5874, 0.0
      %v5907 = vmax.f32 %v5875, 0.0
      %v5908 = vmax.f32 %v5876, 0.0
      %v5909 = vmax.f32 %v5877, 0.0
      %v5910 = vmax.f32 %v5878, 0.0
      %v5911 = vmax.f32 %v5879, 0.0
      %v5912 = vmax.f32 %v5880, 0.0
      %v5913 = vmax.f32 %v5881, 0.0
      %v5914 = vmax.f32 %v5882, 0.0
      %v5915 = vmax.f32 %v5883, 0.0
      %v5916 = vmax.f32 %v5884, 0.0
      %v5917 = vmax.f32 %v5885, 0.0
      %v5918 = vmax.f32 %v5886, 0.0
      %v5919 = vmax.f32 %v5887, 0.0
      %v5920 = vmax.f32 %v5888, 0.0
      %v5921 = vmax.f32 %v5889, 0.0
      %v5922 = vpack.c.bf16 %v5891, %v5890
      %v5923 = vpack.c.bf16 %v5893, %v5892
      %v5924 = vpack.c.bf16 %v5895, %v5894
      %v5925 = vpack.c.bf16 %v5897, %v5896
      %v5926 = vpack.c.bf16 %v5899, %v5898
      %v5927 = vpack.c.bf16 %v5901, %v5900
      %v5928 = vpack.c.bf16 %v5903, %v5902
      %v5929 = vpack.c.bf16 %v5905, %v5904
      %v5930 = vpack.c.bf16 %v5907, %v5906
      %v5931 = vpack.c.bf16 %v5909, %v5908
      %v5932 = vpack.c.bf16 %v5911, %v5910
      %v5933 = vpack.c.bf16 %v5913, %v5912
      %v5934 = vpack.c.bf16 %v5915, %v5914
      %v5935 = vpack.c.bf16 %v5917, %v5916
      %v5936 = vpack.c.bf16 %v5919, %v5918
      %v5937 = vpack.c.bf16 %v5921, %v5920
      %v5954 = vunpack.c.l.b16 %v5922
      %v5955 = vunpack.c.h.b16 %v5922
      %v5956 = vunpack.c.l.b16 %v5923
      %v5957 = vunpack.c.h.b16 %v5923
      %v5958 = vunpack.c.l.b16 %v5924
      %v5959 = vunpack.c.h.b16 %v5924
      %v5960 = vunpack.c.l.b16 %v5925
      %v5961 = vunpack.c.h.b16 %v5925
      %v5962 = vunpack.c.l.b16 %v5926
      %v5963 = vunpack.c.h.b16 %v5926
      %v5964 = vunpack.c.l.b16 %v5927
      %v5965 = vunpack.c.h.b16 %v5927
      %v5966 = vunpack.c.l.b16 %v5928
      %v5967 = vunpack.c.h.b16 %v5928
      %v5968 = vunpack.c.l.b16 %v5929
      %v5969 = vunpack.c.h.b16 %v5929
      %v5970 = vunpack.c.l.b16 %v5930
      %v5971 = vunpack.c.h.b16 %v5930
      %v5972 = vunpack.c.l.b16 %v5931
      %v5973 = vunpack.c.h.b16 %v5931
      %v5974 = vunpack.c.l.b16 %v5932
      %v5975 = vunpack.c.h.b16 %v5932
      %v5976 = vunpack.c.l.b16 %v5933
      %v5977 = vunpack.c.h.b16 %v5933
      %v5978 = vunpack.c.l.b16 %v5934
      %v5979 = vunpack.c.h.b16 %v5934
      %v5980 = vunpack.c.l.b16 %v5935
      %v5981 = vunpack.c.h.b16 %v5935
      %v5982 = vunpack.c.l.b16 %v5936
      %v5983 = vunpack.c.h.b16 %v5936
      %v5984 = vunpack.c.l.b16 %v5937
      %v5985 = vunpack.c.h.b16 %v5937
      %v5986 = vpack.c.b16 %v5954, %v5954
      %v5987 = vpack.c.b16 %v5955, %v5955
      %v5988 = vpack.c.b16 %v5956, %v5956
      %v5989 = vpack.c.b16 %v5957, %v5957
      %v5990 = vpack.c.b16 %v5958, %v5958
      %v5991 = vpack.c.b16 %v5959, %v5959
      %v5992 = vpack.c.b16 %v5960, %v5960
      %v5993 = vpack.c.b16 %v5961, %v5961
      %v5994 = vpack.c.b16 %v5962, %v5962
      %v5995 = vpack.c.b16 %v5963, %v5963
      %v5996 = vpack.c.b16 %v5964, %v5964
      %v5997 = vpack.c.b16 %v5965, %v5965
      %v5998 = vpack.c.b16 %v5966, %v5966
      %v5999 = vpack.c.b16 %v5967, %v5967
      %v6000 = vpack.c.b16 %v5968, %v5968
      %v6001 = vpack.c.b16 %v5969, %v5969
      %v6002 = vpack.c.b16 %v5970, %v5970
      %v6003 = vpack.c.b16 %v5971, %v5971
      %v6004 = vpack.c.b16 %v5972, %v5972
      %v6005 = vpack.c.b16 %v5973, %v5973
      %v6006 = vpack.c.b16 %v5974, %v5974
      %v6007 = vpack.c.b16 %v5975, %v5975
      %v6008 = vpack.c.b16 %v5976, %v5976
      %v6009 = vpack.c.b16 %v5977, %v5977
      %v6010 = vpack.c.b16 %v5978, %v5978
      %v6011 = vpack.c.b16 %v5979, %v5979
      %v6012 = vpack.c.b16 %v5980, %v5980
      %v6013 = vpack.c.b16 %v5981, %v5981
      %v6014 = vpack.c.b16 %v5982, %v5982
      %v6015 = vpack.c.b16 %v5983, %v5983
      %v6016 = vpack.c.b16 %v5984, %v5984
      %v6017 = vpack.c.b16 %v5985, %v5985
      %vm6050 = vcmask 519168
      %6051 = vst.msk [vmem:[%s170] sm:$0xf] %vm6050, %v5986
      %6052 = vst.msk [vmem:[%s170 + $0x4] sm:$0xf] %vm6050, %v5987
      %6053 = vst.msk [vmem:[%s170 + $0x8] sm:$0xf] %vm6050, %v5988
      %6054 = vst.msk [vmem:[%s170 + $0xc] sm:$0xf] %vm6050, %v5989
      %6055 = vst.msk [vmem:[%s170 + $0x10] sm:$0xf] %vm6050, %v5990
      %6056 = vst.msk [vmem:[%s170 + $0x14] sm:$0xf] %vm6050, %v5991
      %6057 = vst.msk [vmem:[%s170 + $0x18] sm:$0xf] %vm6050, %v5992
      %6058 = vst.msk [vmem:[%s170 + $0x1c] sm:$0xf] %vm6050, %v5993
      %6059 = vst.msk [vmem:[%s170 + $0x20] sm:$0xf] %vm6050, %v5994
      %6060 = vst.msk [vmem:[%s170 + $0x24] sm:$0xf] %vm6050, %v5995
      %6061 = vst.msk [vmem:[%s170 + $0x28] sm:$0xf] %vm6050, %v5996
      %6062 = vst.msk [vmem:[%s170 + $0x2c] sm:$0xf] %vm6050, %v5997
      %6063 = vst.msk [vmem:[%s170 + $0x30] sm:$0xf] %vm6050, %v5998
      %6064 = vst.msk [vmem:[%s170 + $0x34] sm:$0xf] %vm6050, %v5999
      %6065 = vst.msk [vmem:[%s170 + $0x38] sm:$0xf] %vm6050, %v6000
      %6066 = vst.msk [vmem:[%s170 + $0x3c] sm:$0xf] %vm6050, %v6001
      %6067 = vst.msk [vmem:[%s170 + $0x40] sm:$0xf] %vm6050, %v6002
      %6068 = vst.msk [vmem:[%s170 + $0x44] sm:$0xf] %vm6050, %v6003
      %6069 = vst.msk [vmem:[%s170 + $0x48] sm:$0xf] %vm6050, %v6004
      %6070 = vst.msk [vmem:[%s170 + $0x4c] sm:$0xf] %vm6050, %v6005
      %6071 = vst.msk [vmem:[%s170 + $0x50] sm:$0xf] %vm6050, %v6006
      %6072 = vst.msk [vmem:[%s170 + $0x54] sm:$0xf] %vm6050, %v6007
      %6073 = vst.msk [vmem:[%s170 + $0x58] sm:$0xf] %vm6050, %v6008
      %6074 = vst.msk [vmem:[%s170 + $0x5c] sm:$0xf] %vm6050, %v6009
      %6075 = vst.msk [vmem:[%s170 + $0x60] sm:$0xf] %vm6050, %v6010
      %6076 = vst.msk [vmem:[%s170 + $0x64] sm:$0xf] %vm6050, %v6011
      %6077 = vst.msk [vmem:[%s170 + $0x68] sm:$0xf] %vm6050, %v6012
      %6078 = vst.msk [vmem:[%s170 + $0x6c] sm:$0xf] %vm6050, %v6013
      %6079 = vst.msk [vmem:[%s170 + $0x70] sm:$0xf] %vm6050, %v6014
      %6080 = vst.msk [vmem:[%s170 + $0x74] sm:$0xf] %vm6050, %v6015
      %6081 = vst.msk [vmem:[%s170 + $0x78] sm:$0xf] %vm6050, %v6016
      %6082 = vst.msk [vmem:[%s170 + $0x7c] sm:$0xf] %vm6050, %v6017
      %p6083 = scmp.lt.s32.totalorder %s14, 1
      %s6084 = scalar_select %p6083, %s14, 1
      %s6085 = smul.addr %s6084, 32
      %s6086 = smul.addr %s6085, 4
      %s6087 = scalar_lea.vmem %s3, %s6086
      // Predicated region
      $region33: #{tpu_custom_call.1} parent=31 // pred_check
        %p6088 = pneg %p100
      $region34: #{tpu_custom_call.1} parent=31 // pred_check_branch
        %6090 = sbr.rel (%p6088) target = $region36
      $region35: #{tpu_custom_call.1} parent=31 // pred_region
        _
      $region36: #{tpu_custom_call.1} parent=31 // pred_fallthru
        _
    $region32: #{tpu_custom_call.1} parent=5 // pred_fallthru
      _
    %p6091 = scmp.le.s32.totalorder 2, %s9
    // Predicated region
    $region37: #{tpu_custom_call.1} parent=5 // pred_check
      %p6092 = pneg %p6091
    $region38: #{tpu_custom_call.1} parent=5 // pred_check_branch
      %6094 = sbr.rel (%p6092) target = $region40
    $region39: #{tpu_custom_call.1} parent=5 // pred_region
      %s6095 = ssub.s32 %s9, 2
      // Predicated region
      $region41: #{tpu_custom_call.1} parent=39 // pred_check
        %p6096 = pneg %p106
      $region42: #{tpu_custom_call.1} parent=39 // pred_check_branch
        %6098 = sbr.rel (%p6096) target = $region44
      $region43: #{tpu_custom_call.1} parent=39 // pred_region
        %p6099 = scmp.lt.s32.totalorder %s15, 1
        %s6100 = scalar_select %p6099, %s15, 1
        %s6101 = smul.addr %s6100, 32
        %s6102 = smul.addr %s6101, 4
        %s6103 = scalar_lea.vmem %s3, %s6102
      $region44: #{tpu_custom_call.1} parent=39 // pred_fallthru
        _
    $region40: #{tpu_custom_call.1} parent=5 // pred_fallthru
      _
  $region6: #{tpu_custom_call.1} parent=0 // loop_footer
    %s13 = sadd.s32 1, %s9
  $region7: #{tpu_custom_call.1} parent=0 // loop_footer_branch
    %8 = sbr.rel target = $region3
  $region8: #{tpu_custom_call.1} parent=0 // loop_exit
    _

</llo_original>
